<compile_context>
chip_gen: v7x
topology: tpu7x:2x2x1
jax: 0.10.0
libtpu: 0.0.40
codegen_flags: <defaults>
</compile_context>

<pallas_src>
import functools

import jax
import jax.numpy as jnp
import numpy as np
from jax.experimental import pallas as pl
from jax.experimental.pallas import tpu as pltpu

DEPTH = 8
WIDTH = 128
LEN_EMBED = 6
SKIP_EVERY = 4
INPUT_SIZE = 3 + 3 * 2 * LEN_EMBED  # 39
PAD = 128                           # lane-dense feature padding
OUT_DIM = 4

VMEM_LIMIT_BYTES = 48 * 1024 * 1024  # > 16/32 MiB scoped defaults, < v7x 64 MiB


def _round_up(n, m):
    return ((n + m - 1) // m) * m


def _default_fuse_skip():
    """Fuse the skip layer into one K=256 matmul only on 256-deep MXUs."""
    try:
        kind = jax.devices()[0].device_kind.lower()
    except Exception:
        return False
    return ("v6" in kind) or ("v7" in kind) or ("7x" in kind)


def _choose_tile(n, tn_req):
    """Pick a row tile: big enough to amortize ~0.35us/step, small enough to
    keep >=2 grid steps when there is enough work (v7x 2-TC sharding)."""
    tn = int(max(256, min(tn_req, 4096)))
    tn = _round_up(tn, 256)
    n_ceil = _round_up(n, 256)
    tn = min(tn, n_ceil)
    if n_ceil >= 512:
        tn = min(tn, _round_up(n_ceil // 2, 256))
    return tn


# ----------------------------------------------------------------------------
# Kernel
# ----------------------------------------------------------------------------
def tiny_nerf_kernel(x_ref,        # [tn, 128] bf16 (cols 39: are zero)
                     w_ref,        # [9, 128, 128] bf16: w_in, h0..h3, h5..h7, w_out
                     wskip_ref,    # [256, 128] bf16: rows 0..127 = W4[:128],
                                   #   rows 128..166 = W4[128:167], rest zero
                     b_ref,        # [10, 1, 128] f32: b_in, b0..b7, b_out
                     o_ref,        # [tn, 128] out dtype
                     *, fuse_skip):
    x_bf = x_ref[...]  # bf16

    # Input linear: NO relu (matches PyTorch forward); f32 accumulate,
    # carry activation in bf16 (exactly what the MXU consumes next anyway).
    h = (jnp.dot(x_bf, w_ref[0], preferred_element_type=jnp.float32)
         + b_ref[0]).astype(jnp.bfloat16)

    for i in range(DEPTH):
        if i == SKIP_EVERY:
            # PyTorch: x = relu(cat(h, x_in)); x = relu(L4(x)).
            # h is already post-relu (relu idempotent); only x_in needs relu.
            # Zero-padded x columns hit zero weight rows -> exact.
            xr = jnp.maximum(x_bf, 0)
            if fuse_skip:
                # One K=256 pass fills the 256-deep MXU (v6e / v7x).
                hc = jnp.concatenate([h, xr], axis=-1)          # [tn, 256] bf16
                acc = jnp.dot(hc, wskip_ref[...],
                              preferred_element_type=jnp.float32)
            else:
                # Two accumulating K=128 passes (v5e and older: 128-deep MXU).
                wsk = wskip_ref[...]
                acc = (jnp.dot(h, wsk[:WIDTH],
                               preferred_element_type=jnp.float32)
                       + jnp.dot(xr, wsk[WIDTH:],
                                 preferred_element_type=jnp.float32))
        else:
            w_idx = 1 + i if i < SKIP_EVERY else i
            acc = jnp.dot(h, w_ref[w_idx],
                          preferred_element_type=jnp.float32)
        # bias + relu in f32, carry in bf16.
        h = jnp.maximum(acc + b_ref[1 + i], 0.0).astype(jnp.bfloat16)

    out = (jnp.dot(h, w_ref[DEPTH], preferred_element_type=jnp.float32)
           + b_ref[DEPTH + 1])
    o_ref[...] = out.astype(o_ref.dtype)


# ----------------------------------------------------------------------------
# Pallas wrapper (jit'd so the pad/cast + final slice are single fused passes)
# ----------------------------------------------------------------------------
@functools.partial(jax.jit, static_argnames=("tn", "fuse_skip", "out_dtype"))
def _tiny_nerf_pallas(x, w_sq, w_skip, b_stk, *, tn, fuse_skip, out_dtype):
    N, D = x.shape
    n_pad = _round_up(N, tn)

    # Lane-dense bf16 input (zero-pad rows and feature columns) -- one pass.
    x_p = jnp.pad(x.astype(jnp.bfloat16), ((0, n_pad - N), (0, PAD - D)))

    grid = (n_pad // tn,)
    kernel = functools.partial(tiny_nerf_kernel, fuse_skip=fuse_skip)

    def const_spec(arr):
        nd = arr.ndim
        return pl.BlockSpec(arr.shape, lambda i, _nd=nd: (0,) * _nd)

    in_specs = [pl.BlockSpec((tn, PAD), lambda i: (i, 0)),
                const_spec(w_sq), const_spec(w_skip), const_spec(b_stk)]
    out_spec = pl.BlockSpec((tn, PAD), lambda i: (i, 0))

    # 11 K=128-equivalent MXU passes per row (9 square + K=256 skip counts 2).
    flops = 2 * n_pad * PAD * PAD * (DEPTH + 3)
    weight_bytes = (9 * PAD * PAD + 2 * PAD * PAD) * 2 + 10 * PAD * 4
    out_itemsize = jnp.dtype(out_dtype).itemsize
    bytes_accessed = n_pad * PAD * 2 + n_pad * PAD * out_itemsize + weight_bytes
    cost = pl.CostEstimate(flops=flops, transcendentals=0,
                           bytes_accessed=bytes_accessed)

    out = pl.pallas_call(
        kernel,
        out_shape=jax.ShapeDtypeStruct((n_pad, PAD), out_dtype),
        grid_spec=pltpu.PrefetchScalarGridSpec(
            num_scalar_prefetch=0,
            grid=grid,
            in_specs=in_specs,
            out_specs=out_spec,
        ),
        compiler_params=pltpu.CompilerParams(
            dimension_semantics=("parallel",),
            vmem_limit_bytes=VMEM_LIMIT_BYTES),
        cost_estimate=cost,
    )(x_p, w_sq, w_skip, b_stk)

    # TODO(synk): let downstream consume the padded lane-dense slab directly
    # (or emit bf16) to avoid this extra HBM pass, biggest relative win on v5e.
    return out[:N, :OUT_DIM].astype(jnp.float32)


def tiny_nerf_forward(x, kparams, *, tn=2048, fuse_skip=None,
                      out_dtype=jnp.float32):
    """x: [N, 39] f32.  kparams from prep_kernel_params.  Returns [N, 4] f32."""
    N, D = x.shape
    assert D == INPUT_SIZE
    if fuse_skip is None:
        fuse_skip = _default_fuse_skip()
    tn_eff = _choose_tile(N, tn)
    w_sq, w_skip, b_stk = kparams
    return _tiny_nerf_pallas(x, w_sq, w_skip, b_stk, tn=tn_eff,
                             fuse_skip=bool(fuse_skip), out_dtype=out_dtype)


# ----------------------------------------------------------------------------
# Parameter construction (PyTorch-style init) + kernel-layout preparation
# ----------------------------------------------------------------------------
def init_linear(key, fan_in, fan_out):
    """Deterministic PyTorch-style uniform init; weight returned as [in, out]."""
    k1, k2 = jax.random.split(key)
    bound = 1.0 / np.sqrt(fan_in)
    w = jax.random.uniform(k1, (fan_in, fan_out), jnp.float32, -bound, bound)
    b = jax.random.uniform(k2, (1, fan_out), jnp.float32, -bound, bound)
    return w, b


def make_params(seed=0):
    key = jax.random.PRNGKey(seed)
    keys = jax.random.split(key, DEPTH + 2)

    w_in, b_in = init_linear(keys[0], INPUT_SIZE, WIDTH)

    layer_params = []
    for i in range(DEPTH):
        if i % SKIP_EVERY == 0 and i > 0 and i != DEPTH - 1:
            fan_in = INPUT_SIZE + WIDTH  # 167 (skip layer)
        else:
            fan_in = WIDTH
        layer_params.append(init_linear(keys[1 + i], fan_in, WIDTH))

    w_out, b_out = init_linear(keys[-1], WIDTH, OUT_DIM)
    return (w_in, b_in, layer_params, w_out, b_out)


def prep_kernel_params(structured):
    """Pack into 3 kernel inputs: [9,128,128] bf16 squares, [256,128] bf16
    skip weight, [10,1,128] f32 biases. All lane-dense / zero-padded."""
    w_in, b_in, layer_params, w_out, b_out = structured

    def pad_rows(w, rows):
        return jnp.pad(w, ((0, rows - w.shape[0]), (0, 0)))

    def pad_cols(a, cols):
        return jnp.pad(a, ((0, 0), (0, cols - a.shape[-1])))

    sq = [pad_rows(w_in, PAD)]               # index 0: w_in (rows >= 39 zero)
    biases = [b_in]
    w_skip_full = None
    for i in range(DEPTH):
        w, b = layer_params[i]
        if i == SKIP_EVERY:  # the only skip layer for depth=8
            # rows 0..127 multiply h, rows 128..166 multiply relu(x_in),
            # rows 167..255 are zero (only ever see zero-padded x columns).
            w_skip_full = jnp.concatenate(
                [w[:WIDTH, :], pad_rows(w[WIDTH:, :], PAD)], axis=0)  # [256,128]
        else:
            sq.append(w)                     # indices 1..4 = h0..h3, 5..7 = h5..h7
        biases.append(b)
    sq.append(pad_cols(w_out, PAD))          # index 8: w_out (cols >= 4 zero)
    biases.append(pad_cols(b_out, PAD))      # index 9: b_out (cols >= 4 zero)

    w_sq = jnp.stack(sq).astype(jnp.bfloat16)        # [9, 128, 128]
    w_skip = w_skip_full.astype(jnp.bfloat16)        # [256, 128]
    b_stk = jnp.stack(biases)                        # [10, 1, 128] f32
    return [w_sq, w_skip, b_stk]


def ref_forward(x, structured):
    """Pure-JAX f32 reference mirroring the PyTorch forward exactly."""
    w_in, b_in, layer_params, w_out, b_out = structured
    x_in = x
    h = x @ w_in + b_in
    for i in range(DEPTH):
        if i % SKIP_EVERY == 0 and i > 0 and i != DEPTH - 1:
            h = jax.nn.relu(jnp.concatenate([h, x_in], axis=-1))
        w, b = layer_params[i]
        h = jax.nn.relu(h @ w + b)
    return h @ w_out + b_out


if __name__ == "__main__":
    N = 2048  # number of sample points (auto-tiled into 2 row tiles of 1024)
    key = jax.random.PRNGKey(0)
    x = jax.random.normal(key, (N, INPUT_SIZE), jnp.float32)

    structured = make_params(seed=0)
    kparams = prep_kernel_params(structured)

    out = tiny_nerf_forward(x, kparams)
    out = jax.block_until_ready(out)

    ref = ref_forward(x, structured)
    # bf16 matmul operands (f32 accumulation) -> loose tolerance vs f32 reference.
    np.testing.assert_allclose(np.asarray(out), np.asarray(ref), rtol=2e-2, atol=2e-2)

    assert out.shape == (N, OUT_DIM) and out.dtype == jnp.float32
    print("KERNEL_OK")
</pallas_src>

<mosaic_0001>
module attributes {stable_mosaic.version = 11 : i64} {
  func.func @tiny_nerf_kernel(%arg0: i32, %arg1: memref<1024x128xbf16, #tpu.memory_space<vmem>>, %arg2: memref<9x128x128xbf16, #tpu.memory_space<vmem>>, %arg3: memref<256x128xbf16, #tpu.memory_space<vmem>>, %arg4: memref<10x1x128xf32, #tpu.memory_space<vmem>>, %arg5: memref<1024x128xf32, #tpu.memory_space<vmem>>) attributes {dimension_semantics = [#tpu.dimension_semantics<parallel>], iteration_bounds = array<i64: 2>, scalar_prefetch = 0 : i64, scratch_operands = 0 : i64, tpu.core_type = #tpu.core_type<tc>, window_params = [{transform_indices = @transform_0, window_bounds = array<i64: 1024, 128>}, {pipeline_mode = #tpu.pipeline_mode<synchronous>, transform_indices = @transform_1, window_bounds = array<i64: 9, 128, 128>}, {pipeline_mode = #tpu.pipeline_mode<synchronous>, transform_indices = @transform_2, window_bounds = array<i64: 256, 128>}, {pipeline_mode = #tpu.pipeline_mode<synchronous>, transform_indices = @transform_3, window_bounds = array<i64: 10, 1, 128>}, {transform_indices = @transform_4, window_bounds = array<i64: 1024, 128>}]} {
    %c0 = arith.constant 0 : index
    %c0_0 = arith.constant 0 : index
    %0 = vector.load %arg1[%c0, %c0_0] : memref<1024x128xbf16, #tpu.memory_space<vmem>>, vector<1024x128xbf16>
    %c0_1 = arith.constant 0 : index
    %c0_2 = arith.constant 0 : index
    %c0_3 = arith.constant 0 : index
    %1 = vector.load %arg2[%c0_1, %c0_2, %c0_3] : memref<9x128x128xbf16, #tpu.memory_space<vmem>>, vector<1x128x128xbf16>
    %2 = vector.shape_cast %1 : vector<1x128x128xbf16> to vector<128x128xbf16>
    %cst = arith.constant dense<0.000000e+00> : vector<1024x128xf32>
    %3 = tpu.matmul %0, %2, %cst {dimension_numbers = #tpu.dot_dimension_numbers<[1], [0], [0], [1], [0, 0, 1, 1], [], []>} : vector<1024x128xbf16>, vector<128x128xbf16>, vector<1024x128xf32> -> vector<1024x128xf32>
    %c0_4 = arith.constant 0 : index
    %c0_5 = arith.constant 0 : index
    %c0_6 = arith.constant 0 : index
    %4 = vector.load %arg4[%c0_4, %c0_5, %c0_6] : memref<10x1x128xf32, #tpu.memory_space<vmem>>, vector<1x1x128xf32>
    %5 = vector.shape_cast %4 : vector<1x1x128xf32> to vector<1x128xf32>
    %6 = vector.broadcast %5 : vector<1x128xf32> to vector<1024x128xf32>
    %7 = arith.addf %3, %6 : vector<1024x128xf32>
    %8 = arith.truncf %7 : vector<1024x128xf32> to vector<1024x128xbf16>
    %c1 = arith.constant 1 : index
    %c0_7 = arith.constant 0 : index
    %c0_8 = arith.constant 0 : index
    %9 = vector.load %arg2[%c1, %c0_7, %c0_8] : memref<9x128x128xbf16, #tpu.memory_space<vmem>>, vector<1x128x128xbf16>
    %10 = vector.shape_cast %9 : vector<1x128x128xbf16> to vector<128x128xbf16>
    %cst_9 = arith.constant dense<0.000000e+00> : vector<1024x128xf32>
    %11 = tpu.matmul %8, %10, %cst_9 {dimension_numbers = #tpu.dot_dimension_numbers<[1], [0], [0], [1], [0, 0, 1, 1], [], []>} : vector<1024x128xbf16>, vector<128x128xbf16>, vector<1024x128xf32> -> vector<1024x128xf32>
    %c1_10 = arith.constant 1 : index
    %c0_11 = arith.constant 0 : index
    %c0_12 = arith.constant 0 : index
    %12 = vector.load %arg4[%c1_10, %c0_11, %c0_12] : memref<10x1x128xf32, #tpu.memory_space<vmem>>, vector<1x1x128xf32>
    %13 = vector.shape_cast %12 : vector<1x1x128xf32> to vector<1x128xf32>
    %14 = vector.broadcast %13 : vector<1x128xf32> to vector<1024x128xf32>
    %15 = arith.addf %11, %14 : vector<1024x128xf32>
    %cst_13 = arith.constant 0.000000e+00 : f32
    %16 = vector.broadcast %cst_13 : f32 to vector<1024x128xf32>
    %17 = arith.maximumf %15, %16 : vector<1024x128xf32>
    %18 = arith.truncf %17 : vector<1024x128xf32> to vector<1024x128xbf16>
    %c2 = arith.constant 2 : index
    %c0_14 = arith.constant 0 : index
    %c0_15 = arith.constant 0 : index
    %19 = vector.load %arg2[%c2, %c0_14, %c0_15] : memref<9x128x128xbf16, #tpu.memory_space<vmem>>, vector<1x128x128xbf16>
    %20 = vector.shape_cast %19 : vector<1x128x128xbf16> to vector<128x128xbf16>
    %cst_16 = arith.constant dense<0.000000e+00> : vector<1024x128xf32>
    %21 = tpu.matmul %18, %20, %cst_16 {dimension_numbers = #tpu.dot_dimension_numbers<[1], [0], [0], [1], [0, 0, 1, 1], [], []>} : vector<1024x128xbf16>, vector<128x128xbf16>, vector<1024x128xf32> -> vector<1024x128xf32>
    %c2_17 = arith.constant 2 : index
    %c0_18 = arith.constant 0 : index
    %c0_19 = arith.constant 0 : index
    %22 = vector.load %arg4[%c2_17, %c0_18, %c0_19] : memref<10x1x128xf32, #tpu.memory_space<vmem>>, vector<1x1x128xf32>
    %23 = vector.shape_cast %22 : vector<1x1x128xf32> to vector<1x128xf32>
    %24 = vector.broadcast %23 : vector<1x128xf32> to vector<1024x128xf32>
    %25 = arith.addf %21, %24 : vector<1024x128xf32>
    %cst_20 = arith.constant 0.000000e+00 : f32
    %26 = vector.broadcast %cst_20 : f32 to vector<1024x128xf32>
    %27 = arith.maximumf %25, %26 : vector<1024x128xf32>
    %28 = arith.truncf %27 : vector<1024x128xf32> to vector<1024x128xbf16>
    %c3 = arith.constant 3 : index
    %c0_21 = arith.constant 0 : index
    %c0_22 = arith.constant 0 : index
    %29 = vector.load %arg2[%c3, %c0_21, %c0_22] : memref<9x128x128xbf16, #tpu.memory_space<vmem>>, vector<1x128x128xbf16>
    %30 = vector.shape_cast %29 : vector<1x128x128xbf16> to vector<128x128xbf16>
    %cst_23 = arith.constant dense<0.000000e+00> : vector<1024x128xf32>
    %31 = tpu.matmul %28, %30, %cst_23 {dimension_numbers = #tpu.dot_dimension_numbers<[1], [0], [0], [1], [0, 0, 1, 1], [], []>} : vector<1024x128xbf16>, vector<128x128xbf16>, vector<1024x128xf32> -> vector<1024x128xf32>
    %c3_24 = arith.constant 3 : index
    %c0_25 = arith.constant 0 : index
    %c0_26 = arith.constant 0 : index
    %32 = vector.load %arg4[%c3_24, %c0_25, %c0_26] : memref<10x1x128xf32, #tpu.memory_space<vmem>>, vector<1x1x128xf32>
    %33 = vector.shape_cast %32 : vector<1x1x128xf32> to vector<1x128xf32>
    %34 = vector.broadcast %33 : vector<1x128xf32> to vector<1024x128xf32>
    %35 = arith.addf %31, %34 : vector<1024x128xf32>
    %cst_27 = arith.constant 0.000000e+00 : f32
    %36 = vector.broadcast %cst_27 : f32 to vector<1024x128xf32>
    %37 = arith.maximumf %35, %36 : vector<1024x128xf32>
    %38 = arith.truncf %37 : vector<1024x128xf32> to vector<1024x128xbf16>
    %c4 = arith.constant 4 : index
    %c0_28 = arith.constant 0 : index
    %c0_29 = arith.constant 0 : index
    %39 = vector.load %arg2[%c4, %c0_28, %c0_29] : memref<9x128x128xbf16, #tpu.memory_space<vmem>>, vector<1x128x128xbf16>
    %40 = vector.shape_cast %39 : vector<1x128x128xbf16> to vector<128x128xbf16>
    %cst_30 = arith.constant dense<0.000000e+00> : vector<1024x128xf32>
    %41 = tpu.matmul %38, %40, %cst_30 {dimension_numbers = #tpu.dot_dimension_numbers<[1], [0], [0], [1], [0, 0, 1, 1], [], []>} : vector<1024x128xbf16>, vector<128x128xbf16>, vector<1024x128xf32> -> vector<1024x128xf32>
    %c4_31 = arith.constant 4 : index
    %c0_32 = arith.constant 0 : index
    %c0_33 = arith.constant 0 : index
    %42 = vector.load %arg4[%c4_31, %c0_32, %c0_33] : memref<10x1x128xf32, #tpu.memory_space<vmem>>, vector<1x1x128xf32>
    %43 = vector.shape_cast %42 : vector<1x1x128xf32> to vector<1x128xf32>
    %44 = vector.broadcast %43 : vector<1x128xf32> to vector<1024x128xf32>
    %45 = arith.addf %41, %44 : vector<1024x128xf32>
    %cst_34 = arith.constant 0.000000e+00 : f32
    %46 = vector.broadcast %cst_34 : f32 to vector<1024x128xf32>
    %47 = arith.maximumf %45, %46 : vector<1024x128xf32>
    %48 = arith.truncf %47 : vector<1024x128xf32> to vector<1024x128xbf16>
    %cst_35 = arith.constant 0.000000e+00 : bf16
    %49 = vector.broadcast %cst_35 : bf16 to vector<1024x128xbf16>
    %50 = arith.maximumf %0, %49 : vector<1024x128xbf16>
    %c0_36 = arith.constant 0 : index
    %c0_37 = arith.constant 0 : index
    %51 = vector.load %arg3[%c0_36, %c0_37] : memref<256x128xbf16, #tpu.memory_space<vmem>>, vector<256x128xbf16>
    %52 = vector.extract_strided_slice %51 {offsets = [0, 0], sizes = [128, 128], strides = [1, 1]} : vector<256x128xbf16> to vector<128x128xbf16>
    %cst_38 = arith.constant dense<0.000000e+00> : vector<1024x128xf32>
    %53 = tpu.matmul %48, %52, %cst_38 {dimension_numbers = #tpu.dot_dimension_numbers<[1], [0], [0], [1], [0, 0, 1, 1], [], []>} : vector<1024x128xbf16>, vector<128x128xbf16>, vector<1024x128xf32> -> vector<1024x128xf32>
    %54 = vector.extract_strided_slice %51 {offsets = [128, 0], sizes = [128, 128], strides = [1, 1]} : vector<256x128xbf16> to vector<128x128xbf16>
    %cst_39 = arith.constant dense<0.000000e+00> : vector<1024x128xf32>
    %55 = tpu.matmul %50, %54, %cst_39 {dimension_numbers = #tpu.dot_dimension_numbers<[1], [0], [0], [1], [0, 0, 1, 1], [], []>} : vector<1024x128xbf16>, vector<128x128xbf16>, vector<1024x128xf32> -> vector<1024x128xf32>
    %56 = arith.addf %53, %55 : vector<1024x128xf32>
    %c5 = arith.constant 5 : index
    %c0_40 = arith.constant 0 : index
    %c0_41 = arith.constant 0 : index
    %57 = vector.load %arg4[%c5, %c0_40, %c0_41] : memref<10x1x128xf32, #tpu.memory_space<vmem>>, vector<1x1x128xf32>
    %58 = vector.shape_cast %57 : vector<1x1x128xf32> to vector<1x128xf32>
    %59 = vector.broadcast %58 : vector<1x128xf32> to vector<1024x128xf32>
    %60 = arith.addf %56, %59 : vector<1024x128xf32>
    %cst_42 = arith.constant 0.000000e+00 : f32
    %61 = vector.broadcast %cst_42 : f32 to vector<1024x128xf32>
    %62 = arith.maximumf %60, %61 : vector<1024x128xf32>
    %63 = arith.truncf %62 : vector<1024x128xf32> to vector<1024x128xbf16>
    %c5_43 = arith.constant 5 : index
    %c0_44 = arith.constant 0 : index
    %c0_45 = arith.constant 0 : index
    %64 = vector.load %arg2[%c5_43, %c0_44, %c0_45] : memref<9x128x128xbf16, #tpu.memory_space<vmem>>, vector<1x128x128xbf16>
    %65 = vector.shape_cast %64 : vector<1x128x128xbf16> to vector<128x128xbf16>
    %cst_46 = arith.constant dense<0.000000e+00> : vector<1024x128xf32>
    %66 = tpu.matmul %63, %65, %cst_46 {dimension_numbers = #tpu.dot_dimension_numbers<[1], [0], [0], [1], [0, 0, 1, 1], [], []>} : vector<1024x128xbf16>, vector<128x128xbf16>, vector<1024x128xf32> -> vector<1024x128xf32>
    %c6 = arith.constant 6 : index
    %c0_47 = arith.constant 0 : index
    %c0_48 = arith.constant 0 : index
    %67 = vector.load %arg4[%c6, %c0_47, %c0_48] : memref<10x1x128xf32, #tpu.memory_space<vmem>>, vector<1x1x128xf32>
    %68 = vector.shape_cast %67 : vector<1x1x128xf32> to vector<1x128xf32>
    %69 = vector.broadcast %68 : vector<1x128xf32> to vector<1024x128xf32>
    %70 = arith.addf %66, %69 : vector<1024x128xf32>
    %cst_49 = arith.constant 0.000000e+00 : f32
    %71 = vector.broadcast %cst_49 : f32 to vector<1024x128xf32>
    %72 = arith.maximumf %70, %71 : vector<1024x128xf32>
    %73 = arith.truncf %72 : vector<1024x128xf32> to vector<1024x128xbf16>
    %c6_50 = arith.constant 6 : index
    %c0_51 = arith.constant 0 : index
    %c0_52 = arith.constant 0 : index
    %74 = vector.load %arg2[%c6_50, %c0_51, %c0_52] : memref<9x128x128xbf16, #tpu.memory_space<vmem>>, vector<1x128x128xbf16>
    %75 = vector.shape_cast %74 : vector<1x128x128xbf16> to vector<128x128xbf16>
    %cst_53 = arith.constant dense<0.000000e+00> : vector<1024x128xf32>
    %76 = tpu.matmul %73, %75, %cst_53 {dimension_numbers = #tpu.dot_dimension_numbers<[1], [0], [0], [1], [0, 0, 1, 1], [], []>} : vector<1024x128xbf16>, vector<128x128xbf16>, vector<1024x128xf32> -> vector<1024x128xf32>
    %c7 = arith.constant 7 : index
    %c0_54 = arith.constant 0 : index
    %c0_55 = arith.constant 0 : index
    %77 = vector.load %arg4[%c7, %c0_54, %c0_55] : memref<10x1x128xf32, #tpu.memory_space<vmem>>, vector<1x1x128xf32>
    %78 = vector.shape_cast %77 : vector<1x1x128xf32> to vector<1x128xf32>
    %79 = vector.broadcast %78 : vector<1x128xf32> to vector<1024x128xf32>
    %80 = arith.addf %76, %79 : vector<1024x128xf32>
    %cst_56 = arith.constant 0.000000e+00 : f32
    %81 = vector.broadcast %cst_56 : f32 to vector<1024x128xf32>
    %82 = arith.maximumf %80, %81 : vector<1024x128xf32>
    %83 = arith.truncf %82 : vector<1024x128xf32> to vector<1024x128xbf16>
    %c7_57 = arith.constant 7 : index
    %c0_58 = arith.constant 0 : index
    %c0_59 = arith.constant 0 : index
    %84 = vector.load %arg2[%c7_57, %c0_58, %c0_59] : memref<9x128x128xbf16, #tpu.memory_space<vmem>>, vector<1x128x128xbf16>
    %85 = vector.shape_cast %84 : vector<1x128x128xbf16> to vector<128x128xbf16>
    %cst_60 = arith.constant dense<0.000000e+00> : vector<1024x128xf32>
    %86 = tpu.matmul %83, %85, %cst_60 {dimension_numbers = #tpu.dot_dimension_numbers<[1], [0], [0], [1], [0, 0, 1, 1], [], []>} : vector<1024x128xbf16>, vector<128x128xbf16>, vector<1024x128xf32> -> vector<1024x128xf32>
    %c8 = arith.constant 8 : index
    %c0_61 = arith.constant 0 : index
    %c0_62 = arith.constant 0 : index
    %87 = vector.load %arg4[%c8, %c0_61, %c0_62] : memref<10x1x128xf32, #tpu.memory_space<vmem>>, vector<1x1x128xf32>
    %88 = vector.shape_cast %87 : vector<1x1x128xf32> to vector<1x128xf32>
    %89 = vector.broadcast %88 : vector<1x128xf32> to vector<1024x128xf32>
    %90 = arith.addf %86, %89 : vector<1024x128xf32>
    %cst_63 = arith.constant 0.000000e+00 : f32
    %91 = vector.broadcast %cst_63 : f32 to vector<1024x128xf32>
    %92 = arith.maximumf %90, %91 : vector<1024x128xf32>
    %93 = arith.truncf %92 : vector<1024x128xf32> to vector<1024x128xbf16>
    %c8_64 = arith.constant 8 : index
    %c0_65 = arith.constant 0 : index
    %c0_66 = arith.constant 0 : index
    %94 = vector.load %arg2[%c8_64, %c0_65, %c0_66] : memref<9x128x128xbf16, #tpu.memory_space<vmem>>, vector<1x128x128xbf16>
    %95 = vector.shape_cast %94 : vector<1x128x128xbf16> to vector<128x128xbf16>
    %cst_67 = arith.constant dense<0.000000e+00> : vector<1024x128xf32>
    %96 = tpu.matmul %93, %95, %cst_67 {dimension_numbers = #tpu.dot_dimension_numbers<[1], [0], [0], [1], [0, 0, 1, 1], [], []>} : vector<1024x128xbf16>, vector<128x128xbf16>, vector<1024x128xf32> -> vector<1024x128xf32>
    %c9 = arith.constant 9 : index
    %c0_68 = arith.constant 0 : index
    %c0_69 = arith.constant 0 : index
    %97 = vector.load %arg4[%c9, %c0_68, %c0_69] : memref<10x1x128xf32, #tpu.memory_space<vmem>>, vector<1x1x128xf32>
    %98 = vector.shape_cast %97 : vector<1x1x128xf32> to vector<1x128xf32>
    %99 = vector.broadcast %98 : vector<1x128xf32> to vector<1024x128xf32>
    %100 = arith.addf %96, %99 : vector<1024x128xf32>
    %c0_70 = arith.constant 0 : index
    %c0_71 = arith.constant 0 : index
    %101 = vector.load %arg5[%c0_70, %c0_71] : memref<1024x128xf32, #tpu.memory_space<vmem>>, vector<1024x128xf32>
    tpu.vector_store %arg5[%c0_70, %c0_71], %100 {strides = array<i32>} : memref<1024x128xf32, #tpu.memory_space<vmem>>, vector<1024x128xf32>,
    return
  }
  func.func @transform_0(%arg0: i32) -> (i32, i32) {
    %c0_i32 = arith.constant 0 : i32
    %c0_i32_0 = arith.constant 0 : i32
    return %arg0, %c0_i32 : i32, i32
  }
  func.func @transform_1(%arg0: i32) -> (i32, i32, i32) {
    %c0_i32 = arith.constant 0 : i32
    %c0_i32_0 = arith.constant 0 : i32
    %c0_i32_1 = arith.constant 0 : i32
    %c0_i32_2 = arith.constant 0 : i32
    return %c0_i32, %c0_i32_0, %c0_i32_1 : i32, i32, i32
  }
  func.func @transform_2(%arg0: i32) -> (i32, i32) {
    %c0_i32 = arith.constant 0 : i32
    %c0_i32_0 = arith.constant 0 : i32
    %c0_i32_1 = arith.constant 0 : i32
    return %c0_i32, %c0_i32_0 : i32, i32
  }
  func.func @transform_3(%arg0: i32) -> (i32, i32, i32) {
    %c0_i32 = arith.constant 0 : i32
    %c0_i32_0 = arith.constant 0 : i32
    %c0_i32_1 = arith.constant 0 : i32
    %c0_i32_2 = arith.constant 0 : i32
    return %c0_i32, %c0_i32_0, %c0_i32_1 : i32, i32, i32
  }
  func.func @transform_4(%arg0: i32) -> (i32, i32) {
    %c0_i32 = arith.constant 0 : i32
    %c0_i32_0 = arith.constant 0 : i32
    return %arg0, %c0_i32 : i32, i32
  }
}

</mosaic_0001>

<llo_original>
// kernel: _tiny_nerf_pallas.1
$region0: #{_tiny_nerf_pallas.1}
  #allocation0 [shape = 'u32[]', space=smem, size = 0x4, offset = 0x4, fixed_abs, tag = 'smem constant byte address 0x4 - core index']
  #allocation1 [shape = 'u32[144,128]{1,0:T(1,128)}', space=vmem, size = 0x12000, scoped, tag = 'internal scratch']
  %s0 = inlined_call_operand.vmem [shape: bf16[2048,128], index: 0, kind: input, shape index: {}]
  %s1 = inlined_call_operand.vmem [shape: bf16[9,128,128], index: 1, kind: input, shape index: {}]
  %s2 = inlined_call_operand.vmem [shape: bf16[256,128], index: 2, kind: input, shape index: {}]
  %s3 = inlined_call_operand.vmem [shape: f32[10,1,128], index: 3, kind: input, shape index: {}]
  %s4 = inlined_call_operand.vmem [shape: f32[2048,128], index: 4, kind: output, shape index: {}]
  %s5 = sld [smem:[#allocation0]]
  $region49: #{_tiny_nerf_pallas.1} parent=0
    _
  %s7 = ssub.s32 1, %s5
  %s8 = scalar_select 0, %s7, %s5
  loop: start=0, step=1, limit=4
  $region2: #{_tiny_nerf_pallas.1} parent=0 // loop_pre_header
    _
  $region3: #{_tiny_nerf_pallas.1} parent=0 // loop_header
    %s10 = sphi 0, %s14
    %p11 = scmp.ge.s32.totalorder %s10, 4
    %s20 = sphi 0, %s22
    %s23 = sphi 0, %s20
    %s24 = sphi 0, %s23
    %s40 = sphi 0, %s24
    %s44 = sphi 0, %s44
    %s46 = sphi 0, %s44
    %s47 = sphi 0, %s46
    %s61 = sphi 0, %s47
    %s65 = sphi 0, %s65
    %s67 = sphi 0, %s65
    %s68 = sphi 0, %s67
    %s82 = sphi 0, %s68
    %s86 = sphi 0, %s86
    %s88 = sphi 0, %s86
    %s89 = sphi 0, %s88
    %s103 = sphi 0, %s89
    %s109 = sphi 0, %s111
    %s112 = sphi 0, %s109
    %s113 = sphi 0, %s112
    %s129 = sphi 0, %s113
  $region4: #{_tiny_nerf_pallas.1} parent=0 // loop_header_branch
    %13 = sbr.rel (%p11) target = $region8
  $region5: #{_tiny_nerf_pallas.1} parent=0 // loop_body
    %s15 = ssub.s32 %s10, 1
    %s16 = ssub.s32 %s10, 2
    %s17 = sadd.s32 %s10, 1
    %s18 = ssub.s32 %s10, %s17
    %p19 = scmp.eq.s32.totalorder %s18, 0
    %s21 = sadd.s32 %s20, 1
    %s22 = scalar_select %p19, %s20, %s21
    %p25 = pneg %p19
    %p26 = scmp.eq.s32.totalorder %s10, 1
    %p27 = por %p25, %p26
    %p28 = scmp.ne.s32.totalorder %s20, %s23
    %p29 = scmp.eq.s32.totalorder %s10, 0
    %p30 = por %p28, %p29
    %p31 = scmp.ne.s32.totalorder %s20, %s23
    %p32 = scmp.eq.s32.totalorder %s15, 1
    %p33 = por %p31, %p32
    %p34 = scmp.ne.s32.totalorder %s23, %s24
    %p35 = scmp.eq.s32.totalorder %s15, 0
    %p36 = por %p34, %p35
    %p37 = scmp.ne.s32.totalorder %s23, %s24
    %p38 = scmp.eq.s32.totalorder %s16, 1
    %p39 = por %p37, %p38
    %p41 = scmp.ne.s32.totalorder %s24, %s40
    %p42 = scmp.eq.s32.totalorder %s16, 0
    %p43 = por %p41, %p42
    %s45 = sadd.s32 %s44, 1
    %p48 = scmp.eq.s32.totalorder %s10, 1
    %p49 = scmp.ne.s32.totalorder %s44, %s46
    %p50 = scmp.eq.s32.totalorder %s10, 0
    %p51 = por %p49, %p50
    %p52 = scmp.ne.s32.totalorder %s44, %s46
    %p53 = scmp.eq.s32.totalorder %s15, 1
    %p54 = por %p52, %p53
    %p55 = scmp.ne.s32.totalorder %s46, %s47
    %p56 = scmp.eq.s32.totalorder %s15, 0
    %p57 = por %p55, %p56
    %p58 = scmp.ne.s32.totalorder %s46, %s47
    %p59 = scmp.eq.s32.totalorder %s16, 1
    %p60 = por %p58, %p59
    %p62 = scmp.ne.s32.totalorder %s47, %s61
    %p63 = scmp.eq.s32.totalorder %s16, 0
    %p64 = por %p62, %p63
    %s66 = sadd.s32 %s65, 1
    %p69 = scmp.eq.s32.totalorder %s10, 1
    %p70 = scmp.ne.s32.totalorder %s65, %s67
    %p71 = scmp.eq.s32.totalorder %s10, 0
    %p72 = por %p70, %p71
    %p73 = scmp.ne.s32.totalorder %s65, %s67
    %p74 = scmp.eq.s32.totalorder %s15, 1
    %p75 = por %p73, %p74
    %p76 = scmp.ne.s32.totalorder %s67, %s68
    %p77 = scmp.eq.s32.totalorder %s15, 0
    %p78 = por %p76, %p77
    %p79 = scmp.ne.s32.totalorder %s67, %s68
    %p80 = scmp.eq.s32.totalorder %s16, 1
    %p81 = por %p79, %p80
    %p83 = scmp.ne.s32.totalorder %s68, %s82
    %p84 = scmp.eq.s32.totalorder %s16, 0
    %p85 = por %p83, %p84
    %s87 = sadd.s32 %s86, 1
    %p90 = scmp.eq.s32.totalorder %s10, 1
    %p91 = scmp.ne.s32.totalorder %s86, %s88
    %p92 = scmp.eq.s32.totalorder %s10, 0
    %p93 = por %p91, %p92
    %p94 = scmp.ne.s32.totalorder %s86, %s88
    %p95 = scmp.eq.s32.totalorder %s15, 1
    %p96 = por %p94, %p95
    %p97 = scmp.ne.s32.totalorder %s88, %s89
    %p98 = scmp.eq.s32.totalorder %s15, 0
    %p99 = por %p97, %p98
    %p100 = scmp.ne.s32.totalorder %s88, %s89
    %p101 = scmp.eq.s32.totalorder %s16, 1
    %p102 = por %p100, %p101
    %p104 = scmp.ne.s32.totalorder %s89, %s103
    %p105 = scmp.eq.s32.totalorder %s16, 0
    %p106 = por %p104, %p105
    %s107 = ssub.s32 %s10, %s17
    %p108 = scmp.eq.s32.totalorder %s107, 0
    %s110 = sadd.s32 %s109, 1
    %s111 = scalar_select %p108, %s109, %s110
    %p114 = pneg %p108
    %p115 = scmp.eq.s32.totalorder %s10, 1
    %p116 = por %p114, %p115
    %p117 = scmp.ne.s32.totalorder %s109, %s112
    %p118 = scmp.eq.s32.totalorder %s10, 0
    %p119 = por %p117, %p118
    %p120 = scmp.ne.s32.totalorder %s109, %s112
    %p121 = scmp.eq.s32.totalorder %s15, 1
    %p122 = por %p120, %p121
    %p123 = scmp.ne.s32.totalorder %s112, %s113
    %p124 = scmp.eq.s32.totalorder %s15, 0
    %p125 = por %p123, %p124
    %p126 = scmp.ne.s32.totalorder %s112, %s113
    %p127 = scmp.eq.s32.totalorder %s16, 1
    %p128 = por %p126, %p127
    %p130 = scmp.ne.s32.totalorder %s113, %s129
    %p131 = scmp.eq.s32.totalorder %s16, 0
    %p132 = por %p130, %p131
    %p133 = scmp.le.s32.totalorder 1, %s10
    %p134 = scmp.lt.s32.totalorder %s10, 3
    %p135 = pnand %p133, %p134
    %p136 = pneg %p135
    // Predicated region
    $region9: #{_tiny_nerf_pallas.1} parent=5 // pred_check
      _
    $region10: #{_tiny_nerf_pallas.1} parent=5 // pred_check_branch
      %138 = sbr.rel (%p135) target = $region12
    $region11: #{_tiny_nerf_pallas.1} parent=5 // pred_region
      %s139 = ssub.s32 %s10, 1
      // Predicated region
      $region13: #{_tiny_nerf_pallas.1} parent=11 // pred_check
        %p140 = pneg %p57
      $region14: #{_tiny_nerf_pallas.1} parent=11 // pred_check_branch
        %142 = sbr.rel (%p140) target = $region16
      $region15: #{_tiny_nerf_pallas.1} parent=11 // pred_region
        _
      $region16: #{_tiny_nerf_pallas.1} parent=11 // pred_fallthru
        _
      // Predicated region
      $region17: #{_tiny_nerf_pallas.1} parent=11 // pred_check
        %p143 = pneg %p78
      $region18: #{_tiny_nerf_pallas.1} parent=11 // pred_check_branch
        %145 = sbr.rel (%p143) target = $region20
      $region19: #{_tiny_nerf_pallas.1} parent=11 // pred_region
        _
      $region20: #{_tiny_nerf_pallas.1} parent=11 // pred_fallthru
        _
      // Predicated region
      $region21: #{_tiny_nerf_pallas.1} parent=11 // pred_check
        %p146 = pneg %p99
      $region22: #{_tiny_nerf_pallas.1} parent=11 // pred_check_branch
        %148 = sbr.rel (%p146) target = $region24
      $region23: #{_tiny_nerf_pallas.1} parent=11 // pred_region
        _
      $region24: #{_tiny_nerf_pallas.1} parent=11 // pred_fallthru
        _
    $region12: #{_tiny_nerf_pallas.1} parent=5 // pred_fallthru
      _
    %p149 = scmp.lt.s32.totalorder %s10, 2
    // Predicated region
    $region25: #{_tiny_nerf_pallas.1} parent=5 // pred_check
      %p150 = pneg %p149
    $region26: #{_tiny_nerf_pallas.1} parent=5 // pred_check_branch
      %152 = sbr.rel (%p150) target = $region28
    $region27: #{_tiny_nerf_pallas.1} parent=5 // pred_region
      // Predicated region
      $region29: #{_tiny_nerf_pallas.1} parent=27 // pred_check
        %p153 = pneg %p30
      $region30: #{_tiny_nerf_pallas.1} parent=27 // pred_check_branch
        %155 = sbr.rel (%p153) target = $region32
      $region31: #{_tiny_nerf_pallas.1} parent=27 // pred_region
        %s156 = smul.u32 128, %s10
        %p157 = scmp.lt.s32.totalorder %s156, 255
        %s158 = scalar_select %p157, %s156, 255
        %s159 = smul.addr %s158, 4
        %s160 = scalar_lea.vmem %s0, %s159
        %s161 = smul.u32 128, %s10
      $region32: #{_tiny_nerf_pallas.1} parent=27 // pred_fallthru
        _
    $region28: #{_tiny_nerf_pallas.1} parent=5 // pred_fallthru
      _
    %p162 = scmp.le.s32.totalorder 1, %s10
    %p163 = scmp.lt.s32.totalorder %s10, 3
    %p164 = pnand %p162, %p163
    %p165 = pneg %p164
    // Predicated region
    $region33: #{_tiny_nerf_pallas.1} parent=5 // pred_check
      _
    $region34: #{_tiny_nerf_pallas.1} parent=5 // pred_check_branch
      %167 = sbr.rel (%p164) target = $region36
    $region35: #{_tiny_nerf_pallas.1} parent=5 // pred_region
      %s168 = ssub.s32 %s10, 1
      %s169 = smul.u32 128, %s15
      %p170 = scmp.lt.s32.totalorder %s169, 255
      %s171 = scalar_select %p170, %s169, 255
      %s172 = smul.addr %s171, 4
      %s173 = scalar_lea.vmem %s0, %s172
      %p174 = pneg %p36
      %p175 = pneg %p33
      %p176 = pneg %p57
      %p177 = pneg %p54
      %p178 = pneg %p78
      %p179 = pneg %p75
      %p180 = pneg %p99
      %p181 = pneg %p96
      %p182 = pneg %p125
      %p183 = pneg %p122
      %s184 = smul.u32 128, %s15
      %p185 = scmp.lt.s32.totalorder %s184, 255
      %s186 = scalar_select %p185, %s184, 255
      %s187 = smul.addr %s186, 8
      %s188 = scalar_lea.vmem %s4, %s187
      %s189 = smul.u32 128, %s15
      %p190 = scmp.lt.s32.totalorder %s189, 255
      %s191 = scalar_select %p190, %s189, 255
      %s192 = smul.addr %s191, 4
      %s193 = scalar_lea.vmem %s0, %s192
      %s194 = smul.u32 128, %s15
      %s195 = smul.u32 128, %s15
      %p196 = scmp.lt.s32.totalorder %s195, 255
      %s197 = scalar_select %p196, %s195, 255
      %s198 = smul.addr %s197, 8
      %s199 = scalar_lea.vmem %s4, %s198
      %s200 = smul.u32 128, %s15
      %v202 = vld [vmem:[%s193] sm:$0xf]
      %v203 = vld [vmem:[%s193 + $0x4] sm:$0xf]
      %v204 = vld [vmem:[%s193 + $0x8] sm:$0xf]
      %v205 = vld [vmem:[%s193 + $0xc] sm:$0xf]
      %v206 = vld [vmem:[%s193 + $0x10] sm:$0xf]
      %v207 = vld [vmem:[%s193 + $0x14] sm:$0xf]
      %v208 = vld [vmem:[%s193 + $0x18] sm:$0xf]
      %v209 = vld [vmem:[%s193 + $0x1c] sm:$0xf]
      %v210 = vld [vmem:[%s193 + $0x20] sm:$0xf]
      %v211 = vld [vmem:[%s193 + $0x24] sm:$0xf]
      %v212 = vld [vmem:[%s193 + $0x28] sm:$0xf]
      %v213 = vld [vmem:[%s193 + $0x2c] sm:$0xf]
      %v214 = vld [vmem:[%s193 + $0x30] sm:$0xf]
      %v215 = vld [vmem:[%s193 + $0x34] sm:$0xf]
      %v216 = vld [vmem:[%s193 + $0x38] sm:$0xf]
      %v217 = vld [vmem:[%s193 + $0x3c] sm:$0xf]
      %v218 = vld [vmem:[%s193 + $0x40] sm:$0xf]
      %v219 = vld [vmem:[%s193 + $0x44] sm:$0xf]
      %v220 = vld [vmem:[%s193 + $0x48] sm:$0xf]
      %v221 = vld [vmem:[%s193 + $0x4c] sm:$0xf]
      %v222 = vld [vmem:[%s193 + $0x50] sm:$0xf]
      %v223 = vld [vmem:[%s193 + $0x54] sm:$0xf]
      %v224 = vld [vmem:[%s193 + $0x58] sm:$0xf]
      %v225 = vld [vmem:[%s193 + $0x5c] sm:$0xf]
      %v226 = vld [vmem:[%s193 + $0x60] sm:$0xf]
      %v227 = vld [vmem:[%s193 + $0x64] sm:$0xf]
      %v228 = vld [vmem:[%s193 + $0x68] sm:$0xf]
      %v229 = vld [vmem:[%s193 + $0x6c] sm:$0xf]
      %v230 = vld [vmem:[%s193 + $0x70] sm:$0xf]
      %v231 = vld [vmem:[%s193 + $0x74] sm:$0xf]
      %v232 = vld [vmem:[%s193 + $0x78] sm:$0xf]
      %v233 = vld [vmem:[%s193 + $0x7c] sm:$0xf]
      %v234 = vld [vmem:[%s193 + $0x80] sm:$0xf]
      %v235 = vld [vmem:[%s193 + $0x84] sm:$0xf]
      %v236 = vld [vmem:[%s193 + $0x88] sm:$0xf]
      %v237 = vld [vmem:[%s193 + $0x8c] sm:$0xf]
      %v238 = vld [vmem:[%s193 + $0x90] sm:$0xf]
      %v239 = vld [vmem:[%s193 + $0x94] sm:$0xf]
      %v240 = vld [vmem:[%s193 + $0x98] sm:$0xf]
      %v241 = vld [vmem:[%s193 + $0x9c] sm:$0xf]
      %v242 = vld [vmem:[%s193 + $0xa0] sm:$0xf]
      %v243 = vld [vmem:[%s193 + $0xa4] sm:$0xf]
      %v244 = vld [vmem:[%s193 + $0xa8] sm:$0xf]
      %v245 = vld [vmem:[%s193 + $0xac] sm:$0xf]
      %v246 = vld [vmem:[%s193 + $0xb0] sm:$0xf]
      %v247 = vld [vmem:[%s193 + $0xb4] sm:$0xf]
      %v248 = vld [vmem:[%s193 + $0xb8] sm:$0xf]
      %v249 = vld [vmem:[%s193 + $0xbc] sm:$0xf]
      %v250 = vld [vmem:[%s193 + $0xc0] sm:$0xf]
      %v251 = vld [vmem:[%s193 + $0xc4] sm:$0xf]
      %v252 = vld [vmem:[%s193 + $0xc8] sm:$0xf]
      %v253 = vld [vmem:[%s193 + $0xcc] sm:$0xf]
      %v254 = vld [vmem:[%s193 + $0xd0] sm:$0xf]
      %v255 = vld [vmem:[%s193 + $0xd4] sm:$0xf]
      %v256 = vld [vmem:[%s193 + $0xd8] sm:$0xf]
      %v257 = vld [vmem:[%s193 + $0xdc] sm:$0xf]
      %v258 = vld [vmem:[%s193 + $0xe0] sm:$0xf]
      %v259 = vld [vmem:[%s193 + $0xe4] sm:$0xf]
      %v260 = vld [vmem:[%s193 + $0xe8] sm:$0xf]
      %v261 = vld [vmem:[%s193 + $0xec] sm:$0xf]
      %v262 = vld [vmem:[%s193 + $0xf0] sm:$0xf]
      %v263 = vld [vmem:[%s193 + $0xf4] sm:$0xf]
      %v264 = vld [vmem:[%s193 + $0xf8] sm:$0xf]
      %v265 = vld [vmem:[%s193 + $0xfc] sm:$0xf]
      %v266 = vld [vmem:[%s193 + $0x100] sm:$0xf]
      %v267 = vld [vmem:[%s193 + $0x104] sm:$0xf]
      %v268 = vld [vmem:[%s193 + $0x108] sm:$0xf]
      %v269 = vld [vmem:[%s193 + $0x10c] sm:$0xf]
      %v270 = vld [vmem:[%s193 + $0x110] sm:$0xf]
      %v271 = vld [vmem:[%s193 + $0x114] sm:$0xf]
      %v272 = vld [vmem:[%s193 + $0x118] sm:$0xf]
      %v273 = vld [vmem:[%s193 + $0x11c] sm:$0xf]
      %v274 = vld [vmem:[%s193 + $0x120] sm:$0xf]
      %v275 = vld [vmem:[%s193 + $0x124] sm:$0xf]
      %v276 = vld [vmem:[%s193 + $0x128] sm:$0xf]
      %v277 = vld [vmem:[%s193 + $0x12c] sm:$0xf]
      %v278 = vld [vmem:[%s193 + $0x130] sm:$0xf]
      %v279 = vld [vmem:[%s193 + $0x134] sm:$0xf]
      %v280 = vld [vmem:[%s193 + $0x138] sm:$0xf]
      %v281 = vld [vmem:[%s193 + $0x13c] sm:$0xf]
      %v282 = vld [vmem:[%s193 + $0x140] sm:$0xf]
      %v283 = vld [vmem:[%s193 + $0x144] sm:$0xf]
      %v284 = vld [vmem:[%s193 + $0x148] sm:$0xf]
      %v285 = vld [vmem:[%s193 + $0x14c] sm:$0xf]
      %v286 = vld [vmem:[%s193 + $0x150] sm:$0xf]
      %v287 = vld [vmem:[%s193 + $0x154] sm:$0xf]
      %v288 = vld [vmem:[%s193 + $0x158] sm:$0xf]
      %v289 = vld [vmem:[%s193 + $0x15c] sm:$0xf]
      %v290 = vld [vmem:[%s193 + $0x160] sm:$0xf]
      %v291 = vld [vmem:[%s193 + $0x164] sm:$0xf]
      %v292 = vld [vmem:[%s193 + $0x168] sm:$0xf]
      %v293 = vld [vmem:[%s193 + $0x16c] sm:$0xf]
      %v294 = vld [vmem:[%s193 + $0x170] sm:$0xf]
      %v295 = vld [vmem:[%s193 + $0x174] sm:$0xf]
      %v296 = vld [vmem:[%s193 + $0x178] sm:$0xf]
      %v297 = vld [vmem:[%s193 + $0x17c] sm:$0xf]
      %v298 = vld [vmem:[%s193 + $0x180] sm:$0xf]
      %v299 = vld [vmem:[%s193 + $0x184] sm:$0xf]
      %v300 = vld [vmem:[%s193 + $0x188] sm:$0xf]
      %v301 = vld [vmem:[%s193 + $0x18c] sm:$0xf]
      %v302 = vld [vmem:[%s193 + $0x190] sm:$0xf]
      %v303 = vld [vmem:[%s193 + $0x194] sm:$0xf]
      %v304 = vld [vmem:[%s193 + $0x198] sm:$0xf]
      %v305 = vld [vmem:[%s193 + $0x19c] sm:$0xf]
      %v306 = vld [vmem:[%s193 + $0x1a0] sm:$0xf]
      %v307 = vld [vmem:[%s193 + $0x1a4] sm:$0xf]
      %v308 = vld [vmem:[%s193 + $0x1a8] sm:$0xf]
      %v309 = vld [vmem:[%s193 + $0x1ac] sm:$0xf]
      %v310 = vld [vmem:[%s193 + $0x1b0] sm:$0xf]
      %v311 = vld [vmem:[%s193 + $0x1b4] sm:$0xf]
      %v312 = vld [vmem:[%s193 + $0x1b8] sm:$0xf]
      %v313 = vld [vmem:[%s193 + $0x1bc] sm:$0xf]
      %v314 = vld [vmem:[%s193 + $0x1c0] sm:$0xf]
      %v315 = vld [vmem:[%s193 + $0x1c4] sm:$0xf]
      %v316 = vld [vmem:[%s193 + $0x1c8] sm:$0xf]
      %v317 = vld [vmem:[%s193 + $0x1cc] sm:$0xf]
      %v318 = vld [vmem:[%s193 + $0x1d0] sm:$0xf]
      %v319 = vld [vmem:[%s193 + $0x1d4] sm:$0xf]
      %v320 = vld [vmem:[%s193 + $0x1d8] sm:$0xf]
      %v321 = vld [vmem:[%s193 + $0x1dc] sm:$0xf]
      %v322 = vld [vmem:[%s193 + $0x1e0] sm:$0xf]
      %v323 = vld [vmem:[%s193 + $0x1e4] sm:$0xf]
      %v324 = vld [vmem:[%s193 + $0x1e8] sm:$0xf]
      %v325 = vld [vmem:[%s193 + $0x1ec] sm:$0xf]
      %v326 = vld [vmem:[%s193 + $0x1f0] sm:$0xf]
      %v327 = vld [vmem:[%s193 + $0x1f4] sm:$0xf]
      %v328 = vld [vmem:[%s193 + $0x1f8] sm:$0xf]
      %v329 = vld [vmem:[%s193 + $0x1fc] sm:$0xf]
      %v330 = vld [vmem:[%s1] sm:$0xf]
      %v331 = vld [vmem:[%s1 + $0x4] sm:$0xf]
      %v332 = vld [vmem:[%s1 + $0x8] sm:$0xf]
      %v333 = vld [vmem:[%s1 + $0xc] sm:$0xf]
      %v334 = vld [vmem:[%s1 + $0x10] sm:$0xf]
      %v335 = vld [vmem:[%s1 + $0x14] sm:$0xf]
      %v336 = vld [vmem:[%s1 + $0x18] sm:$0xf]
      %v337 = vld [vmem:[%s1 + $0x1c] sm:$0xf]
      %v338 = vld [vmem:[%s1 + $0x20] sm:$0xf]
      %v339 = vld [vmem:[%s1 + $0x24] sm:$0xf]
      %v340 = vld [vmem:[%s1 + $0x28] sm:$0xf]
      %v341 = vld [vmem:[%s1 + $0x2c] sm:$0xf]
      %v342 = vld [vmem:[%s1 + $0x30] sm:$0xf]
      %v343 = vld [vmem:[%s1 + $0x34] sm:$0xf]
      %v344 = vld [vmem:[%s1 + $0x38] sm:$0xf]
      %v345 = vld [vmem:[%s1 + $0x3c] sm:$0xf]
      %v346 = vld [vmem:[%s3] sm:$0x1]
      %v348 = vlaneseq
      %v349 = vshrl.u32 %v348, 7
      %v350 = vsub.s32 0, %v349
      %v351 = vrot.slane %v346, %v350
      %v481 = vunpack.c.l.b16 %v202
      %v482 = vunpack.c.l.b16 %v203
      %v483 = vunpack.c.l.b16 %v204
      %v484 = vunpack.c.l.b16 %v205
      %v485 = vunpack.c.l.b16 %v206
      %v486 = vunpack.c.l.b16 %v207
      %v487 = vunpack.c.l.b16 %v208
      %v488 = vunpack.c.l.b16 %v209
      %v489 = vunpack.c.l.b16 %v210
      %v490 = vunpack.c.l.b16 %v211
      %v491 = vunpack.c.l.b16 %v212
      %v492 = vunpack.c.l.b16 %v213
      %v493 = vunpack.c.l.b16 %v214
      %v494 = vunpack.c.l.b16 %v215
      %v495 = vunpack.c.l.b16 %v216
      %v496 = vunpack.c.l.b16 %v217
      %v497 = vunpack.c.l.b16 %v218
      %v498 = vunpack.c.l.b16 %v219
      %v499 = vunpack.c.l.b16 %v220
      %v500 = vunpack.c.l.b16 %v221
      %v501 = vunpack.c.l.b16 %v222
      %v502 = vunpack.c.l.b16 %v223
      %v503 = vunpack.c.l.b16 %v224
      %v504 = vunpack.c.l.b16 %v225
      %v505 = vunpack.c.l.b16 %v226
      %v506 = vunpack.c.l.b16 %v227
      %v507 = vunpack.c.l.b16 %v228
      %v508 = vunpack.c.l.b16 %v229
      %v509 = vunpack.c.l.b16 %v230
      %v510 = vunpack.c.l.b16 %v231
      %v511 = vunpack.c.l.b16 %v232
      %v512 = vunpack.c.l.b16 %v233
      %v513 = vunpack.c.l.b16 %v234
      %v514 = vunpack.c.l.b16 %v235
      %v515 = vunpack.c.l.b16 %v236
      %v516 = vunpack.c.l.b16 %v237
      %v517 = vunpack.c.l.b16 %v238
      %v518 = vunpack.c.l.b16 %v239
      %v519 = vunpack.c.l.b16 %v240
      %v520 = vunpack.c.l.b16 %v241
      %v521 = vunpack.c.l.b16 %v242
      %v522 = vunpack.c.l.b16 %v243
      %v523 = vunpack.c.l.b16 %v244
      %v524 = vunpack.c.l.b16 %v245
      %v525 = vunpack.c.l.b16 %v246
      %v526 = vunpack.c.l.b16 %v247
      %v527 = vunpack.c.l.b16 %v248
      %v528 = vunpack.c.l.b16 %v249
      %v529 = vunpack.c.l.b16 %v250
      %v530 = vunpack.c.l.b16 %v251
      %v531 = vunpack.c.l.b16 %v252
      %v532 = vunpack.c.l.b16 %v253
      %v533 = vunpack.c.l.b16 %v254
      %v534 = vunpack.c.l.b16 %v255
      %v535 = vunpack.c.l.b16 %v256
      %v536 = vunpack.c.l.b16 %v257
      %v537 = vunpack.c.l.b16 %v258
      %v538 = vunpack.c.l.b16 %v259
      %v539 = vunpack.c.l.b16 %v260
      %v540 = vunpack.c.l.b16 %v261
      %v541 = vunpack.c.l.b16 %v262
      %v542 = vunpack.c.l.b16 %v263
      %v543 = vunpack.c.l.b16 %v264
      %v544 = vunpack.c.l.b16 %v265
      %v545 = vunpack.c.l.b16 %v266
      %v546 = vunpack.c.l.b16 %v267
      %v547 = vunpack.c.l.b16 %v268
      %v548 = vunpack.c.l.b16 %v269
      %v549 = vunpack.c.l.b16 %v270
      %v550 = vunpack.c.l.b16 %v271
      %v551 = vunpack.c.l.b16 %v272
      %v552 = vunpack.c.l.b16 %v273
      %v553 = vunpack.c.l.b16 %v274
      %v554 = vunpack.c.l.b16 %v275
      %v555 = vunpack.c.l.b16 %v276
      %v556 = vunpack.c.l.b16 %v277
      %v557 = vunpack.c.l.b16 %v278
      %v558 = vunpack.c.l.b16 %v279
      %v559 = vunpack.c.l.b16 %v280
      %v560 = vunpack.c.l.b16 %v281
      %v561 = vunpack.c.l.b16 %v282
      %v562 = vunpack.c.l.b16 %v283
      %v563 = vunpack.c.l.b16 %v284
      %v564 = vunpack.c.l.b16 %v285
      %v565 = vunpack.c.l.b16 %v286
      %v566 = vunpack.c.l.b16 %v287
      %v567 = vunpack.c.l.b16 %v288
      %v568 = vunpack.c.l.b16 %v289
      %v569 = vunpack.c.l.b16 %v290
      %v570 = vunpack.c.l.b16 %v291
      %v571 = vunpack.c.l.b16 %v292
      %v572 = vunpack.c.l.b16 %v293
      %v573 = vunpack.c.l.b16 %v294
      %v574 = vunpack.c.l.b16 %v295
      %v575 = vunpack.c.l.b16 %v296
      %v576 = vunpack.c.l.b16 %v297
      %v577 = vunpack.c.l.b16 %v298
      %v578 = vunpack.c.l.b16 %v299
      %v579 = vunpack.c.l.b16 %v300
      %v580 = vunpack.c.l.b16 %v301
      %v581 = vunpack.c.l.b16 %v302
      %v582 = vunpack.c.l.b16 %v303
      %v583 = vunpack.c.l.b16 %v304
      %v584 = vunpack.c.l.b16 %v305
      %v585 = vunpack.c.l.b16 %v306
      %v586 = vunpack.c.l.b16 %v307
      %v587 = vunpack.c.l.b16 %v308
      %v588 = vunpack.c.l.b16 %v309
      %v589 = vunpack.c.l.b16 %v310
      %v590 = vunpack.c.l.b16 %v311
      %v591 = vunpack.c.l.b16 %v312
      %v592 = vunpack.c.l.b16 %v313
      %v593 = vunpack.c.l.b16 %v314
      %v594 = vunpack.c.l.b16 %v315
      %v595 = vunpack.c.l.b16 %v316
      %v596 = vunpack.c.l.b16 %v317
      %v597 = vunpack.c.l.b16 %v318
      %v598 = vunpack.c.l.b16 %v319
      %v599 = vunpack.c.l.b16 %v320
      %v600 = vunpack.c.l.b16 %v321
      %v601 = vunpack.c.l.b16 %v322
      %v602 = vunpack.c.l.b16 %v323
      %v603 = vunpack.c.l.b16 %v324
      %v604 = vunpack.c.l.b16 %v325
      %v605 = vunpack.c.l.b16 %v326
      %v606 = vunpack.c.l.b16 %v327
      %v607 = vunpack.c.l.b16 %v328
      %v608 = vunpack.c.l.b16 %v329
      %v609 = vpack.c.b16 %v482, %v481
      %v610 = vpack.c.b16 %v484, %v483
      %v611 = vpack.c.b16 %v486, %v485
      %v612 = vpack.c.b16 %v488, %v487
      %v613 = vpack.c.b16 %v490, %v489
      %v614 = vpack.c.b16 %v492, %v491
      %v615 = vpack.c.b16 %v494, %v493
      %v616 = vpack.c.b16 %v496, %v495
      %v617 = vpack.c.b16 %v498, %v497
      %v618 = vpack.c.b16 %v500, %v499
      %v619 = vpack.c.b16 %v502, %v501
      %v620 = vpack.c.b16 %v504, %v503
      %v621 = vpack.c.b16 %v506, %v505
      %v622 = vpack.c.b16 %v508, %v507
      %v623 = vpack.c.b16 %v510, %v509
      %v624 = vpack.c.b16 %v512, %v511
      %v625 = vpack.c.b16 %v514, %v513
      %v626 = vpack.c.b16 %v516, %v515
      %v627 = vpack.c.b16 %v518, %v517
      %v628 = vpack.c.b16 %v520, %v519
      %v629 = vpack.c.b16 %v522, %v521
      %v630 = vpack.c.b16 %v524, %v523
      %v631 = vpack.c.b16 %v526, %v525
      %v632 = vpack.c.b16 %v528, %v527
      %v633 = vpack.c.b16 %v530, %v529
      %v634 = vpack.c.b16 %v532, %v531
      %v635 = vpack.c.b16 %v534, %v533
      %v636 = vpack.c.b16 %v536, %v535
      %v637 = vpack.c.b16 %v538, %v537
      %v638 = vpack.c.b16 %v540, %v539
      %v639 = vpack.c.b16 %v542, %v541
      %v640 = vpack.c.b16 %v544, %v543
      %v641 = vpack.c.b16 %v546, %v545
      %v642 = vpack.c.b16 %v548, %v547
      %v643 = vpack.c.b16 %v550, %v549
      %v644 = vpack.c.b16 %v552, %v551
      %v645 = vpack.c.b16 %v554, %v553
      %v646 = vpack.c.b16 %v556, %v555
      %v647 = vpack.c.b16 %v558, %v557
      %v648 = vpack.c.b16 %v560, %v559
      %v649 = vpack.c.b16 %v562, %v561
      %v650 = vpack.c.b16 %v564, %v563
      %v651 = vpack.c.b16 %v566, %v565
      %v652 = vpack.c.b16 %v568, %v567
      %v653 = vpack.c.b16 %v570, %v569
      %v654 = vpack.c.b16 %v572, %v571
      %v655 = vpack.c.b16 %v574, %v573
      %v656 = vpack.c.b16 %v576, %v575
      %v657 = vpack.c.b16 %v578, %v577
      %v658 = vpack.c.b16 %v580, %v579
      %v659 = vpack.c.b16 %v582, %v581
      %v660 = vpack.c.b16 %v584, %v583
      %v661 = vpack.c.b16 %v586, %v585
      %v662 = vpack.c.b16 %v588, %v587
      %v663 = vpack.c.b16 %v590, %v589
      %v664 = vpack.c.b16 %v592, %v591
      %v665 = vpack.c.b16 %v594, %v593
      %v666 = vpack.c.b16 %v596, %v595
      %v667 = vpack.c.b16 %v598, %v597
      %v668 = vpack.c.b16 %v600, %v599
      %v669 = vpack.c.b16 %v602, %v601
      %v670 = vpack.c.b16 %v604, %v603
      %v671 = vpack.c.b16 %v606, %v605
      %v672 = vpack.c.b16 %v608, %v607
      %v753 = vunpack.c.l.b16 %v330
      %v754 = vunpack.c.l.b16 %v331
      %v755 = vunpack.c.l.b16 %v332
      %v756 = vunpack.c.l.b16 %v333
      %v757 = vunpack.c.l.b16 %v334
      %v758 = vunpack.c.l.b16 %v335
      %v759 = vunpack.c.l.b16 %v336
      %v760 = vunpack.c.l.b16 %v337
      %v761 = vunpack.c.l.b16 %v338
      %v762 = vunpack.c.l.b16 %v339
      %v763 = vunpack.c.l.b16 %v340
      %v764 = vunpack.c.l.b16 %v341
      %v765 = vunpack.c.l.b16 %v342
      %v766 = vunpack.c.l.b16 %v343
      %v767 = vunpack.c.l.b16 %v344
      %v768 = vunpack.c.l.b16 %v345
      %v769 = vpack.c.b16 %v754, %v753
      %v770 = vpack.c.b16 %v756, %v755
      %v771 = vpack.c.b16 %v758, %v757
      %v772 = vpack.c.b16 %v760, %v759
      %v773 = vpack.c.b16 %v762, %v761
      %v774 = vpack.c.b16 %v764, %v763
      %v775 = vpack.c.b16 %v766, %v765
      %v776 = vpack.c.b16 %v768, %v767
      %785 = vmatprep.subr.bf16.mxu0 0
      %786 = vmatpush1.bf16.msra.mxu0 %v769
      %787 = vmatprep.subr.bf16.mxu0 0
      %788 = vmatpush1.bf16.msra.mxu0 %v770
      %789 = vmatprep.subr.bf16.mxu0 0
      %790 = vmatpush1.bf16.msra.mxu0 %v771
      %791 = vmatprep.subr.bf16.mxu0 0
      %792 = vmatpush1.bf16.msra.mxu0 %v772
      %793 = vmatprep.subr.bf16.mxu0 0
      %794 = vmatpush1.bf16.msra.mxu0 %v773
      %795 = vmatprep.subr.bf16.mxu0 0
      %796 = vmatpush1.bf16.msra.mxu0 %v774
      %797 = vmatprep.subr.bf16.mxu0 0
      %798 = vmatpush1.bf16.msra.mxu0 %v775
      %799 = vmatprep.subr.bf16.mxu0 0
      %800 = vmatpush1.bf16.msra.mxu0 %v776
      %801 = vmatprep.subr.bf16.mxu0 0
      %802 = vmatpush1.bf16.msra.mxu0 0
      %803 = vmatprep.subr.bf16.mxu0 0
      %804 = vmatpush1.bf16.msra.mxu0 0
      %805 = vmatprep.subr.bf16.mxu0 0
      %806 = vmatpush1.bf16.msra.mxu0 0
      %807 = vmatprep.subr.bf16.mxu0 0
      %808 = vmatpush1.bf16.msra.mxu0 0
      %809 = vmatprep.subr.bf16.mxu0 0
      %810 = vmatpush1.bf16.msra.mxu0 0
      %811 = vmatprep.subr.bf16.mxu0 0
      %812 = vmatpush1.bf16.msra.mxu0 0
      %813 = vmatprep.subr.bf16.mxu0 0
      %814 = vmatpush1.bf16.msra.mxu0 0
      %815 = vmatprep.subr.bf16.mxu0 0
      %816 = vmatpush1.bf16.msra.mxu0 0
      %817 = vmatprep.mubr.bf16.mxu0 0
      %818 = vmatmul.mubr.bf16.gmra.mrb[0].mxu0 %v609
      %v819 = vpop.f32.mrb[0].mxu0
      %v820 = vadd.f32 %v351, %v819
      %v821 = vpop.f32.mrb[0].mxu0
      %v822 = vpop.f32.mrb[0].mxu0
      %v823 = vadd.f32 %v351, %v822
      %v824 = vpop.f32.mrb[0].mxu0
      %825 = vmatprep.mubr.bf16.mxu0 0
      %826 = vmatmul.mubr.bf16.gmra.mrb[0].mxu0 %v610
      %v827 = vpop.f32.mrb[0].mxu0
      %v828 = vadd.f32 %v351, %v827
      %v829 = vpop.f32.mrb[0].mxu0
      %v830 = vpop.f32.mrb[0].mxu0
      %v831 = vadd.f32 %v351, %v830
      %v832 = vpop.f32.mrb[0].mxu0
      %833 = vmatprep.mubr.bf16.mxu0 0
      %834 = vmatmul.mubr.bf16.gmra.mrb[0].mxu0 %v611
      %v835 = vpop.f32.mrb[0].mxu0
      %v836 = vadd.f32 %v351, %v835
      %v837 = vpop.f32.mrb[0].mxu0
      %v838 = vpop.f32.mrb[0].mxu0
      %v839 = vadd.f32 %v351, %v838
      %v840 = vpop.f32.mrb[0].mxu0
      %841 = vmatprep.mubr.bf16.mxu0 0
      %842 = vmatmul.mubr.bf16.gmra.mrb[0].mxu0 %v612
      %v843 = vpop.f32.mrb[0].mxu0
      %v844 = vadd.f32 %v351, %v843
      %v845 = vpop.f32.mrb[0].mxu0
      %v846 = vpop.f32.mrb[0].mxu0
      %v847 = vadd.f32 %v351, %v846
      %v848 = vpop.f32.mrb[0].mxu0
      %849 = vmatprep.mubr.bf16.mxu0 0
      %850 = vmatmul.mubr.bf16.gmra.mrb[0].mxu0 %v613
      %v851 = vpop.f32.mrb[0].mxu0
      %v852 = vadd.f32 %v351, %v851
      %v853 = vpop.f32.mrb[0].mxu0
      %v854 = vpop.f32.mrb[0].mxu0
      %v855 = vadd.f32 %v351, %v854
      %v856 = vpop.f32.mrb[0].mxu0
      %857 = vmatprep.mubr.bf16.mxu0 0
      %858 = vmatmul.mubr.bf16.gmra.mrb[0].mxu0 %v614
      %v859 = vpop.f32.mrb[0].mxu0
      %v860 = vadd.f32 %v351, %v859
      %v861 = vpop.f32.mrb[0].mxu0
      %v862 = vpop.f32.mrb[0].mxu0
      %v863 = vadd.f32 %v351, %v862
      %v864 = vpop.f32.mrb[0].mxu0
      %865 = vmatprep.mubr.bf16.mxu0 0
      %866 = vmatmul.mubr.bf16.gmra.mrb[0].mxu0 %v615
      %v867 = vpop.f32.mrb[0].mxu0
      %v868 = vadd.f32 %v351, %v867
      %v869 = vpop.f32.mrb[0].mxu0
      %v870 = vpop.f32.mrb[0].mxu0
      %v871 = vadd.f32 %v351, %v870
      %v872 = vpop.f32.mrb[0].mxu0
      %873 = vmatprep.mubr.bf16.mxu0 0
      %874 = vmatmul.mubr.bf16.gmra.mrb[0].mxu0 %v616
      %v875 = vpop.f32.mrb[0].mxu0
      %v876 = vadd.f32 %v351, %v875
      %v877 = vpop.f32.mrb[0].mxu0
      %v878 = vpop.f32.mrb[0].mxu0
      %v879 = vadd.f32 %v351, %v878
      %v880 = vpop.f32.mrb[0].mxu0
      %881 = vmatprep.mubr.bf16.mxu0 0
      %882 = vmatmul.mubr.bf16.gmra.mrb[0].mxu0 %v617
      %v883 = vpop.f32.mrb[0].mxu0
      %v884 = vadd.f32 %v351, %v883
      %v885 = vpop.f32.mrb[0].mxu0
      %v886 = vpop.f32.mrb[0].mxu0
      %v887 = vadd.f32 %v351, %v886
      %v888 = vpop.f32.mrb[0].mxu0
      %889 = vmatprep.mubr.bf16.mxu0 0
      %890 = vmatmul.mubr.bf16.gmra.mrb[0].mxu0 %v618
      %v891 = vpop.f32.mrb[0].mxu0
      %v892 = vadd.f32 %v351, %v891
      %v893 = vpop.f32.mrb[0].mxu0
      %v894 = vpop.f32.mrb[0].mxu0
      %v895 = vadd.f32 %v351, %v894
      %v896 = vpop.f32.mrb[0].mxu0
      %897 = vmatprep.mubr.bf16.mxu0 0
      %898 = vmatmul.mubr.bf16.gmra.mrb[0].mxu0 %v619
      %v899 = vpop.f32.mrb[0].mxu0
      %v900 = vadd.f32 %v351, %v899
      %v901 = vpop.f32.mrb[0].mxu0
      %v902 = vpop.f32.mrb[0].mxu0
      %v903 = vadd.f32 %v351, %v902
      %v904 = vpop.f32.mrb[0].mxu0
      %905 = vmatprep.mubr.bf16.mxu0 0
      %906 = vmatmul.mubr.bf16.gmra.mrb[0].mxu0 %v620
      %v907 = vpop.f32.mrb[0].mxu0
      %v908 = vadd.f32 %v351, %v907
      %v909 = vpop.f32.mrb[0].mxu0
      %v910 = vpop.f32.mrb[0].mxu0
      %v911 = vadd.f32 %v351, %v910
      %v912 = vpop.f32.mrb[0].mxu0
      %913 = vmatprep.mubr.bf16.mxu0 0
      %914 = vmatmul.mubr.bf16.gmra.mrb[0].mxu0 %v621
      %v915 = vpop.f32.mrb[0].mxu0
      %v916 = vadd.f32 %v351, %v915
      %v917 = vpop.f32.mrb[0].mxu0
      %v918 = vpop.f32.mrb[0].mxu0
      %v919 = vadd.f32 %v351, %v918
      %v920 = vpop.f32.mrb[0].mxu0
      %921 = vmatprep.mubr.bf16.mxu0 0
      %922 = vmatmul.mubr.bf16.gmra.mrb[0].mxu0 %v622
      %v923 = vpop.f32.mrb[0].mxu0
      %v924 = vadd.f32 %v351, %v923
      %v925 = vpop.f32.mrb[0].mxu0
      %v926 = vpop.f32.mrb[0].mxu0
      %v927 = vadd.f32 %v351, %v926
      %v928 = vpop.f32.mrb[0].mxu0
      %929 = vmatprep.mubr.bf16.mxu0 0
      %930 = vmatmul.mubr.bf16.gmra.mrb[0].mxu0 %v623
      %v931 = vpop.f32.mrb[0].mxu0
      %v932 = vadd.f32 %v351, %v931
      %v933 = vpop.f32.mrb[0].mxu0
      %v934 = vpop.f32.mrb[0].mxu0
      %v935 = vadd.f32 %v351, %v934
      %v936 = vpop.f32.mrb[0].mxu0
      %937 = vmatprep.mubr.bf16.mxu0 0
      %938 = vmatmul.mubr.bf16.gmra.mrb[0].mxu0 %v624
      %v939 = vpop.f32.mrb[0].mxu0
      %v940 = vadd.f32 %v351, %v939
      %v941 = vpop.f32.mrb[0].mxu0
      %v942 = vpop.f32.mrb[0].mxu0
      %v943 = vadd.f32 %v351, %v942
      %v944 = vpop.f32.mrb[0].mxu0
      %945 = vmatprep.mubr.bf16.mxu0 0
      %946 = vmatmul.mubr.bf16.gmra.mrb[0].mxu0 %v625
      %v947 = vpop.f32.mrb[0].mxu0
      %v948 = vadd.f32 %v351, %v947
      %v949 = vpop.f32.mrb[0].mxu0
      %v950 = vpop.f32.mrb[0].mxu0
      %v951 = vadd.f32 %v351, %v950
      %v952 = vpop.f32.mrb[0].mxu0
      %953 = vmatprep.mubr.bf16.mxu0 0
      %954 = vmatmul.mubr.bf16.gmra.mrb[0].mxu0 %v626
      %v955 = vpop.f32.mrb[0].mxu0
      %v956 = vadd.f32 %v351, %v955
      %v957 = vpop.f32.mrb[0].mxu0
      %v958 = vpop.f32.mrb[0].mxu0
      %v959 = vadd.f32 %v351, %v958
      %v960 = vpop.f32.mrb[0].mxu0
      %961 = vmatprep.mubr.bf16.mxu0 0
      %962 = vmatmul.mubr.bf16.gmra.mrb[0].mxu0 %v627
      %v963 = vpop.f32.mrb[0].mxu0
      %v964 = vadd.f32 %v351, %v963
      %v965 = vpop.f32.mrb[0].mxu0
      %v966 = vpop.f32.mrb[0].mxu0
      %v967 = vadd.f32 %v351, %v966
      %v968 = vpop.f32.mrb[0].mxu0
      %969 = vmatprep.mubr.bf16.mxu0 0
      %970 = vmatmul.mubr.bf16.gmra.mrb[0].mxu0 %v628
      %v971 = vpop.f32.mrb[0].mxu0
      %v972 = vadd.f32 %v351, %v971
      %v973 = vpop.f32.mrb[0].mxu0
      %v974 = vpop.f32.mrb[0].mxu0
      %v975 = vadd.f32 %v351, %v974
      %v976 = vpop.f32.mrb[0].mxu0
      %977 = vmatprep.mubr.bf16.mxu0 0
      %978 = vmatmul.mubr.bf16.gmra.mrb[0].mxu0 %v629
      %v979 = vpop.f32.mrb[0].mxu0
      %v980 = vadd.f32 %v351, %v979
      %v981 = vpop.f32.mrb[0].mxu0
      %v982 = vpop.f32.mrb[0].mxu0
      %v983 = vadd.f32 %v351, %v982
      %v984 = vpop.f32.mrb[0].mxu0
      %985 = vmatprep.mubr.bf16.mxu0 0
      %986 = vmatmul.mubr.bf16.gmra.mrb[0].mxu0 %v630
      %v987 = vpop.f32.mrb[0].mxu0
      %v988 = vadd.f32 %v351, %v987
      %v989 = vpop.f32.mrb[0].mxu0
      %v990 = vpop.f32.mrb[0].mxu0
      %v991 = vadd.f32 %v351, %v990
      %v992 = vpop.f32.mrb[0].mxu0
      %993 = vmatprep.mubr.bf16.mxu0 0
      %994 = vmatmul.mubr.bf16.gmra.mrb[0].mxu0 %v631
      %v995 = vpop.f32.mrb[0].mxu0
      %v996 = vadd.f32 %v351, %v995
      %v997 = vpop.f32.mrb[0].mxu0
      %v998 = vpop.f32.mrb[0].mxu0
      %v999 = vadd.f32 %v351, %v998
      %v1000 = vpop.f32.mrb[0].mxu0
      %1001 = vmatprep.mubr.bf16.mxu0 0
      %1002 = vmatmul.mubr.bf16.gmra.mrb[0].mxu0 %v632
      %v1003 = vpop.f32.mrb[0].mxu0
      %v1004 = vadd.f32 %v351, %v1003
      %v1005 = vpop.f32.mrb[0].mxu0
      %v1006 = vpop.f32.mrb[0].mxu0
      %v1007 = vadd.f32 %v351, %v1006
      %v1008 = vpop.f32.mrb[0].mxu0
      %1009 = vmatprep.mubr.bf16.mxu0 0
      %1010 = vmatmul.mubr.bf16.gmra.mrb[0].mxu0 %v633
      %v1011 = vpop.f32.mrb[0].mxu0
      %v1012 = vadd.f32 %v351, %v1011
      %v1013 = vpop.f32.mrb[0].mxu0
      %v1014 = vpop.f32.mrb[0].mxu0
      %v1015 = vadd.f32 %v351, %v1014
      %v1016 = vpop.f32.mrb[0].mxu0
      %1017 = vmatprep.mubr.bf16.mxu0 0
      %1018 = vmatmul.mubr.bf16.gmra.mrb[0].mxu0 %v634
      %v1019 = vpop.f32.mrb[0].mxu0
      %v1020 = vadd.f32 %v351, %v1019
      %v1021 = vpop.f32.mrb[0].mxu0
      %v1022 = vpop.f32.mrb[0].mxu0
      %v1023 = vadd.f32 %v351, %v1022
      %v1024 = vpop.f32.mrb[0].mxu0
      %1025 = vmatprep.mubr.bf16.mxu0 0
      %1026 = vmatmul.mubr.bf16.gmra.mrb[0].mxu0 %v635
      %v1027 = vpop.f32.mrb[0].mxu0
      %v1028 = vadd.f32 %v351, %v1027
      %v1029 = vpop.f32.mrb[0].mxu0
      %v1030 = vpop.f32.mrb[0].mxu0
      %v1031 = vadd.f32 %v351, %v1030
      %v1032 = vpop.f32.mrb[0].mxu0
      %1033 = vmatprep.mubr.bf16.mxu0 0
      %1034 = vmatmul.mubr.bf16.gmra.mrb[0].mxu0 %v636
      %v1035 = vpop.f32.mrb[0].mxu0
      %v1036 = vadd.f32 %v351, %v1035
      %v1037 = vpop.f32.mrb[0].mxu0
      %v1038 = vpop.f32.mrb[0].mxu0
      %v1039 = vadd.f32 %v351, %v1038
      %v1040 = vpop.f32.mrb[0].mxu0
      %1041 = vmatprep.mubr.bf16.mxu0 0
      %1042 = vmatmul.mubr.bf16.gmra.mrb[0].mxu0 %v637
      %v1043 = vpop.f32.mrb[0].mxu0
      %v1044 = vadd.f32 %v351, %v1043
      %v1045 = vpop.f32.mrb[0].mxu0
      %v1046 = vpop.f32.mrb[0].mxu0
      %v1047 = vadd.f32 %v351, %v1046
      %v1048 = vpop.f32.mrb[0].mxu0
      %1049 = vmatprep.mubr.bf16.mxu0 0
      %1050 = vmatmul.mubr.bf16.gmra.mrb[0].mxu0 %v638
      %v1051 = vpop.f32.mrb[0].mxu0
      %v1052 = vadd.f32 %v351, %v1051
      %v1053 = vpop.f32.mrb[0].mxu0
      %v1054 = vpop.f32.mrb[0].mxu0
      %v1055 = vadd.f32 %v351, %v1054
      %v1056 = vpop.f32.mrb[0].mxu0
      %1057 = vmatprep.mubr.bf16.mxu0 0
      %1058 = vmatmul.mubr.bf16.gmra.mrb[0].mxu0 %v639
      %v1059 = vpop.f32.mrb[0].mxu0
      %v1060 = vadd.f32 %v351, %v1059
      %v1061 = vpop.f32.mrb[0].mxu0
      %v1062 = vpop.f32.mrb[0].mxu0
      %v1063 = vadd.f32 %v351, %v1062
      %v1064 = vpop.f32.mrb[0].mxu0
      %1065 = vmatprep.mubr.bf16.mxu0 0
      %1066 = vmatmul.mubr.bf16.gmra.mrb[0].mxu0 %v640
      %v1067 = vpop.f32.mrb[0].mxu0
      %v1068 = vadd.f32 %v351, %v1067
      %v1069 = vpop.f32.mrb[0].mxu0
      %v1070 = vpop.f32.mrb[0].mxu0
      %v1071 = vadd.f32 %v351, %v1070
      %v1072 = vpop.f32.mrb[0].mxu0
      %1073 = vmatprep.mubr.bf16.mxu0 0
      %1074 = vmatmul.mubr.bf16.gmra.mrb[0].mxu0 %v641
      %v1075 = vpop.f32.mrb[0].mxu0
      %v1076 = vadd.f32 %v351, %v1075
      %v1077 = vpop.f32.mrb[0].mxu0
      %v1078 = vpop.f32.mrb[0].mxu0
      %v1079 = vadd.f32 %v351, %v1078
      %v1080 = vpop.f32.mrb[0].mxu0
      %1081 = vmatprep.mubr.bf16.mxu0 0
      %1082 = vmatmul.mubr.bf16.gmra.mrb[0].mxu0 %v642
      %v1083 = vpop.f32.mrb[0].mxu0
      %v1084 = vadd.f32 %v351, %v1083
      %v1085 = vpop.f32.mrb[0].mxu0
      %v1086 = vpop.f32.mrb[0].mxu0
      %v1087 = vadd.f32 %v351, %v1086
      %v1088 = vpop.f32.mrb[0].mxu0
      %1089 = vmatprep.mubr.bf16.mxu0 0
      %1090 = vmatmul.mubr.bf16.gmra.mrb[0].mxu0 %v643
      %v1091 = vpop.f32.mrb[0].mxu0
      %v1092 = vadd.f32 %v351, %v1091
      %v1093 = vpop.f32.mrb[0].mxu0
      %v1094 = vpop.f32.mrb[0].mxu0
      %v1095 = vadd.f32 %v351, %v1094
      %v1096 = vpop.f32.mrb[0].mxu0
      %1097 = vmatprep.mubr.bf16.mxu0 0
      %1098 = vmatmul.mubr.bf16.gmra.mrb[0].mxu0 %v644
      %v1099 = vpop.f32.mrb[0].mxu0
      %v1100 = vadd.f32 %v351, %v1099
      %v1101 = vpop.f32.mrb[0].mxu0
      %v1102 = vpop.f32.mrb[0].mxu0
      %v1103 = vadd.f32 %v351, %v1102
      %v1104 = vpop.f32.mrb[0].mxu0
      %1105 = vmatprep.mubr.bf16.mxu0 0
      %1106 = vmatmul.mubr.bf16.gmra.mrb[0].mxu0 %v645
      %v1107 = vpop.f32.mrb[0].mxu0
      %v1108 = vadd.f32 %v351, %v1107
      %v1109 = vpop.f32.mrb[0].mxu0
      %v1110 = vpop.f32.mrb[0].mxu0
      %v1111 = vadd.f32 %v351, %v1110
      %v1112 = vpop.f32.mrb[0].mxu0
      %1113 = vmatprep.mubr.bf16.mxu0 0
      %1114 = vmatmul.mubr.bf16.gmra.mrb[0].mxu0 %v646
      %v1115 = vpop.f32.mrb[0].mxu0
      %v1116 = vadd.f32 %v351, %v1115
      %v1117 = vpop.f32.mrb[0].mxu0
      %v1118 = vpop.f32.mrb[0].mxu0
      %v1119 = vadd.f32 %v351, %v1118
      %v1120 = vpop.f32.mrb[0].mxu0
      %1121 = vmatprep.mubr.bf16.mxu0 0
      %1122 = vmatmul.mubr.bf16.gmra.mrb[0].mxu0 %v647
      %v1123 = vpop.f32.mrb[0].mxu0
      %v1124 = vadd.f32 %v351, %v1123
      %v1125 = vpop.f32.mrb[0].mxu0
      %v1126 = vpop.f32.mrb[0].mxu0
      %v1127 = vadd.f32 %v351, %v1126
      %v1128 = vpop.f32.mrb[0].mxu0
      %1129 = vmatprep.mubr.bf16.mxu0 0
      %1130 = vmatmul.mubr.bf16.gmra.mrb[0].mxu0 %v648
      %v1131 = vpop.f32.mrb[0].mxu0
      %v1132 = vadd.f32 %v351, %v1131
      %v1133 = vpop.f32.mrb[0].mxu0
      %v1134 = vpop.f32.mrb[0].mxu0
      %v1135 = vadd.f32 %v351, %v1134
      %v1136 = vpop.f32.mrb[0].mxu0
      %1137 = vmatprep.mubr.bf16.mxu0 0
      %1138 = vmatmul.mubr.bf16.gmra.mrb[0].mxu0 %v649
      %v1139 = vpop.f32.mrb[0].mxu0
      %v1140 = vadd.f32 %v351, %v1139
      %v1141 = vpop.f32.mrb[0].mxu0
      %v1142 = vpop.f32.mrb[0].mxu0
      %v1143 = vadd.f32 %v351, %v1142
      %v1144 = vpop.f32.mrb[0].mxu0
      %1145 = vmatprep.mubr.bf16.mxu0 0
      %1146 = vmatmul.mubr.bf16.gmra.mrb[0].mxu0 %v650
      %v1147 = vpop.f32.mrb[0].mxu0
      %v1148 = vadd.f32 %v351, %v1147
      %v1149 = vpop.f32.mrb[0].mxu0
      %v1150 = vpop.f32.mrb[0].mxu0
      %v1151 = vadd.f32 %v351, %v1150
      %v1152 = vpop.f32.mrb[0].mxu0
      %1153 = vmatprep.mubr.bf16.mxu0 0
      %1154 = vmatmul.mubr.bf16.gmra.mrb[0].mxu0 %v651
      %v1155 = vpop.f32.mrb[0].mxu0
      %v1156 = vadd.f32 %v351, %v1155
      %v1157 = vpop.f32.mrb[0].mxu0
      %v1158 = vpop.f32.mrb[0].mxu0
      %v1159 = vadd.f32 %v351, %v1158
      %v1160 = vpop.f32.mrb[0].mxu0
      %1161 = vmatprep.mubr.bf16.mxu0 0
      %1162 = vmatmul.mubr.bf16.gmra.mrb[0].mxu0 %v652
      %v1163 = vpop.f32.mrb[0].mxu0
      %v1164 = vadd.f32 %v351, %v1163
      %v1165 = vpop.f32.mrb[0].mxu0
      %v1166 = vpop.f32.mrb[0].mxu0
      %v1167 = vadd.f32 %v351, %v1166
      %v1168 = vpop.f32.mrb[0].mxu0
      %1169 = vmatprep.mubr.bf16.mxu0 0
      %1170 = vmatmul.mubr.bf16.gmra.mrb[0].mxu0 %v653
      %v1171 = vpop.f32.mrb[0].mxu0
      %v1172 = vadd.f32 %v351, %v1171
      %v1173 = vpop.f32.mrb[0].mxu0
      %v1174 = vpop.f32.mrb[0].mxu0
      %v1175 = vadd.f32 %v351, %v1174
      %v1176 = vpop.f32.mrb[0].mxu0
      %1177 = vmatprep.mubr.bf16.mxu0 0
      %1178 = vmatmul.mubr.bf16.gmra.mrb[0].mxu0 %v654
      %v1179 = vpop.f32.mrb[0].mxu0
      %v1180 = vadd.f32 %v351, %v1179
      %v1181 = vpop.f32.mrb[0].mxu0
      %v1182 = vpop.f32.mrb[0].mxu0
      %v1183 = vadd.f32 %v351, %v1182
      %v1184 = vpop.f32.mrb[0].mxu0
      %1185 = vmatprep.mubr.bf16.mxu0 0
      %1186 = vmatmul.mubr.bf16.gmra.mrb[0].mxu0 %v655
      %v1187 = vpop.f32.mrb[0].mxu0
      %v1188 = vadd.f32 %v351, %v1187
      %v1189 = vpop.f32.mrb[0].mxu0
      %v1190 = vpop.f32.mrb[0].mxu0
      %v1191 = vadd.f32 %v351, %v1190
      %v1192 = vpop.f32.mrb[0].mxu0
      %1193 = vmatprep.mubr.bf16.mxu0 0
      %1194 = vmatmul.mubr.bf16.gmra.mrb[0].mxu0 %v656
      %v1195 = vpop.f32.mrb[0].mxu0
      %v1196 = vadd.f32 %v351, %v1195
      %v1197 = vpop.f32.mrb[0].mxu0
      %v1198 = vpop.f32.mrb[0].mxu0
      %v1199 = vadd.f32 %v351, %v1198
      %v1200 = vpop.f32.mrb[0].mxu0
      %1201 = vmatprep.mubr.bf16.mxu0 0
      %1202 = vmatmul.mubr.bf16.gmra.mrb[0].mxu0 %v657
      %v1203 = vpop.f32.mrb[0].mxu0
      %v1204 = vadd.f32 %v351, %v1203
      %v1205 = vpop.f32.mrb[0].mxu0
      %v1206 = vpop.f32.mrb[0].mxu0
      %v1207 = vadd.f32 %v351, %v1206
      %v1208 = vpop.f32.mrb[0].mxu0
      %1209 = vmatprep.mubr.bf16.mxu0 0
      %1210 = vmatmul.mubr.bf16.gmra.mrb[0].mxu0 %v658
      %v1211 = vpop.f32.mrb[0].mxu0
      %v1212 = vadd.f32 %v351, %v1211
      %v1213 = vpop.f32.mrb[0].mxu0
      %v1214 = vpop.f32.mrb[0].mxu0
      %v1215 = vadd.f32 %v351, %v1214
      %v1216 = vpop.f32.mrb[0].mxu0
      %1217 = vmatprep.mubr.bf16.mxu0 0
      %1218 = vmatmul.mubr.bf16.gmra.mrb[0].mxu0 %v659
      %v1219 = vpop.f32.mrb[0].mxu0
      %v1220 = vadd.f32 %v351, %v1219
      %v1221 = vpop.f32.mrb[0].mxu0
      %v1222 = vpop.f32.mrb[0].mxu0
      %v1223 = vadd.f32 %v351, %v1222
      %v1224 = vpop.f32.mrb[0].mxu0
      %1225 = vmatprep.mubr.bf16.mxu0 0
      %1226 = vmatmul.mubr.bf16.gmra.mrb[0].mxu0 %v660
      %v1227 = vpop.f32.mrb[0].mxu0
      %v1228 = vadd.f32 %v351, %v1227
      %v1229 = vpop.f32.mrb[0].mxu0
      %v1230 = vpop.f32.mrb[0].mxu0
      %v1231 = vadd.f32 %v351, %v1230
      %v1232 = vpop.f32.mrb[0].mxu0
      %1233 = vmatprep.mubr.bf16.mxu0 0
      %1234 = vmatmul.mubr.bf16.gmra.mrb[0].mxu0 %v661
      %v1235 = vpop.f32.mrb[0].mxu0
      %v1236 = vadd.f32 %v351, %v1235
      %v1237 = vpop.f32.mrb[0].mxu0
      %v1238 = vpop.f32.mrb[0].mxu0
      %v1239 = vadd.f32 %v351, %v1238
      %v1240 = vpop.f32.mrb[0].mxu0
      %1241 = vmatprep.mubr.bf16.mxu0 0
      %1242 = vmatmul.mubr.bf16.gmra.mrb[0].mxu0 %v662
      %v1243 = vpop.f32.mrb[0].mxu0
      %v1244 = vadd.f32 %v351, %v1243
      %v1245 = vpop.f32.mrb[0].mxu0
      %v1246 = vpop.f32.mrb[0].mxu0
      %v1247 = vadd.f32 %v351, %v1246
      %v1248 = vpop.f32.mrb[0].mxu0
      %1249 = vmatprep.mubr.bf16.mxu0 0
      %1250 = vmatmul.mubr.bf16.gmra.mrb[0].mxu0 %v663
      %v1251 = vpop.f32.mrb[0].mxu0
      %v1252 = vadd.f32 %v351, %v1251
      %v1253 = vpop.f32.mrb[0].mxu0
      %v1254 = vpop.f32.mrb[0].mxu0
      %v1255 = vadd.f32 %v351, %v1254
      %v1256 = vpop.f32.mrb[0].mxu0
      %1257 = vmatprep.mubr.bf16.mxu0 0
      %1258 = vmatmul.mubr.bf16.gmra.mrb[0].mxu0 %v664
      %v1259 = vpop.f32.mrb[0].mxu0
      %v1260 = vadd.f32 %v351, %v1259
      %v1261 = vpop.f32.mrb[0].mxu0
      %v1262 = vpop.f32.mrb[0].mxu0
      %v1263 = vadd.f32 %v351, %v1262
      %v1264 = vpop.f32.mrb[0].mxu0
      %1265 = vmatprep.mubr.bf16.mxu0 0
      %1266 = vmatmul.mubr.bf16.gmra.mrb[0].mxu0 %v665
      %v1267 = vpop.f32.mrb[0].mxu0
      %v1268 = vadd.f32 %v351, %v1267
      %v1269 = vpop.f32.mrb[0].mxu0
      %v1270 = vpop.f32.mrb[0].mxu0
      %v1271 = vadd.f32 %v351, %v1270
      %v1272 = vpop.f32.mrb[0].mxu0
      %1273 = vmatprep.mubr.bf16.mxu0 0
      %1274 = vmatmul.mubr.bf16.gmra.mrb[0].mxu0 %v666
      %v1275 = vpop.f32.mrb[0].mxu0
      %v1276 = vadd.f32 %v351, %v1275
      %v1277 = vpop.f32.mrb[0].mxu0
      %v1278 = vpop.f32.mrb[0].mxu0
      %v1279 = vadd.f32 %v351, %v1278
      %v1280 = vpop.f32.mrb[0].mxu0
      %1281 = vmatprep.mubr.bf16.mxu0 0
      %1282 = vmatmul.mubr.bf16.gmra.mrb[0].mxu0 %v667
      %v1283 = vpop.f32.mrb[0].mxu0
      %v1284 = vadd.f32 %v351, %v1283
      %v1285 = vpop.f32.mrb[0].mxu0
      %v1286 = vpop.f32.mrb[0].mxu0
      %v1287 = vadd.f32 %v351, %v1286
      %v1288 = vpop.f32.mrb[0].mxu0
      %1289 = vmatprep.mubr.bf16.mxu0 0
      %1290 = vmatmul.mubr.bf16.gmra.mrb[0].mxu0 %v668
      %v1291 = vpop.f32.mrb[0].mxu0
      %v1292 = vadd.f32 %v351, %v1291
      %v1293 = vpop.f32.mrb[0].mxu0
      %v1294 = vpop.f32.mrb[0].mxu0
      %v1295 = vadd.f32 %v351, %v1294
      %v1296 = vpop.f32.mrb[0].mxu0
      %1297 = vmatprep.mubr.bf16.mxu0 0
      %1298 = vmatmul.mubr.bf16.gmra.mrb[0].mxu0 %v669
      %v1299 = vpop.f32.mrb[0].mxu0
      %v1300 = vadd.f32 %v351, %v1299
      %v1301 = vpop.f32.mrb[0].mxu0
      %v1302 = vpop.f32.mrb[0].mxu0
      %v1303 = vadd.f32 %v351, %v1302
      %v1304 = vpop.f32.mrb[0].mxu0
      %1305 = vmatprep.mubr.bf16.mxu0 0
      %1306 = vmatmul.mubr.bf16.gmra.mrb[0].mxu0 %v670
      %v1307 = vpop.f32.mrb[0].mxu0
      %v1308 = vadd.f32 %v351, %v1307
      %v1309 = vpop.f32.mrb[0].mxu0
      %v1310 = vpop.f32.mrb[0].mxu0
      %v1311 = vadd.f32 %v351, %v1310
      %v1312 = vpop.f32.mrb[0].mxu0
      %1313 = vmatprep.mubr.bf16.mxu0 0
      %1314 = vmatmul.mubr.bf16.gmra.mrb[0].mxu0 %v671
      %v1315 = vpop.f32.mrb[0].mxu0
      %v1316 = vadd.f32 %v351, %v1315
      %v1317 = vpop.f32.mrb[0].mxu0
      %v1318 = vpop.f32.mrb[0].mxu0
      %v1319 = vadd.f32 %v351, %v1318
      %v1320 = vpop.f32.mrb[0].mxu0
      %1321 = vmatprep.mubr.bf16.mxu0 0
      %1322 = vmatmul.mubr.bf16.gmra.mrb[0].mxu0 %v672
      %v1323 = vpop.f32.mrb[0].mxu0
      %v1324 = vadd.f32 %v351, %v1323
      %v1325 = vpop.f32.mrb[0].mxu0
      %v1326 = vpop.f32.mrb[0].mxu0
      %v1327 = vadd.f32 %v351, %v1326
      %v1328 = vpop.f32.mrb[0].mxu0
      %1329 = vdwg.mxu0
      %v1330 = vpack.c.bf16 %v823, %v820
      %v1331 = vpack.c.bf16 %v831, %v828
      %v1332 = vpack.c.bf16 %v839, %v836
      %v1333 = vpack.c.bf16 %v847, %v844
      %v1334 = vpack.c.bf16 %v855, %v852
      %v1335 = vpack.c.bf16 %v863, %v860
      %v1336 = vpack.c.bf16 %v871, %v868
      %v1337 = vpack.c.bf16 %v879, %v876
      %v1338 = vpack.c.bf16 %v887, %v884
      %v1339 = vpack.c.bf16 %v895, %v892
      %v1340 = vpack.c.bf16 %v903, %v900
      %v1341 = vpack.c.bf16 %v911, %v908
      %v1342 = vpack.c.bf16 %v919, %v916
      %v1343 = vpack.c.bf16 %v927, %v924
      %v1344 = vpack.c.bf16 %v935, %v932
      %v1345 = vpack.c.bf16 %v943, %v940
      %v1346 = vpack.c.bf16 %v951, %v948
      %v1347 = vpack.c.bf16 %v959, %v956
      %v1348 = vpack.c.bf16 %v967, %v964
      %v1349 = vpack.c.bf16 %v975, %v972
      %v1350 = vpack.c.bf16 %v983, %v980
      %v1351 = vpack.c.bf16 %v991, %v988
      %v1352 = vpack.c.bf16 %v999, %v996
      %v1353 = vpack.c.bf16 %v1007, %v1004
      %v1354 = vpack.c.bf16 %v1015, %v1012
      %v1355 = vpack.c.bf16 %v1023, %v1020
      %v1356 = vpack.c.bf16 %v1031, %v1028
      %v1357 = vpack.c.bf16 %v1039, %v1036
      %v1358 = vpack.c.bf16 %v1047, %v1044
      %v1359 = vpack.c.bf16 %v1055, %v1052
      %v1360 = vpack.c.bf16 %v1063, %v1060
      %v1361 = vpack.c.bf16 %v1071, %v1068
      %v1362 = vpack.c.bf16 %v1079, %v1076
      %v1363 = vpack.c.bf16 %v1087, %v1084
      %v1364 = vpack.c.bf16 %v1095, %v1092
      %v1365 = vpack.c.bf16 %v1103, %v1100
      %v1366 = vpack.c.bf16 %v1111, %v1108
      %v1367 = vpack.c.bf16 %v1119, %v1116
      %v1368 = vpack.c.bf16 %v1127, %v1124
      %v1369 = vpack.c.bf16 %v1135, %v1132
      %v1370 = vpack.c.bf16 %v1143, %v1140
      %v1371 = vpack.c.bf16 %v1151, %v1148
      %v1372 = vpack.c.bf16 %v1159, %v1156
      %v1373 = vpack.c.bf16 %v1167, %v1164
      %v1374 = vpack.c.bf16 %v1175, %v1172
      %v1375 = vpack.c.bf16 %v1183, %v1180
      %v1376 = vpack.c.bf16 %v1191, %v1188
      %v1377 = vpack.c.bf16 %v1199, %v1196
      %v1378 = vpack.c.bf16 %v1207, %v1204
      %v1379 = vpack.c.bf16 %v1215, %v1212
      %v1380 = vpack.c.bf16 %v1223, %v1220
      %v1381 = vpack.c.bf16 %v1231, %v1228
      %v1382 = vpack.c.bf16 %v1239, %v1236
      %v1383 = vpack.c.bf16 %v1247, %v1244
      %v1384 = vpack.c.bf16 %v1255, %v1252
      %v1385 = vpack.c.bf16 %v1263, %v1260
      %v1386 = vpack.c.bf16 %v1271, %v1268
      %v1387 = vpack.c.bf16 %v1279, %v1276
      %v1388 = vpack.c.bf16 %v1287, %v1284
      %v1389 = vpack.c.bf16 %v1295, %v1292
      %v1390 = vpack.c.bf16 %v1303, %v1300
      %v1391 = vpack.c.bf16 %v1311, %v1308
      %v1392 = vpack.c.bf16 %v1319, %v1316
      %v1393 = vpack.c.bf16 %v1327, %v1324
      %s1394 = scalar_lea.vmem %s1, 64
      %v1395 = vld [vmem:[%s1394] sm:$0xf]
      %v1396 = vld [vmem:[%s1394 + $0x4] sm:$0xf]
      %v1397 = vld [vmem:[%s1394 + $0x8] sm:$0xf]
      %v1398 = vld [vmem:[%s1394 + $0xc] sm:$0xf]
      %v1399 = vld [vmem:[%s1394 + $0x10] sm:$0xf]
      %v1400 = vld [vmem:[%s1394 + $0x14] sm:$0xf]
      %v1401 = vld [vmem:[%s1394 + $0x18] sm:$0xf]
      %v1402 = vld [vmem:[%s1394 + $0x1c] sm:$0xf]
      %v1403 = vld [vmem:[%s1394 + $0x20] sm:$0xf]
      %v1404 = vld [vmem:[%s1394 + $0x24] sm:$0xf]
      %v1405 = vld [vmem:[%s1394 + $0x28] sm:$0xf]
      %v1406 = vld [vmem:[%s1394 + $0x2c] sm:$0xf]
      %v1407 = vld [vmem:[%s1394 + $0x30] sm:$0xf]
      %v1408 = vld [vmem:[%s1394 + $0x34] sm:$0xf]
      %v1409 = vld [vmem:[%s1394 + $0x38] sm:$0xf]
      %v1410 = vld [vmem:[%s1394 + $0x3c] sm:$0xf]
      %s1411 = scalar_lea.vmem %s3, 1
      %v1412 = vld [vmem:[%s1411] sm:$0x1]
      %v1414 = vlaneseq
      %v1415 = vshrl.u32 %v1414, 7
      %v1416 = vsub.s32 0, %v1415
      %v1417 = vrot.slane %v1412, %v1416
      %v1435 = vunpack.c.l.b16 %v1395
      %v1436 = vunpack.c.l.b16 %v1396
      %v1437 = vunpack.c.l.b16 %v1397
      %v1438 = vunpack.c.l.b16 %v1398
      %v1439 = vunpack.c.l.b16 %v1399
      %v1440 = vunpack.c.l.b16 %v1400
      %v1441 = vunpack.c.l.b16 %v1401
      %v1442 = vunpack.c.l.b16 %v1402
      %v1443 = vunpack.c.l.b16 %v1403
      %v1444 = vunpack.c.l.b16 %v1404
      %v1445 = vunpack.c.l.b16 %v1405
      %v1446 = vunpack.c.l.b16 %v1406
      %v1447 = vunpack.c.l.b16 %v1407
      %v1448 = vunpack.c.l.b16 %v1408
      %v1449 = vunpack.c.l.b16 %v1409
      %v1450 = vunpack.c.l.b16 %v1410
      %v1451 = vpack.c.b16 %v1436, %v1435
      %v1452 = vpack.c.b16 %v1438, %v1437
      %v1453 = vpack.c.b16 %v1440, %v1439
      %v1454 = vpack.c.b16 %v1442, %v1441
      %v1455 = vpack.c.b16 %v1444, %v1443
      %v1456 = vpack.c.b16 %v1446, %v1445
      %v1457 = vpack.c.b16 %v1448, %v1447
      %v1458 = vpack.c.b16 %v1450, %v1449
      %1467 = vmatprep.subr.bf16.mxu0 0
      %1468 = vmatpush1.bf16.msra.mxu0 %v1451
      %1469 = vmatprep.subr.bf16.mxu0 0
      %1470 = vmatpush1.bf16.msra.mxu0 %v1452
      %1471 = vmatprep.subr.bf16.mxu0 0
      %1472 = vmatpush1.bf16.msra.mxu0 %v1453
      %1473 = vmatprep.subr.bf16.mxu0 0
      %1474 = vmatpush1.bf16.msra.mxu0 %v1454
      %1475 = vmatprep.subr.bf16.mxu0 0
      %1476 = vmatpush1.bf16.msra.mxu0 %v1455
      %1477 = vmatprep.subr.bf16.mxu0 0
      %1478 = vmatpush1.bf16.msra.mxu0 %v1456
      %1479 = vmatprep.subr.bf16.mxu0 0
      %1480 = vmatpush1.bf16.msra.mxu0 %v1457
      %1481 = vmatprep.subr.bf16.mxu0 0
      %1482 = vmatpush1.bf16.msra.mxu0 %v1458
      %1483 = vmatprep.subr.bf16.mxu0 0
      %1484 = vmatpush1.bf16.msra.mxu0 0
      %1485 = vmatprep.subr.bf16.mxu0 0
      %1486 = vmatpush1.bf16.msra.mxu0 0
      %1487 = vmatprep.subr.bf16.mxu0 0
      %1488 = vmatpush1.bf16.msra.mxu0 0
      %1489 = vmatprep.subr.bf16.mxu0 0
      %1490 = vmatpush1.bf16.msra.mxu0 0
      %1491 = vmatprep.subr.bf16.mxu0 0
      %1492 = vmatpush1.bf16.msra.mxu0 0
      %1493 = vmatprep.subr.bf16.mxu0 0
      %1494 = vmatpush1.bf16.msra.mxu0 0
      %1495 = vmatprep.subr.bf16.mxu0 0
      %1496 = vmatpush1.bf16.msra.mxu0 0
      %1497 = vmatprep.subr.bf16.mxu0 0
      %1498 = vmatpush1.bf16.msra.mxu0 0
      %1499 = vmatprep.mubr.bf16.mxu0 0
      %1500 = vmatmul.mubr.bf16.gmra.mrb[0].mxu0 %v1330
      %v1501 = vpop.f32.mrb[0].mxu0
      %v1502 = vadd.f32 %v1417, %v1501
      %v1503 = vpop.f32.mrb[0].mxu0
      %v1504 = vpop.f32.mrb[0].mxu0
      %v1505 = vadd.f32 %v1417, %v1504
      %v1506 = vpop.f32.mrb[0].mxu0
      %1507 = vmatprep.mubr.bf16.mxu0 0
      %1508 = vmatmul.mubr.bf16.gmra.mrb[0].mxu0 %v1331
      %v1509 = vpop.f32.mrb[0].mxu0
      %v1510 = vadd.f32 %v1417, %v1509
      %v1511 = vpop.f32.mrb[0].mxu0
      %v1512 = vpop.f32.mrb[0].mxu0
      %v1513 = vadd.f32 %v1417, %v1512
      %v1514 = vpop.f32.mrb[0].mxu0
      %1515 = vmatprep.mubr.bf16.mxu0 0
      %1516 = vmatmul.mubr.bf16.gmra.mrb[0].mxu0 %v1332
      %v1517 = vpop.f32.mrb[0].mxu0
      %v1518 = vadd.f32 %v1417, %v1517
      %v1519 = vpop.f32.mrb[0].mxu0
      %v1520 = vpop.f32.mrb[0].mxu0
      %v1521 = vadd.f32 %v1417, %v1520
      %v1522 = vpop.f32.mrb[0].mxu0
      %1523 = vmatprep.mubr.bf16.mxu0 0
      %1524 = vmatmul.mubr.bf16.gmra.mrb[0].mxu0 %v1333
      %v1525 = vpop.f32.mrb[0].mxu0
      %v1526 = vadd.f32 %v1417, %v1525
      %v1527 = vpop.f32.mrb[0].mxu0
      %v1528 = vpop.f32.mrb[0].mxu0
      %v1529 = vadd.f32 %v1417, %v1528
      %v1530 = vpop.f32.mrb[0].mxu0
      %1531 = vmatprep.mubr.bf16.mxu0 0
      %1532 = vmatmul.mubr.bf16.gmra.mrb[0].mxu0 %v1334
      %v1533 = vpop.f32.mrb[0].mxu0
      %v1534 = vadd.f32 %v1417, %v1533
      %v1535 = vpop.f32.mrb[0].mxu0
      %v1536 = vpop.f32.mrb[0].mxu0
      %v1537 = vadd.f32 %v1417, %v1536
      %v1538 = vpop.f32.mrb[0].mxu0
      %1539 = vmatprep.mubr.bf16.mxu0 0
      %1540 = vmatmul.mubr.bf16.gmra.mrb[0].mxu0 %v1335
      %v1541 = vpop.f32.mrb[0].mxu0
      %v1542 = vadd.f32 %v1417, %v1541
      %v1543 = vpop.f32.mrb[0].mxu0
      %v1544 = vpop.f32.mrb[0].mxu0
      %v1545 = vadd.f32 %v1417, %v1544
      %v1546 = vpop.f32.mrb[0].mxu0
      %1547 = vmatprep.mubr.bf16.mxu0 0
      %1548 = vmatmul.mubr.bf16.gmra.mrb[0].mxu0 %v1336
      %v1549 = vpop.f32.mrb[0].mxu0
      %v1550 = vadd.f32 %v1417, %v1549
      %v1551 = vpop.f32.mrb[0].mxu0
      %v1552 = vpop.f32.mrb[0].mxu0
      %v1553 = vadd.f32 %v1417, %v1552
      %v1554 = vpop.f32.mrb[0].mxu0
      %1555 = vmatprep.mubr.bf16.mxu0 0
      %1556 = vmatmul.mubr.bf16.gmra.mrb[0].mxu0 %v1337
      %v1557 = vpop.f32.mrb[0].mxu0
      %v1558 = vadd.f32 %v1417, %v1557
      %v1559 = vpop.f32.mrb[0].mxu0
      %v1560 = vpop.f32.mrb[0].mxu0
      %v1561 = vadd.f32 %v1417, %v1560
      %v1562 = vpop.f32.mrb[0].mxu0
      %1563 = vmatprep.mubr.bf16.mxu0 0
      %1564 = vmatmul.mubr.bf16.gmra.mrb[0].mxu0 %v1338
      %v1565 = vpop.f32.mrb[0].mxu0
      %v1566 = vadd.f32 %v1417, %v1565
      %v1567 = vpop.f32.mrb[0].mxu0
      %v1568 = vpop.f32.mrb[0].mxu0
      %v1569 = vadd.f32 %v1417, %v1568
      %v1570 = vpop.f32.mrb[0].mxu0
      %1571 = vmatprep.mubr.bf16.mxu0 0
      %1572 = vmatmul.mubr.bf16.gmra.mrb[0].mxu0 %v1339
      %v1573 = vpop.f32.mrb[0].mxu0
      %v1574 = vadd.f32 %v1417, %v1573
      %v1575 = vpop.f32.mrb[0].mxu0
      %v1576 = vpop.f32.mrb[0].mxu0
      %v1577 = vadd.f32 %v1417, %v1576
      %v1578 = vpop.f32.mrb[0].mxu0
      %1579 = vmatprep.mubr.bf16.mxu0 0
      %1580 = vmatmul.mubr.bf16.gmra.mrb[0].mxu0 %v1340
      %v1581 = vpop.f32.mrb[0].mxu0
      %v1582 = vadd.f32 %v1417, %v1581
      %v1583 = vpop.f32.mrb[0].mxu0
      %v1584 = vpop.f32.mrb[0].mxu0
      %v1585 = vadd.f32 %v1417, %v1584
      %v1586 = vpop.f32.mrb[0].mxu0
      %1587 = vmatprep.mubr.bf16.mxu0 0
      %1588 = vmatmul.mubr.bf16.gmra.mrb[0].mxu0 %v1341
      %v1589 = vpop.f32.mrb[0].mxu0
      %v1590 = vadd.f32 %v1417, %v1589
      %v1591 = vpop.f32.mrb[0].mxu0
      %v1592 = vpop.f32.mrb[0].mxu0
      %v1593 = vadd.f32 %v1417, %v1592
      %v1594 = vpop.f32.mrb[0].mxu0
      %1595 = vmatprep.mubr.bf16.mxu0 0
      %1596 = vmatmul.mubr.bf16.gmra.mrb[0].mxu0 %v1342
      %v1597 = vpop.f32.mrb[0].mxu0
      %v1598 = vadd.f32 %v1417, %v1597
      %v1599 = vpop.f32.mrb[0].mxu0
      %v1600 = vpop.f32.mrb[0].mxu0
      %v1601 = vadd.f32 %v1417, %v1600
      %v1602 = vpop.f32.mrb[0].mxu0
      %1603 = vmatprep.mubr.bf16.mxu0 0
      %1604 = vmatmul.mubr.bf16.gmra.mrb[0].mxu0 %v1343
      %v1605 = vpop.f32.mrb[0].mxu0
      %v1606 = vadd.f32 %v1417, %v1605
      %v1607 = vpop.f32.mrb[0].mxu0
      %v1608 = vpop.f32.mrb[0].mxu0
      %v1609 = vadd.f32 %v1417, %v1608
      %v1610 = vpop.f32.mrb[0].mxu0
      %1611 = vmatprep.mubr.bf16.mxu0 0
      %1612 = vmatmul.mubr.bf16.gmra.mrb[0].mxu0 %v1344
      %v1613 = vpop.f32.mrb[0].mxu0
      %v1614 = vadd.f32 %v1417, %v1613
      %v1615 = vpop.f32.mrb[0].mxu0
      %v1616 = vpop.f32.mrb[0].mxu0
      %v1617 = vadd.f32 %v1417, %v1616
      %v1618 = vpop.f32.mrb[0].mxu0
      %1619 = vmatprep.mubr.bf16.mxu0 0
      %1620 = vmatmul.mubr.bf16.gmra.mrb[0].mxu0 %v1345
      %v1621 = vpop.f32.mrb[0].mxu0
      %v1622 = vadd.f32 %v1417, %v1621
      %v1623 = vpop.f32.mrb[0].mxu0
      %v1624 = vpop.f32.mrb[0].mxu0
      %v1625 = vadd.f32 %v1417, %v1624
      %v1626 = vpop.f32.mrb[0].mxu0
      %1627 = vmatprep.mubr.bf16.mxu0 0
      %1628 = vmatmul.mubr.bf16.gmra.mrb[0].mxu0 %v1346
      %v1629 = vpop.f32.mrb[0].mxu0
      %v1630 = vadd.f32 %v1417, %v1629
      %v1631 = vpop.f32.mrb[0].mxu0
      %v1632 = vpop.f32.mrb[0].mxu0
      %v1633 = vadd.f32 %v1417, %v1632
      %v1634 = vpop.f32.mrb[0].mxu0
      %1635 = vmatprep.mubr.bf16.mxu0 0
      %1636 = vmatmul.mubr.bf16.gmra.mrb[0].mxu0 %v1347
      %v1637 = vpop.f32.mrb[0].mxu0
      %v1638 = vadd.f32 %v1417, %v1637
      %v1639 = vpop.f32.mrb[0].mxu0
      %v1640 = vpop.f32.mrb[0].mxu0
      %v1641 = vadd.f32 %v1417, %v1640
      %v1642 = vpop.f32.mrb[0].mxu0
      %1643 = vmatprep.mubr.bf16.mxu0 0
      %1644 = vmatmul.mubr.bf16.gmra.mrb[0].mxu0 %v1348
      %v1645 = vpop.f32.mrb[0].mxu0
      %v1646 = vadd.f32 %v1417, %v1645
      %v1647 = vpop.f32.mrb[0].mxu0
      %v1648 = vpop.f32.mrb[0].mxu0
      %v1649 = vadd.f32 %v1417, %v1648
      %v1650 = vpop.f32.mrb[0].mxu0
      %1651 = vmatprep.mubr.bf16.mxu0 0
      %1652 = vmatmul.mubr.bf16.gmra.mrb[0].mxu0 %v1349
      %v1653 = vpop.f32.mrb[0].mxu0
      %v1654 = vadd.f32 %v1417, %v1653
      %v1655 = vpop.f32.mrb[0].mxu0
      %v1656 = vpop.f32.mrb[0].mxu0
      %v1657 = vadd.f32 %v1417, %v1656
      %v1658 = vpop.f32.mrb[0].mxu0
      %1659 = vmatprep.mubr.bf16.mxu0 0
      %1660 = vmatmul.mubr.bf16.gmra.mrb[0].mxu0 %v1350
      %v1661 = vpop.f32.mrb[0].mxu0
      %v1662 = vadd.f32 %v1417, %v1661
      %v1663 = vpop.f32.mrb[0].mxu0
      %v1664 = vpop.f32.mrb[0].mxu0
      %v1665 = vadd.f32 %v1417, %v1664
      %v1666 = vpop.f32.mrb[0].mxu0
      %1667 = vmatprep.mubr.bf16.mxu0 0
      %1668 = vmatmul.mubr.bf16.gmra.mrb[0].mxu0 %v1351
      %v1669 = vpop.f32.mrb[0].mxu0
      %v1670 = vadd.f32 %v1417, %v1669
      %v1671 = vpop.f32.mrb[0].mxu0
      %v1672 = vpop.f32.mrb[0].mxu0
      %v1673 = vadd.f32 %v1417, %v1672
      %v1674 = vpop.f32.mrb[0].mxu0
      %1675 = vmatprep.mubr.bf16.mxu0 0
      %1676 = vmatmul.mubr.bf16.gmra.mrb[0].mxu0 %v1352
      %v1677 = vpop.f32.mrb[0].mxu0
      %v1678 = vadd.f32 %v1417, %v1677
      %v1679 = vpop.f32.mrb[0].mxu0
      %v1680 = vpop.f32.mrb[0].mxu0
      %v1681 = vadd.f32 %v1417, %v1680
      %v1682 = vpop.f32.mrb[0].mxu0
      %1683 = vmatprep.mubr.bf16.mxu0 0
      %1684 = vmatmul.mubr.bf16.gmra.mrb[0].mxu0 %v1353
      %v1685 = vpop.f32.mrb[0].mxu0
      %v1686 = vadd.f32 %v1417, %v1685
      %v1687 = vpop.f32.mrb[0].mxu0
      %v1688 = vpop.f32.mrb[0].mxu0
      %v1689 = vadd.f32 %v1417, %v1688
      %v1690 = vpop.f32.mrb[0].mxu0
      %1691 = vmatprep.mubr.bf16.mxu0 0
      %1692 = vmatmul.mubr.bf16.gmra.mrb[0].mxu0 %v1354
      %v1693 = vpop.f32.mrb[0].mxu0
      %v1694 = vadd.f32 %v1417, %v1693
      %v1695 = vpop.f32.mrb[0].mxu0
      %v1696 = vpop.f32.mrb[0].mxu0
      %v1697 = vadd.f32 %v1417, %v1696
      %v1698 = vpop.f32.mrb[0].mxu0
      %1699 = vmatprep.mubr.bf16.mxu0 0
      %1700 = vmatmul.mubr.bf16.gmra.mrb[0].mxu0 %v1355
      %v1701 = vpop.f32.mrb[0].mxu0
      %v1702 = vadd.f32 %v1417, %v1701
      %v1703 = vpop.f32.mrb[0].mxu0
      %v1704 = vpop.f32.mrb[0].mxu0
      %v1705 = vadd.f32 %v1417, %v1704
      %v1706 = vpop.f32.mrb[0].mxu0
      %1707 = vmatprep.mubr.bf16.mxu0 0
      %1708 = vmatmul.mubr.bf16.gmra.mrb[0].mxu0 %v1356
      %v1709 = vpop.f32.mrb[0].mxu0
      %v1710 = vadd.f32 %v1417, %v1709
      %v1711 = vpop.f32.mrb[0].mxu0
      %v1712 = vpop.f32.mrb[0].mxu0
      %v1713 = vadd.f32 %v1417, %v1712
      %v1714 = vpop.f32.mrb[0].mxu0
      %1715 = vmatprep.mubr.bf16.mxu0 0
      %1716 = vmatmul.mubr.bf16.gmra.mrb[0].mxu0 %v1357
      %v1717 = vpop.f32.mrb[0].mxu0
      %v1718 = vadd.f32 %v1417, %v1717
      %v1719 = vpop.f32.mrb[0].mxu0
      %v1720 = vpop.f32.mrb[0].mxu0
      %v1721 = vadd.f32 %v1417, %v1720
      %v1722 = vpop.f32.mrb[0].mxu0
      %1723 = vmatprep.mubr.bf16.mxu0 0
      %1724 = vmatmul.mubr.bf16.gmra.mrb[0].mxu0 %v1358
      %v1725 = vpop.f32.mrb[0].mxu0
      %v1726 = vadd.f32 %v1417, %v1725
      %v1727 = vpop.f32.mrb[0].mxu0
      %v1728 = vpop.f32.mrb[0].mxu0
      %v1729 = vadd.f32 %v1417, %v1728
      %v1730 = vpop.f32.mrb[0].mxu0
      %1731 = vmatprep.mubr.bf16.mxu0 0
      %1732 = vmatmul.mubr.bf16.gmra.mrb[0].mxu0 %v1359
      %v1733 = vpop.f32.mrb[0].mxu0
      %v1734 = vadd.f32 %v1417, %v1733
      %v1735 = vpop.f32.mrb[0].mxu0
      %v1736 = vpop.f32.mrb[0].mxu0
      %v1737 = vadd.f32 %v1417, %v1736
      %v1738 = vpop.f32.mrb[0].mxu0
      %1739 = vmatprep.mubr.bf16.mxu0 0
      %1740 = vmatmul.mubr.bf16.gmra.mrb[0].mxu0 %v1360
      %v1741 = vpop.f32.mrb[0].mxu0
      %v1742 = vadd.f32 %v1417, %v1741
      %v1743 = vpop.f32.mrb[0].mxu0
      %v1744 = vpop.f32.mrb[0].mxu0
      %v1745 = vadd.f32 %v1417, %v1744
      %v1746 = vpop.f32.mrb[0].mxu0
      %1747 = vmatprep.mubr.bf16.mxu0 0
      %1748 = vmatmul.mubr.bf16.gmra.mrb[0].mxu0 %v1361
      %v1749 = vpop.f32.mrb[0].mxu0
      %v1750 = vadd.f32 %v1417, %v1749
      %v1751 = vpop.f32.mrb[0].mxu0
      %v1752 = vpop.f32.mrb[0].mxu0
      %v1753 = vadd.f32 %v1417, %v1752
      %v1754 = vpop.f32.mrb[0].mxu0
      %1755 = vmatprep.mubr.bf16.mxu0 0
      %1756 = vmatmul.mubr.bf16.gmra.mrb[0].mxu0 %v1362
      %v1757 = vpop.f32.mrb[0].mxu0
      %v1758 = vadd.f32 %v1417, %v1757
      %v1759 = vpop.f32.mrb[0].mxu0
      %v1760 = vpop.f32.mrb[0].mxu0
      %v1761 = vadd.f32 %v1417, %v1760
      %v1762 = vpop.f32.mrb[0].mxu0
      %1763 = vmatprep.mubr.bf16.mxu0 0
      %1764 = vmatmul.mubr.bf16.gmra.mrb[0].mxu0 %v1363
      %v1765 = vpop.f32.mrb[0].mxu0
      %v1766 = vadd.f32 %v1417, %v1765
      %v1767 = vpop.f32.mrb[0].mxu0
      %v1768 = vpop.f32.mrb[0].mxu0
      %v1769 = vadd.f32 %v1417, %v1768
      %v1770 = vpop.f32.mrb[0].mxu0
      %1771 = vmatprep.mubr.bf16.mxu0 0
      %1772 = vmatmul.mubr.bf16.gmra.mrb[0].mxu0 %v1364
      %v1773 = vpop.f32.mrb[0].mxu0
      %v1774 = vadd.f32 %v1417, %v1773
      %v1775 = vpop.f32.mrb[0].mxu0
      %v1776 = vpop.f32.mrb[0].mxu0
      %v1777 = vadd.f32 %v1417, %v1776
      %v1778 = vpop.f32.mrb[0].mxu0
      %1779 = vmatprep.mubr.bf16.mxu0 0
      %1780 = vmatmul.mubr.bf16.gmra.mrb[0].mxu0 %v1365
      %v1781 = vpop.f32.mrb[0].mxu0
      %v1782 = vadd.f32 %v1417, %v1781
      %v1783 = vpop.f32.mrb[0].mxu0
      %v1784 = vpop.f32.mrb[0].mxu0
      %v1785 = vadd.f32 %v1417, %v1784
      %v1786 = vpop.f32.mrb[0].mxu0
      %1787 = vmatprep.mubr.bf16.mxu0 0
      %1788 = vmatmul.mubr.bf16.gmra.mrb[0].mxu0 %v1366
      %v1789 = vpop.f32.mrb[0].mxu0
      %v1790 = vadd.f32 %v1417, %v1789
      %v1791 = vpop.f32.mrb[0].mxu0
      %v1792 = vpop.f32.mrb[0].mxu0
      %v1793 = vadd.f32 %v1417, %v1792
      %v1794 = vpop.f32.mrb[0].mxu0
      %1795 = vmatprep.mubr.bf16.mxu0 0
      %1796 = vmatmul.mubr.bf16.gmra.mrb[0].mxu0 %v1367
      %v1797 = vpop.f32.mrb[0].mxu0
      %v1798 = vadd.f32 %v1417, %v1797
      %v1799 = vpop.f32.mrb[0].mxu0
      %v1800 = vpop.f32.mrb[0].mxu0
      %v1801 = vadd.f32 %v1417, %v1800
      %v1802 = vpop.f32.mrb[0].mxu0
      %1803 = vmatprep.mubr.bf16.mxu0 0
      %1804 = vmatmul.mubr.bf16.gmra.mrb[0].mxu0 %v1368
      %v1805 = vpop.f32.mrb[0].mxu0
      %v1806 = vadd.f32 %v1417, %v1805
      %v1807 = vpop.f32.mrb[0].mxu0
      %v1808 = vpop.f32.mrb[0].mxu0
      %v1809 = vadd.f32 %v1417, %v1808
      %v1810 = vpop.f32.mrb[0].mxu0
      %1811 = vmatprep.mubr.bf16.mxu0 0
      %1812 = vmatmul.mubr.bf16.gmra.mrb[0].mxu0 %v1369
      %v1813 = vpop.f32.mrb[0].mxu0
      %v1814 = vadd.f32 %v1417, %v1813
      %v1815 = vpop.f32.mrb[0].mxu0
      %v1816 = vpop.f32.mrb[0].mxu0
      %v1817 = vadd.f32 %v1417, %v1816
      %v1818 = vpop.f32.mrb[0].mxu0
      %1819 = vmatprep.mubr.bf16.mxu0 0
      %1820 = vmatmul.mubr.bf16.gmra.mrb[0].mxu0 %v1370
      %v1821 = vpop.f32.mrb[0].mxu0
      %v1822 = vadd.f32 %v1417, %v1821
      %v1823 = vpop.f32.mrb[0].mxu0
      %v1824 = vpop.f32.mrb[0].mxu0
      %v1825 = vadd.f32 %v1417, %v1824
      %v1826 = vpop.f32.mrb[0].mxu0
      %1827 = vmatprep.mubr.bf16.mxu0 0
      %1828 = vmatmul.mubr.bf16.gmra.mrb[0].mxu0 %v1371
      %v1829 = vpop.f32.mrb[0].mxu0
      %v1830 = vadd.f32 %v1417, %v1829
      %v1831 = vpop.f32.mrb[0].mxu0
      %v1832 = vpop.f32.mrb[0].mxu0
      %v1833 = vadd.f32 %v1417, %v1832
      %v1834 = vpop.f32.mrb[0].mxu0
      %1835 = vmatprep.mubr.bf16.mxu0 0
      %1836 = vmatmul.mubr.bf16.gmra.mrb[0].mxu0 %v1372
      %v1837 = vpop.f32.mrb[0].mxu0
      %v1838 = vadd.f32 %v1417, %v1837
      %v1839 = vpop.f32.mrb[0].mxu0
      %v1840 = vpop.f32.mrb[0].mxu0
      %v1841 = vadd.f32 %v1417, %v1840
      %v1842 = vpop.f32.mrb[0].mxu0
      %1843 = vmatprep.mubr.bf16.mxu0 0
      %1844 = vmatmul.mubr.bf16.gmra.mrb[0].mxu0 %v1373
      %v1845 = vpop.f32.mrb[0].mxu0
      %v1846 = vadd.f32 %v1417, %v1845
      %v1847 = vpop.f32.mrb[0].mxu0
      %v1848 = vpop.f32.mrb[0].mxu0
      %v1849 = vadd.f32 %v1417, %v1848
      %v1850 = vpop.f32.mrb[0].mxu0
      %1851 = vmatprep.mubr.bf16.mxu0 0
      %1852 = vmatmul.mubr.bf16.gmra.mrb[0].mxu0 %v1374
      %v1853 = vpop.f32.mrb[0].mxu0
      %v1854 = vadd.f32 %v1417, %v1853
      %v1855 = vpop.f32.mrb[0].mxu0
      %v1856 = vpop.f32.mrb[0].mxu0
      %v1857 = vadd.f32 %v1417, %v1856
      %v1858 = vpop.f32.mrb[0].mxu0
      %1859 = vmatprep.mubr.bf16.mxu0 0
      %1860 = vmatmul.mubr.bf16.gmra.mrb[0].mxu0 %v1375
      %v1861 = vpop.f32.mrb[0].mxu0
      %v1862 = vadd.f32 %v1417, %v1861
      %v1863 = vpop.f32.mrb[0].mxu0
      %v1864 = vpop.f32.mrb[0].mxu0
      %v1865 = vadd.f32 %v1417, %v1864
      %v1866 = vpop.f32.mrb[0].mxu0
      %1867 = vmatprep.mubr.bf16.mxu0 0
      %1868 = vmatmul.mubr.bf16.gmra.mrb[0].mxu0 %v1376
      %v1869 = vpop.f32.mrb[0].mxu0
      %v1870 = vadd.f32 %v1417, %v1869
      %v1871 = vpop.f32.mrb[0].mxu0
      %v1872 = vpop.f32.mrb[0].mxu0
      %v1873 = vadd.f32 %v1417, %v1872
      %v1874 = vpop.f32.mrb[0].mxu0
      %1875 = vmatprep.mubr.bf16.mxu0 0
      %1876 = vmatmul.mubr.bf16.gmra.mrb[0].mxu0 %v1377
      %v1877 = vpop.f32.mrb[0].mxu0
      %v1878 = vadd.f32 %v1417, %v1877
      %v1879 = vpop.f32.mrb[0].mxu0
      %v1880 = vpop.f32.mrb[0].mxu0
      %v1881 = vadd.f32 %v1417, %v1880
      %v1882 = vpop.f32.mrb[0].mxu0
      %1883 = vmatprep.mubr.bf16.mxu0 0
      %1884 = vmatmul.mubr.bf16.gmra.mrb[0].mxu0 %v1378
      %v1885 = vpop.f32.mrb[0].mxu0
      %v1886 = vadd.f32 %v1417, %v1885
      %v1887 = vpop.f32.mrb[0].mxu0
      %v1888 = vpop.f32.mrb[0].mxu0
      %v1889 = vadd.f32 %v1417, %v1888
      %v1890 = vpop.f32.mrb[0].mxu0
      %1891 = vmatprep.mubr.bf16.mxu0 0
      %1892 = vmatmul.mubr.bf16.gmra.mrb[0].mxu0 %v1379
      %v1893 = vpop.f32.mrb[0].mxu0
      %v1894 = vadd.f32 %v1417, %v1893
      %v1895 = vpop.f32.mrb[0].mxu0
      %v1896 = vpop.f32.mrb[0].mxu0
      %v1897 = vadd.f32 %v1417, %v1896
      %v1898 = vpop.f32.mrb[0].mxu0
      %1899 = vmatprep.mubr.bf16.mxu0 0
      %1900 = vmatmul.mubr.bf16.gmra.mrb[0].mxu0 %v1380
      %v1901 = vpop.f32.mrb[0].mxu0
      %v1902 = vadd.f32 %v1417, %v1901
      %v1903 = vpop.f32.mrb[0].mxu0
      %v1904 = vpop.f32.mrb[0].mxu0
      %v1905 = vadd.f32 %v1417, %v1904
      %v1906 = vpop.f32.mrb[0].mxu0
      %1907 = vmatprep.mubr.bf16.mxu0 0
      %1908 = vmatmul.mubr.bf16.gmra.mrb[0].mxu0 %v1381
      %v1909 = vpop.f32.mrb[0].mxu0
      %v1910 = vadd.f32 %v1417, %v1909
      %v1911 = vpop.f32.mrb[0].mxu0
      %v1912 = vpop.f32.mrb[0].mxu0
      %v1913 = vadd.f32 %v1417, %v1912
      %v1914 = vpop.f32.mrb[0].mxu0
      %1915 = vmatprep.mubr.bf16.mxu0 0
      %1916 = vmatmul.mubr.bf16.gmra.mrb[0].mxu0 %v1382
      %v1917 = vpop.f32.mrb[0].mxu0
      %v1918 = vadd.f32 %v1417, %v1917
      %v1919 = vpop.f32.mrb[0].mxu0
      %v1920 = vpop.f32.mrb[0].mxu0
      %v1921 = vadd.f32 %v1417, %v1920
      %v1922 = vpop.f32.mrb[0].mxu0
      %1923 = vmatprep.mubr.bf16.mxu0 0
      %1924 = vmatmul.mubr.bf16.gmra.mrb[0].mxu0 %v1383
      %v1925 = vpop.f32.mrb[0].mxu0
      %v1926 = vadd.f32 %v1417, %v1925
      %v1927 = vpop.f32.mrb[0].mxu0
      %v1928 = vpop.f32.mrb[0].mxu0
      %v1929 = vadd.f32 %v1417, %v1928
      %v1930 = vpop.f32.mrb[0].mxu0
      %1931 = vmatprep.mubr.bf16.mxu0 0
      %1932 = vmatmul.mubr.bf16.gmra.mrb[0].mxu0 %v1384
      %v1933 = vpop.f32.mrb[0].mxu0
      %v1934 = vadd.f32 %v1417, %v1933
      %v1935 = vpop.f32.mrb[0].mxu0
      %v1936 = vpop.f32.mrb[0].mxu0
      %v1937 = vadd.f32 %v1417, %v1936
      %v1938 = vpop.f32.mrb[0].mxu0
      %1939 = vmatprep.mubr.bf16.mxu0 0
      %1940 = vmatmul.mubr.bf16.gmra.mrb[0].mxu0 %v1385
      %v1941 = vpop.f32.mrb[0].mxu0
      %v1942 = vadd.f32 %v1417, %v1941
      %v1943 = vpop.f32.mrb[0].mxu0
      %v1944 = vpop.f32.mrb[0].mxu0
      %v1945 = vadd.f32 %v1417, %v1944
      %v1946 = vpop.f32.mrb[0].mxu0
      %1947 = vmatprep.mubr.bf16.mxu0 0
      %1948 = vmatmul.mubr.bf16.gmra.mrb[0].mxu0 %v1386
      %v1949 = vpop.f32.mrb[0].mxu0
      %v1950 = vadd.f32 %v1417, %v1949
      %v1951 = vpop.f32.mrb[0].mxu0
      %v1952 = vpop.f32.mrb[0].mxu0
      %v1953 = vadd.f32 %v1417, %v1952
      %v1954 = vpop.f32.mrb[0].mxu0
      %1955 = vmatprep.mubr.bf16.mxu0 0
      %1956 = vmatmul.mubr.bf16.gmra.mrb[0].mxu0 %v1387
      %v1957 = vpop.f32.mrb[0].mxu0
      %v1958 = vadd.f32 %v1417, %v1957
      %v1959 = vpop.f32.mrb[0].mxu0
      %v1960 = vpop.f32.mrb[0].mxu0
      %v1961 = vadd.f32 %v1417, %v1960
      %v1962 = vpop.f32.mrb[0].mxu0
      %1963 = vmatprep.mubr.bf16.mxu0 0
      %1964 = vmatmul.mubr.bf16.gmra.mrb[0].mxu0 %v1388
      %v1965 = vpop.f32.mrb[0].mxu0
      %v1966 = vadd.f32 %v1417, %v1965
      %v1967 = vpop.f32.mrb[0].mxu0
      %v1968 = vpop.f32.mrb[0].mxu0
      %v1969 = vadd.f32 %v1417, %v1968
      %v1970 = vpop.f32.mrb[0].mxu0
      %1971 = vmatprep.mubr.bf16.mxu0 0
      %1972 = vmatmul.mubr.bf16.gmra.mrb[0].mxu0 %v1389
      %v1973 = vpop.f32.mrb[0].mxu0
      %v1974 = vadd.f32 %v1417, %v1973
      %v1975 = vpop.f32.mrb[0].mxu0
      %v1976 = vpop.f32.mrb[0].mxu0
      %v1977 = vadd.f32 %v1417, %v1976
      %v1978 = vpop.f32.mrb[0].mxu0
      %1979 = vmatprep.mubr.bf16.mxu0 0
      %1980 = vmatmul.mubr.bf16.gmra.mrb[0].mxu0 %v1390
      %v1981 = vpop.f32.mrb[0].mxu0
      %v1982 = vadd.f32 %v1417, %v1981
      %v1983 = vpop.f32.mrb[0].mxu0
      %v1984 = vpop.f32.mrb[0].mxu0
      %v1985 = vadd.f32 %v1417, %v1984
      %v1986 = vpop.f32.mrb[0].mxu0
      %1987 = vmatprep.mubr.bf16.mxu0 0
      %1988 = vmatmul.mubr.bf16.gmra.mrb[0].mxu0 %v1391
      %v1989 = vpop.f32.mrb[0].mxu0
      %v1990 = vadd.f32 %v1417, %v1989
      %v1991 = vpop.f32.mrb[0].mxu0
      %v1992 = vpop.f32.mrb[0].mxu0
      %v1993 = vadd.f32 %v1417, %v1992
      %v1994 = vpop.f32.mrb[0].mxu0
      %1995 = vmatprep.mubr.bf16.mxu0 0
      %1996 = vmatmul.mubr.bf16.gmra.mrb[0].mxu0 %v1392
      %v1997 = vpop.f32.mrb[0].mxu0
      %v1998 = vadd.f32 %v1417, %v1997
      %v1999 = vpop.f32.mrb[0].mxu0
      %v2000 = vpop.f32.mrb[0].mxu0
      %v2001 = vadd.f32 %v1417, %v2000
      %v2002 = vpop.f32.mrb[0].mxu0
      %2003 = vmatprep.mubr.bf16.mxu0 0
      %2004 = vmatmul.mubr.bf16.gmra.mrb[0].mxu0 %v1393
      %v2005 = vpop.f32.mrb[0].mxu0
      %v2006 = vadd.f32 %v1417, %v2005
      %v2007 = vpop.f32.mrb[0].mxu0
      %v2008 = vpop.f32.mrb[0].mxu0
      %v2009 = vadd.f32 %v1417, %v2008
      %v2010 = vpop.f32.mrb[0].mxu0
      %2011 = vdwg.mxu0
      %v2012 = vmax.f32 %v1502, 0.0
      %v2013 = vmax.f32 %v1505, 0.0
      %v2014 = vmax.f32 %v1510, 0.0
      %v2015 = vmax.f32 %v1513, 0.0
      %v2016 = vmax.f32 %v1518, 0.0
      %v2017 = vmax.f32 %v1521, 0.0
      %v2018 = vmax.f32 %v1526, 0.0
      %v2019 = vmax.f32 %v1529, 0.0
      %v2020 = vmax.f32 %v1534, 0.0
      %v2021 = vmax.f32 %v1537, 0.0
      %v2022 = vmax.f32 %v1542, 0.0
      %v2023 = vmax.f32 %v1545, 0.0
      %v2024 = vmax.f32 %v1550, 0.0
      %v2025 = vmax.f32 %v1553, 0.0
      %v2026 = vmax.f32 %v1558, 0.0
      %v2027 = vmax.f32 %v1561, 0.0
      %v2028 = vmax.f32 %v1566, 0.0
      %v2029 = vmax.f32 %v1569, 0.0
      %v2030 = vmax.f32 %v1574, 0.0
      %v2031 = vmax.f32 %v1577, 0.0
      %v2032 = vmax.f32 %v1582, 0.0
      %v2033 = vmax.f32 %v1585, 0.0
      %v2034 = vmax.f32 %v1590, 0.0
      %v2035 = vmax.f32 %v1593, 0.0
      %v2036 = vmax.f32 %v1598, 0.0
      %v2037 = vmax.f32 %v1601, 0.0
      %v2038 = vmax.f32 %v1606, 0.0
      %v2039 = vmax.f32 %v1609, 0.0
      %v2040 = vmax.f32 %v1614, 0.0
      %v2041 = vmax.f32 %v1617, 0.0
      %v2042 = vmax.f32 %v1622, 0.0
      %v2043 = vmax.f32 %v1625, 0.0
      %v2044 = vmax.f32 %v1630, 0.0
      %v2045 = vmax.f32 %v1633, 0.0
      %v2046 = vmax.f32 %v1638, 0.0
      %v2047 = vmax.f32 %v1641, 0.0
      %v2048 = vmax.f32 %v1646, 0.0
      %v2049 = vmax.f32 %v1649, 0.0
      %v2050 = vmax.f32 %v1654, 0.0
      %v2051 = vmax.f32 %v1657, 0.0
      %v2052 = vmax.f32 %v1662, 0.0
      %v2053 = vmax.f32 %v1665, 0.0
      %v2054 = vmax.f32 %v1670, 0.0
      %v2055 = vmax.f32 %v1673, 0.0
      %v2056 = vmax.f32 %v1678, 0.0
      %v2057 = vmax.f32 %v1681, 0.0
      %v2058 = vmax.f32 %v1686, 0.0
      %v2059 = vmax.f32 %v1689, 0.0
      %v2060 = vmax.f32 %v1694, 0.0
      %v2061 = vmax.f32 %v1697, 0.0
      %v2062 = vmax.f32 %v1702, 0.0
      %v2063 = vmax.f32 %v1705, 0.0
      %v2064 = vmax.f32 %v1710, 0.0
      %v2065 = vmax.f32 %v1713, 0.0
      %v2066 = vmax.f32 %v1718, 0.0
      %v2067 = vmax.f32 %v1721, 0.0
      %v2068 = vmax.f32 %v1726, 0.0
      %v2069 = vmax.f32 %v1729, 0.0
      %v2070 = vmax.f32 %v1734, 0.0
      %v2071 = vmax.f32 %v1737, 0.0
      %v2072 = vmax.f32 %v1742, 0.0
      %v2073 = vmax.f32 %v1745, 0.0
      %v2074 = vmax.f32 %v1750, 0.0
      %v2075 = vmax.f32 %v1753, 0.0
      %v2076 = vmax.f32 %v1758, 0.0
      %v2077 = vmax.f32 %v1761, 0.0
      %v2078 = vmax.f32 %v1766, 0.0
      %v2079 = vmax.f32 %v1769, 0.0
      %v2080 = vmax.f32 %v1774, 0.0
      %v2081 = vmax.f32 %v1777, 0.0
      %v2082 = vmax.f32 %v1782, 0.0
      %v2083 = vmax.f32 %v1785, 0.0
      %v2084 = vmax.f32 %v1790, 0.0
      %v2085 = vmax.f32 %v1793, 0.0
      %v2086 = vmax.f32 %v1798, 0.0
      %v2087 = vmax.f32 %v1801, 0.0
      %v2088 = vmax.f32 %v1806, 0.0
      %v2089 = vmax.f32 %v1809, 0.0
      %v2090 = vmax.f32 %v1814, 0.0
      %v2091 = vmax.f32 %v1817, 0.0
      %v2092 = vmax.f32 %v1822, 0.0
      %v2093 = vmax.f32 %v1825, 0.0
      %v2094 = vmax.f32 %v1830, 0.0
      %v2095 = vmax.f32 %v1833, 0.0
      %v2096 = vmax.f32 %v1838, 0.0
      %v2097 = vmax.f32 %v1841, 0.0
      %v2098 = vmax.f32 %v1846, 0.0
      %v2099 = vmax.f32 %v1849, 0.0
      %v2100 = vmax.f32 %v1854, 0.0
      %v2101 = vmax.f32 %v1857, 0.0
      %v2102 = vmax.f32 %v1862, 0.0
      %v2103 = vmax.f32 %v1865, 0.0
      %v2104 = vmax.f32 %v1870, 0.0
      %v2105 = vmax.f32 %v1873, 0.0
      %v2106 = vmax.f32 %v1878, 0.0
      %v2107 = vmax.f32 %v1881, 0.0
      %v2108 = vmax.f32 %v1886, 0.0
      %v2109 = vmax.f32 %v1889, 0.0
      %v2110 = vmax.f32 %v1894, 0.0
      %v2111 = vmax.f32 %v1897, 0.0
      %v2112 = vmax.f32 %v1902, 0.0
      %v2113 = vmax.f32 %v1905, 0.0
      %v2114 = vmax.f32 %v1910, 0.0
      %v2115 = vmax.f32 %v1913, 0.0
      %v2116 = vmax.f32 %v1918, 0.0
      %v2117 = vmax.f32 %v1921, 0.0
      %v2118 = vmax.f32 %v1926, 0.0
      %v2119 = vmax.f32 %v1929, 0.0
      %v2120 = vmax.f32 %v1934, 0.0
      %v2121 = vmax.f32 %v1937, 0.0
      %v2122 = vmax.f32 %v1942, 0.0
      %v2123 = vmax.f32 %v1945, 0.0
      %v2124 = vmax.f32 %v1950, 0.0
      %v2125 = vmax.f32 %v1953, 0.0
      %v2126 = vmax.f32 %v1958, 0.0
      %v2127 = vmax.f32 %v1961, 0.0
      %v2128 = vmax.f32 %v1966, 0.0
      %v2129 = vmax.f32 %v1969, 0.0
      %v2130 = vmax.f32 %v1974, 0.0
      %v2131 = vmax.f32 %v1977, 0.0
      %v2132 = vmax.f32 %v1982, 0.0
      %v2133 = vmax.f32 %v1985, 0.0
      %v2134 = vmax.f32 %v1990, 0.0
      %v2135 = vmax.f32 %v1993, 0.0
      %v2136 = vmax.f32 %v1998, 0.0
      %v2137 = vmax.f32 %v2001, 0.0
      %v2138 = vmax.f32 %v2006, 0.0
      %v2139 = vmax.f32 %v2009, 0.0
      %v2140 = vpack.c.bf16 %v2013, %v2012
      %v2141 = vpack.c.bf16 %v2015, %v2014
      %v2142 = vpack.c.bf16 %v2017, %v2016
      %v2143 = vpack.c.bf16 %v2019, %v2018
      %v2144 = vpack.c.bf16 %v2021, %v2020
      %v2145 = vpack.c.bf16 %v2023, %v2022
      %v2146 = vpack.c.bf16 %v2025, %v2024
      %v2147 = vpack.c.bf16 %v2027, %v2026
      %v2148 = vpack.c.bf16 %v2029, %v2028
      %v2149 = vpack.c.bf16 %v2031, %v2030
      %v2150 = vpack.c.bf16 %v2033, %v2032
      %v2151 = vpack.c.bf16 %v2035, %v2034
      %v2152 = vpack.c.bf16 %v2037, %v2036
      %v2153 = vpack.c.bf16 %v2039, %v2038
      %v2154 = vpack.c.bf16 %v2041, %v2040
      %v2155 = vpack.c.bf16 %v2043, %v2042
      %v2156 = vpack.c.bf16 %v2045, %v2044
      %v2157 = vpack.c.bf16 %v2047, %v2046
      %v2158 = vpack.c.bf16 %v2049, %v2048
      %v2159 = vpack.c.bf16 %v2051, %v2050
      %v2160 = vpack.c.bf16 %v2053, %v2052
      %v2161 = vpack.c.bf16 %v2055, %v2054
      %v2162 = vpack.c.bf16 %v2057, %v2056
      %v2163 = vpack.c.bf16 %v2059, %v2058
      %v2164 = vpack.c.bf16 %v2061, %v2060
      %v2165 = vpack.c.bf16 %v2063, %v2062
      %v2166 = vpack.c.bf16 %v2065, %v2064
      %v2167 = vpack.c.bf16 %v2067, %v2066
      %v2168 = vpack.c.bf16 %v2069, %v2068
      %v2169 = vpack.c.bf16 %v2071, %v2070
      %v2170 = vpack.c.bf16 %v2073, %v2072
      %v2171 = vpack.c.bf16 %v2075, %v2074
      %v2172 = vpack.c.bf16 %v2077, %v2076
      %v2173 = vpack.c.bf16 %v2079, %v2078
      %v2174 = vpack.c.bf16 %v2081, %v2080
      %v2175 = vpack.c.bf16 %v2083, %v2082
      %v2176 = vpack.c.bf16 %v2085, %v2084
      %v2177 = vpack.c.bf16 %v2087, %v2086
      %v2178 = vpack.c.bf16 %v2089, %v2088
      %v2179 = vpack.c.bf16 %v2091, %v2090
      %v2180 = vpack.c.bf16 %v2093, %v2092
      %v2181 = vpack.c.bf16 %v2095, %v2094
      %v2182 = vpack.c.bf16 %v2097, %v2096
      %v2183 = vpack.c.bf16 %v2099, %v2098
      %v2184 = vpack.c.bf16 %v2101, %v2100
      %v2185 = vpack.c.bf16 %v2103, %v2102
      %v2186 = vpack.c.bf16 %v2105, %v2104
      %v2187 = vpack.c.bf16 %v2107, %v2106
      %v2188 = vpack.c.bf16 %v2109, %v2108
      %v2189 = vpack.c.bf16 %v2111, %v2110
      %v2190 = vpack.c.bf16 %v2113, %v2112
      %v2191 = vpack.c.bf16 %v2115, %v2114
      %v2192 = vpack.c.bf16 %v2117, %v2116
      %v2193 = vpack.c.bf16 %v2119, %v2118
      %v2194 = vpack.c.bf16 %v2121, %v2120
      %v2195 = vpack.c.bf16 %v2123, %v2122
      %v2196 = vpack.c.bf16 %v2125, %v2124
      %v2197 = vpack.c.bf16 %v2127, %v2126
      %v2198 = vpack.c.bf16 %v2129, %v2128
      %v2199 = vpack.c.bf16 %v2131, %v2130
      %v2200 = vpack.c.bf16 %v2133, %v2132
      %v2201 = vpack.c.bf16 %v2135, %v2134
      %v2202 = vpack.c.bf16 %v2137, %v2136
      %v2203 = vpack.c.bf16 %v2139, %v2138
      %s2204 = scalar_lea.vmem %s1, 128
      %v2205 = vld [vmem:[%s2204] sm:$0xf]
      %v2206 = vld [vmem:[%s2204 + $0x4] sm:$0xf]
      %v2207 = vld [vmem:[%s2204 + $0x8] sm:$0xf]
      %v2208 = vld [vmem:[%s2204 + $0xc] sm:$0xf]
      %v2209 = vld [vmem:[%s2204 + $0x10] sm:$0xf]
      %v2210 = vld [vmem:[%s2204 + $0x14] sm:$0xf]
      %v2211 = vld [vmem:[%s2204 + $0x18] sm:$0xf]
      %v2212 = vld [vmem:[%s2204 + $0x1c] sm:$0xf]
      %v2213 = vld [vmem:[%s2204 + $0x20] sm:$0xf]
      %v2214 = vld [vmem:[%s2204 + $0x24] sm:$0xf]
      %v2215 = vld [vmem:[%s2204 + $0x28] sm:$0xf]
      %v2216 = vld [vmem:[%s2204 + $0x2c] sm:$0xf]
      %v2217 = vld [vmem:[%s2204 + $0x30] sm:$0xf]
      %v2218 = vld [vmem:[%s2204 + $0x34] sm:$0xf]
      %v2219 = vld [vmem:[%s2204 + $0x38] sm:$0xf]
      %v2220 = vld [vmem:[%s2204 + $0x3c] sm:$0xf]
      %s2221 = scalar_lea.vmem %s3, 2
      %v2222 = vld [vmem:[%s2221] sm:$0x1]
      %v2224 = vlaneseq
      %v2225 = vshrl.u32 %v2224, 7
      %v2226 = vsub.s32 0, %v2225
      %v2227 = vrot.slane %v2222, %v2226
      %v2245 = vunpack.c.l.b16 %v2205
      %v2246 = vunpack.c.l.b16 %v2206
      %v2247 = vunpack.c.l.b16 %v2207
      %v2248 = vunpack.c.l.b16 %v2208
      %v2249 = vunpack.c.l.b16 %v2209
      %v2250 = vunpack.c.l.b16 %v2210
      %v2251 = vunpack.c.l.b16 %v2211
      %v2252 = vunpack.c.l.b16 %v2212
      %v2253 = vunpack.c.l.b16 %v2213
      %v2254 = vunpack.c.l.b16 %v2214
      %v2255 = vunpack.c.l.b16 %v2215
      %v2256 = vunpack.c.l.b16 %v2216
      %v2257 = vunpack.c.l.b16 %v2217
      %v2258 = vunpack.c.l.b16 %v2218
      %v2259 = vunpack.c.l.b16 %v2219
      %v2260 = vunpack.c.l.b16 %v2220
      %v2261 = vpack.c.b16 %v2246, %v2245
      %v2262 = vpack.c.b16 %v2248, %v2247
      %v2263 = vpack.c.b16 %v2250, %v2249
      %v2264 = vpack.c.b16 %v2252, %v2251
      %v2265 = vpack.c.b16 %v2254, %v2253
      %v2266 = vpack.c.b16 %v2256, %v2255
      %v2267 = vpack.c.b16 %v2258, %v2257
      %v2268 = vpack.c.b16 %v2260, %v2259
      %2277 = vmatprep.subr.bf16.mxu0 0
      %2278 = vmatpush1.bf16.msra.mxu0 %v2261
      %2279 = vmatprep.subr.bf16.mxu0 0
      %2280 = vmatpush1.bf16.msra.mxu0 %v2262
      %2281 = vmatprep.subr.bf16.mxu0 0
      %2282 = vmatpush1.bf16.msra.mxu0 %v2263
      %2283 = vmatprep.subr.bf16.mxu0 0
      %2284 = vmatpush1.bf16.msra.mxu0 %v2264
      %2285 = vmatprep.subr.bf16.mxu0 0
      %2286 = vmatpush1.bf16.msra.mxu0 %v2265
      %2287 = vmatprep.subr.bf16.mxu0 0
      %2288 = vmatpush1.bf16.msra.mxu0 %v2266
      %2289 = vmatprep.subr.bf16.mxu0 0
      %2290 = vmatpush1.bf16.msra.mxu0 %v2267
      %2291 = vmatprep.subr.bf16.mxu0 0
      %2292 = vmatpush1.bf16.msra.mxu0 %v2268
      %2293 = vmatprep.subr.bf16.mxu0 0
      %2294 = vmatpush1.bf16.msra.mxu0 0
      %2295 = vmatprep.subr.bf16.mxu0 0
      %2296 = vmatpush1.bf16.msra.mxu0 0
      %2297 = vmatprep.subr.bf16.mxu0 0
      %2298 = vmatpush1.bf16.msra.mxu0 0
      %2299 = vmatprep.subr.bf16.mxu0 0
      %2300 = vmatpush1.bf16.msra.mxu0 0
      %2301 = vmatprep.subr.bf16.mxu0 0
      %2302 = vmatpush1.bf16.msra.mxu0 0
      %2303 = vmatprep.subr.bf16.mxu0 0
      %2304 = vmatpush1.bf16.msra.mxu0 0
      %2305 = vmatprep.subr.bf16.mxu0 0
      %2306 = vmatpush1.bf16.msra.mxu0 0
      %2307 = vmatprep.subr.bf16.mxu0 0
      %2308 = vmatpush1.bf16.msra.mxu0 0
      %2309 = vmatprep.mubr.bf16.mxu0 0
      %2310 = vmatmul.mubr.bf16.gmra.mrb[0].mxu0 %v2140
      %v2311 = vpop.f32.mrb[0].mxu0
      %v2312 = vadd.f32 %v2227, %v2311
      %v2313 = vpop.f32.mrb[0].mxu0
      %v2314 = vpop.f32.mrb[0].mxu0
      %v2315 = vadd.f32 %v2227, %v2314
      %v2316 = vpop.f32.mrb[0].mxu0
      %2317 = vmatprep.mubr.bf16.mxu0 0
      %2318 = vmatmul.mubr.bf16.gmra.mrb[0].mxu0 %v2141
      %v2319 = vpop.f32.mrb[0].mxu0
      %v2320 = vadd.f32 %v2227, %v2319
      %v2321 = vpop.f32.mrb[0].mxu0
      %v2322 = vpop.f32.mrb[0].mxu0
      %v2323 = vadd.f32 %v2227, %v2322
      %v2324 = vpop.f32.mrb[0].mxu0
      %2325 = vmatprep.mubr.bf16.mxu0 0
      %2326 = vmatmul.mubr.bf16.gmra.mrb[0].mxu0 %v2142
      %v2327 = vpop.f32.mrb[0].mxu0
      %v2328 = vadd.f32 %v2227, %v2327
      %v2329 = vpop.f32.mrb[0].mxu0
      %v2330 = vpop.f32.mrb[0].mxu0
      %v2331 = vadd.f32 %v2227, %v2330
      %v2332 = vpop.f32.mrb[0].mxu0
      %2333 = vmatprep.mubr.bf16.mxu0 0
      %2334 = vmatmul.mubr.bf16.gmra.mrb[0].mxu0 %v2143
      %v2335 = vpop.f32.mrb[0].mxu0
      %v2336 = vadd.f32 %v2227, %v2335
      %v2337 = vpop.f32.mrb[0].mxu0
      %v2338 = vpop.f32.mrb[0].mxu0
      %v2339 = vadd.f32 %v2227, %v2338
      %v2340 = vpop.f32.mrb[0].mxu0
      %2341 = vmatprep.mubr.bf16.mxu0 0
      %2342 = vmatmul.mubr.bf16.gmra.mrb[0].mxu0 %v2144
      %v2343 = vpop.f32.mrb[0].mxu0
      %v2344 = vadd.f32 %v2227, %v2343
      %v2345 = vpop.f32.mrb[0].mxu0
      %v2346 = vpop.f32.mrb[0].mxu0
      %v2347 = vadd.f32 %v2227, %v2346
      %v2348 = vpop.f32.mrb[0].mxu0
      %2349 = vmatprep.mubr.bf16.mxu0 0
      %2350 = vmatmul.mubr.bf16.gmra.mrb[0].mxu0 %v2145
      %v2351 = vpop.f32.mrb[0].mxu0
      %v2352 = vadd.f32 %v2227, %v2351
      %v2353 = vpop.f32.mrb[0].mxu0
      %v2354 = vpop.f32.mrb[0].mxu0
      %v2355 = vadd.f32 %v2227, %v2354
      %v2356 = vpop.f32.mrb[0].mxu0
      %2357 = vmatprep.mubr.bf16.mxu0 0
      %2358 = vmatmul.mubr.bf16.gmra.mrb[0].mxu0 %v2146
      %v2359 = vpop.f32.mrb[0].mxu0
      %v2360 = vadd.f32 %v2227, %v2359
      %v2361 = vpop.f32.mrb[0].mxu0
      %v2362 = vpop.f32.mrb[0].mxu0
      %v2363 = vadd.f32 %v2227, %v2362
      %v2364 = vpop.f32.mrb[0].mxu0
      %2365 = vmatprep.mubr.bf16.mxu0 0
      %2366 = vmatmul.mubr.bf16.gmra.mrb[0].mxu0 %v2147
      %v2367 = vpop.f32.mrb[0].mxu0
      %v2368 = vadd.f32 %v2227, %v2367
      %v2369 = vpop.f32.mrb[0].mxu0
      %v2370 = vpop.f32.mrb[0].mxu0
      %v2371 = vadd.f32 %v2227, %v2370
      %v2372 = vpop.f32.mrb[0].mxu0
      %2373 = vmatprep.mubr.bf16.mxu0 0
      %2374 = vmatmul.mubr.bf16.gmra.mrb[0].mxu0 %v2148
      %v2375 = vpop.f32.mrb[0].mxu0
      %v2376 = vadd.f32 %v2227, %v2375
      %v2377 = vpop.f32.mrb[0].mxu0
      %v2378 = vpop.f32.mrb[0].mxu0
      %v2379 = vadd.f32 %v2227, %v2378
      %v2380 = vpop.f32.mrb[0].mxu0
      %2381 = vmatprep.mubr.bf16.mxu0 0
      %2382 = vmatmul.mubr.bf16.gmra.mrb[0].mxu0 %v2149
      %v2383 = vpop.f32.mrb[0].mxu0
      %v2384 = vadd.f32 %v2227, %v2383
      %v2385 = vpop.f32.mrb[0].mxu0
      %v2386 = vpop.f32.mrb[0].mxu0
      %v2387 = vadd.f32 %v2227, %v2386
      %v2388 = vpop.f32.mrb[0].mxu0
      %2389 = vmatprep.mubr.bf16.mxu0 0
      %2390 = vmatmul.mubr.bf16.gmra.mrb[0].mxu0 %v2150
      %v2391 = vpop.f32.mrb[0].mxu0
      %v2392 = vadd.f32 %v2227, %v2391
      %v2393 = vpop.f32.mrb[0].mxu0
      %v2394 = vpop.f32.mrb[0].mxu0
      %v2395 = vadd.f32 %v2227, %v2394
      %v2396 = vpop.f32.mrb[0].mxu0
      %2397 = vmatprep.mubr.bf16.mxu0 0
      %2398 = vmatmul.mubr.bf16.gmra.mrb[0].mxu0 %v2151
      %v2399 = vpop.f32.mrb[0].mxu0
      %v2400 = vadd.f32 %v2227, %v2399
      %v2401 = vpop.f32.mrb[0].mxu0
      %v2402 = vpop.f32.mrb[0].mxu0
      %v2403 = vadd.f32 %v2227, %v2402
      %v2404 = vpop.f32.mrb[0].mxu0
      %2405 = vmatprep.mubr.bf16.mxu0 0
      %2406 = vmatmul.mubr.bf16.gmra.mrb[0].mxu0 %v2152
      %v2407 = vpop.f32.mrb[0].mxu0
      %v2408 = vadd.f32 %v2227, %v2407
      %v2409 = vpop.f32.mrb[0].mxu0
      %v2410 = vpop.f32.mrb[0].mxu0
      %v2411 = vadd.f32 %v2227, %v2410
      %v2412 = vpop.f32.mrb[0].mxu0
      %2413 = vmatprep.mubr.bf16.mxu0 0
      %2414 = vmatmul.mubr.bf16.gmra.mrb[0].mxu0 %v2153
      %v2415 = vpop.f32.mrb[0].mxu0
      %v2416 = vadd.f32 %v2227, %v2415
      %v2417 = vpop.f32.mrb[0].mxu0
      %v2418 = vpop.f32.mrb[0].mxu0
      %v2419 = vadd.f32 %v2227, %v2418
      %v2420 = vpop.f32.mrb[0].mxu0
      %2421 = vmatprep.mubr.bf16.mxu0 0
      %2422 = vmatmul.mubr.bf16.gmra.mrb[0].mxu0 %v2154
      %v2423 = vpop.f32.mrb[0].mxu0
      %v2424 = vadd.f32 %v2227, %v2423
      %v2425 = vpop.f32.mrb[0].mxu0
      %v2426 = vpop.f32.mrb[0].mxu0
      %v2427 = vadd.f32 %v2227, %v2426
      %v2428 = vpop.f32.mrb[0].mxu0
      %2429 = vmatprep.mubr.bf16.mxu0 0
      %2430 = vmatmul.mubr.bf16.gmra.mrb[0].mxu0 %v2155
      %v2431 = vpop.f32.mrb[0].mxu0
      %v2432 = vadd.f32 %v2227, %v2431
      %v2433 = vpop.f32.mrb[0].mxu0
      %v2434 = vpop.f32.mrb[0].mxu0
      %v2435 = vadd.f32 %v2227, %v2434
      %v2436 = vpop.f32.mrb[0].mxu0
      %2437 = vmatprep.mubr.bf16.mxu0 0
      %2438 = vmatmul.mubr.bf16.gmra.mrb[0].mxu0 %v2156
      %v2439 = vpop.f32.mrb[0].mxu0
      %v2440 = vadd.f32 %v2227, %v2439
      %v2441 = vpop.f32.mrb[0].mxu0
      %v2442 = vpop.f32.mrb[0].mxu0
      %v2443 = vadd.f32 %v2227, %v2442
      %v2444 = vpop.f32.mrb[0].mxu0
      %2445 = vmatprep.mubr.bf16.mxu0 0
      %2446 = vmatmul.mubr.bf16.gmra.mrb[0].mxu0 %v2157
      %v2447 = vpop.f32.mrb[0].mxu0
      %v2448 = vadd.f32 %v2227, %v2447
      %v2449 = vpop.f32.mrb[0].mxu0
      %v2450 = vpop.f32.mrb[0].mxu0
      %v2451 = vadd.f32 %v2227, %v2450
      %v2452 = vpop.f32.mrb[0].mxu0
      %2453 = vmatprep.mubr.bf16.mxu0 0
      %2454 = vmatmul.mubr.bf16.gmra.mrb[0].mxu0 %v2158
      %v2455 = vpop.f32.mrb[0].mxu0
      %v2456 = vadd.f32 %v2227, %v2455
      %v2457 = vpop.f32.mrb[0].mxu0
      %v2458 = vpop.f32.mrb[0].mxu0
      %v2459 = vadd.f32 %v2227, %v2458
      %v2460 = vpop.f32.mrb[0].mxu0
      %2461 = vmatprep.mubr.bf16.mxu0 0
      %2462 = vmatmul.mubr.bf16.gmra.mrb[0].mxu0 %v2159
      %v2463 = vpop.f32.mrb[0].mxu0
      %v2464 = vadd.f32 %v2227, %v2463
      %v2465 = vpop.f32.mrb[0].mxu0
      %v2466 = vpop.f32.mrb[0].mxu0
      %v2467 = vadd.f32 %v2227, %v2466
      %v2468 = vpop.f32.mrb[0].mxu0
      %2469 = vmatprep.mubr.bf16.mxu0 0
      %2470 = vmatmul.mubr.bf16.gmra.mrb[0].mxu0 %v2160
      %v2471 = vpop.f32.mrb[0].mxu0
      %v2472 = vadd.f32 %v2227, %v2471
      %v2473 = vpop.f32.mrb[0].mxu0
      %v2474 = vpop.f32.mrb[0].mxu0
      %v2475 = vadd.f32 %v2227, %v2474
      %v2476 = vpop.f32.mrb[0].mxu0
      %2477 = vmatprep.mubr.bf16.mxu0 0
      %2478 = vmatmul.mubr.bf16.gmra.mrb[0].mxu0 %v2161
      %v2479 = vpop.f32.mrb[0].mxu0
      %v2480 = vadd.f32 %v2227, %v2479
      %v2481 = vpop.f32.mrb[0].mxu0
      %v2482 = vpop.f32.mrb[0].mxu0
      %v2483 = vadd.f32 %v2227, %v2482
      %v2484 = vpop.f32.mrb[0].mxu0
      %2485 = vmatprep.mubr.bf16.mxu0 0
      %2486 = vmatmul.mubr.bf16.gmra.mrb[0].mxu0 %v2162
      %v2487 = vpop.f32.mrb[0].mxu0
      %v2488 = vadd.f32 %v2227, %v2487
      %v2489 = vpop.f32.mrb[0].mxu0
      %v2490 = vpop.f32.mrb[0].mxu0
      %v2491 = vadd.f32 %v2227, %v2490
      %v2492 = vpop.f32.mrb[0].mxu0
      %2493 = vmatprep.mubr.bf16.mxu0 0
      %2494 = vmatmul.mubr.bf16.gmra.mrb[0].mxu0 %v2163
      %v2495 = vpop.f32.mrb[0].mxu0
      %v2496 = vadd.f32 %v2227, %v2495
      %v2497 = vpop.f32.mrb[0].mxu0
      %v2498 = vpop.f32.mrb[0].mxu0
      %v2499 = vadd.f32 %v2227, %v2498
      %v2500 = vpop.f32.mrb[0].mxu0
      %2501 = vmatprep.mubr.bf16.mxu0 0
      %2502 = vmatmul.mubr.bf16.gmra.mrb[0].mxu0 %v2164
      %v2503 = vpop.f32.mrb[0].mxu0
      %v2504 = vadd.f32 %v2227, %v2503
      %v2505 = vpop.f32.mrb[0].mxu0
      %v2506 = vpop.f32.mrb[0].mxu0
      %v2507 = vadd.f32 %v2227, %v2506
      %v2508 = vpop.f32.mrb[0].mxu0
      %2509 = vmatprep.mubr.bf16.mxu0 0
      %2510 = vmatmul.mubr.bf16.gmra.mrb[0].mxu0 %v2165
      %v2511 = vpop.f32.mrb[0].mxu0
      %v2512 = vadd.f32 %v2227, %v2511
      %v2513 = vpop.f32.mrb[0].mxu0
      %v2514 = vpop.f32.mrb[0].mxu0
      %v2515 = vadd.f32 %v2227, %v2514
      %v2516 = vpop.f32.mrb[0].mxu0
      %2517 = vmatprep.mubr.bf16.mxu0 0
      %2518 = vmatmul.mubr.bf16.gmra.mrb[0].mxu0 %v2166
      %v2519 = vpop.f32.mrb[0].mxu0
      %v2520 = vadd.f32 %v2227, %v2519
      %v2521 = vpop.f32.mrb[0].mxu0
      %v2522 = vpop.f32.mrb[0].mxu0
      %v2523 = vadd.f32 %v2227, %v2522
      %v2524 = vpop.f32.mrb[0].mxu0
      %2525 = vmatprep.mubr.bf16.mxu0 0
      %2526 = vmatmul.mubr.bf16.gmra.mrb[0].mxu0 %v2167
      %v2527 = vpop.f32.mrb[0].mxu0
      %v2528 = vadd.f32 %v2227, %v2527
      %v2529 = vpop.f32.mrb[0].mxu0
      %v2530 = vpop.f32.mrb[0].mxu0
      %v2531 = vadd.f32 %v2227, %v2530
      %v2532 = vpop.f32.mrb[0].mxu0
      %2533 = vmatprep.mubr.bf16.mxu0 0
      %2534 = vmatmul.mubr.bf16.gmra.mrb[0].mxu0 %v2168
      %v2535 = vpop.f32.mrb[0].mxu0
      %v2536 = vadd.f32 %v2227, %v2535
      %v2537 = vpop.f32.mrb[0].mxu0
      %v2538 = vpop.f32.mrb[0].mxu0
      %v2539 = vadd.f32 %v2227, %v2538
      %v2540 = vpop.f32.mrb[0].mxu0
      %2541 = vmatprep.mubr.bf16.mxu0 0
      %2542 = vmatmul.mubr.bf16.gmra.mrb[0].mxu0 %v2169
      %v2543 = vpop.f32.mrb[0].mxu0
      %v2544 = vadd.f32 %v2227, %v2543
      %v2545 = vpop.f32.mrb[0].mxu0
      %v2546 = vpop.f32.mrb[0].mxu0
      %v2547 = vadd.f32 %v2227, %v2546
      %v2548 = vpop.f32.mrb[0].mxu0
      %2549 = vmatprep.mubr.bf16.mxu0 0
      %2550 = vmatmul.mubr.bf16.gmra.mrb[0].mxu0 %v2170
      %v2551 = vpop.f32.mrb[0].mxu0
      %v2552 = vadd.f32 %v2227, %v2551
      %v2553 = vpop.f32.mrb[0].mxu0
      %v2554 = vpop.f32.mrb[0].mxu0
      %v2555 = vadd.f32 %v2227, %v2554
      %v2556 = vpop.f32.mrb[0].mxu0
      %2557 = vmatprep.mubr.bf16.mxu0 0
      %2558 = vmatmul.mubr.bf16.gmra.mrb[0].mxu0 %v2171
      %v2559 = vpop.f32.mrb[0].mxu0
      %v2560 = vadd.f32 %v2227, %v2559
      %v2561 = vpop.f32.mrb[0].mxu0
      %v2562 = vpop.f32.mrb[0].mxu0
      %v2563 = vadd.f32 %v2227, %v2562
      %v2564 = vpop.f32.mrb[0].mxu0
      %2565 = vmatprep.mubr.bf16.mxu0 0
      %2566 = vmatmul.mubr.bf16.gmra.mrb[0].mxu0 %v2172
      %v2567 = vpop.f32.mrb[0].mxu0
      %v2568 = vadd.f32 %v2227, %v2567
      %v2569 = vpop.f32.mrb[0].mxu0
      %v2570 = vpop.f32.mrb[0].mxu0
      %v2571 = vadd.f32 %v2227, %v2570
      %v2572 = vpop.f32.mrb[0].mxu0
      %2573 = vmatprep.mubr.bf16.mxu0 0
      %2574 = vmatmul.mubr.bf16.gmra.mrb[0].mxu0 %v2173
      %v2575 = vpop.f32.mrb[0].mxu0
      %v2576 = vadd.f32 %v2227, %v2575
      %v2577 = vpop.f32.mrb[0].mxu0
      %v2578 = vpop.f32.mrb[0].mxu0
      %v2579 = vadd.f32 %v2227, %v2578
      %v2580 = vpop.f32.mrb[0].mxu0
      %2581 = vmatprep.mubr.bf16.mxu0 0
      %2582 = vmatmul.mubr.bf16.gmra.mrb[0].mxu0 %v2174
      %v2583 = vpop.f32.mrb[0].mxu0
      %v2584 = vadd.f32 %v2227, %v2583
      %v2585 = vpop.f32.mrb[0].mxu0
      %v2586 = vpop.f32.mrb[0].mxu0
      %v2587 = vadd.f32 %v2227, %v2586
      %v2588 = vpop.f32.mrb[0].mxu0
      %2589 = vmatprep.mubr.bf16.mxu0 0
      %2590 = vmatmul.mubr.bf16.gmra.mrb[0].mxu0 %v2175
      %v2591 = vpop.f32.mrb[0].mxu0
      %v2592 = vadd.f32 %v2227, %v2591
      %v2593 = vpop.f32.mrb[0].mxu0
      %v2594 = vpop.f32.mrb[0].mxu0
      %v2595 = vadd.f32 %v2227, %v2594
      %v2596 = vpop.f32.mrb[0].mxu0
      %2597 = vmatprep.mubr.bf16.mxu0 0
      %2598 = vmatmul.mubr.bf16.gmra.mrb[0].mxu0 %v2176
      %v2599 = vpop.f32.mrb[0].mxu0
      %v2600 = vadd.f32 %v2227, %v2599
      %v2601 = vpop.f32.mrb[0].mxu0
      %v2602 = vpop.f32.mrb[0].mxu0
      %v2603 = vadd.f32 %v2227, %v2602
      %v2604 = vpop.f32.mrb[0].mxu0
      %2605 = vmatprep.mubr.bf16.mxu0 0
      %2606 = vmatmul.mubr.bf16.gmra.mrb[0].mxu0 %v2177
      %v2607 = vpop.f32.mrb[0].mxu0
      %v2608 = vadd.f32 %v2227, %v2607
      %v2609 = vpop.f32.mrb[0].mxu0
      %v2610 = vpop.f32.mrb[0].mxu0
      %v2611 = vadd.f32 %v2227, %v2610
      %v2612 = vpop.f32.mrb[0].mxu0
      %2613 = vmatprep.mubr.bf16.mxu0 0
      %2614 = vmatmul.mubr.bf16.gmra.mrb[0].mxu0 %v2178
      %v2615 = vpop.f32.mrb[0].mxu0
      %v2616 = vadd.f32 %v2227, %v2615
      %v2617 = vpop.f32.mrb[0].mxu0
      %v2618 = vpop.f32.mrb[0].mxu0
      %v2619 = vadd.f32 %v2227, %v2618
      %v2620 = vpop.f32.mrb[0].mxu0
      %2621 = vmatprep.mubr.bf16.mxu0 0
      %2622 = vmatmul.mubr.bf16.gmra.mrb[0].mxu0 %v2179
      %v2623 = vpop.f32.mrb[0].mxu0
      %v2624 = vadd.f32 %v2227, %v2623
      %v2625 = vpop.f32.mrb[0].mxu0
      %v2626 = vpop.f32.mrb[0].mxu0
      %v2627 = vadd.f32 %v2227, %v2626
      %v2628 = vpop.f32.mrb[0].mxu0
      %2629 = vmatprep.mubr.bf16.mxu0 0
      %2630 = vmatmul.mubr.bf16.gmra.mrb[0].mxu0 %v2180
      %v2631 = vpop.f32.mrb[0].mxu0
      %v2632 = vadd.f32 %v2227, %v2631
      %v2633 = vpop.f32.mrb[0].mxu0
      %v2634 = vpop.f32.mrb[0].mxu0
      %v2635 = vadd.f32 %v2227, %v2634
      %v2636 = vpop.f32.mrb[0].mxu0
      %2637 = vmatprep.mubr.bf16.mxu0 0
      %2638 = vmatmul.mubr.bf16.gmra.mrb[0].mxu0 %v2181
      %v2639 = vpop.f32.mrb[0].mxu0
      %v2640 = vadd.f32 %v2227, %v2639
      %v2641 = vpop.f32.mrb[0].mxu0
      %v2642 = vpop.f32.mrb[0].mxu0
      %v2643 = vadd.f32 %v2227, %v2642
      %v2644 = vpop.f32.mrb[0].mxu0
      %2645 = vmatprep.mubr.bf16.mxu0 0
      %2646 = vmatmul.mubr.bf16.gmra.mrb[0].mxu0 %v2182
      %v2647 = vpop.f32.mrb[0].mxu0
      %v2648 = vadd.f32 %v2227, %v2647
      %v2649 = vpop.f32.mrb[0].mxu0
      %v2650 = vpop.f32.mrb[0].mxu0
      %v2651 = vadd.f32 %v2227, %v2650
      %v2652 = vpop.f32.mrb[0].mxu0
      %2653 = vmatprep.mubr.bf16.mxu0 0
      %2654 = vmatmul.mubr.bf16.gmra.mrb[0].mxu0 %v2183
      %v2655 = vpop.f32.mrb[0].mxu0
      %v2656 = vadd.f32 %v2227, %v2655
      %v2657 = vpop.f32.mrb[0].mxu0
      %v2658 = vpop.f32.mrb[0].mxu0
      %v2659 = vadd.f32 %v2227, %v2658
      %v2660 = vpop.f32.mrb[0].mxu0
      %2661 = vmatprep.mubr.bf16.mxu0 0
      %2662 = vmatmul.mubr.bf16.gmra.mrb[0].mxu0 %v2184
      %v2663 = vpop.f32.mrb[0].mxu0
      %v2664 = vadd.f32 %v2227, %v2663
      %v2665 = vpop.f32.mrb[0].mxu0
      %v2666 = vpop.f32.mrb[0].mxu0
      %v2667 = vadd.f32 %v2227, %v2666
      %v2668 = vpop.f32.mrb[0].mxu0
      %2669 = vmatprep.mubr.bf16.mxu0 0
      %2670 = vmatmul.mubr.bf16.gmra.mrb[0].mxu0 %v2185
      %v2671 = vpop.f32.mrb[0].mxu0
      %v2672 = vadd.f32 %v2227, %v2671
      %v2673 = vpop.f32.mrb[0].mxu0
      %v2674 = vpop.f32.mrb[0].mxu0
      %v2675 = vadd.f32 %v2227, %v2674
      %v2676 = vpop.f32.mrb[0].mxu0
      %2677 = vmatprep.mubr.bf16.mxu0 0
      %2678 = vmatmul.mubr.bf16.gmra.mrb[0].mxu0 %v2186
      %v2679 = vpop.f32.mrb[0].mxu0
      %v2680 = vadd.f32 %v2227, %v2679
      %v2681 = vpop.f32.mrb[0].mxu0
      %v2682 = vpop.f32.mrb[0].mxu0
      %v2683 = vadd.f32 %v2227, %v2682
      %v2684 = vpop.f32.mrb[0].mxu0
      %2685 = vmatprep.mubr.bf16.mxu0 0
      %2686 = vmatmul.mubr.bf16.gmra.mrb[0].mxu0 %v2187
      %v2687 = vpop.f32.mrb[0].mxu0
      %v2688 = vadd.f32 %v2227, %v2687
      %v2689 = vpop.f32.mrb[0].mxu0
      %v2690 = vpop.f32.mrb[0].mxu0
      %v2691 = vadd.f32 %v2227, %v2690
      %v2692 = vpop.f32.mrb[0].mxu0
      %2693 = vmatprep.mubr.bf16.mxu0 0
      %2694 = vmatmul.mubr.bf16.gmra.mrb[0].mxu0 %v2188
      %v2695 = vpop.f32.mrb[0].mxu0
      %v2696 = vadd.f32 %v2227, %v2695
      %v2697 = vpop.f32.mrb[0].mxu0
      %v2698 = vpop.f32.mrb[0].mxu0
      %v2699 = vadd.f32 %v2227, %v2698
      %v2700 = vpop.f32.mrb[0].mxu0
      %2701 = vmatprep.mubr.bf16.mxu0 0
      %2702 = vmatmul.mubr.bf16.gmra.mrb[0].mxu0 %v2189
      %v2703 = vpop.f32.mrb[0].mxu0
      %v2704 = vadd.f32 %v2227, %v2703
      %v2705 = vpop.f32.mrb[0].mxu0
      %v2706 = vpop.f32.mrb[0].mxu0
      %v2707 = vadd.f32 %v2227, %v2706
      %v2708 = vpop.f32.mrb[0].mxu0
      %2709 = vmatprep.mubr.bf16.mxu0 0
      %2710 = vmatmul.mubr.bf16.gmra.mrb[0].mxu0 %v2190
      %v2711 = vpop.f32.mrb[0].mxu0
      %v2712 = vadd.f32 %v2227, %v2711
      %v2713 = vpop.f32.mrb[0].mxu0
      %v2714 = vpop.f32.mrb[0].mxu0
      %v2715 = vadd.f32 %v2227, %v2714
      %v2716 = vpop.f32.mrb[0].mxu0
      %2717 = vmatprep.mubr.bf16.mxu0 0
      %2718 = vmatmul.mubr.bf16.gmra.mrb[0].mxu0 %v2191
      %v2719 = vpop.f32.mrb[0].mxu0
      %v2720 = vadd.f32 %v2227, %v2719
      %v2721 = vpop.f32.mrb[0].mxu0
      %v2722 = vpop.f32.mrb[0].mxu0
      %v2723 = vadd.f32 %v2227, %v2722
      %v2724 = vpop.f32.mrb[0].mxu0
      %2725 = vmatprep.mubr.bf16.mxu0 0
      %2726 = vmatmul.mubr.bf16.gmra.mrb[0].mxu0 %v2192
      %v2727 = vpop.f32.mrb[0].mxu0
      %v2728 = vadd.f32 %v2227, %v2727
      %v2729 = vpop.f32.mrb[0].mxu0
      %v2730 = vpop.f32.mrb[0].mxu0
      %v2731 = vadd.f32 %v2227, %v2730
      %v2732 = vpop.f32.mrb[0].mxu0
      %2733 = vmatprep.mubr.bf16.mxu0 0
      %2734 = vmatmul.mubr.bf16.gmra.mrb[0].mxu0 %v2193
      %v2735 = vpop.f32.mrb[0].mxu0
      %v2736 = vadd.f32 %v2227, %v2735
      %v2737 = vpop.f32.mrb[0].mxu0
      %v2738 = vpop.f32.mrb[0].mxu0
      %v2739 = vadd.f32 %v2227, %v2738
      %v2740 = vpop.f32.mrb[0].mxu0
      %2741 = vmatprep.mubr.bf16.mxu0 0
      %2742 = vmatmul.mubr.bf16.gmra.mrb[0].mxu0 %v2194
      %v2743 = vpop.f32.mrb[0].mxu0
      %v2744 = vadd.f32 %v2227, %v2743
      %v2745 = vpop.f32.mrb[0].mxu0
      %v2746 = vpop.f32.mrb[0].mxu0
      %v2747 = vadd.f32 %v2227, %v2746
      %v2748 = vpop.f32.mrb[0].mxu0
      %2749 = vmatprep.mubr.bf16.mxu0 0
      %2750 = vmatmul.mubr.bf16.gmra.mrb[0].mxu0 %v2195
      %v2751 = vpop.f32.mrb[0].mxu0
      %v2752 = vadd.f32 %v2227, %v2751
      %v2753 = vpop.f32.mrb[0].mxu0
      %v2754 = vpop.f32.mrb[0].mxu0
      %v2755 = vadd.f32 %v2227, %v2754
      %v2756 = vpop.f32.mrb[0].mxu0
      %2757 = vmatprep.mubr.bf16.mxu0 0
      %2758 = vmatmul.mubr.bf16.gmra.mrb[0].mxu0 %v2196
      %v2759 = vpop.f32.mrb[0].mxu0
      %v2760 = vadd.f32 %v2227, %v2759
      %v2761 = vpop.f32.mrb[0].mxu0
      %v2762 = vpop.f32.mrb[0].mxu0
      %v2763 = vadd.f32 %v2227, %v2762
      %v2764 = vpop.f32.mrb[0].mxu0
      %2765 = vmatprep.mubr.bf16.mxu0 0
      %2766 = vmatmul.mubr.bf16.gmra.mrb[0].mxu0 %v2197
      %v2767 = vpop.f32.mrb[0].mxu0
      %v2768 = vadd.f32 %v2227, %v2767
      %v2769 = vpop.f32.mrb[0].mxu0
      %v2770 = vpop.f32.mrb[0].mxu0
      %v2771 = vadd.f32 %v2227, %v2770
      %v2772 = vpop.f32.mrb[0].mxu0
      %2773 = vmatprep.mubr.bf16.mxu0 0
      %2774 = vmatmul.mubr.bf16.gmra.mrb[0].mxu0 %v2198
      %v2775 = vpop.f32.mrb[0].mxu0
      %v2776 = vadd.f32 %v2227, %v2775
      %v2777 = vpop.f32.mrb[0].mxu0
      %v2778 = vpop.f32.mrb[0].mxu0
      %v2779 = vadd.f32 %v2227, %v2778
      %v2780 = vpop.f32.mrb[0].mxu0
      %2781 = vmatprep.mubr.bf16.mxu0 0
      %2782 = vmatmul.mubr.bf16.gmra.mrb[0].mxu0 %v2199
      %v2783 = vpop.f32.mrb[0].mxu0
      %v2784 = vadd.f32 %v2227, %v2783
      %v2785 = vpop.f32.mrb[0].mxu0
      %v2786 = vpop.f32.mrb[0].mxu0
      %v2787 = vadd.f32 %v2227, %v2786
      %v2788 = vpop.f32.mrb[0].mxu0
      %2789 = vmatprep.mubr.bf16.mxu0 0
      %2790 = vmatmul.mubr.bf16.gmra.mrb[0].mxu0 %v2200
      %v2791 = vpop.f32.mrb[0].mxu0
      %v2792 = vadd.f32 %v2227, %v2791
      %v2793 = vpop.f32.mrb[0].mxu0
      %v2794 = vpop.f32.mrb[0].mxu0
      %v2795 = vadd.f32 %v2227, %v2794
      %v2796 = vpop.f32.mrb[0].mxu0
      %2797 = vmatprep.mubr.bf16.mxu0 0
      %2798 = vmatmul.mubr.bf16.gmra.mrb[0].mxu0 %v2201
      %v2799 = vpop.f32.mrb[0].mxu0
      %v2800 = vadd.f32 %v2227, %v2799
      %v2801 = vpop.f32.mrb[0].mxu0
      %v2802 = vpop.f32.mrb[0].mxu0
      %v2803 = vadd.f32 %v2227, %v2802
      %v2804 = vpop.f32.mrb[0].mxu0
      %2805 = vmatprep.mubr.bf16.mxu0 0
      %2806 = vmatmul.mubr.bf16.gmra.mrb[0].mxu0 %v2202
      %v2807 = vpop.f32.mrb[0].mxu0
      %v2808 = vadd.f32 %v2227, %v2807
      %v2809 = vpop.f32.mrb[0].mxu0
      %v2810 = vpop.f32.mrb[0].mxu0
      %v2811 = vadd.f32 %v2227, %v2810
      %v2812 = vpop.f32.mrb[0].mxu0
      %2813 = vmatprep.mubr.bf16.mxu0 0
      %2814 = vmatmul.mubr.bf16.gmra.mrb[0].mxu0 %v2203
      %v2815 = vpop.f32.mrb[0].mxu0
      %v2816 = vadd.f32 %v2227, %v2815
      %v2817 = vpop.f32.mrb[0].mxu0
      %v2818 = vpop.f32.mrb[0].mxu0
      %v2819 = vadd.f32 %v2227, %v2818
      %v2820 = vpop.f32.mrb[0].mxu0
      %2821 = vdwg.mxu0
      %v2822 = vmax.f32 %v2312, 0.0
      %v2823 = vmax.f32 %v2315, 0.0
      %v2824 = vmax.f32 %v2320, 0.0
      %v2825 = vmax.f32 %v2323, 0.0
      %v2826 = vmax.f32 %v2328, 0.0
      %v2827 = vmax.f32 %v2331, 0.0
      %v2828 = vmax.f32 %v2336, 0.0
      %v2829 = vmax.f32 %v2339, 0.0
      %v2830 = vmax.f32 %v2344, 0.0
      %v2831 = vmax.f32 %v2347, 0.0
      %v2832 = vmax.f32 %v2352, 0.0
      %v2833 = vmax.f32 %v2355, 0.0
      %v2834 = vmax.f32 %v2360, 0.0
      %v2835 = vmax.f32 %v2363, 0.0
      %v2836 = vmax.f32 %v2368, 0.0
      %v2837 = vmax.f32 %v2371, 0.0
      %v2838 = vmax.f32 %v2376, 0.0
      %v2839 = vmax.f32 %v2379, 0.0
      %v2840 = vmax.f32 %v2384, 0.0
      %v2841 = vmax.f32 %v2387, 0.0
      %v2842 = vmax.f32 %v2392, 0.0
      %v2843 = vmax.f32 %v2395, 0.0
      %v2844 = vmax.f32 %v2400, 0.0
      %v2845 = vmax.f32 %v2403, 0.0
      %v2846 = vmax.f32 %v2408, 0.0
      %v2847 = vmax.f32 %v2411, 0.0
      %v2848 = vmax.f32 %v2416, 0.0
      %v2849 = vmax.f32 %v2419, 0.0
      %v2850 = vmax.f32 %v2424, 0.0
      %v2851 = vmax.f32 %v2427, 0.0
      %v2852 = vmax.f32 %v2432, 0.0
      %v2853 = vmax.f32 %v2435, 0.0
      %v2854 = vmax.f32 %v2440, 0.0
      %v2855 = vmax.f32 %v2443, 0.0
      %v2856 = vmax.f32 %v2448, 0.0
      %v2857 = vmax.f32 %v2451, 0.0
      %v2858 = vmax.f32 %v2456, 0.0
      %v2859 = vmax.f32 %v2459, 0.0
      %v2860 = vmax.f32 %v2464, 0.0
      %v2861 = vmax.f32 %v2467, 0.0
      %v2862 = vmax.f32 %v2472, 0.0
      %v2863 = vmax.f32 %v2475, 0.0
      %v2864 = vmax.f32 %v2480, 0.0
      %v2865 = vmax.f32 %v2483, 0.0
      %v2866 = vmax.f32 %v2488, 0.0
      %v2867 = vmax.f32 %v2491, 0.0
      %v2868 = vmax.f32 %v2496, 0.0
      %v2869 = vmax.f32 %v2499, 0.0
      %v2870 = vmax.f32 %v2504, 0.0
      %v2871 = vmax.f32 %v2507, 0.0
      %v2872 = vmax.f32 %v2512, 0.0
      %v2873 = vmax.f32 %v2515, 0.0
      %v2874 = vmax.f32 %v2520, 0.0
      %v2875 = vmax.f32 %v2523, 0.0
      %v2876 = vmax.f32 %v2528, 0.0
      %v2877 = vmax.f32 %v2531, 0.0
      %v2878 = vmax.f32 %v2536, 0.0
      %v2879 = vmax.f32 %v2539, 0.0
      %v2880 = vmax.f32 %v2544, 0.0
      %v2881 = vmax.f32 %v2547, 0.0
      %v2882 = vmax.f32 %v2552, 0.0
      %v2883 = vmax.f32 %v2555, 0.0
      %v2884 = vmax.f32 %v2560, 0.0
      %v2885 = vmax.f32 %v2563, 0.0
      %v2886 = vmax.f32 %v2568, 0.0
      %v2887 = vmax.f32 %v2571, 0.0
      %v2888 = vmax.f32 %v2576, 0.0
      %v2889 = vmax.f32 %v2579, 0.0
      %v2890 = vmax.f32 %v2584, 0.0
      %v2891 = vmax.f32 %v2587, 0.0
      %v2892 = vmax.f32 %v2592, 0.0
      %v2893 = vmax.f32 %v2595, 0.0
      %v2894 = vmax.f32 %v2600, 0.0
      %v2895 = vmax.f32 %v2603, 0.0
      %v2896 = vmax.f32 %v2608, 0.0
      %v2897 = vmax.f32 %v2611, 0.0
      %v2898 = vmax.f32 %v2616, 0.0
      %v2899 = vmax.f32 %v2619, 0.0
      %v2900 = vmax.f32 %v2624, 0.0
      %v2901 = vmax.f32 %v2627, 0.0
      %v2902 = vmax.f32 %v2632, 0.0
      %v2903 = vmax.f32 %v2635, 0.0
      %v2904 = vmax.f32 %v2640, 0.0
      %v2905 = vmax.f32 %v2643, 0.0
      %v2906 = vmax.f32 %v2648, 0.0
      %v2907 = vmax.f32 %v2651, 0.0
      %v2908 = vmax.f32 %v2656, 0.0
      %v2909 = vmax.f32 %v2659, 0.0
      %v2910 = vmax.f32 %v2664, 0.0
      %v2911 = vmax.f32 %v2667, 0.0
      %v2912 = vmax.f32 %v2672, 0.0
      %v2913 = vmax.f32 %v2675, 0.0
      %v2914 = vmax.f32 %v2680, 0.0
      %v2915 = vmax.f32 %v2683, 0.0
      %v2916 = vmax.f32 %v2688, 0.0
      %v2917 = vmax.f32 %v2691, 0.0
      %v2918 = vmax.f32 %v2696, 0.0
      %v2919 = vmax.f32 %v2699, 0.0
      %v2920 = vmax.f32 %v2704, 0.0
      %v2921 = vmax.f32 %v2707, 0.0
      %v2922 = vmax.f32 %v2712, 0.0
      %v2923 = vmax.f32 %v2715, 0.0
      %v2924 = vmax.f32 %v2720, 0.0
      %v2925 = vmax.f32 %v2723, 0.0
      %v2926 = vmax.f32 %v2728, 0.0
      %v2927 = vmax.f32 %v2731, 0.0
      %v2928 = vmax.f32 %v2736, 0.0
      %v2929 = vmax.f32 %v2739, 0.0
      %v2930 = vmax.f32 %v2744, 0.0
      %v2931 = vmax.f32 %v2747, 0.0
      %v2932 = vmax.f32 %v2752, 0.0
      %v2933 = vmax.f32 %v2755, 0.0
      %v2934 = vmax.f32 %v2760, 0.0
      %v2935 = vmax.f32 %v2763, 0.0
      %v2936 = vmax.f32 %v2768, 0.0
      %v2937 = vmax.f32 %v2771, 0.0
      %v2938 = vmax.f32 %v2776, 0.0
      %v2939 = vmax.f32 %v2779, 0.0
      %v2940 = vmax.f32 %v2784, 0.0
      %v2941 = vmax.f32 %v2787, 0.0
      %v2942 = vmax.f32 %v2792, 0.0
      %v2943 = vmax.f32 %v2795, 0.0
      %v2944 = vmax.f32 %v2800, 0.0
      %v2945 = vmax.f32 %v2803, 0.0
      %v2946 = vmax.f32 %v2808, 0.0
      %v2947 = vmax.f32 %v2811, 0.0
      %v2948 = vmax.f32 %v2816, 0.0
      %v2949 = vmax.f32 %v2819, 0.0
      %v2950 = vpack.c.bf16 %v2823, %v2822
      %v2951 = vpack.c.bf16 %v2825, %v2824
      %v2952 = vpack.c.bf16 %v2827, %v2826
      %v2953 = vpack.c.bf16 %v2829, %v2828
      %v2954 = vpack.c.bf16 %v2831, %v2830
      %v2955 = vpack.c.bf16 %v2833, %v2832
      %v2956 = vpack.c.bf16 %v2835, %v2834
      %v2957 = vpack.c.bf16 %v2837, %v2836
      %v2958 = vpack.c.bf16 %v2839, %v2838
      %v2959 = vpack.c.bf16 %v2841, %v2840
      %v2960 = vpack.c.bf16 %v2843, %v2842
      %v2961 = vpack.c.bf16 %v2845, %v2844
      %v2962 = vpack.c.bf16 %v2847, %v2846
      %v2963 = vpack.c.bf16 %v2849, %v2848
      %v2964 = vpack.c.bf16 %v2851, %v2850
      %v2965 = vpack.c.bf16 %v2853, %v2852
      %v2966 = vpack.c.bf16 %v2855, %v2854
      %v2967 = vpack.c.bf16 %v2857, %v2856
      %v2968 = vpack.c.bf16 %v2859, %v2858
      %v2969 = vpack.c.bf16 %v2861, %v2860
      %v2970 = vpack.c.bf16 %v2863, %v2862
      %v2971 = vpack.c.bf16 %v2865, %v2864
      %v2972 = vpack.c.bf16 %v2867, %v2866
      %v2973 = vpack.c.bf16 %v2869, %v2868
      %v2974 = vpack.c.bf16 %v2871, %v2870
      %v2975 = vpack.c.bf16 %v2873, %v2872
      %v2976 = vpack.c.bf16 %v2875, %v2874
      %v2977 = vpack.c.bf16 %v2877, %v2876
      %v2978 = vpack.c.bf16 %v2879, %v2878
      %v2979 = vpack.c.bf16 %v2881, %v2880
      %v2980 = vpack.c.bf16 %v2883, %v2882
      %v2981 = vpack.c.bf16 %v2885, %v2884
      %v2982 = vpack.c.bf16 %v2887, %v2886
      %v2983 = vpack.c.bf16 %v2889, %v2888
      %v2984 = vpack.c.bf16 %v2891, %v2890
      %v2985 = vpack.c.bf16 %v2893, %v2892
      %v2986 = vpack.c.bf16 %v2895, %v2894
      %v2987 = vpack.c.bf16 %v2897, %v2896
      %v2988 = vpack.c.bf16 %v2899, %v2898
      %v2989 = vpack.c.bf16 %v2901, %v2900
      %v2990 = vpack.c.bf16 %v2903, %v2902
      %v2991 = vpack.c.bf16 %v2905, %v2904
      %v2992 = vpack.c.bf16 %v2907, %v2906
      %v2993 = vpack.c.bf16 %v2909, %v2908
      %v2994 = vpack.c.bf16 %v2911, %v2910
      %v2995 = vpack.c.bf16 %v2913, %v2912
      %v2996 = vpack.c.bf16 %v2915, %v2914
      %v2997 = vpack.c.bf16 %v2917, %v2916
      %v2998 = vpack.c.bf16 %v2919, %v2918
      %v2999 = vpack.c.bf16 %v2921, %v2920
      %v3000 = vpack.c.bf16 %v2923, %v2922
      %v3001 = vpack.c.bf16 %v2925, %v2924
      %v3002 = vpack.c.bf16 %v2927, %v2926
      %v3003 = vpack.c.bf16 %v2929, %v2928
      %v3004 = vpack.c.bf16 %v2931, %v2930
      %v3005 = vpack.c.bf16 %v2933, %v2932
      %v3006 = vpack.c.bf16 %v2935, %v2934
      %v3007 = vpack.c.bf16 %v2937, %v2936
      %v3008 = vpack.c.bf16 %v2939, %v2938
      %v3009 = vpack.c.bf16 %v2941, %v2940
      %v3010 = vpack.c.bf16 %v2943, %v2942
      %v3011 = vpack.c.bf16 %v2945, %v2944
      %v3012 = vpack.c.bf16 %v2947, %v2946
      %v3013 = vpack.c.bf16 %v2949, %v2948
      %s3014 = scalar_lea.vmem %s1, 192
      %v3015 = vld [vmem:[%s3014] sm:$0xf]
      %v3016 = vld [vmem:[%s3014 + $0x4] sm:$0xf]
      %v3017 = vld [vmem:[%s3014 + $0x8] sm:$0xf]
      %v3018 = vld [vmem:[%s3014 + $0xc] sm:$0xf]
      %v3019 = vld [vmem:[%s3014 + $0x10] sm:$0xf]
      %v3020 = vld [vmem:[%s3014 + $0x14] sm:$0xf]
      %v3021 = vld [vmem:[%s3014 + $0x18] sm:$0xf]
      %v3022 = vld [vmem:[%s3014 + $0x1c] sm:$0xf]
      %v3023 = vld [vmem:[%s3014 + $0x20] sm:$0xf]
      %v3024 = vld [vmem:[%s3014 + $0x24] sm:$0xf]
      %v3025 = vld [vmem:[%s3014 + $0x28] sm:$0xf]
      %v3026 = vld [vmem:[%s3014 + $0x2c] sm:$0xf]
      %v3027 = vld [vmem:[%s3014 + $0x30] sm:$0xf]
      %v3028 = vld [vmem:[%s3014 + $0x34] sm:$0xf]
      %v3029 = vld [vmem:[%s3014 + $0x38] sm:$0xf]
      %v3030 = vld [vmem:[%s3014 + $0x3c] sm:$0xf]
      %s3031 = scalar_lea.vmem %s3, 3
      %v3032 = vld [vmem:[%s3031] sm:$0x1]
      %v3034 = vlaneseq
      %v3035 = vshrl.u32 %v3034, 7
      %v3036 = vsub.s32 0, %v3035
      %v3037 = vrot.slane %v3032, %v3036
      %v3055 = vunpack.c.l.b16 %v3015
      %v3056 = vunpack.c.l.b16 %v3016
      %v3057 = vunpack.c.l.b16 %v3017
      %v3058 = vunpack.c.l.b16 %v3018
      %v3059 = vunpack.c.l.b16 %v3019
      %v3060 = vunpack.c.l.b16 %v3020
      %v3061 = vunpack.c.l.b16 %v3021
      %v3062 = vunpack.c.l.b16 %v3022
      %v3063 = vunpack.c.l.b16 %v3023
      %v3064 = vunpack.c.l.b16 %v3024
      %v3065 = vunpack.c.l.b16 %v3025
      %v3066 = vunpack.c.l.b16 %v3026
      %v3067 = vunpack.c.l.b16 %v3027
      %v3068 = vunpack.c.l.b16 %v3028
      %v3069 = vunpack.c.l.b16 %v3029
      %v3070 = vunpack.c.l.b16 %v3030
      %v3071 = vpack.c.b16 %v3056, %v3055
      %v3072 = vpack.c.b16 %v3058, %v3057
      %v3073 = vpack.c.b16 %v3060, %v3059
      %v3074 = vpack.c.b16 %v3062, %v3061
      %v3075 = vpack.c.b16 %v3064, %v3063
      %v3076 = vpack.c.b16 %v3066, %v3065
      %v3077 = vpack.c.b16 %v3068, %v3067
      %v3078 = vpack.c.b16 %v3070, %v3069
      %3087 = vmatprep.subr.bf16.mxu0 0
      %3088 = vmatpush1.bf16.msra.mxu0 %v3071
      %3089 = vmatprep.subr.bf16.mxu0 0
      %3090 = vmatpush1.bf16.msra.mxu0 %v3072
      %3091 = vmatprep.subr.bf16.mxu0 0
      %3092 = vmatpush1.bf16.msra.mxu0 %v3073
      %3093 = vmatprep.subr.bf16.mxu0 0
      %3094 = vmatpush1.bf16.msra.mxu0 %v3074
      %3095 = vmatprep.subr.bf16.mxu0 0
      %3096 = vmatpush1.bf16.msra.mxu0 %v3075
      %3097 = vmatprep.subr.bf16.mxu0 0
      %3098 = vmatpush1.bf16.msra.mxu0 %v3076
      %3099 = vmatprep.subr.bf16.mxu0 0
      %3100 = vmatpush1.bf16.msra.mxu0 %v3077
      %3101 = vmatprep.subr.bf16.mxu0 0
      %3102 = vmatpush1.bf16.msra.mxu0 %v3078
      %3103 = vmatprep.subr.bf16.mxu0 0
      %3104 = vmatpush1.bf16.msra.mxu0 0
      %3105 = vmatprep.subr.bf16.mxu0 0
      %3106 = vmatpush1.bf16.msra.mxu0 0
      %3107 = vmatprep.subr.bf16.mxu0 0
      %3108 = vmatpush1.bf16.msra.mxu0 0
      %3109 = vmatprep.subr.bf16.mxu0 0
      %3110 = vmatpush1.bf16.msra.mxu0 0
      %3111 = vmatprep.subr.bf16.mxu0 0
      %3112 = vmatpush1.bf16.msra.mxu0 0
      %3113 = vmatprep.subr.bf16.mxu0 0
      %3114 = vmatpush1.bf16.msra.mxu0 0
      %3115 = vmatprep.subr.bf16.mxu0 0
      %3116 = vmatpush1.bf16.msra.mxu0 0
      %3117 = vmatprep.subr.bf16.mxu0 0
      %3118 = vmatpush1.bf16.msra.mxu0 0
      %3119 = vmatprep.mubr.bf16.mxu0 0
      %3120 = vmatmul.mubr.bf16.gmra.mrb[0].mxu0 %v2950
      %v3121 = vpop.f32.mrb[0].mxu0
      %v3122 = vadd.f32 %v3037, %v3121
      %v3123 = vpop.f32.mrb[0].mxu0
      %v3124 = vpop.f32.mrb[0].mxu0
      %v3125 = vadd.f32 %v3037, %v3124
      %v3126 = vpop.f32.mrb[0].mxu0
      %3127 = vmatprep.mubr.bf16.mxu0 0
      %3128 = vmatmul.mubr.bf16.gmra.mrb[0].mxu0 %v2951
      %v3129 = vpop.f32.mrb[0].mxu0
      %v3130 = vadd.f32 %v3037, %v3129
      %v3131 = vpop.f32.mrb[0].mxu0
      %v3132 = vpop.f32.mrb[0].mxu0
      %v3133 = vadd.f32 %v3037, %v3132
      %v3134 = vpop.f32.mrb[0].mxu0
      %3135 = vmatprep.mubr.bf16.mxu0 0
      %3136 = vmatmul.mubr.bf16.gmra.mrb[0].mxu0 %v2952
      %v3137 = vpop.f32.mrb[0].mxu0
      %v3138 = vadd.f32 %v3037, %v3137
      %v3139 = vpop.f32.mrb[0].mxu0
      %v3140 = vpop.f32.mrb[0].mxu0
      %v3141 = vadd.f32 %v3037, %v3140
      %v3142 = vpop.f32.mrb[0].mxu0
      %3143 = vmatprep.mubr.bf16.mxu0 0
      %3144 = vmatmul.mubr.bf16.gmra.mrb[0].mxu0 %v2953
      %v3145 = vpop.f32.mrb[0].mxu0
      %v3146 = vadd.f32 %v3037, %v3145
      %v3147 = vpop.f32.mrb[0].mxu0
      %v3148 = vpop.f32.mrb[0].mxu0
      %v3149 = vadd.f32 %v3037, %v3148
      %v3150 = vpop.f32.mrb[0].mxu0
      %3151 = vmatprep.mubr.bf16.mxu0 0
      %3152 = vmatmul.mubr.bf16.gmra.mrb[0].mxu0 %v2954
      %v3153 = vpop.f32.mrb[0].mxu0
      %v3154 = vadd.f32 %v3037, %v3153
      %v3155 = vpop.f32.mrb[0].mxu0
      %v3156 = vpop.f32.mrb[0].mxu0
      %v3157 = vadd.f32 %v3037, %v3156
      %v3158 = vpop.f32.mrb[0].mxu0
      %3159 = vmatprep.mubr.bf16.mxu0 0
      %3160 = vmatmul.mubr.bf16.gmra.mrb[0].mxu0 %v2955
      %v3161 = vpop.f32.mrb[0].mxu0
      %v3162 = vadd.f32 %v3037, %v3161
      %v3163 = vpop.f32.mrb[0].mxu0
      %v3164 = vpop.f32.mrb[0].mxu0
      %v3165 = vadd.f32 %v3037, %v3164
      %v3166 = vpop.f32.mrb[0].mxu0
      %3167 = vmatprep.mubr.bf16.mxu0 0
      %3168 = vmatmul.mubr.bf16.gmra.mrb[0].mxu0 %v2956
      %v3169 = vpop.f32.mrb[0].mxu0
      %v3170 = vadd.f32 %v3037, %v3169
      %v3171 = vpop.f32.mrb[0].mxu0
      %v3172 = vpop.f32.mrb[0].mxu0
      %v3173 = vadd.f32 %v3037, %v3172
      %v3174 = vpop.f32.mrb[0].mxu0
      %3175 = vmatprep.mubr.bf16.mxu0 0
      %3176 = vmatmul.mubr.bf16.gmra.mrb[0].mxu0 %v2957
      %v3177 = vpop.f32.mrb[0].mxu0
      %v3178 = vadd.f32 %v3037, %v3177
      %v3179 = vpop.f32.mrb[0].mxu0
      %v3180 = vpop.f32.mrb[0].mxu0
      %v3181 = vadd.f32 %v3037, %v3180
      %v3182 = vpop.f32.mrb[0].mxu0
      %3183 = vmatprep.mubr.bf16.mxu0 0
      %3184 = vmatmul.mubr.bf16.gmra.mrb[0].mxu0 %v2958
      %v3185 = vpop.f32.mrb[0].mxu0
      %v3186 = vadd.f32 %v3037, %v3185
      %v3187 = vpop.f32.mrb[0].mxu0
      %v3188 = vpop.f32.mrb[0].mxu0
      %v3189 = vadd.f32 %v3037, %v3188
      %v3190 = vpop.f32.mrb[0].mxu0
      %3191 = vmatprep.mubr.bf16.mxu0 0
      %3192 = vmatmul.mubr.bf16.gmra.mrb[0].mxu0 %v2959
      %v3193 = vpop.f32.mrb[0].mxu0
      %v3194 = vadd.f32 %v3037, %v3193
      %v3195 = vpop.f32.mrb[0].mxu0
      %v3196 = vpop.f32.mrb[0].mxu0
      %v3197 = vadd.f32 %v3037, %v3196
      %v3198 = vpop.f32.mrb[0].mxu0
      %3199 = vmatprep.mubr.bf16.mxu0 0
      %3200 = vmatmul.mubr.bf16.gmra.mrb[0].mxu0 %v2960
      %v3201 = vpop.f32.mrb[0].mxu0
      %v3202 = vadd.f32 %v3037, %v3201
      %v3203 = vpop.f32.mrb[0].mxu0
      %v3204 = vpop.f32.mrb[0].mxu0
      %v3205 = vadd.f32 %v3037, %v3204
      %v3206 = vpop.f32.mrb[0].mxu0
      %3207 = vmatprep.mubr.bf16.mxu0 0
      %3208 = vmatmul.mubr.bf16.gmra.mrb[0].mxu0 %v2961
      %v3209 = vpop.f32.mrb[0].mxu0
      %v3210 = vadd.f32 %v3037, %v3209
      %v3211 = vpop.f32.mrb[0].mxu0
      %v3212 = vpop.f32.mrb[0].mxu0
      %v3213 = vadd.f32 %v3037, %v3212
      %v3214 = vpop.f32.mrb[0].mxu0
      %3215 = vmatprep.mubr.bf16.mxu0 0
      %3216 = vmatmul.mubr.bf16.gmra.mrb[0].mxu0 %v2962
      %v3217 = vpop.f32.mrb[0].mxu0
      %v3218 = vadd.f32 %v3037, %v3217
      %v3219 = vpop.f32.mrb[0].mxu0
      %v3220 = vpop.f32.mrb[0].mxu0
      %v3221 = vadd.f32 %v3037, %v3220
      %v3222 = vpop.f32.mrb[0].mxu0
      %3223 = vmatprep.mubr.bf16.mxu0 0
      %3224 = vmatmul.mubr.bf16.gmra.mrb[0].mxu0 %v2963
      %v3225 = vpop.f32.mrb[0].mxu0
      %v3226 = vadd.f32 %v3037, %v3225
      %v3227 = vpop.f32.mrb[0].mxu0
      %v3228 = vpop.f32.mrb[0].mxu0
      %v3229 = vadd.f32 %v3037, %v3228
      %v3230 = vpop.f32.mrb[0].mxu0
      %3231 = vmatprep.mubr.bf16.mxu0 0
      %3232 = vmatmul.mubr.bf16.gmra.mrb[0].mxu0 %v2964
      %v3233 = vpop.f32.mrb[0].mxu0
      %v3234 = vadd.f32 %v3037, %v3233
      %v3235 = vpop.f32.mrb[0].mxu0
      %v3236 = vpop.f32.mrb[0].mxu0
      %v3237 = vadd.f32 %v3037, %v3236
      %v3238 = vpop.f32.mrb[0].mxu0
      %3239 = vmatprep.mubr.bf16.mxu0 0
      %3240 = vmatmul.mubr.bf16.gmra.mrb[0].mxu0 %v2965
      %v3241 = vpop.f32.mrb[0].mxu0
      %v3242 = vadd.f32 %v3037, %v3241
      %v3243 = vpop.f32.mrb[0].mxu0
      %v3244 = vpop.f32.mrb[0].mxu0
      %v3245 = vadd.f32 %v3037, %v3244
      %v3246 = vpop.f32.mrb[0].mxu0
      %3247 = vmatprep.mubr.bf16.mxu0 0
      %3248 = vmatmul.mubr.bf16.gmra.mrb[0].mxu0 %v2966
      %v3249 = vpop.f32.mrb[0].mxu0
      %v3250 = vadd.f32 %v3037, %v3249
      %v3251 = vpop.f32.mrb[0].mxu0
      %v3252 = vpop.f32.mrb[0].mxu0
      %v3253 = vadd.f32 %v3037, %v3252
      %v3254 = vpop.f32.mrb[0].mxu0
      %3255 = vmatprep.mubr.bf16.mxu0 0
      %3256 = vmatmul.mubr.bf16.gmra.mrb[0].mxu0 %v2967
      %v3257 = vpop.f32.mrb[0].mxu0
      %v3258 = vadd.f32 %v3037, %v3257
      %v3259 = vpop.f32.mrb[0].mxu0
      %v3260 = vpop.f32.mrb[0].mxu0
      %v3261 = vadd.f32 %v3037, %v3260
      %v3262 = vpop.f32.mrb[0].mxu0
      %3263 = vmatprep.mubr.bf16.mxu0 0
      %3264 = vmatmul.mubr.bf16.gmra.mrb[0].mxu0 %v2968
      %v3265 = vpop.f32.mrb[0].mxu0
      %v3266 = vadd.f32 %v3037, %v3265
      %v3267 = vpop.f32.mrb[0].mxu0
      %v3268 = vpop.f32.mrb[0].mxu0
      %v3269 = vadd.f32 %v3037, %v3268
      %v3270 = vpop.f32.mrb[0].mxu0
      %3271 = vmatprep.mubr.bf16.mxu0 0
      %3272 = vmatmul.mubr.bf16.gmra.mrb[0].mxu0 %v2969
      %v3273 = vpop.f32.mrb[0].mxu0
      %v3274 = vadd.f32 %v3037, %v3273
      %v3275 = vpop.f32.mrb[0].mxu0
      %v3276 = vpop.f32.mrb[0].mxu0
      %v3277 = vadd.f32 %v3037, %v3276
      %v3278 = vpop.f32.mrb[0].mxu0
      %3279 = vmatprep.mubr.bf16.mxu0 0
      %3280 = vmatmul.mubr.bf16.gmra.mrb[0].mxu0 %v2970
      %v3281 = vpop.f32.mrb[0].mxu0
      %v3282 = vadd.f32 %v3037, %v3281
      %v3283 = vpop.f32.mrb[0].mxu0
      %v3284 = vpop.f32.mrb[0].mxu0
      %v3285 = vadd.f32 %v3037, %v3284
      %v3286 = vpop.f32.mrb[0].mxu0
      %3287 = vmatprep.mubr.bf16.mxu0 0
      %3288 = vmatmul.mubr.bf16.gmra.mrb[0].mxu0 %v2971
      %v3289 = vpop.f32.mrb[0].mxu0
      %v3290 = vadd.f32 %v3037, %v3289
      %v3291 = vpop.f32.mrb[0].mxu0
      %v3292 = vpop.f32.mrb[0].mxu0
      %v3293 = vadd.f32 %v3037, %v3292
      %v3294 = vpop.f32.mrb[0].mxu0
      %3295 = vmatprep.mubr.bf16.mxu0 0
      %3296 = vmatmul.mubr.bf16.gmra.mrb[0].mxu0 %v2972
      %v3297 = vpop.f32.mrb[0].mxu0
      %v3298 = vadd.f32 %v3037, %v3297
      %v3299 = vpop.f32.mrb[0].mxu0
      %v3300 = vpop.f32.mrb[0].mxu0
      %v3301 = vadd.f32 %v3037, %v3300
      %v3302 = vpop.f32.mrb[0].mxu0
      %3303 = vmatprep.mubr.bf16.mxu0 0
      %3304 = vmatmul.mubr.bf16.gmra.mrb[0].mxu0 %v2973
      %v3305 = vpop.f32.mrb[0].mxu0
      %v3306 = vadd.f32 %v3037, %v3305
      %v3307 = vpop.f32.mrb[0].mxu0
      %v3308 = vpop.f32.mrb[0].mxu0
      %v3309 = vadd.f32 %v3037, %v3308
      %v3310 = vpop.f32.mrb[0].mxu0
      %3311 = vmatprep.mubr.bf16.mxu0 0
      %3312 = vmatmul.mubr.bf16.gmra.mrb[0].mxu0 %v2974
      %v3313 = vpop.f32.mrb[0].mxu0
      %v3314 = vadd.f32 %v3037, %v3313
      %v3315 = vpop.f32.mrb[0].mxu0
      %v3316 = vpop.f32.mrb[0].mxu0
      %v3317 = vadd.f32 %v3037, %v3316
      %v3318 = vpop.f32.mrb[0].mxu0
      %3319 = vmatprep.mubr.bf16.mxu0 0
      %3320 = vmatmul.mubr.bf16.gmra.mrb[0].mxu0 %v2975
      %v3321 = vpop.f32.mrb[0].mxu0
      %v3322 = vadd.f32 %v3037, %v3321
      %v3323 = vpop.f32.mrb[0].mxu0
      %v3324 = vpop.f32.mrb[0].mxu0
      %v3325 = vadd.f32 %v3037, %v3324
      %v3326 = vpop.f32.mrb[0].mxu0
      %3327 = vmatprep.mubr.bf16.mxu0 0
      %3328 = vmatmul.mubr.bf16.gmra.mrb[0].mxu0 %v2976
      %v3329 = vpop.f32.mrb[0].mxu0
      %v3330 = vadd.f32 %v3037, %v3329
      %v3331 = vpop.f32.mrb[0].mxu0
      %v3332 = vpop.f32.mrb[0].mxu0
      %v3333 = vadd.f32 %v3037, %v3332
      %v3334 = vpop.f32.mrb[0].mxu0
      %3335 = vmatprep.mubr.bf16.mxu0 0
      %3336 = vmatmul.mubr.bf16.gmra.mrb[0].mxu0 %v2977
      %v3337 = vpop.f32.mrb[0].mxu0
      %v3338 = vadd.f32 %v3037, %v3337
      %v3339 = vpop.f32.mrb[0].mxu0
      %v3340 = vpop.f32.mrb[0].mxu0
      %v3341 = vadd.f32 %v3037, %v3340
      %v3342 = vpop.f32.mrb[0].mxu0
      %3343 = vmatprep.mubr.bf16.mxu0 0
      %3344 = vmatmul.mubr.bf16.gmra.mrb[0].mxu0 %v2978
      %v3345 = vpop.f32.mrb[0].mxu0
      %v3346 = vadd.f32 %v3037, %v3345
      %v3347 = vpop.f32.mrb[0].mxu0
      %v3348 = vpop.f32.mrb[0].mxu0
      %v3349 = vadd.f32 %v3037, %v3348
      %v3350 = vpop.f32.mrb[0].mxu0
      %3351 = vmatprep.mubr.bf16.mxu0 0
      %3352 = vmatmul.mubr.bf16.gmra.mrb[0].mxu0 %v2979
      %v3353 = vpop.f32.mrb[0].mxu0
      %v3354 = vadd.f32 %v3037, %v3353
      %v3355 = vpop.f32.mrb[0].mxu0
      %v3356 = vpop.f32.mrb[0].mxu0
      %v3357 = vadd.f32 %v3037, %v3356
      %v3358 = vpop.f32.mrb[0].mxu0
      %3359 = vmatprep.mubr.bf16.mxu0 0
      %3360 = vmatmul.mubr.bf16.gmra.mrb[0].mxu0 %v2980
      %v3361 = vpop.f32.mrb[0].mxu0
      %v3362 = vadd.f32 %v3037, %v3361
      %v3363 = vpop.f32.mrb[0].mxu0
      %v3364 = vpop.f32.mrb[0].mxu0
      %v3365 = vadd.f32 %v3037, %v3364
      %v3366 = vpop.f32.mrb[0].mxu0
      %3367 = vmatprep.mubr.bf16.mxu0 0
      %3368 = vmatmul.mubr.bf16.gmra.mrb[0].mxu0 %v2981
      %v3369 = vpop.f32.mrb[0].mxu0
      %v3370 = vadd.f32 %v3037, %v3369
      %v3371 = vpop.f32.mrb[0].mxu0
      %v3372 = vpop.f32.mrb[0].mxu0
      %v3373 = vadd.f32 %v3037, %v3372
      %v3374 = vpop.f32.mrb[0].mxu0
      %3375 = vmatprep.mubr.bf16.mxu0 0
      %3376 = vmatmul.mubr.bf16.gmra.mrb[0].mxu0 %v2982
      %v3377 = vpop.f32.mrb[0].mxu0
      %v3378 = vadd.f32 %v3037, %v3377
      %v3379 = vpop.f32.mrb[0].mxu0
      %v3380 = vpop.f32.mrb[0].mxu0
      %v3381 = vadd.f32 %v3037, %v3380
      %v3382 = vpop.f32.mrb[0].mxu0
      %3383 = vmatprep.mubr.bf16.mxu0 0
      %3384 = vmatmul.mubr.bf16.gmra.mrb[0].mxu0 %v2983
      %v3385 = vpop.f32.mrb[0].mxu0
      %v3386 = vadd.f32 %v3037, %v3385
      %v3387 = vpop.f32.mrb[0].mxu0
      %v3388 = vpop.f32.mrb[0].mxu0
      %v3389 = vadd.f32 %v3037, %v3388
      %v3390 = vpop.f32.mrb[0].mxu0
      %3391 = vmatprep.mubr.bf16.mxu0 0
      %3392 = vmatmul.mubr.bf16.gmra.mrb[0].mxu0 %v2984
      %v3393 = vpop.f32.mrb[0].mxu0
      %v3394 = vadd.f32 %v3037, %v3393
      %v3395 = vpop.f32.mrb[0].mxu0
      %v3396 = vpop.f32.mrb[0].mxu0
      %v3397 = vadd.f32 %v3037, %v3396
      %v3398 = vpop.f32.mrb[0].mxu0
      %3399 = vmatprep.mubr.bf16.mxu0 0
      %3400 = vmatmul.mubr.bf16.gmra.mrb[0].mxu0 %v2985
      %v3401 = vpop.f32.mrb[0].mxu0
      %v3402 = vadd.f32 %v3037, %v3401
      %v3403 = vpop.f32.mrb[0].mxu0
      %v3404 = vpop.f32.mrb[0].mxu0
      %v3405 = vadd.f32 %v3037, %v3404
      %v3406 = vpop.f32.mrb[0].mxu0
      %3407 = vmatprep.mubr.bf16.mxu0 0
      %3408 = vmatmul.mubr.bf16.gmra.mrb[0].mxu0 %v2986
      %v3409 = vpop.f32.mrb[0].mxu0
      %v3410 = vadd.f32 %v3037, %v3409
      %v3411 = vpop.f32.mrb[0].mxu0
      %v3412 = vpop.f32.mrb[0].mxu0
      %v3413 = vadd.f32 %v3037, %v3412
      %v3414 = vpop.f32.mrb[0].mxu0
      %3415 = vmatprep.mubr.bf16.mxu0 0
      %3416 = vmatmul.mubr.bf16.gmra.mrb[0].mxu0 %v2987
      %v3417 = vpop.f32.mrb[0].mxu0
      %v3418 = vadd.f32 %v3037, %v3417
      %v3419 = vpop.f32.mrb[0].mxu0
      %v3420 = vpop.f32.mrb[0].mxu0
      %v3421 = vadd.f32 %v3037, %v3420
      %v3422 = vpop.f32.mrb[0].mxu0
      %3423 = vmatprep.mubr.bf16.mxu0 0
      %3424 = vmatmul.mubr.bf16.gmra.mrb[0].mxu0 %v2988
      %v3425 = vpop.f32.mrb[0].mxu0
      %v3426 = vadd.f32 %v3037, %v3425
      %v3427 = vpop.f32.mrb[0].mxu0
      %v3428 = vpop.f32.mrb[0].mxu0
      %v3429 = vadd.f32 %v3037, %v3428
      %v3430 = vpop.f32.mrb[0].mxu0
      %3431 = vmatprep.mubr.bf16.mxu0 0
      %3432 = vmatmul.mubr.bf16.gmra.mrb[0].mxu0 %v2989
      %v3433 = vpop.f32.mrb[0].mxu0
      %v3434 = vadd.f32 %v3037, %v3433
      %v3435 = vpop.f32.mrb[0].mxu0
      %v3436 = vpop.f32.mrb[0].mxu0
      %v3437 = vadd.f32 %v3037, %v3436
      %v3438 = vpop.f32.mrb[0].mxu0
      %3439 = vmatprep.mubr.bf16.mxu0 0
      %3440 = vmatmul.mubr.bf16.gmra.mrb[0].mxu0 %v2990
      %v3441 = vpop.f32.mrb[0].mxu0
      %v3442 = vadd.f32 %v3037, %v3441
      %v3443 = vpop.f32.mrb[0].mxu0
      %v3444 = vpop.f32.mrb[0].mxu0
      %v3445 = vadd.f32 %v3037, %v3444
      %v3446 = vpop.f32.mrb[0].mxu0
      %3447 = vmatprep.mubr.bf16.mxu0 0
      %3448 = vmatmul.mubr.bf16.gmra.mrb[0].mxu0 %v2991
      %v3449 = vpop.f32.mrb[0].mxu0
      %v3450 = vadd.f32 %v3037, %v3449
      %v3451 = vpop.f32.mrb[0].mxu0
      %v3452 = vpop.f32.mrb[0].mxu0
      %v3453 = vadd.f32 %v3037, %v3452
      %v3454 = vpop.f32.mrb[0].mxu0
      %3455 = vmatprep.mubr.bf16.mxu0 0
      %3456 = vmatmul.mubr.bf16.gmra.mrb[0].mxu0 %v2992
      %v3457 = vpop.f32.mrb[0].mxu0
      %v3458 = vadd.f32 %v3037, %v3457
      %v3459 = vpop.f32.mrb[0].mxu0
      %v3460 = vpop.f32.mrb[0].mxu0
      %v3461 = vadd.f32 %v3037, %v3460
      %v3462 = vpop.f32.mrb[0].mxu0
      %3463 = vmatprep.mubr.bf16.mxu0 0
      %3464 = vmatmul.mubr.bf16.gmra.mrb[0].mxu0 %v2993
      %v3465 = vpop.f32.mrb[0].mxu0
      %v3466 = vadd.f32 %v3037, %v3465
      %v3467 = vpop.f32.mrb[0].mxu0
      %v3468 = vpop.f32.mrb[0].mxu0
      %v3469 = vadd.f32 %v3037, %v3468
      %v3470 = vpop.f32.mrb[0].mxu0
      %3471 = vmatprep.mubr.bf16.mxu0 0
      %3472 = vmatmul.mubr.bf16.gmra.mrb[0].mxu0 %v2994
      %v3473 = vpop.f32.mrb[0].mxu0
      %v3474 = vadd.f32 %v3037, %v3473
      %v3475 = vpop.f32.mrb[0].mxu0
      %v3476 = vpop.f32.mrb[0].mxu0
      %v3477 = vadd.f32 %v3037, %v3476
      %v3478 = vpop.f32.mrb[0].mxu0
      %3479 = vmatprep.mubr.bf16.mxu0 0
      %3480 = vmatmul.mubr.bf16.gmra.mrb[0].mxu0 %v2995
      %v3481 = vpop.f32.mrb[0].mxu0
      %v3482 = vadd.f32 %v3037, %v3481
      %v3483 = vpop.f32.mrb[0].mxu0
      %v3484 = vpop.f32.mrb[0].mxu0
      %v3485 = vadd.f32 %v3037, %v3484
      %v3486 = vpop.f32.mrb[0].mxu0
      %3487 = vmatprep.mubr.bf16.mxu0 0
      %3488 = vmatmul.mubr.bf16.gmra.mrb[0].mxu0 %v2996
      %v3489 = vpop.f32.mrb[0].mxu0
      %v3490 = vadd.f32 %v3037, %v3489
      %v3491 = vpop.f32.mrb[0].mxu0
      %v3492 = vpop.f32.mrb[0].mxu0
      %v3493 = vadd.f32 %v3037, %v3492
      %v3494 = vpop.f32.mrb[0].mxu0
      %3495 = vmatprep.mubr.bf16.mxu0 0
      %3496 = vmatmul.mubr.bf16.gmra.mrb[0].mxu0 %v2997
      %v3497 = vpop.f32.mrb[0].mxu0
      %v3498 = vadd.f32 %v3037, %v3497
      %v3499 = vpop.f32.mrb[0].mxu0
      %v3500 = vpop.f32.mrb[0].mxu0
      %v3501 = vadd.f32 %v3037, %v3500
      %v3502 = vpop.f32.mrb[0].mxu0
      %3503 = vmatprep.mubr.bf16.mxu0 0
      %3504 = vmatmul.mubr.bf16.gmra.mrb[0].mxu0 %v2998
      %v3505 = vpop.f32.mrb[0].mxu0
      %v3506 = vadd.f32 %v3037, %v3505
      %v3507 = vpop.f32.mrb[0].mxu0
      %v3508 = vpop.f32.mrb[0].mxu0
      %v3509 = vadd.f32 %v3037, %v3508
      %v3510 = vpop.f32.mrb[0].mxu0
      %3511 = vmatprep.mubr.bf16.mxu0 0
      %3512 = vmatmul.mubr.bf16.gmra.mrb[0].mxu0 %v2999
      %v3513 = vpop.f32.mrb[0].mxu0
      %v3514 = vadd.f32 %v3037, %v3513
      %v3515 = vpop.f32.mrb[0].mxu0
      %v3516 = vpop.f32.mrb[0].mxu0
      %v3517 = vadd.f32 %v3037, %v3516
      %v3518 = vpop.f32.mrb[0].mxu0
      %3519 = vmatprep.mubr.bf16.mxu0 0
      %3520 = vmatmul.mubr.bf16.gmra.mrb[0].mxu0 %v3000
      %v3521 = vpop.f32.mrb[0].mxu0
      %v3522 = vadd.f32 %v3037, %v3521
      %v3523 = vpop.f32.mrb[0].mxu0
      %v3524 = vpop.f32.mrb[0].mxu0
      %v3525 = vadd.f32 %v3037, %v3524
      %v3526 = vpop.f32.mrb[0].mxu0
      %3527 = vmatprep.mubr.bf16.mxu0 0
      %3528 = vmatmul.mubr.bf16.gmra.mrb[0].mxu0 %v3001
      %v3529 = vpop.f32.mrb[0].mxu0
      %v3530 = vadd.f32 %v3037, %v3529
      %v3531 = vpop.f32.mrb[0].mxu0
      %v3532 = vpop.f32.mrb[0].mxu0
      %v3533 = vadd.f32 %v3037, %v3532
      %v3534 = vpop.f32.mrb[0].mxu0
      %3535 = vmatprep.mubr.bf16.mxu0 0
      %3536 = vmatmul.mubr.bf16.gmra.mrb[0].mxu0 %v3002
      %v3537 = vpop.f32.mrb[0].mxu0
      %v3538 = vadd.f32 %v3037, %v3537
      %v3539 = vpop.f32.mrb[0].mxu0
      %v3540 = vpop.f32.mrb[0].mxu0
      %v3541 = vadd.f32 %v3037, %v3540
      %v3542 = vpop.f32.mrb[0].mxu0
      %3543 = vmatprep.mubr.bf16.mxu0 0
      %3544 = vmatmul.mubr.bf16.gmra.mrb[0].mxu0 %v3003
      %v3545 = vpop.f32.mrb[0].mxu0
      %v3546 = vadd.f32 %v3037, %v3545
      %v3547 = vpop.f32.mrb[0].mxu0
      %v3548 = vpop.f32.mrb[0].mxu0
      %v3549 = vadd.f32 %v3037, %v3548
      %v3550 = vpop.f32.mrb[0].mxu0
      %3551 = vmatprep.mubr.bf16.mxu0 0
      %3552 = vmatmul.mubr.bf16.gmra.mrb[0].mxu0 %v3004
      %v3553 = vpop.f32.mrb[0].mxu0
      %v3554 = vadd.f32 %v3037, %v3553
      %v3555 = vpop.f32.mrb[0].mxu0
      %v3556 = vpop.f32.mrb[0].mxu0
      %v3557 = vadd.f32 %v3037, %v3556
      %v3558 = vpop.f32.mrb[0].mxu0
      %3559 = vmatprep.mubr.bf16.mxu0 0
      %3560 = vmatmul.mubr.bf16.gmra.mrb[0].mxu0 %v3005
      %v3561 = vpop.f32.mrb[0].mxu0
      %v3562 = vadd.f32 %v3037, %v3561
      %v3563 = vpop.f32.mrb[0].mxu0
      %v3564 = vpop.f32.mrb[0].mxu0
      %v3565 = vadd.f32 %v3037, %v3564
      %v3566 = vpop.f32.mrb[0].mxu0
      %3567 = vmatprep.mubr.bf16.mxu0 0
      %3568 = vmatmul.mubr.bf16.gmra.mrb[0].mxu0 %v3006
      %v3569 = vpop.f32.mrb[0].mxu0
      %v3570 = vadd.f32 %v3037, %v3569
      %v3571 = vpop.f32.mrb[0].mxu0
      %v3572 = vpop.f32.mrb[0].mxu0
      %v3573 = vadd.f32 %v3037, %v3572
      %v3574 = vpop.f32.mrb[0].mxu0
      %3575 = vmatprep.mubr.bf16.mxu0 0
      %3576 = vmatmul.mubr.bf16.gmra.mrb[0].mxu0 %v3007
      %v3577 = vpop.f32.mrb[0].mxu0
      %v3578 = vadd.f32 %v3037, %v3577
      %v3579 = vpop.f32.mrb[0].mxu0
      %v3580 = vpop.f32.mrb[0].mxu0
      %v3581 = vadd.f32 %v3037, %v3580
      %v3582 = vpop.f32.mrb[0].mxu0
      %3583 = vmatprep.mubr.bf16.mxu0 0
      %3584 = vmatmul.mubr.bf16.gmra.mrb[0].mxu0 %v3008
      %v3585 = vpop.f32.mrb[0].mxu0
      %v3586 = vadd.f32 %v3037, %v3585
      %v3587 = vpop.f32.mrb[0].mxu0
      %v3588 = vpop.f32.mrb[0].mxu0
      %v3589 = vadd.f32 %v3037, %v3588
      %v3590 = vpop.f32.mrb[0].mxu0
      %3591 = vmatprep.mubr.bf16.mxu0 0
      %3592 = vmatmul.mubr.bf16.gmra.mrb[0].mxu0 %v3009
      %v3593 = vpop.f32.mrb[0].mxu0
      %v3594 = vadd.f32 %v3037, %v3593
      %v3595 = vpop.f32.mrb[0].mxu0
      %v3596 = vpop.f32.mrb[0].mxu0
      %v3597 = vadd.f32 %v3037, %v3596
      %v3598 = vpop.f32.mrb[0].mxu0
      %3599 = vmatprep.mubr.bf16.mxu0 0
      %3600 = vmatmul.mubr.bf16.gmra.mrb[0].mxu0 %v3010
      %v3601 = vpop.f32.mrb[0].mxu0
      %v3602 = vadd.f32 %v3037, %v3601
      %v3603 = vpop.f32.mrb[0].mxu0
      %v3604 = vpop.f32.mrb[0].mxu0
      %v3605 = vadd.f32 %v3037, %v3604
      %v3606 = vpop.f32.mrb[0].mxu0
      %3607 = vmatprep.mubr.bf16.mxu0 0
      %3608 = vmatmul.mubr.bf16.gmra.mrb[0].mxu0 %v3011
      %v3609 = vpop.f32.mrb[0].mxu0
      %v3610 = vadd.f32 %v3037, %v3609
      %v3611 = vpop.f32.mrb[0].mxu0
      %v3612 = vpop.f32.mrb[0].mxu0
      %v3613 = vadd.f32 %v3037, %v3612
      %v3614 = vpop.f32.mrb[0].mxu0
      %3615 = vmatprep.mubr.bf16.mxu0 0
      %3616 = vmatmul.mubr.bf16.gmra.mrb[0].mxu0 %v3012
      %v3617 = vpop.f32.mrb[0].mxu0
      %v3618 = vadd.f32 %v3037, %v3617
      %v3619 = vpop.f32.mrb[0].mxu0
      %v3620 = vpop.f32.mrb[0].mxu0
      %v3621 = vadd.f32 %v3037, %v3620
      %v3622 = vpop.f32.mrb[0].mxu0
      %3623 = vmatprep.mubr.bf16.mxu0 0
      %3624 = vmatmul.mubr.bf16.gmra.mrb[0].mxu0 %v3013
      %v3625 = vpop.f32.mrb[0].mxu0
      %v3626 = vadd.f32 %v3037, %v3625
      %v3627 = vpop.f32.mrb[0].mxu0
      %v3628 = vpop.f32.mrb[0].mxu0
      %v3629 = vadd.f32 %v3037, %v3628
      %v3630 = vpop.f32.mrb[0].mxu0
      %3631 = vdwg.mxu0
      %v3632 = vmax.f32 %v3122, 0.0
      %v3633 = vmax.f32 %v3125, 0.0
      %v3634 = vmax.f32 %v3130, 0.0
      %v3635 = vmax.f32 %v3133, 0.0
      %v3636 = vmax.f32 %v3138, 0.0
      %v3637 = vmax.f32 %v3141, 0.0
      %v3638 = vmax.f32 %v3146, 0.0
      %v3639 = vmax.f32 %v3149, 0.0
      %v3640 = vmax.f32 %v3154, 0.0
      %v3641 = vmax.f32 %v3157, 0.0
      %v3642 = vmax.f32 %v3162, 0.0
      %v3643 = vmax.f32 %v3165, 0.0
      %v3644 = vmax.f32 %v3170, 0.0
      %v3645 = vmax.f32 %v3173, 0.0
      %v3646 = vmax.f32 %v3178, 0.0
      %v3647 = vmax.f32 %v3181, 0.0
      %v3648 = vmax.f32 %v3186, 0.0
      %v3649 = vmax.f32 %v3189, 0.0
      %v3650 = vmax.f32 %v3194, 0.0
      %v3651 = vmax.f32 %v3197, 0.0
      %v3652 = vmax.f32 %v3202, 0.0
      %v3653 = vmax.f32 %v3205, 0.0
      %v3654 = vmax.f32 %v3210, 0.0
      %v3655 = vmax.f32 %v3213, 0.0
      %v3656 = vmax.f32 %v3218, 0.0
      %v3657 = vmax.f32 %v3221, 0.0
      %v3658 = vmax.f32 %v3226, 0.0
      %v3659 = vmax.f32 %v3229, 0.0
      %v3660 = vmax.f32 %v3234, 0.0
      %v3661 = vmax.f32 %v3237, 0.0
      %v3662 = vmax.f32 %v3242, 0.0
      %v3663 = vmax.f32 %v3245, 0.0
      %v3664 = vmax.f32 %v3250, 0.0
      %v3665 = vmax.f32 %v3253, 0.0
      %v3666 = vmax.f32 %v3258, 0.0
      %v3667 = vmax.f32 %v3261, 0.0
      %v3668 = vmax.f32 %v3266, 0.0
      %v3669 = vmax.f32 %v3269, 0.0
      %v3670 = vmax.f32 %v3274, 0.0
      %v3671 = vmax.f32 %v3277, 0.0
      %v3672 = vmax.f32 %v3282, 0.0
      %v3673 = vmax.f32 %v3285, 0.0
      %v3674 = vmax.f32 %v3290, 0.0
      %v3675 = vmax.f32 %v3293, 0.0
      %v3676 = vmax.f32 %v3298, 0.0
      %v3677 = vmax.f32 %v3301, 0.0
      %v3678 = vmax.f32 %v3306, 0.0
      %v3679 = vmax.f32 %v3309, 0.0
      %v3680 = vmax.f32 %v3314, 0.0
      %v3681 = vmax.f32 %v3317, 0.0
      %v3682 = vmax.f32 %v3322, 0.0
      %v3683 = vmax.f32 %v3325, 0.0
      %v3684 = vmax.f32 %v3330, 0.0
      %v3685 = vmax.f32 %v3333, 0.0
      %v3686 = vmax.f32 %v3338, 0.0
      %v3687 = vmax.f32 %v3341, 0.0
      %v3688 = vmax.f32 %v3346, 0.0
      %v3689 = vmax.f32 %v3349, 0.0
      %v3690 = vmax.f32 %v3354, 0.0
      %v3691 = vmax.f32 %v3357, 0.0
      %v3692 = vmax.f32 %v3362, 0.0
      %v3693 = vmax.f32 %v3365, 0.0
      %v3694 = vmax.f32 %v3370, 0.0
      %v3695 = vmax.f32 %v3373, 0.0
      %v3696 = vmax.f32 %v3378, 0.0
      %v3697 = vmax.f32 %v3381, 0.0
      %v3698 = vmax.f32 %v3386, 0.0
      %v3699 = vmax.f32 %v3389, 0.0
      %v3700 = vmax.f32 %v3394, 0.0
      %v3701 = vmax.f32 %v3397, 0.0
      %v3702 = vmax.f32 %v3402, 0.0
      %v3703 = vmax.f32 %v3405, 0.0
      %v3704 = vmax.f32 %v3410, 0.0
      %v3705 = vmax.f32 %v3413, 0.0
      %v3706 = vmax.f32 %v3418, 0.0
      %v3707 = vmax.f32 %v3421, 0.0
      %v3708 = vmax.f32 %v3426, 0.0
      %v3709 = vmax.f32 %v3429, 0.0
      %v3710 = vmax.f32 %v3434, 0.0
      %v3711 = vmax.f32 %v3437, 0.0
      %v3712 = vmax.f32 %v3442, 0.0
      %v3713 = vmax.f32 %v3445, 0.0
      %v3714 = vmax.f32 %v3450, 0.0
      %v3715 = vmax.f32 %v3453, 0.0
      %v3716 = vmax.f32 %v3458, 0.0
      %v3717 = vmax.f32 %v3461, 0.0
      %v3718 = vmax.f32 %v3466, 0.0
      %v3719 = vmax.f32 %v3469, 0.0
      %v3720 = vmax.f32 %v3474, 0.0
      %v3721 = vmax.f32 %v3477, 0.0
      %v3722 = vmax.f32 %v3482, 0.0
      %v3723 = vmax.f32 %v3485, 0.0
      %v3724 = vmax.f32 %v3490, 0.0
      %v3725 = vmax.f32 %v3493, 0.0
      %v3726 = vmax.f32 %v3498, 0.0
      %v3727 = vmax.f32 %v3501, 0.0
      %v3728 = vmax.f32 %v3506, 0.0
      %v3729 = vmax.f32 %v3509, 0.0
      %v3730 = vmax.f32 %v3514, 0.0
      %v3731 = vmax.f32 %v3517, 0.0
      %v3732 = vmax.f32 %v3522, 0.0
      %v3733 = vmax.f32 %v3525, 0.0
      %v3734 = vmax.f32 %v3530, 0.0
      %v3735 = vmax.f32 %v3533, 0.0
      %v3736 = vmax.f32 %v3538, 0.0
      %v3737 = vmax.f32 %v3541, 0.0
      %v3738 = vmax.f32 %v3546, 0.0
      %v3739 = vmax.f32 %v3549, 0.0
      %v3740 = vmax.f32 %v3554, 0.0
      %v3741 = vmax.f32 %v3557, 0.0
      %v3742 = vmax.f32 %v3562, 0.0
      %v3743 = vmax.f32 %v3565, 0.0
      %v3744 = vmax.f32 %v3570, 0.0
      %v3745 = vmax.f32 %v3573, 0.0
      %v3746 = vmax.f32 %v3578, 0.0
      %v3747 = vmax.f32 %v3581, 0.0
      %v3748 = vmax.f32 %v3586, 0.0
      %v3749 = vmax.f32 %v3589, 0.0
      %v3750 = vmax.f32 %v3594, 0.0
      %v3751 = vmax.f32 %v3597, 0.0
      %v3752 = vmax.f32 %v3602, 0.0
      %v3753 = vmax.f32 %v3605, 0.0
      %v3754 = vmax.f32 %v3610, 0.0
      %v3755 = vmax.f32 %v3613, 0.0
      %v3756 = vmax.f32 %v3618, 0.0
      %v3757 = vmax.f32 %v3621, 0.0
      %v3758 = vmax.f32 %v3626, 0.0
      %v3759 = vmax.f32 %v3629, 0.0
      %v3760 = vpack.c.bf16 %v3633, %v3632
      %v3761 = vpack.c.bf16 %v3635, %v3634
      %v3762 = vpack.c.bf16 %v3637, %v3636
      %v3763 = vpack.c.bf16 %v3639, %v3638
      %v3764 = vpack.c.bf16 %v3641, %v3640
      %v3765 = vpack.c.bf16 %v3643, %v3642
      %v3766 = vpack.c.bf16 %v3645, %v3644
      %v3767 = vpack.c.bf16 %v3647, %v3646
      %v3768 = vpack.c.bf16 %v3649, %v3648
      %v3769 = vpack.c.bf16 %v3651, %v3650
      %v3770 = vpack.c.bf16 %v3653, %v3652
      %v3771 = vpack.c.bf16 %v3655, %v3654
      %v3772 = vpack.c.bf16 %v3657, %v3656
      %v3773 = vpack.c.bf16 %v3659, %v3658
      %v3774 = vpack.c.bf16 %v3661, %v3660
      %v3775 = vpack.c.bf16 %v3663, %v3662
      %v3776 = vpack.c.bf16 %v3665, %v3664
      %v3777 = vpack.c.bf16 %v3667, %v3666
      %v3778 = vpack.c.bf16 %v3669, %v3668
      %v3779 = vpack.c.bf16 %v3671, %v3670
      %v3780 = vpack.c.bf16 %v3673, %v3672
      %v3781 = vpack.c.bf16 %v3675, %v3674
      %v3782 = vpack.c.bf16 %v3677, %v3676
      %v3783 = vpack.c.bf16 %v3679, %v3678
      %v3784 = vpack.c.bf16 %v3681, %v3680
      %v3785 = vpack.c.bf16 %v3683, %v3682
      %v3786 = vpack.c.bf16 %v3685, %v3684
      %v3787 = vpack.c.bf16 %v3687, %v3686
      %v3788 = vpack.c.bf16 %v3689, %v3688
      %v3789 = vpack.c.bf16 %v3691, %v3690
      %v3790 = vpack.c.bf16 %v3693, %v3692
      %v3791 = vpack.c.bf16 %v3695, %v3694
      %v3792 = vpack.c.bf16 %v3697, %v3696
      %v3793 = vpack.c.bf16 %v3699, %v3698
      %v3794 = vpack.c.bf16 %v3701, %v3700
      %v3795 = vpack.c.bf16 %v3703, %v3702
      %v3796 = vpack.c.bf16 %v3705, %v3704
      %v3797 = vpack.c.bf16 %v3707, %v3706
      %v3798 = vpack.c.bf16 %v3709, %v3708
      %v3799 = vpack.c.bf16 %v3711, %v3710
      %v3800 = vpack.c.bf16 %v3713, %v3712
      %v3801 = vpack.c.bf16 %v3715, %v3714
      %v3802 = vpack.c.bf16 %v3717, %v3716
      %v3803 = vpack.c.bf16 %v3719, %v3718
      %v3804 = vpack.c.bf16 %v3721, %v3720
      %v3805 = vpack.c.bf16 %v3723, %v3722
      %v3806 = vpack.c.bf16 %v3725, %v3724
      %v3807 = vpack.c.bf16 %v3727, %v3726
      %v3808 = vpack.c.bf16 %v3729, %v3728
      %v3809 = vpack.c.bf16 %v3731, %v3730
      %v3810 = vpack.c.bf16 %v3733, %v3732
      %v3811 = vpack.c.bf16 %v3735, %v3734
      %v3812 = vpack.c.bf16 %v3737, %v3736
      %v3813 = vpack.c.bf16 %v3739, %v3738
      %v3814 = vpack.c.bf16 %v3741, %v3740
      %v3815 = vpack.c.bf16 %v3743, %v3742
      %v3816 = vpack.c.bf16 %v3745, %v3744
      %v3817 = vpack.c.bf16 %v3747, %v3746
      %v3818 = vpack.c.bf16 %v3749, %v3748
      %v3819 = vpack.c.bf16 %v3751, %v3750
      %v3820 = vpack.c.bf16 %v3753, %v3752
      %v3821 = vpack.c.bf16 %v3755, %v3754
      %v3822 = vpack.c.bf16 %v3757, %v3756
      %v3823 = vpack.c.bf16 %v3759, %v3758
      %s3824 = scalar_lea.vmem %s1, 256
      %v3825 = vld [vmem:[%s3824] sm:$0xf]
      %v3826 = vld [vmem:[%s3824 + $0x4] sm:$0xf]
      %v3827 = vld [vmem:[%s3824 + $0x8] sm:$0xf]
      %v3828 = vld [vmem:[%s3824 + $0xc] sm:$0xf]
      %v3829 = vld [vmem:[%s3824 + $0x10] sm:$0xf]
      %v3830 = vld [vmem:[%s3824 + $0x14] sm:$0xf]
      %v3831 = vld [vmem:[%s3824 + $0x18] sm:$0xf]
      %v3832 = vld [vmem:[%s3824 + $0x1c] sm:$0xf]
      %v3833 = vld [vmem:[%s3824 + $0x20] sm:$0xf]
      %v3834 = vld [vmem:[%s3824 + $0x24] sm:$0xf]
      %v3835 = vld [vmem:[%s3824 + $0x28] sm:$0xf]
      %v3836 = vld [vmem:[%s3824 + $0x2c] sm:$0xf]
      %v3837 = vld [vmem:[%s3824 + $0x30] sm:$0xf]
      %v3838 = vld [vmem:[%s3824 + $0x34] sm:$0xf]
      %v3839 = vld [vmem:[%s3824 + $0x38] sm:$0xf]
      %v3840 = vld [vmem:[%s3824 + $0x3c] sm:$0xf]
      %s3841 = scalar_lea.vmem %s3, 4
      %v3842 = vld [vmem:[%s3841] sm:$0x1]
      %v3844 = vlaneseq
      %v3845 = vshrl.u32 %v3844, 7
      %v3846 = vsub.s32 0, %v3845
      %v3847 = vrot.slane %v3842, %v3846
      %v3865 = vunpack.c.l.b16 %v3825
      %v3866 = vunpack.c.l.b16 %v3826
      %v3867 = vunpack.c.l.b16 %v3827
      %v3868 = vunpack.c.l.b16 %v3828
      %v3869 = vunpack.c.l.b16 %v3829
      %v3870 = vunpack.c.l.b16 %v3830
      %v3871 = vunpack.c.l.b16 %v3831
      %v3872 = vunpack.c.l.b16 %v3832
      %v3873 = vunpack.c.l.b16 %v3833
      %v3874 = vunpack.c.l.b16 %v3834
      %v3875 = vunpack.c.l.b16 %v3835
      %v3876 = vunpack.c.l.b16 %v3836
      %v3877 = vunpack.c.l.b16 %v3837
      %v3878 = vunpack.c.l.b16 %v3838
      %v3879 = vunpack.c.l.b16 %v3839
      %v3880 = vunpack.c.l.b16 %v3840
      %v3881 = vpack.c.b16 %v3866, %v3865
      %v3882 = vpack.c.b16 %v3868, %v3867
      %v3883 = vpack.c.b16 %v3870, %v3869
      %v3884 = vpack.c.b16 %v3872, %v3871
      %v3885 = vpack.c.b16 %v3874, %v3873
      %v3886 = vpack.c.b16 %v3876, %v3875
      %v3887 = vpack.c.b16 %v3878, %v3877
      %v3888 = vpack.c.b16 %v3880, %v3879
      %3897 = vmatprep.subr.bf16.mxu0 0
      %3898 = vmatpush1.bf16.msra.mxu0 %v3881
      %3899 = vmatprep.subr.bf16.mxu0 0
      %3900 = vmatpush1.bf16.msra.mxu0 %v3882
      %3901 = vmatprep.subr.bf16.mxu0 0
      %3902 = vmatpush1.bf16.msra.mxu0 %v3883
      %3903 = vmatprep.subr.bf16.mxu0 0
      %3904 = vmatpush1.bf16.msra.mxu0 %v3884
      %3905 = vmatprep.subr.bf16.mxu0 0
      %3906 = vmatpush1.bf16.msra.mxu0 %v3885
      %3907 = vmatprep.subr.bf16.mxu0 0
      %3908 = vmatpush1.bf16.msra.mxu0 %v3886
      %3909 = vmatprep.subr.bf16.mxu0 0
      %3910 = vmatpush1.bf16.msra.mxu0 %v3887
      %3911 = vmatprep.subr.bf16.mxu0 0
      %3912 = vmatpush1.bf16.msra.mxu0 %v3888
      %3913 = vmatprep.subr.bf16.mxu0 0
      %3914 = vmatpush1.bf16.msra.mxu0 0
      %3915 = vmatprep.subr.bf16.mxu0 0
      %3916 = vmatpush1.bf16.msra.mxu0 0
      %3917 = vmatprep.subr.bf16.mxu0 0
      %3918 = vmatpush1.bf16.msra.mxu0 0
      %3919 = vmatprep.subr.bf16.mxu0 0
      %3920 = vmatpush1.bf16.msra.mxu0 0
      %3921 = vmatprep.subr.bf16.mxu0 0
      %3922 = vmatpush1.bf16.msra.mxu0 0
      %3923 = vmatprep.subr.bf16.mxu0 0
      %3924 = vmatpush1.bf16.msra.mxu0 0
      %3925 = vmatprep.subr.bf16.mxu0 0
      %3926 = vmatpush1.bf16.msra.mxu0 0
      %3927 = vmatprep.subr.bf16.mxu0 0
      %3928 = vmatpush1.bf16.msra.mxu0 0
      %3929 = vmatprep.mubr.bf16.mxu0 0
      %3930 = vmatmul.mubr.bf16.gmra.mrb[0].mxu0 %v3760
      %v3931 = vpop.f32.mrb[0].mxu0
      %v3932 = vadd.f32 %v3847, %v3931
      %v3933 = vpop.f32.mrb[0].mxu0
      %v3934 = vpop.f32.mrb[0].mxu0
      %v3935 = vadd.f32 %v3847, %v3934
      %v3936 = vpop.f32.mrb[0].mxu0
      %3937 = vmatprep.mubr.bf16.mxu0 0
      %3938 = vmatmul.mubr.bf16.gmra.mrb[0].mxu0 %v3761
      %v3939 = vpop.f32.mrb[0].mxu0
      %v3940 = vadd.f32 %v3847, %v3939
      %v3941 = vpop.f32.mrb[0].mxu0
      %v3942 = vpop.f32.mrb[0].mxu0
      %v3943 = vadd.f32 %v3847, %v3942
      %v3944 = vpop.f32.mrb[0].mxu0
      %3945 = vmatprep.mubr.bf16.mxu0 0
      %3946 = vmatmul.mubr.bf16.gmra.mrb[0].mxu0 %v3762
      %v3947 = vpop.f32.mrb[0].mxu0
      %v3948 = vadd.f32 %v3847, %v3947
      %v3949 = vpop.f32.mrb[0].mxu0
      %v3950 = vpop.f32.mrb[0].mxu0
      %v3951 = vadd.f32 %v3847, %v3950
      %v3952 = vpop.f32.mrb[0].mxu0
      %3953 = vmatprep.mubr.bf16.mxu0 0
      %3954 = vmatmul.mubr.bf16.gmra.mrb[0].mxu0 %v3763
      %v3955 = vpop.f32.mrb[0].mxu0
      %v3956 = vadd.f32 %v3847, %v3955
      %v3957 = vpop.f32.mrb[0].mxu0
      %v3958 = vpop.f32.mrb[0].mxu0
      %v3959 = vadd.f32 %v3847, %v3958
      %v3960 = vpop.f32.mrb[0].mxu0
      %3961 = vmatprep.mubr.bf16.mxu0 0
      %3962 = vmatmul.mubr.bf16.gmra.mrb[0].mxu0 %v3764
      %v3963 = vpop.f32.mrb[0].mxu0
      %v3964 = vadd.f32 %v3847, %v3963
      %v3965 = vpop.f32.mrb[0].mxu0
      %v3966 = vpop.f32.mrb[0].mxu0
      %v3967 = vadd.f32 %v3847, %v3966
      %v3968 = vpop.f32.mrb[0].mxu0
      %3969 = vmatprep.mubr.bf16.mxu0 0
      %3970 = vmatmul.mubr.bf16.gmra.mrb[0].mxu0 %v3765
      %v3971 = vpop.f32.mrb[0].mxu0
      %v3972 = vadd.f32 %v3847, %v3971
      %v3973 = vpop.f32.mrb[0].mxu0
      %v3974 = vpop.f32.mrb[0].mxu0
      %v3975 = vadd.f32 %v3847, %v3974
      %v3976 = vpop.f32.mrb[0].mxu0
      %3977 = vmatprep.mubr.bf16.mxu0 0
      %3978 = vmatmul.mubr.bf16.gmra.mrb[0].mxu0 %v3766
      %v3979 = vpop.f32.mrb[0].mxu0
      %v3980 = vadd.f32 %v3847, %v3979
      %v3981 = vpop.f32.mrb[0].mxu0
      %v3982 = vpop.f32.mrb[0].mxu0
      %v3983 = vadd.f32 %v3847, %v3982
      %v3984 = vpop.f32.mrb[0].mxu0
      %3985 = vmatprep.mubr.bf16.mxu0 0
      %3986 = vmatmul.mubr.bf16.gmra.mrb[0].mxu0 %v3767
      %v3987 = vpop.f32.mrb[0].mxu0
      %v3988 = vadd.f32 %v3847, %v3987
      %v3989 = vpop.f32.mrb[0].mxu0
      %v3990 = vpop.f32.mrb[0].mxu0
      %v3991 = vadd.f32 %v3847, %v3990
      %v3992 = vpop.f32.mrb[0].mxu0
      %3993 = vmatprep.mubr.bf16.mxu0 0
      %3994 = vmatmul.mubr.bf16.gmra.mrb[0].mxu0 %v3768
      %v3995 = vpop.f32.mrb[0].mxu0
      %v3996 = vadd.f32 %v3847, %v3995
      %v3997 = vpop.f32.mrb[0].mxu0
      %v3998 = vpop.f32.mrb[0].mxu0
      %v3999 = vadd.f32 %v3847, %v3998
      %v4000 = vpop.f32.mrb[0].mxu0
      %4001 = vmatprep.mubr.bf16.mxu0 0
      %4002 = vmatmul.mubr.bf16.gmra.mrb[0].mxu0 %v3769
      %v4003 = vpop.f32.mrb[0].mxu0
      %v4004 = vadd.f32 %v3847, %v4003
      %v4005 = vpop.f32.mrb[0].mxu0
      %v4006 = vpop.f32.mrb[0].mxu0
      %v4007 = vadd.f32 %v3847, %v4006
      %v4008 = vpop.f32.mrb[0].mxu0
      %4009 = vmatprep.mubr.bf16.mxu0 0
      %4010 = vmatmul.mubr.bf16.gmra.mrb[0].mxu0 %v3770
      %v4011 = vpop.f32.mrb[0].mxu0
      %v4012 = vadd.f32 %v3847, %v4011
      %v4013 = vpop.f32.mrb[0].mxu0
      %v4014 = vpop.f32.mrb[0].mxu0
      %v4015 = vadd.f32 %v3847, %v4014
      %v4016 = vpop.f32.mrb[0].mxu0
      %4017 = vmatprep.mubr.bf16.mxu0 0
      %4018 = vmatmul.mubr.bf16.gmra.mrb[0].mxu0 %v3771
      %v4019 = vpop.f32.mrb[0].mxu0
      %v4020 = vadd.f32 %v3847, %v4019
      %v4021 = vpop.f32.mrb[0].mxu0
      %v4022 = vpop.f32.mrb[0].mxu0
      %v4023 = vadd.f32 %v3847, %v4022
      %v4024 = vpop.f32.mrb[0].mxu0
      %4025 = vmatprep.mubr.bf16.mxu0 0
      %4026 = vmatmul.mubr.bf16.gmra.mrb[0].mxu0 %v3772
      %v4027 = vpop.f32.mrb[0].mxu0
      %v4028 = vadd.f32 %v3847, %v4027
      %v4029 = vpop.f32.mrb[0].mxu0
      %v4030 = vpop.f32.mrb[0].mxu0
      %v4031 = vadd.f32 %v3847, %v4030
      %v4032 = vpop.f32.mrb[0].mxu0
      %4033 = vmatprep.mubr.bf16.mxu0 0
      %4034 = vmatmul.mubr.bf16.gmra.mrb[0].mxu0 %v3773
      %v4035 = vpop.f32.mrb[0].mxu0
      %v4036 = vadd.f32 %v3847, %v4035
      %v4037 = vpop.f32.mrb[0].mxu0
      %v4038 = vpop.f32.mrb[0].mxu0
      %v4039 = vadd.f32 %v3847, %v4038
      %v4040 = vpop.f32.mrb[0].mxu0
      %4041 = vmatprep.mubr.bf16.mxu0 0
      %4042 = vmatmul.mubr.bf16.gmra.mrb[0].mxu0 %v3774
      %v4043 = vpop.f32.mrb[0].mxu0
      %v4044 = vadd.f32 %v3847, %v4043
      %v4045 = vpop.f32.mrb[0].mxu0
      %v4046 = vpop.f32.mrb[0].mxu0
      %v4047 = vadd.f32 %v3847, %v4046
      %v4048 = vpop.f32.mrb[0].mxu0
      %4049 = vmatprep.mubr.bf16.mxu0 0
      %4050 = vmatmul.mubr.bf16.gmra.mrb[0].mxu0 %v3775
      %v4051 = vpop.f32.mrb[0].mxu0
      %v4052 = vadd.f32 %v3847, %v4051
      %v4053 = vpop.f32.mrb[0].mxu0
      %v4054 = vpop.f32.mrb[0].mxu0
      %v4055 = vadd.f32 %v3847, %v4054
      %v4056 = vpop.f32.mrb[0].mxu0
      %4057 = vmatprep.mubr.bf16.mxu0 0
      %4058 = vmatmul.mubr.bf16.gmra.mrb[0].mxu0 %v3776
      %v4059 = vpop.f32.mrb[0].mxu0
      %v4060 = vadd.f32 %v3847, %v4059
      %v4061 = vpop.f32.mrb[0].mxu0
      %v4062 = vpop.f32.mrb[0].mxu0
      %v4063 = vadd.f32 %v3847, %v4062
      %v4064 = vpop.f32.mrb[0].mxu0
      %4065 = vmatprep.mubr.bf16.mxu0 0
      %4066 = vmatmul.mubr.bf16.gmra.mrb[0].mxu0 %v3777
      %v4067 = vpop.f32.mrb[0].mxu0
      %v4068 = vadd.f32 %v3847, %v4067
      %v4069 = vpop.f32.mrb[0].mxu0
      %v4070 = vpop.f32.mrb[0].mxu0
      %v4071 = vadd.f32 %v3847, %v4070
      %v4072 = vpop.f32.mrb[0].mxu0
      %4073 = vmatprep.mubr.bf16.mxu0 0
      %4074 = vmatmul.mubr.bf16.gmra.mrb[0].mxu0 %v3778
      %v4075 = vpop.f32.mrb[0].mxu0
      %v4076 = vadd.f32 %v3847, %v4075
      %v4077 = vpop.f32.mrb[0].mxu0
      %v4078 = vpop.f32.mrb[0].mxu0
      %v4079 = vadd.f32 %v3847, %v4078
      %v4080 = vpop.f32.mrb[0].mxu0
      %4081 = vmatprep.mubr.bf16.mxu0 0
      %4082 = vmatmul.mubr.bf16.gmra.mrb[0].mxu0 %v3779
      %v4083 = vpop.f32.mrb[0].mxu0
      %v4084 = vadd.f32 %v3847, %v4083
      %v4085 = vpop.f32.mrb[0].mxu0
      %v4086 = vpop.f32.mrb[0].mxu0
      %v4087 = vadd.f32 %v3847, %v4086
      %v4088 = vpop.f32.mrb[0].mxu0
      %4089 = vmatprep.mubr.bf16.mxu0 0
      %4090 = vmatmul.mubr.bf16.gmra.mrb[0].mxu0 %v3780
      %v4091 = vpop.f32.mrb[0].mxu0
      %v4092 = vadd.f32 %v3847, %v4091
      %v4093 = vpop.f32.mrb[0].mxu0
      %v4094 = vpop.f32.mrb[0].mxu0
      %v4095 = vadd.f32 %v3847, %v4094
      %v4096 = vpop.f32.mrb[0].mxu0
      %4097 = vmatprep.mubr.bf16.mxu0 0
      %4098 = vmatmul.mubr.bf16.gmra.mrb[0].mxu0 %v3781
      %v4099 = vpop.f32.mrb[0].mxu0
      %v4100 = vadd.f32 %v3847, %v4099
      %v4101 = vpop.f32.mrb[0].mxu0
      %v4102 = vpop.f32.mrb[0].mxu0
      %v4103 = vadd.f32 %v3847, %v4102
      %v4104 = vpop.f32.mrb[0].mxu0
      %4105 = vmatprep.mubr.bf16.mxu0 0
      %4106 = vmatmul.mubr.bf16.gmra.mrb[0].mxu0 %v3782
      %v4107 = vpop.f32.mrb[0].mxu0
      %v4108 = vadd.f32 %v3847, %v4107
      %v4109 = vpop.f32.mrb[0].mxu0
      %v4110 = vpop.f32.mrb[0].mxu0
      %v4111 = vadd.f32 %v3847, %v4110
      %v4112 = vpop.f32.mrb[0].mxu0
      %4113 = vmatprep.mubr.bf16.mxu0 0
      %4114 = vmatmul.mubr.bf16.gmra.mrb[0].mxu0 %v3783
      %v4115 = vpop.f32.mrb[0].mxu0
      %v4116 = vadd.f32 %v3847, %v4115
      %v4117 = vpop.f32.mrb[0].mxu0
      %v4118 = vpop.f32.mrb[0].mxu0
      %v4119 = vadd.f32 %v3847, %v4118
      %v4120 = vpop.f32.mrb[0].mxu0
      %4121 = vmatprep.mubr.bf16.mxu0 0
      %4122 = vmatmul.mubr.bf16.gmra.mrb[0].mxu0 %v3784
      %v4123 = vpop.f32.mrb[0].mxu0
      %v4124 = vadd.f32 %v3847, %v4123
      %v4125 = vpop.f32.mrb[0].mxu0
      %v4126 = vpop.f32.mrb[0].mxu0
      %v4127 = vadd.f32 %v3847, %v4126
      %v4128 = vpop.f32.mrb[0].mxu0
      %4129 = vmatprep.mubr.bf16.mxu0 0
      %4130 = vmatmul.mubr.bf16.gmra.mrb[0].mxu0 %v3785
      %v4131 = vpop.f32.mrb[0].mxu0
      %v4132 = vadd.f32 %v3847, %v4131
      %v4133 = vpop.f32.mrb[0].mxu0
      %v4134 = vpop.f32.mrb[0].mxu0
      %v4135 = vadd.f32 %v3847, %v4134
      %v4136 = vpop.f32.mrb[0].mxu0
      %4137 = vmatprep.mubr.bf16.mxu0 0
      %4138 = vmatmul.mubr.bf16.gmra.mrb[0].mxu0 %v3786
      %v4139 = vpop.f32.mrb[0].mxu0
      %v4140 = vadd.f32 %v3847, %v4139
      %v4141 = vpop.f32.mrb[0].mxu0
      %v4142 = vpop.f32.mrb[0].mxu0
      %v4143 = vadd.f32 %v3847, %v4142
      %v4144 = vpop.f32.mrb[0].mxu0
      %4145 = vmatprep.mubr.bf16.mxu0 0
      %4146 = vmatmul.mubr.bf16.gmra.mrb[0].mxu0 %v3787
      %v4147 = vpop.f32.mrb[0].mxu0
      %v4148 = vadd.f32 %v3847, %v4147
      %v4149 = vpop.f32.mrb[0].mxu0
      %v4150 = vpop.f32.mrb[0].mxu0
      %v4151 = vadd.f32 %v3847, %v4150
      %v4152 = vpop.f32.mrb[0].mxu0
      %4153 = vmatprep.mubr.bf16.mxu0 0
      %4154 = vmatmul.mubr.bf16.gmra.mrb[0].mxu0 %v3788
      %v4155 = vpop.f32.mrb[0].mxu0
      %v4156 = vadd.f32 %v3847, %v4155
      %v4157 = vpop.f32.mrb[0].mxu0
      %v4158 = vpop.f32.mrb[0].mxu0
      %v4159 = vadd.f32 %v3847, %v4158
      %v4160 = vpop.f32.mrb[0].mxu0
      %4161 = vmatprep.mubr.bf16.mxu0 0
      %4162 = vmatmul.mubr.bf16.gmra.mrb[0].mxu0 %v3789
      %v4163 = vpop.f32.mrb[0].mxu0
      %v4164 = vadd.f32 %v3847, %v4163
      %v4165 = vpop.f32.mrb[0].mxu0
      %v4166 = vpop.f32.mrb[0].mxu0
      %v4167 = vadd.f32 %v3847, %v4166
      %v4168 = vpop.f32.mrb[0].mxu0
      %4169 = vmatprep.mubr.bf16.mxu0 0
      %4170 = vmatmul.mubr.bf16.gmra.mrb[0].mxu0 %v3790
      %v4171 = vpop.f32.mrb[0].mxu0
      %v4172 = vadd.f32 %v3847, %v4171
      %v4173 = vpop.f32.mrb[0].mxu0
      %v4174 = vpop.f32.mrb[0].mxu0
      %v4175 = vadd.f32 %v3847, %v4174
      %v4176 = vpop.f32.mrb[0].mxu0
      %4177 = vmatprep.mubr.bf16.mxu0 0
      %4178 = vmatmul.mubr.bf16.gmra.mrb[0].mxu0 %v3791
      %v4179 = vpop.f32.mrb[0].mxu0
      %v4180 = vadd.f32 %v3847, %v4179
      %v4181 = vpop.f32.mrb[0].mxu0
      %v4182 = vpop.f32.mrb[0].mxu0
      %v4183 = vadd.f32 %v3847, %v4182
      %v4184 = vpop.f32.mrb[0].mxu0
      %4185 = vmatprep.mubr.bf16.mxu0 0
      %4186 = vmatmul.mubr.bf16.gmra.mrb[0].mxu0 %v3792
      %v4187 = vpop.f32.mrb[0].mxu0
      %v4188 = vadd.f32 %v3847, %v4187
      %v4189 = vpop.f32.mrb[0].mxu0
      %v4190 = vpop.f32.mrb[0].mxu0
      %v4191 = vadd.f32 %v3847, %v4190
      %v4192 = vpop.f32.mrb[0].mxu0
      %4193 = vmatprep.mubr.bf16.mxu0 0
      %4194 = vmatmul.mubr.bf16.gmra.mrb[0].mxu0 %v3793
      %v4195 = vpop.f32.mrb[0].mxu0
      %v4196 = vadd.f32 %v3847, %v4195
      %v4197 = vpop.f32.mrb[0].mxu0
      %v4198 = vpop.f32.mrb[0].mxu0
      %v4199 = vadd.f32 %v3847, %v4198
      %v4200 = vpop.f32.mrb[0].mxu0
      %4201 = vmatprep.mubr.bf16.mxu0 0
      %4202 = vmatmul.mubr.bf16.gmra.mrb[0].mxu0 %v3794
      %v4203 = vpop.f32.mrb[0].mxu0
      %v4204 = vadd.f32 %v3847, %v4203
      %v4205 = vpop.f32.mrb[0].mxu0
      %v4206 = vpop.f32.mrb[0].mxu0
      %v4207 = vadd.f32 %v3847, %v4206
      %v4208 = vpop.f32.mrb[0].mxu0
      %4209 = vmatprep.mubr.bf16.mxu0 0
      %4210 = vmatmul.mubr.bf16.gmra.mrb[0].mxu0 %v3795
      %v4211 = vpop.f32.mrb[0].mxu0
      %v4212 = vadd.f32 %v3847, %v4211
      %v4213 = vpop.f32.mrb[0].mxu0
      %v4214 = vpop.f32.mrb[0].mxu0
      %v4215 = vadd.f32 %v3847, %v4214
      %v4216 = vpop.f32.mrb[0].mxu0
      %4217 = vmatprep.mubr.bf16.mxu0 0
      %4218 = vmatmul.mubr.bf16.gmra.mrb[0].mxu0 %v3796
      %v4219 = vpop.f32.mrb[0].mxu0
      %v4220 = vadd.f32 %v3847, %v4219
      %v4221 = vpop.f32.mrb[0].mxu0
      %v4222 = vpop.f32.mrb[0].mxu0
      %v4223 = vadd.f32 %v3847, %v4222
      %v4224 = vpop.f32.mrb[0].mxu0
      %4225 = vmatprep.mubr.bf16.mxu0 0
      %4226 = vmatmul.mubr.bf16.gmra.mrb[0].mxu0 %v3797
      %v4227 = vpop.f32.mrb[0].mxu0
      %v4228 = vadd.f32 %v3847, %v4227
      %v4229 = vpop.f32.mrb[0].mxu0
      %v4230 = vpop.f32.mrb[0].mxu0
      %v4231 = vadd.f32 %v3847, %v4230
      %v4232 = vpop.f32.mrb[0].mxu0
      %4233 = vmatprep.mubr.bf16.mxu0 0
      %4234 = vmatmul.mubr.bf16.gmra.mrb[0].mxu0 %v3798
      %v4235 = vpop.f32.mrb[0].mxu0
      %v4236 = vadd.f32 %v3847, %v4235
      %v4237 = vpop.f32.mrb[0].mxu0
      %v4238 = vpop.f32.mrb[0].mxu0
      %v4239 = vadd.f32 %v3847, %v4238
      %v4240 = vpop.f32.mrb[0].mxu0
      %4241 = vmatprep.mubr.bf16.mxu0 0
      %4242 = vmatmul.mubr.bf16.gmra.mrb[0].mxu0 %v3799
      %v4243 = vpop.f32.mrb[0].mxu0
      %v4244 = vadd.f32 %v3847, %v4243
      %v4245 = vpop.f32.mrb[0].mxu0
      %v4246 = vpop.f32.mrb[0].mxu0
      %v4247 = vadd.f32 %v3847, %v4246
      %v4248 = vpop.f32.mrb[0].mxu0
      %4249 = vmatprep.mubr.bf16.mxu0 0
      %4250 = vmatmul.mubr.bf16.gmra.mrb[0].mxu0 %v3800
      %v4251 = vpop.f32.mrb[0].mxu0
      %v4252 = vadd.f32 %v3847, %v4251
      %v4253 = vpop.f32.mrb[0].mxu0
      %v4254 = vpop.f32.mrb[0].mxu0
      %v4255 = vadd.f32 %v3847, %v4254
      %v4256 = vpop.f32.mrb[0].mxu0
      %4257 = vmatprep.mubr.bf16.mxu0 0
      %4258 = vmatmul.mubr.bf16.gmra.mrb[0].mxu0 %v3801
      %v4259 = vpop.f32.mrb[0].mxu0
      %v4260 = vadd.f32 %v3847, %v4259
      %v4261 = vpop.f32.mrb[0].mxu0
      %v4262 = vpop.f32.mrb[0].mxu0
      %v4263 = vadd.f32 %v3847, %v4262
      %v4264 = vpop.f32.mrb[0].mxu0
      %4265 = vmatprep.mubr.bf16.mxu0 0
      %4266 = vmatmul.mubr.bf16.gmra.mrb[0].mxu0 %v3802
      %v4267 = vpop.f32.mrb[0].mxu0
      %v4268 = vadd.f32 %v3847, %v4267
      %v4269 = vpop.f32.mrb[0].mxu0
      %v4270 = vpop.f32.mrb[0].mxu0
      %v4271 = vadd.f32 %v3847, %v4270
      %v4272 = vpop.f32.mrb[0].mxu0
      %4273 = vmatprep.mubr.bf16.mxu0 0
      %4274 = vmatmul.mubr.bf16.gmra.mrb[0].mxu0 %v3803
      %v4275 = vpop.f32.mrb[0].mxu0
      %v4276 = vadd.f32 %v3847, %v4275
      %v4277 = vpop.f32.mrb[0].mxu0
      %v4278 = vpop.f32.mrb[0].mxu0
      %v4279 = vadd.f32 %v3847, %v4278
      %v4280 = vpop.f32.mrb[0].mxu0
      %4281 = vmatprep.mubr.bf16.mxu0 0
      %4282 = vmatmul.mubr.bf16.gmra.mrb[0].mxu0 %v3804
      %v4283 = vpop.f32.mrb[0].mxu0
      %v4284 = vadd.f32 %v3847, %v4283
      %v4285 = vpop.f32.mrb[0].mxu0
      %v4286 = vpop.f32.mrb[0].mxu0
      %v4287 = vadd.f32 %v3847, %v4286
      %v4288 = vpop.f32.mrb[0].mxu0
      %4289 = vmatprep.mubr.bf16.mxu0 0
      %4290 = vmatmul.mubr.bf16.gmra.mrb[0].mxu0 %v3805
      %v4291 = vpop.f32.mrb[0].mxu0
      %v4292 = vadd.f32 %v3847, %v4291
      %v4293 = vpop.f32.mrb[0].mxu0
      %v4294 = vpop.f32.mrb[0].mxu0
      %v4295 = vadd.f32 %v3847, %v4294
      %v4296 = vpop.f32.mrb[0].mxu0
      %4297 = vmatprep.mubr.bf16.mxu0 0
      %4298 = vmatmul.mubr.bf16.gmra.mrb[0].mxu0 %v3806
      %v4299 = vpop.f32.mrb[0].mxu0
      %v4300 = vadd.f32 %v3847, %v4299
      %v4301 = vpop.f32.mrb[0].mxu0
      %v4302 = vpop.f32.mrb[0].mxu0
      %v4303 = vadd.f32 %v3847, %v4302
      %v4304 = vpop.f32.mrb[0].mxu0
      %4305 = vmatprep.mubr.bf16.mxu0 0
      %4306 = vmatmul.mubr.bf16.gmra.mrb[0].mxu0 %v3807
      %v4307 = vpop.f32.mrb[0].mxu0
      %v4308 = vadd.f32 %v3847, %v4307
      %v4309 = vpop.f32.mrb[0].mxu0
      %v4310 = vpop.f32.mrb[0].mxu0
      %v4311 = vadd.f32 %v3847, %v4310
      %v4312 = vpop.f32.mrb[0].mxu0
      %4313 = vmatprep.mubr.bf16.mxu0 0
      %4314 = vmatmul.mubr.bf16.gmra.mrb[0].mxu0 %v3808
      %v4315 = vpop.f32.mrb[0].mxu0
      %v4316 = vadd.f32 %v3847, %v4315
      %v4317 = vpop.f32.mrb[0].mxu0
      %v4318 = vpop.f32.mrb[0].mxu0
      %v4319 = vadd.f32 %v3847, %v4318
      %v4320 = vpop.f32.mrb[0].mxu0
      %4321 = vmatprep.mubr.bf16.mxu0 0
      %4322 = vmatmul.mubr.bf16.gmra.mrb[0].mxu0 %v3809
      %v4323 = vpop.f32.mrb[0].mxu0
      %v4324 = vadd.f32 %v3847, %v4323
      %v4325 = vpop.f32.mrb[0].mxu0
      %v4326 = vpop.f32.mrb[0].mxu0
      %v4327 = vadd.f32 %v3847, %v4326
      %v4328 = vpop.f32.mrb[0].mxu0
      %4329 = vmatprep.mubr.bf16.mxu0 0
      %4330 = vmatmul.mubr.bf16.gmra.mrb[0].mxu0 %v3810
      %v4331 = vpop.f32.mrb[0].mxu0
      %v4332 = vadd.f32 %v3847, %v4331
      %v4333 = vpop.f32.mrb[0].mxu0
      %v4334 = vpop.f32.mrb[0].mxu0
      %v4335 = vadd.f32 %v3847, %v4334
      %v4336 = vpop.f32.mrb[0].mxu0
      %4337 = vmatprep.mubr.bf16.mxu0 0
      %4338 = vmatmul.mubr.bf16.gmra.mrb[0].mxu0 %v3811
      %v4339 = vpop.f32.mrb[0].mxu0
      %v4340 = vadd.f32 %v3847, %v4339
      %v4341 = vpop.f32.mrb[0].mxu0
      %v4342 = vpop.f32.mrb[0].mxu0
      %v4343 = vadd.f32 %v3847, %v4342
      %v4344 = vpop.f32.mrb[0].mxu0
      %4345 = vmatprep.mubr.bf16.mxu0 0
      %4346 = vmatmul.mubr.bf16.gmra.mrb[0].mxu0 %v3812
      %v4347 = vpop.f32.mrb[0].mxu0
      %v4348 = vadd.f32 %v3847, %v4347
      %v4349 = vpop.f32.mrb[0].mxu0
      %v4350 = vpop.f32.mrb[0].mxu0
      %v4351 = vadd.f32 %v3847, %v4350
      %v4352 = vpop.f32.mrb[0].mxu0
      %4353 = vmatprep.mubr.bf16.mxu0 0
      %4354 = vmatmul.mubr.bf16.gmra.mrb[0].mxu0 %v3813
      %v4355 = vpop.f32.mrb[0].mxu0
      %v4356 = vadd.f32 %v3847, %v4355
      %v4357 = vpop.f32.mrb[0].mxu0
      %v4358 = vpop.f32.mrb[0].mxu0
      %v4359 = vadd.f32 %v3847, %v4358
      %v4360 = vpop.f32.mrb[0].mxu0
      %4361 = vmatprep.mubr.bf16.mxu0 0
      %4362 = vmatmul.mubr.bf16.gmra.mrb[0].mxu0 %v3814
      %v4363 = vpop.f32.mrb[0].mxu0
      %v4364 = vadd.f32 %v3847, %v4363
      %v4365 = vpop.f32.mrb[0].mxu0
      %v4366 = vpop.f32.mrb[0].mxu0
      %v4367 = vadd.f32 %v3847, %v4366
      %v4368 = vpop.f32.mrb[0].mxu0
      %4369 = vmatprep.mubr.bf16.mxu0 0
      %4370 = vmatmul.mubr.bf16.gmra.mrb[0].mxu0 %v3815
      %v4371 = vpop.f32.mrb[0].mxu0
      %v4372 = vadd.f32 %v3847, %v4371
      %v4373 = vpop.f32.mrb[0].mxu0
      %v4374 = vpop.f32.mrb[0].mxu0
      %v4375 = vadd.f32 %v3847, %v4374
      %v4376 = vpop.f32.mrb[0].mxu0
      %4377 = vmatprep.mubr.bf16.mxu0 0
      %4378 = vmatmul.mubr.bf16.gmra.mrb[0].mxu0 %v3816
      %v4379 = vpop.f32.mrb[0].mxu0
      %v4380 = vadd.f32 %v3847, %v4379
      %v4381 = vpop.f32.mrb[0].mxu0
      %v4382 = vpop.f32.mrb[0].mxu0
      %v4383 = vadd.f32 %v3847, %v4382
      %v4384 = vpop.f32.mrb[0].mxu0
      %4385 = vmatprep.mubr.bf16.mxu0 0
      %4386 = vmatmul.mubr.bf16.gmra.mrb[0].mxu0 %v3817
      %v4387 = vpop.f32.mrb[0].mxu0
      %v4388 = vadd.f32 %v3847, %v4387
      %v4389 = vpop.f32.mrb[0].mxu0
      %v4390 = vpop.f32.mrb[0].mxu0
      %v4391 = vadd.f32 %v3847, %v4390
      %v4392 = vpop.f32.mrb[0].mxu0
      %4393 = vmatprep.mubr.bf16.mxu0 0
      %4394 = vmatmul.mubr.bf16.gmra.mrb[0].mxu0 %v3818
      %v4395 = vpop.f32.mrb[0].mxu0
      %v4396 = vadd.f32 %v3847, %v4395
      %v4397 = vpop.f32.mrb[0].mxu0
      %v4398 = vpop.f32.mrb[0].mxu0
      %v4399 = vadd.f32 %v3847, %v4398
      %v4400 = vpop.f32.mrb[0].mxu0
      %4401 = vmatprep.mubr.bf16.mxu0 0
      %4402 = vmatmul.mubr.bf16.gmra.mrb[0].mxu0 %v3819
      %v4403 = vpop.f32.mrb[0].mxu0
      %v4404 = vadd.f32 %v3847, %v4403
      %v4405 = vpop.f32.mrb[0].mxu0
      %v4406 = vpop.f32.mrb[0].mxu0
      %v4407 = vadd.f32 %v3847, %v4406
      %v4408 = vpop.f32.mrb[0].mxu0
      %4409 = vmatprep.mubr.bf16.mxu0 0
      %4410 = vmatmul.mubr.bf16.gmra.mrb[0].mxu0 %v3820
      %v4411 = vpop.f32.mrb[0].mxu0
      %v4412 = vadd.f32 %v3847, %v4411
      %v4413 = vpop.f32.mrb[0].mxu0
      %v4414 = vpop.f32.mrb[0].mxu0
      %v4415 = vadd.f32 %v3847, %v4414
      %v4416 = vpop.f32.mrb[0].mxu0
      %4417 = vmatprep.mubr.bf16.mxu0 0
      %4418 = vmatmul.mubr.bf16.gmra.mrb[0].mxu0 %v3821
      %v4419 = vpop.f32.mrb[0].mxu0
      %v4420 = vadd.f32 %v3847, %v4419
      %v4421 = vpop.f32.mrb[0].mxu0
      %v4422 = vpop.f32.mrb[0].mxu0
      %v4423 = vadd.f32 %v3847, %v4422
      %v4424 = vpop.f32.mrb[0].mxu0
      %4425 = vmatprep.mubr.bf16.mxu0 0
      %4426 = vmatmul.mubr.bf16.gmra.mrb[0].mxu0 %v3822
      %v4427 = vpop.f32.mrb[0].mxu0
      %v4428 = vadd.f32 %v3847, %v4427
      %v4429 = vpop.f32.mrb[0].mxu0
      %v4430 = vpop.f32.mrb[0].mxu0
      %v4431 = vadd.f32 %v3847, %v4430
      %v4432 = vpop.f32.mrb[0].mxu0
      %4433 = vmatprep.mubr.bf16.mxu0 0
      %4434 = vmatmul.mubr.bf16.gmra.mrb[0].mxu0 %v3823
      %v4435 = vpop.f32.mrb[0].mxu0
      %v4436 = vadd.f32 %v3847, %v4435
      %v4437 = vpop.f32.mrb[0].mxu0
      %v4438 = vpop.f32.mrb[0].mxu0
      %v4439 = vadd.f32 %v3847, %v4438
      %v4440 = vpop.f32.mrb[0].mxu0
      %4441 = vdwg.mxu0
      %v4442 = vmax.f32 %v3932, 0.0
      %v4443 = vmax.f32 %v3935, 0.0
      %v4444 = vmax.f32 %v3940, 0.0
      %v4445 = vmax.f32 %v3943, 0.0
      %v4446 = vmax.f32 %v3948, 0.0
      %v4447 = vmax.f32 %v3951, 0.0
      %v4448 = vmax.f32 %v3956, 0.0
      %v4449 = vmax.f32 %v3959, 0.0
      %v4450 = vmax.f32 %v3964, 0.0
      %v4451 = vmax.f32 %v3967, 0.0
      %v4452 = vmax.f32 %v3972, 0.0
      %v4453 = vmax.f32 %v3975, 0.0
      %v4454 = vmax.f32 %v3980, 0.0
      %v4455 = vmax.f32 %v3983, 0.0
      %v4456 = vmax.f32 %v3988, 0.0
      %v4457 = vmax.f32 %v3991, 0.0
      %v4458 = vmax.f32 %v3996, 0.0
      %v4459 = vmax.f32 %v3999, 0.0
      %v4460 = vmax.f32 %v4004, 0.0
      %v4461 = vmax.f32 %v4007, 0.0
      %v4462 = vmax.f32 %v4012, 0.0
      %v4463 = vmax.f32 %v4015, 0.0
      %v4464 = vmax.f32 %v4020, 0.0
      %v4465 = vmax.f32 %v4023, 0.0
      %v4466 = vmax.f32 %v4028, 0.0
      %v4467 = vmax.f32 %v4031, 0.0
      %v4468 = vmax.f32 %v4036, 0.0
      %v4469 = vmax.f32 %v4039, 0.0
      %v4470 = vmax.f32 %v4044, 0.0
      %v4471 = vmax.f32 %v4047, 0.0
      %v4472 = vmax.f32 %v4052, 0.0
      %v4473 = vmax.f32 %v4055, 0.0
      %v4474 = vmax.f32 %v4060, 0.0
      %v4475 = vmax.f32 %v4063, 0.0
      %v4476 = vmax.f32 %v4068, 0.0
      %v4477 = vmax.f32 %v4071, 0.0
      %v4478 = vmax.f32 %v4076, 0.0
      %v4479 = vmax.f32 %v4079, 0.0
      %v4480 = vmax.f32 %v4084, 0.0
      %v4481 = vmax.f32 %v4087, 0.0
      %v4482 = vmax.f32 %v4092, 0.0
      %v4483 = vmax.f32 %v4095, 0.0
      %v4484 = vmax.f32 %v4100, 0.0
      %v4485 = vmax.f32 %v4103, 0.0
      %v4486 = vmax.f32 %v4108, 0.0
      %v4487 = vmax.f32 %v4111, 0.0
      %v4488 = vmax.f32 %v4116, 0.0
      %v4489 = vmax.f32 %v4119, 0.0
      %v4490 = vmax.f32 %v4124, 0.0
      %v4491 = vmax.f32 %v4127, 0.0
      %v4492 = vmax.f32 %v4132, 0.0
      %v4493 = vmax.f32 %v4135, 0.0
      %v4494 = vmax.f32 %v4140, 0.0
      %v4495 = vmax.f32 %v4143, 0.0
      %v4496 = vmax.f32 %v4148, 0.0
      %v4497 = vmax.f32 %v4151, 0.0
      %v4498 = vmax.f32 %v4156, 0.0
      %v4499 = vmax.f32 %v4159, 0.0
      %v4500 = vmax.f32 %v4164, 0.0
      %v4501 = vmax.f32 %v4167, 0.0
      %v4502 = vmax.f32 %v4172, 0.0
      %v4503 = vmax.f32 %v4175, 0.0
      %v4504 = vmax.f32 %v4180, 0.0
      %v4505 = vmax.f32 %v4183, 0.0
      %v4506 = vmax.f32 %v4188, 0.0
      %v4507 = vmax.f32 %v4191, 0.0
      %v4508 = vmax.f32 %v4196, 0.0
      %v4509 = vmax.f32 %v4199, 0.0
      %v4510 = vmax.f32 %v4204, 0.0
      %v4511 = vmax.f32 %v4207, 0.0
      %v4512 = vmax.f32 %v4212, 0.0
      %v4513 = vmax.f32 %v4215, 0.0
      %v4514 = vmax.f32 %v4220, 0.0
      %v4515 = vmax.f32 %v4223, 0.0
      %v4516 = vmax.f32 %v4228, 0.0
      %v4517 = vmax.f32 %v4231, 0.0
      %v4518 = vmax.f32 %v4236, 0.0
      %v4519 = vmax.f32 %v4239, 0.0
      %v4520 = vmax.f32 %v4244, 0.0
      %v4521 = vmax.f32 %v4247, 0.0
      %v4522 = vmax.f32 %v4252, 0.0
      %v4523 = vmax.f32 %v4255, 0.0
      %v4524 = vmax.f32 %v4260, 0.0
      %v4525 = vmax.f32 %v4263, 0.0
      %v4526 = vmax.f32 %v4268, 0.0
      %v4527 = vmax.f32 %v4271, 0.0
      %v4528 = vmax.f32 %v4276, 0.0
      %v4529 = vmax.f32 %v4279, 0.0
      %v4530 = vmax.f32 %v4284, 0.0
      %v4531 = vmax.f32 %v4287, 0.0
      %v4532 = vmax.f32 %v4292, 0.0
      %v4533 = vmax.f32 %v4295, 0.0
      %v4534 = vmax.f32 %v4300, 0.0
      %v4535 = vmax.f32 %v4303, 0.0
      %v4536 = vmax.f32 %v4308, 0.0
      %v4537 = vmax.f32 %v4311, 0.0
      %v4538 = vmax.f32 %v4316, 0.0
      %v4539 = vmax.f32 %v4319, 0.0
      %v4540 = vmax.f32 %v4324, 0.0
      %v4541 = vmax.f32 %v4327, 0.0
      %v4542 = vmax.f32 %v4332, 0.0
      %v4543 = vmax.f32 %v4335, 0.0
      %v4544 = vmax.f32 %v4340, 0.0
      %v4545 = vmax.f32 %v4343, 0.0
      %v4546 = vmax.f32 %v4348, 0.0
      %v4547 = vmax.f32 %v4351, 0.0
      %v4548 = vmax.f32 %v4356, 0.0
      %v4549 = vmax.f32 %v4359, 0.0
      %v4550 = vmax.f32 %v4364, 0.0
      %v4551 = vmax.f32 %v4367, 0.0
      %v4552 = vmax.f32 %v4372, 0.0
      %v4553 = vmax.f32 %v4375, 0.0
      %v4554 = vmax.f32 %v4380, 0.0
      %v4555 = vmax.f32 %v4383, 0.0
      %v4556 = vmax.f32 %v4388, 0.0
      %v4557 = vmax.f32 %v4391, 0.0
      %v4558 = vmax.f32 %v4396, 0.0
      %v4559 = vmax.f32 %v4399, 0.0
      %v4560 = vmax.f32 %v4404, 0.0
      %v4561 = vmax.f32 %v4407, 0.0
      %v4562 = vmax.f32 %v4412, 0.0
      %v4563 = vmax.f32 %v4415, 0.0
      %v4564 = vmax.f32 %v4420, 0.0
      %v4565 = vmax.f32 %v4423, 0.0
      %v4566 = vmax.f32 %v4428, 0.0
      %v4567 = vmax.f32 %v4431, 0.0
      %v4568 = vmax.f32 %v4436, 0.0
      %v4569 = vmax.f32 %v4439, 0.0
      %v4570 = vpack.c.bf16 %v4443, %v4442
      %v4571 = vpack.c.bf16 %v4445, %v4444
      %v4572 = vpack.c.bf16 %v4447, %v4446
      %v4573 = vpack.c.bf16 %v4449, %v4448
      %v4574 = vpack.c.bf16 %v4451, %v4450
      %v4575 = vpack.c.bf16 %v4453, %v4452
      %v4576 = vpack.c.bf16 %v4455, %v4454
      %v4577 = vpack.c.bf16 %v4457, %v4456
      %v4578 = vpack.c.bf16 %v4459, %v4458
      %v4579 = vpack.c.bf16 %v4461, %v4460
      %v4580 = vpack.c.bf16 %v4463, %v4462
      %v4581 = vpack.c.bf16 %v4465, %v4464
      %v4582 = vpack.c.bf16 %v4467, %v4466
      %v4583 = vpack.c.bf16 %v4469, %v4468
      %v4584 = vpack.c.bf16 %v4471, %v4470
      %v4585 = vpack.c.bf16 %v4473, %v4472
      %v4586 = vpack.c.bf16 %v4475, %v4474
      %v4587 = vpack.c.bf16 %v4477, %v4476
      %v4588 = vpack.c.bf16 %v4479, %v4478
      %v4589 = vpack.c.bf16 %v4481, %v4480
      %v4590 = vpack.c.bf16 %v4483, %v4482
      %v4591 = vpack.c.bf16 %v4485, %v4484
      %v4592 = vpack.c.bf16 %v4487, %v4486
      %v4593 = vpack.c.bf16 %v4489, %v4488
      %v4594 = vpack.c.bf16 %v4491, %v4490
      %v4595 = vpack.c.bf16 %v4493, %v4492
      %v4596 = vpack.c.bf16 %v4495, %v4494
      %v4597 = vpack.c.bf16 %v4497, %v4496
      %v4598 = vpack.c.bf16 %v4499, %v4498
      %v4599 = vpack.c.bf16 %v4501, %v4500
      %v4600 = vpack.c.bf16 %v4503, %v4502
      %v4601 = vpack.c.bf16 %v4505, %v4504
      %v4602 = vpack.c.bf16 %v4507, %v4506
      %v4603 = vpack.c.bf16 %v4509, %v4508
      %v4604 = vpack.c.bf16 %v4511, %v4510
      %v4605 = vpack.c.bf16 %v4513, %v4512
      %v4606 = vpack.c.bf16 %v4515, %v4514
      %v4607 = vpack.c.bf16 %v4517, %v4516
      %v4608 = vpack.c.bf16 %v4519, %v4518
      %v4609 = vpack.c.bf16 %v4521, %v4520
      %v4610 = vpack.c.bf16 %v4523, %v4522
      %v4611 = vpack.c.bf16 %v4525, %v4524
      %v4612 = vpack.c.bf16 %v4527, %v4526
      %v4613 = vpack.c.bf16 %v4529, %v4528
      %v4614 = vpack.c.bf16 %v4531, %v4530
      %v4615 = vpack.c.bf16 %v4533, %v4532
      %v4616 = vpack.c.bf16 %v4535, %v4534
      %v4617 = vpack.c.bf16 %v4537, %v4536
      %v4618 = vpack.c.bf16 %v4539, %v4538
      %v4619 = vpack.c.bf16 %v4541, %v4540
      %v4620 = vpack.c.bf16 %v4543, %v4542
      %v4621 = vpack.c.bf16 %v4545, %v4544
      %v4622 = vpack.c.bf16 %v4547, %v4546
      %v4623 = vpack.c.bf16 %v4549, %v4548
      %v4624 = vpack.c.bf16 %v4551, %v4550
      %v4625 = vpack.c.bf16 %v4553, %v4552
      %v4626 = vpack.c.bf16 %v4555, %v4554
      %v4627 = vpack.c.bf16 %v4557, %v4556
      %v4628 = vpack.c.bf16 %v4559, %v4558
      %v4629 = vpack.c.bf16 %v4561, %v4560
      %v4630 = vpack.c.bf16 %v4563, %v4562
      %v4631 = vpack.c.bf16 %v4565, %v4564
      %v4632 = vpack.c.bf16 %v4567, %v4566
      %v4633 = vpack.c.bf16 %v4569, %v4568
      %v4634 = vmax.bf16 %v202, 0
      %v4635 = vmax.bf16 %v203, 0
      %v4636 = vmax.bf16 %v204, 0
      %v4637 = vmax.bf16 %v205, 0
      %v4638 = vmax.bf16 %v206, 0
      %v4639 = vmax.bf16 %v207, 0
      %v4640 = vmax.bf16 %v208, 0
      %v4641 = vmax.bf16 %v209, 0
      %v4642 = vmax.bf16 %v210, 0
      %v4643 = vmax.bf16 %v211, 0
      %v4644 = vmax.bf16 %v212, 0
      %v4645 = vmax.bf16 %v213, 0
      %v4646 = vmax.bf16 %v214, 0
      %v4647 = vmax.bf16 %v215, 0
      %v4648 = vmax.bf16 %v216, 0
      %v4649 = vmax.bf16 %v217, 0
      %v4650 = vmax.bf16 %v218, 0
      %v4651 = vmax.bf16 %v219, 0
      %v4652 = vmax.bf16 %v220, 0
      %v4653 = vmax.bf16 %v221, 0
      %v4654 = vmax.bf16 %v222, 0
      %v4655 = vmax.bf16 %v223, 0
      %v4656 = vmax.bf16 %v224, 0
      %v4657 = vmax.bf16 %v225, 0
      %v4658 = vmax.bf16 %v226, 0
      %v4659 = vmax.bf16 %v227, 0
      %v4660 = vmax.bf16 %v228, 0
      %v4661 = vmax.bf16 %v229, 0
      %v4662 = vmax.bf16 %v230, 0
      %v4663 = vmax.bf16 %v231, 0
      %v4664 = vmax.bf16 %v232, 0
      %v4665 = vmax.bf16 %v233, 0
      %v4666 = vmax.bf16 %v234, 0
      %v4667 = vmax.bf16 %v235, 0
      %v4668 = vmax.bf16 %v236, 0
      %v4669 = vmax.bf16 %v237, 0
      %v4670 = vmax.bf16 %v238, 0
      %v4671 = vmax.bf16 %v239, 0
      %v4672 = vmax.bf16 %v240, 0
      %v4673 = vmax.bf16 %v241, 0
      %v4674 = vmax.bf16 %v242, 0
      %v4675 = vmax.bf16 %v243, 0
      %v4676 = vmax.bf16 %v244, 0
      %v4677 = vmax.bf16 %v245, 0
      %v4678 = vmax.bf16 %v246, 0
      %v4679 = vmax.bf16 %v247, 0
      %v4680 = vmax.bf16 %v248, 0
      %v4681 = vmax.bf16 %v249, 0
      %v4682 = vmax.bf16 %v250, 0
      %v4683 = vmax.bf16 %v251, 0
      %v4684 = vmax.bf16 %v252, 0
      %v4685 = vmax.bf16 %v253, 0
      %v4686 = vmax.bf16 %v254, 0
      %v4687 = vmax.bf16 %v255, 0
      %v4688 = vmax.bf16 %v256, 0
      %v4689 = vmax.bf16 %v257, 0
      %v4690 = vmax.bf16 %v258, 0
      %v4691 = vmax.bf16 %v259, 0
      %v4692 = vmax.bf16 %v260, 0
      %v4693 = vmax.bf16 %v261, 0
      %v4694 = vmax.bf16 %v262, 0
      %v4695 = vmax.bf16 %v263, 0
      %v4696 = vmax.bf16 %v264, 0
      %v4697 = vmax.bf16 %v265, 0
      %v4698 = vmax.bf16 %v266, 0
      %v4699 = vmax.bf16 %v267, 0
      %v4700 = vmax.bf16 %v268, 0
      %v4701 = vmax.bf16 %v269, 0
      %v4702 = vmax.bf16 %v270, 0
      %v4703 = vmax.bf16 %v271, 0
      %v4704 = vmax.bf16 %v272, 0
      %v4705 = vmax.bf16 %v273, 0
      %v4706 = vmax.bf16 %v274, 0
      %v4707 = vmax.bf16 %v275, 0
      %v4708 = vmax.bf16 %v276, 0
      %v4709 = vmax.bf16 %v277, 0
      %v4710 = vmax.bf16 %v278, 0
      %v4711 = vmax.bf16 %v279, 0
      %v4712 = vmax.bf16 %v280, 0
      %v4713 = vmax.bf16 %v281, 0
      %v4714 = vmax.bf16 %v282, 0
      %v4715 = vmax.bf16 %v283, 0
      %v4716 = vmax.bf16 %v284, 0
      %v4717 = vmax.bf16 %v285, 0
      %v4718 = vmax.bf16 %v286, 0
      %v4719 = vmax.bf16 %v287, 0
      %v4720 = vmax.bf16 %v288, 0
      %v4721 = vmax.bf16 %v289, 0
      %v4722 = vmax.bf16 %v290, 0
      %v4723 = vmax.bf16 %v291, 0
      %v4724 = vmax.bf16 %v292, 0
      %v4725 = vmax.bf16 %v293, 0
      %v4726 = vmax.bf16 %v294, 0
      %v4727 = vmax.bf16 %v295, 0
      %v4728 = vmax.bf16 %v296, 0
      %v4729 = vmax.bf16 %v297, 0
      %v4730 = vmax.bf16 %v298, 0
      %v4731 = vmax.bf16 %v299, 0
      %v4732 = vmax.bf16 %v300, 0
      %v4733 = vmax.bf16 %v301, 0
      %v4734 = vmax.bf16 %v302, 0
      %v4735 = vmax.bf16 %v303, 0
      %v4736 = vmax.bf16 %v304, 0
      %v4737 = vmax.bf16 %v305, 0
      %v4738 = vmax.bf16 %v306, 0
      %v4739 = vmax.bf16 %v307, 0
      %v4740 = vmax.bf16 %v308, 0
      %v4741 = vmax.bf16 %v309, 0
      %v4742 = vmax.bf16 %v310, 0
      %v4743 = vmax.bf16 %v311, 0
      %v4744 = vmax.bf16 %v312, 0
      %v4745 = vmax.bf16 %v313, 0
      %v4746 = vmax.bf16 %v314, 0
      %v4747 = vmax.bf16 %v315, 0
      %v4748 = vmax.bf16 %v316, 0
      %v4749 = vmax.bf16 %v317, 0
      %v4750 = vmax.bf16 %v318, 0
      %v4751 = vmax.bf16 %v319, 0
      %v4752 = vmax.bf16 %v320, 0
      %v4753 = vmax.bf16 %v321, 0
      %v4754 = vmax.bf16 %v322, 0
      %v4755 = vmax.bf16 %v323, 0
      %v4756 = vmax.bf16 %v324, 0
      %v4757 = vmax.bf16 %v325, 0
      %v4758 = vmax.bf16 %v326, 0
      %v4759 = vmax.bf16 %v327, 0
      %v4760 = vmax.bf16 %v328, 0
      %v4761 = vmax.bf16 %v329, 0
      %v4762 = vld [vmem:[%s2] sm:$0xf]
      %v4763 = vld [vmem:[%s2 + $0x4] sm:$0xf]
      %v4764 = vld [vmem:[%s2 + $0x8] sm:$0xf]
      %v4765 = vld [vmem:[%s2 + $0xc] sm:$0xf]
      %v4766 = vld [vmem:[%s2 + $0x10] sm:$0xf]
      %v4767 = vld [vmem:[%s2 + $0x14] sm:$0xf]
      %v4768 = vld [vmem:[%s2 + $0x18] sm:$0xf]
      %v4769 = vld [vmem:[%s2 + $0x1c] sm:$0xf]
      %v4770 = vld [vmem:[%s2 + $0x20] sm:$0xf]
      %v4771 = vld [vmem:[%s2 + $0x24] sm:$0xf]
      %v4772 = vld [vmem:[%s2 + $0x28] sm:$0xf]
      %v4773 = vld [vmem:[%s2 + $0x2c] sm:$0xf]
      %v4774 = vld [vmem:[%s2 + $0x30] sm:$0xf]
      %v4775 = vld [vmem:[%s2 + $0x34] sm:$0xf]
      %v4776 = vld [vmem:[%s2 + $0x38] sm:$0xf]
      %v4777 = vld [vmem:[%s2 + $0x3c] sm:$0xf]
      %v4778 = vld [vmem:[%s2 + $0x40] sm:$0xf]
      %v4779 = vld [vmem:[%s2 + $0x44] sm:$0xf]
      %v4780 = vld [vmem:[%s2 + $0x48] sm:$0xf]
      %v4781 = vld [vmem:[%s2 + $0x4c] sm:$0xf]
      %v4782 = vld [vmem:[%s2 + $0x50] sm:$0xf]
      %v4783 = vld [vmem:[%s2 + $0x54] sm:$0xf]
      %v4784 = vld [vmem:[%s2 + $0x58] sm:$0xf]
      %v4785 = vld [vmem:[%s2 + $0x5c] sm:$0xf]
      %v4786 = vld [vmem:[%s2 + $0x60] sm:$0xf]
      %v4787 = vld [vmem:[%s2 + $0x64] sm:$0xf]
      %v4788 = vld [vmem:[%s2 + $0x68] sm:$0xf]
      %v4789 = vld [vmem:[%s2 + $0x6c] sm:$0xf]
      %v4790 = vld [vmem:[%s2 + $0x70] sm:$0xf]
      %v4791 = vld [vmem:[%s2 + $0x74] sm:$0xf]
      %v4792 = vld [vmem:[%s2 + $0x78] sm:$0xf]
      %v4793 = vld [vmem:[%s2 + $0x7c] sm:$0xf]
      %v4922 = vunpack.c.l.b16 %v4634
      %v4923 = vunpack.c.l.b16 %v4635
      %v4924 = vunpack.c.l.b16 %v4636
      %v4925 = vunpack.c.l.b16 %v4637
      %v4926 = vunpack.c.l.b16 %v4638
      %v4927 = vunpack.c.l.b16 %v4639
      %v4928 = vunpack.c.l.b16 %v4640
      %v4929 = vunpack.c.l.b16 %v4641
      %v4930 = vunpack.c.l.b16 %v4642
      %v4931 = vunpack.c.l.b16 %v4643
      %v4932 = vunpack.c.l.b16 %v4644
      %v4933 = vunpack.c.l.b16 %v4645
      %v4934 = vunpack.c.l.b16 %v4646
      %v4935 = vunpack.c.l.b16 %v4647
      %v4936 = vunpack.c.l.b16 %v4648
      %v4937 = vunpack.c.l.b16 %v4649
      %v4938 = vunpack.c.l.b16 %v4650
      %v4939 = vunpack.c.l.b16 %v4651
      %v4940 = vunpack.c.l.b16 %v4652
      %v4941 = vunpack.c.l.b16 %v4653
      %v4942 = vunpack.c.l.b16 %v4654
      %v4943 = vunpack.c.l.b16 %v4655
      %v4944 = vunpack.c.l.b16 %v4656
      %v4945 = vunpack.c.l.b16 %v4657
      %v4946 = vunpack.c.l.b16 %v4658
      %v4947 = vunpack.c.l.b16 %v4659
      %v4948 = vunpack.c.l.b16 %v4660
      %v4949 = vunpack.c.l.b16 %v4661
      %v4950 = vunpack.c.l.b16 %v4662
      %v4951 = vunpack.c.l.b16 %v4663
      %v4952 = vunpack.c.l.b16 %v4664
      %v4953 = vunpack.c.l.b16 %v4665
      %v4954 = vunpack.c.l.b16 %v4666
      %v4955 = vunpack.c.l.b16 %v4667
      %v4956 = vunpack.c.l.b16 %v4668
      %v4957 = vunpack.c.l.b16 %v4669
      %v4958 = vunpack.c.l.b16 %v4670
      %v4959 = vunpack.c.l.b16 %v4671
      %v4960 = vunpack.c.l.b16 %v4672
      %v4961 = vunpack.c.l.b16 %v4673
      %v4962 = vunpack.c.l.b16 %v4674
      %v4963 = vunpack.c.l.b16 %v4675
      %v4964 = vunpack.c.l.b16 %v4676
      %v4965 = vunpack.c.l.b16 %v4677
      %v4966 = vunpack.c.l.b16 %v4678
      %v4967 = vunpack.c.l.b16 %v4679
      %v4968 = vunpack.c.l.b16 %v4680
      %v4969 = vunpack.c.l.b16 %v4681
      %v4970 = vunpack.c.l.b16 %v4682
      %v4971 = vunpack.c.l.b16 %v4683
      %v4972 = vunpack.c.l.b16 %v4684
      %v4973 = vunpack.c.l.b16 %v4685
      %v4974 = vunpack.c.l.b16 %v4686
      %v4975 = vunpack.c.l.b16 %v4687
      %v4976 = vunpack.c.l.b16 %v4688
      %v4977 = vunpack.c.l.b16 %v4689
      %v4978 = vunpack.c.l.b16 %v4690
      %v4979 = vunpack.c.l.b16 %v4691
      %v4980 = vunpack.c.l.b16 %v4692
      %v4981 = vunpack.c.l.b16 %v4693
      %v4982 = vunpack.c.l.b16 %v4694
      %v4983 = vunpack.c.l.b16 %v4695
      %v4984 = vunpack.c.l.b16 %v4696
      %v4985 = vunpack.c.l.b16 %v4697
      %v4986 = vunpack.c.l.b16 %v4698
      %v4987 = vunpack.c.l.b16 %v4699
      %v4988 = vunpack.c.l.b16 %v4700
      %v4989 = vunpack.c.l.b16 %v4701
      %v4990 = vunpack.c.l.b16 %v4702
      %v4991 = vunpack.c.l.b16 %v4703
      %v4992 = vunpack.c.l.b16 %v4704
      %v4993 = vunpack.c.l.b16 %v4705
      %v4994 = vunpack.c.l.b16 %v4706
      %v4995 = vunpack.c.l.b16 %v4707
      %v4996 = vunpack.c.l.b16 %v4708
      %v4997 = vunpack.c.l.b16 %v4709
      %v4998 = vunpack.c.l.b16 %v4710
      %v4999 = vunpack.c.l.b16 %v4711
      %v5000 = vunpack.c.l.b16 %v4712
      %v5001 = vunpack.c.l.b16 %v4713
      %v5002 = vunpack.c.l.b16 %v4714
      %v5003 = vunpack.c.l.b16 %v4715
      %v5004 = vunpack.c.l.b16 %v4716
      %v5005 = vunpack.c.l.b16 %v4717
      %v5006 = vunpack.c.l.b16 %v4718
      %v5007 = vunpack.c.l.b16 %v4719
      %v5008 = vunpack.c.l.b16 %v4720
      %v5009 = vunpack.c.l.b16 %v4721
      %v5010 = vunpack.c.l.b16 %v4722
      %v5011 = vunpack.c.l.b16 %v4723
      %v5012 = vunpack.c.l.b16 %v4724
      %v5013 = vunpack.c.l.b16 %v4725
      %v5014 = vunpack.c.l.b16 %v4726
      %v5015 = vunpack.c.l.b16 %v4727
      %v5016 = vunpack.c.l.b16 %v4728
      %v5017 = vunpack.c.l.b16 %v4729
      %v5018 = vunpack.c.l.b16 %v4730
      %v5019 = vunpack.c.l.b16 %v4731
      %v5020 = vunpack.c.l.b16 %v4732
      %v5021 = vunpack.c.l.b16 %v4733
      %v5022 = vunpack.c.l.b16 %v4734
      %v5023 = vunpack.c.l.b16 %v4735
      %v5024 = vunpack.c.l.b16 %v4736
      %v5025 = vunpack.c.l.b16 %v4737
      %v5026 = vunpack.c.l.b16 %v4738
      %v5027 = vunpack.c.l.b16 %v4739
      %v5028 = vunpack.c.l.b16 %v4740
      %v5029 = vunpack.c.l.b16 %v4741
      %v5030 = vunpack.c.l.b16 %v4742
      %v5031 = vunpack.c.l.b16 %v4743
      %v5032 = vunpack.c.l.b16 %v4744
      %v5033 = vunpack.c.l.b16 %v4745
      %v5034 = vunpack.c.l.b16 %v4746
      %v5035 = vunpack.c.l.b16 %v4747
      %v5036 = vunpack.c.l.b16 %v4748
      %v5037 = vunpack.c.l.b16 %v4749
      %v5038 = vunpack.c.l.b16 %v4750
      %v5039 = vunpack.c.l.b16 %v4751
      %v5040 = vunpack.c.l.b16 %v4752
      %v5041 = vunpack.c.l.b16 %v4753
      %v5042 = vunpack.c.l.b16 %v4754
      %v5043 = vunpack.c.l.b16 %v4755
      %v5044 = vunpack.c.l.b16 %v4756
      %v5045 = vunpack.c.l.b16 %v4757
      %v5046 = vunpack.c.l.b16 %v4758
      %v5047 = vunpack.c.l.b16 %v4759
      %v5048 = vunpack.c.l.b16 %v4760
      %v5049 = vunpack.c.l.b16 %v4761
      %v5050 = vpack.c.b16 %v4923, %v4922
      %v5051 = vpack.c.b16 %v4925, %v4924
      %v5052 = vpack.c.b16 %v4927, %v4926
      %v5053 = vpack.c.b16 %v4929, %v4928
      %v5054 = vpack.c.b16 %v4931, %v4930
      %v5055 = vpack.c.b16 %v4933, %v4932
      %v5056 = vpack.c.b16 %v4935, %v4934
      %v5057 = vpack.c.b16 %v4937, %v4936
      %v5058 = vpack.c.b16 %v4939, %v4938
      %v5059 = vpack.c.b16 %v4941, %v4940
      %v5060 = vpack.c.b16 %v4943, %v4942
      %v5061 = vpack.c.b16 %v4945, %v4944
      %v5062 = vpack.c.b16 %v4947, %v4946
      %v5063 = vpack.c.b16 %v4949, %v4948
      %v5064 = vpack.c.b16 %v4951, %v4950
      %v5065 = vpack.c.b16 %v4953, %v4952
      %v5066 = vpack.c.b16 %v4955, %v4954
      %v5067 = vpack.c.b16 %v4957, %v4956
      %v5068 = vpack.c.b16 %v4959, %v4958
      %v5069 = vpack.c.b16 %v4961, %v4960
      %v5070 = vpack.c.b16 %v4963, %v4962
      %v5071 = vpack.c.b16 %v4965, %v4964
      %v5072 = vpack.c.b16 %v4967, %v4966
      %v5073 = vpack.c.b16 %v4969, %v4968
      %v5074 = vpack.c.b16 %v4971, %v4970
      %v5075 = vpack.c.b16 %v4973, %v4972
      %v5076 = vpack.c.b16 %v4975, %v4974
      %v5077 = vpack.c.b16 %v4977, %v4976
      %v5078 = vpack.c.b16 %v4979, %v4978
      %v5079 = vpack.c.b16 %v4981, %v4980
      %v5080 = vpack.c.b16 %v4983, %v4982
      %v5081 = vpack.c.b16 %v4985, %v4984
      %v5082 = vpack.c.b16 %v4987, %v4986
      %v5083 = vpack.c.b16 %v4989, %v4988
      %v5084 = vpack.c.b16 %v4991, %v4990
      %v5085 = vpack.c.b16 %v4993, %v4992
      %v5086 = vpack.c.b16 %v4995, %v4994
      %v5087 = vpack.c.b16 %v4997, %v4996
      %v5088 = vpack.c.b16 %v4999, %v4998
      %v5089 = vpack.c.b16 %v5001, %v5000
      %v5090 = vpack.c.b16 %v5003, %v5002
      %v5091 = vpack.c.b16 %v5005, %v5004
      %v5092 = vpack.c.b16 %v5007, %v5006
      %v5093 = vpack.c.b16 %v5009, %v5008
      %v5094 = vpack.c.b16 %v5011, %v5010
      %v5095 = vpack.c.b16 %v5013, %v5012
      %v5096 = vpack.c.b16 %v5015, %v5014
      %v5097 = vpack.c.b16 %v5017, %v5016
      %v5098 = vpack.c.b16 %v5019, %v5018
      %v5099 = vpack.c.b16 %v5021, %v5020
      %v5100 = vpack.c.b16 %v5023, %v5022
      %v5101 = vpack.c.b16 %v5025, %v5024
      %v5102 = vpack.c.b16 %v5027, %v5026
      %v5103 = vpack.c.b16 %v5029, %v5028
      %v5104 = vpack.c.b16 %v5031, %v5030
      %v5105 = vpack.c.b16 %v5033, %v5032
      %v5106 = vpack.c.b16 %v5035, %v5034
      %v5107 = vpack.c.b16 %v5037, %v5036
      %v5108 = vpack.c.b16 %v5039, %v5038
      %v5109 = vpack.c.b16 %v5041, %v5040
      %v5110 = vpack.c.b16 %v5043, %v5042
      %v5111 = vpack.c.b16 %v5045, %v5044
      %v5112 = vpack.c.b16 %v5047, %v5046
      %v5113 = vpack.c.b16 %v5049, %v5048
      %v5194 = vunpack.c.l.b16 %v4778
      %v5195 = vunpack.c.l.b16 %v4779
      %v5196 = vunpack.c.l.b16 %v4780
      %v5197 = vunpack.c.l.b16 %v4781
      %v5198 = vunpack.c.l.b16 %v4782
      %v5199 = vunpack.c.l.b16 %v4783
      %v5200 = vunpack.c.l.b16 %v4784
      %v5201 = vunpack.c.l.b16 %v4785
      %v5202 = vunpack.c.l.b16 %v4786
      %v5203 = vunpack.c.l.b16 %v4787
      %v5204 = vunpack.c.l.b16 %v4788
      %v5205 = vunpack.c.l.b16 %v4789
      %v5206 = vunpack.c.l.b16 %v4790
      %v5207 = vunpack.c.l.b16 %v4791
      %v5208 = vunpack.c.l.b16 %v4792
      %v5209 = vunpack.c.l.b16 %v4793
      %v5210 = vpack.c.b16 %v5195, %v5194
      %v5211 = vpack.c.b16 %v5197, %v5196
      %v5212 = vpack.c.b16 %v5199, %v5198
      %v5213 = vpack.c.b16 %v5201, %v5200
      %v5214 = vpack.c.b16 %v5203, %v5202
      %v5215 = vpack.c.b16 %v5205, %v5204
      %v5216 = vpack.c.b16 %v5207, %v5206
      %v5217 = vpack.c.b16 %v5209, %v5208
      %5226 = vmatprep.subr.bf16.mxu0 0
      %5227 = vmatpush1.bf16.msra.mxu0 %v5210
      %5228 = vmatprep.subr.bf16.mxu0 0
      %5229 = vmatpush1.bf16.msra.mxu0 %v5211
      %5230 = vmatprep.subr.bf16.mxu0 0
      %5231 = vmatpush1.bf16.msra.mxu0 %v5212
      %5232 = vmatprep.subr.bf16.mxu0 0
      %5233 = vmatpush1.bf16.msra.mxu0 %v5213
      %5234 = vmatprep.subr.bf16.mxu0 0
      %5235 = vmatpush1.bf16.msra.mxu0 %v5214
      %5236 = vmatprep.subr.bf16.mxu0 0
      %5237 = vmatpush1.bf16.msra.mxu0 %v5215
      %5238 = vmatprep.subr.bf16.mxu0 0
      %5239 = vmatpush1.bf16.msra.mxu0 %v5216
      %5240 = vmatprep.subr.bf16.mxu0 0
      %5241 = vmatpush1.bf16.msra.mxu0 %v5217
      %5242 = vmatprep.subr.bf16.mxu0 0
      %5243 = vmatpush1.bf16.msra.mxu0 0
      %5244 = vmatprep.subr.bf16.mxu0 0
      %5245 = vmatpush1.bf16.msra.mxu0 0
      %5246 = vmatprep.subr.bf16.mxu0 0
      %5247 = vmatpush1.bf16.msra.mxu0 0
      %5248 = vmatprep.subr.bf16.mxu0 0
      %5249 = vmatpush1.bf16.msra.mxu0 0
      %5250 = vmatprep.subr.bf16.mxu0 0
      %5251 = vmatpush1.bf16.msra.mxu0 0
      %5252 = vmatprep.subr.bf16.mxu0 0
      %5253 = vmatpush1.bf16.msra.mxu0 0
      %5254 = vmatprep.subr.bf16.mxu0 0
      %5255 = vmatpush1.bf16.msra.mxu0 0
      %5256 = vmatprep.subr.bf16.mxu0 0
      %5257 = vmatpush1.bf16.msra.mxu0 0
      %5258 = vmatprep.mubr.bf16.mxu0 0
      %5259 = vmatmul.mubr.bf16.gmra.mrb[0].mxu0 %v5050
      %v5260 = vpop.f32.mrb[0].mxu0
      %v5261 = vadd.f32 0.0, %v5260
      %v5262 = vpop.f32.mrb[0].mxu0
      %v5263 = vpop.f32.mrb[0].mxu0
      %v5264 = vadd.f32 0.0, %v5263
      %v5265 = vpop.f32.mrb[0].mxu0
      %5266 = vmatprep.mubr.bf16.mxu0 0
      %5267 = vmatmul.mubr.bf16.gmra.mrb[0].mxu0 %v5051
      %v5268 = vpop.f32.mrb[0].mxu0
      %v5269 = vadd.f32 0.0, %v5268
      %v5270 = vpop.f32.mrb[0].mxu0
      %v5271 = vpop.f32.mrb[0].mxu0
      %v5272 = vadd.f32 0.0, %v5271
      %v5273 = vpop.f32.mrb[0].mxu0
      %5274 = vmatprep.mubr.bf16.mxu0 0
      %5275 = vmatmul.mubr.bf16.gmra.mrb[0].mxu0 %v5052
      %v5276 = vpop.f32.mrb[0].mxu0
      %v5277 = vadd.f32 0.0, %v5276
      %v5278 = vpop.f32.mrb[0].mxu0
      %v5279 = vpop.f32.mrb[0].mxu0
      %v5280 = vadd.f32 0.0, %v5279
      %v5281 = vpop.f32.mrb[0].mxu0
      %5282 = vmatprep.mubr.bf16.mxu0 0
      %5283 = vmatmul.mubr.bf16.gmra.mrb[0].mxu0 %v5053
      %v5284 = vpop.f32.mrb[0].mxu0
      %v5285 = vadd.f32 0.0, %v5284
      %v5286 = vpop.f32.mrb[0].mxu0
      %v5287 = vpop.f32.mrb[0].mxu0
      %v5288 = vadd.f32 0.0, %v5287
      %v5289 = vpop.f32.mrb[0].mxu0
      %5290 = vmatprep.mubr.bf16.mxu0 0
      %5291 = vmatmul.mubr.bf16.gmra.mrb[0].mxu0 %v5054
      %v5292 = vpop.f32.mrb[0].mxu0
      %v5293 = vadd.f32 0.0, %v5292
      %v5294 = vpop.f32.mrb[0].mxu0
      %v5295 = vpop.f32.mrb[0].mxu0
      %v5296 = vadd.f32 0.0, %v5295
      %v5297 = vpop.f32.mrb[0].mxu0
      %5298 = vmatprep.mubr.bf16.mxu0 0
      %5299 = vmatmul.mubr.bf16.gmra.mrb[0].mxu0 %v5055
      %v5300 = vpop.f32.mrb[0].mxu0
      %v5301 = vadd.f32 0.0, %v5300
      %v5302 = vpop.f32.mrb[0].mxu0
      %v5303 = vpop.f32.mrb[0].mxu0
      %v5304 = vadd.f32 0.0, %v5303
      %v5305 = vpop.f32.mrb[0].mxu0
      %5306 = vmatprep.mubr.bf16.mxu0 0
      %5307 = vmatmul.mubr.bf16.gmra.mrb[0].mxu0 %v5056
      %v5308 = vpop.f32.mrb[0].mxu0
      %v5309 = vadd.f32 0.0, %v5308
      %v5310 = vpop.f32.mrb[0].mxu0
      %v5311 = vpop.f32.mrb[0].mxu0
      %v5312 = vadd.f32 0.0, %v5311
      %v5313 = vpop.f32.mrb[0].mxu0
      %5314 = vmatprep.mubr.bf16.mxu0 0
      %5315 = vmatmul.mubr.bf16.gmra.mrb[0].mxu0 %v5057
      %v5316 = vpop.f32.mrb[0].mxu0
      %v5317 = vadd.f32 0.0, %v5316
      %v5318 = vpop.f32.mrb[0].mxu0
      %v5319 = vpop.f32.mrb[0].mxu0
      %v5320 = vadd.f32 0.0, %v5319
      %v5321 = vpop.f32.mrb[0].mxu0
      %5322 = vmatprep.mubr.bf16.mxu0 0
      %5323 = vmatmul.mubr.bf16.gmra.mrb[0].mxu0 %v5058
      %v5324 = vpop.f32.mrb[0].mxu0
      %v5325 = vadd.f32 0.0, %v5324
      %v5326 = vpop.f32.mrb[0].mxu0
      %v5327 = vpop.f32.mrb[0].mxu0
      %v5328 = vadd.f32 0.0, %v5327
      %v5329 = vpop.f32.mrb[0].mxu0
      %5330 = vmatprep.mubr.bf16.mxu0 0
      %5331 = vmatmul.mubr.bf16.gmra.mrb[0].mxu0 %v5059
      %v5332 = vpop.f32.mrb[0].mxu0
      %v5333 = vadd.f32 0.0, %v5332
      %v5334 = vpop.f32.mrb[0].mxu0
      %v5335 = vpop.f32.mrb[0].mxu0
      %v5336 = vadd.f32 0.0, %v5335
      %v5337 = vpop.f32.mrb[0].mxu0
      %5338 = vmatprep.mubr.bf16.mxu0 0
      %5339 = vmatmul.mubr.bf16.gmra.mrb[0].mxu0 %v5060
      %v5340 = vpop.f32.mrb[0].mxu0
      %v5341 = vadd.f32 0.0, %v5340
      %v5342 = vpop.f32.mrb[0].mxu0
      %v5343 = vpop.f32.mrb[0].mxu0
      %v5344 = vadd.f32 0.0, %v5343
      %v5345 = vpop.f32.mrb[0].mxu0
      %5346 = vmatprep.mubr.bf16.mxu0 0
      %5347 = vmatmul.mubr.bf16.gmra.mrb[0].mxu0 %v5061
      %v5348 = vpop.f32.mrb[0].mxu0
      %v5349 = vadd.f32 0.0, %v5348
      %v5350 = vpop.f32.mrb[0].mxu0
      %v5351 = vpop.f32.mrb[0].mxu0
      %v5352 = vadd.f32 0.0, %v5351
      %v5353 = vpop.f32.mrb[0].mxu0
      %5354 = vmatprep.mubr.bf16.mxu0 0
      %5355 = vmatmul.mubr.bf16.gmra.mrb[0].mxu0 %v5062
      %v5356 = vpop.f32.mrb[0].mxu0
      %v5357 = vadd.f32 0.0, %v5356
      %v5358 = vpop.f32.mrb[0].mxu0
      %v5359 = vpop.f32.mrb[0].mxu0
      %v5360 = vadd.f32 0.0, %v5359
      %v5361 = vpop.f32.mrb[0].mxu0
      %5362 = vmatprep.mubr.bf16.mxu0 0
      %5363 = vmatmul.mubr.bf16.gmra.mrb[0].mxu0 %v5063
      %v5364 = vpop.f32.mrb[0].mxu0
      %v5365 = vadd.f32 0.0, %v5364
      %v5366 = vpop.f32.mrb[0].mxu0
      %v5367 = vpop.f32.mrb[0].mxu0
      %v5368 = vadd.f32 0.0, %v5367
      %v5369 = vpop.f32.mrb[0].mxu0
      %5370 = vmatprep.mubr.bf16.mxu0 0
      %5371 = vmatmul.mubr.bf16.gmra.mrb[0].mxu0 %v5064
      %v5372 = vpop.f32.mrb[0].mxu0
      %v5373 = vadd.f32 0.0, %v5372
      %v5374 = vpop.f32.mrb[0].mxu0
      %v5375 = vpop.f32.mrb[0].mxu0
      %v5376 = vadd.f32 0.0, %v5375
      %v5377 = vpop.f32.mrb[0].mxu0
      %5378 = vmatprep.mubr.bf16.mxu0 0
      %5379 = vmatmul.mubr.bf16.gmra.mrb[0].mxu0 %v5065
      %v5380 = vpop.f32.mrb[0].mxu0
      %v5381 = vadd.f32 0.0, %v5380
      %v5382 = vpop.f32.mrb[0].mxu0
      %v5383 = vpop.f32.mrb[0].mxu0
      %v5384 = vadd.f32 0.0, %v5383
      %v5385 = vpop.f32.mrb[0].mxu0
      %5386 = vmatprep.mubr.bf16.mxu0 0
      %5387 = vmatmul.mubr.bf16.gmra.mrb[0].mxu0 %v5066
      %v5388 = vpop.f32.mrb[0].mxu0
      %v5389 = vadd.f32 0.0, %v5388
      %v5390 = vpop.f32.mrb[0].mxu0
      %v5391 = vpop.f32.mrb[0].mxu0
      %v5392 = vadd.f32 0.0, %v5391
      %v5393 = vpop.f32.mrb[0].mxu0
      %5394 = vmatprep.mubr.bf16.mxu0 0
      %5395 = vmatmul.mubr.bf16.gmra.mrb[0].mxu0 %v5067
      %v5396 = vpop.f32.mrb[0].mxu0
      %v5397 = vadd.f32 0.0, %v5396
      %v5398 = vpop.f32.mrb[0].mxu0
      %v5399 = vpop.f32.mrb[0].mxu0
      %v5400 = vadd.f32 0.0, %v5399
      %v5401 = vpop.f32.mrb[0].mxu0
      %5402 = vmatprep.mubr.bf16.mxu0 0
      %5403 = vmatmul.mubr.bf16.gmra.mrb[0].mxu0 %v5068
      %v5404 = vpop.f32.mrb[0].mxu0
      %v5405 = vadd.f32 0.0, %v5404
      %v5406 = vpop.f32.mrb[0].mxu0
      %v5407 = vpop.f32.mrb[0].mxu0
      %v5408 = vadd.f32 0.0, %v5407
      %v5409 = vpop.f32.mrb[0].mxu0
      %5410 = vmatprep.mubr.bf16.mxu0 0
      %5411 = vmatmul.mubr.bf16.gmra.mrb[0].mxu0 %v5069
      %v5412 = vpop.f32.mrb[0].mxu0
      %v5413 = vadd.f32 0.0, %v5412
      %v5414 = vpop.f32.mrb[0].mxu0
      %v5415 = vpop.f32.mrb[0].mxu0
      %v5416 = vadd.f32 0.0, %v5415
      %v5417 = vpop.f32.mrb[0].mxu0
      %5418 = vmatprep.mubr.bf16.mxu0 0
      %5419 = vmatmul.mubr.bf16.gmra.mrb[0].mxu0 %v5070
      %v5420 = vpop.f32.mrb[0].mxu0
      %v5421 = vadd.f32 0.0, %v5420
      %v5422 = vpop.f32.mrb[0].mxu0
      %v5423 = vpop.f32.mrb[0].mxu0
      %v5424 = vadd.f32 0.0, %v5423
      %v5425 = vpop.f32.mrb[0].mxu0
      %5426 = vmatprep.mubr.bf16.mxu0 0
      %5427 = vmatmul.mubr.bf16.gmra.mrb[0].mxu0 %v5071
      %v5428 = vpop.f32.mrb[0].mxu0
      %v5429 = vadd.f32 0.0, %v5428
      %v5430 = vpop.f32.mrb[0].mxu0
      %v5431 = vpop.f32.mrb[0].mxu0
      %v5432 = vadd.f32 0.0, %v5431
      %v5433 = vpop.f32.mrb[0].mxu0
      %5434 = vmatprep.mubr.bf16.mxu0 0
      %5435 = vmatmul.mubr.bf16.gmra.mrb[0].mxu0 %v5072
      %v5436 = vpop.f32.mrb[0].mxu0
      %v5437 = vadd.f32 0.0, %v5436
      %v5438 = vpop.f32.mrb[0].mxu0
      %v5439 = vpop.f32.mrb[0].mxu0
      %v5440 = vadd.f32 0.0, %v5439
      %v5441 = vpop.f32.mrb[0].mxu0
      %5442 = vmatprep.mubr.bf16.mxu0 0
      %5443 = vmatmul.mubr.bf16.gmra.mrb[0].mxu0 %v5073
      %v5444 = vpop.f32.mrb[0].mxu0
      %v5445 = vadd.f32 0.0, %v5444
      %v5446 = vpop.f32.mrb[0].mxu0
      %v5447 = vpop.f32.mrb[0].mxu0
      %v5448 = vadd.f32 0.0, %v5447
      %v5449 = vpop.f32.mrb[0].mxu0
      %5450 = vmatprep.mubr.bf16.mxu0 0
      %5451 = vmatmul.mubr.bf16.gmra.mrb[0].mxu0 %v5074
      %v5452 = vpop.f32.mrb[0].mxu0
      %v5453 = vadd.f32 0.0, %v5452
      %v5454 = vpop.f32.mrb[0].mxu0
      %v5455 = vpop.f32.mrb[0].mxu0
      %v5456 = vadd.f32 0.0, %v5455
      %v5457 = vpop.f32.mrb[0].mxu0
      %5458 = vmatprep.mubr.bf16.mxu0 0
      %5459 = vmatmul.mubr.bf16.gmra.mrb[0].mxu0 %v5075
      %v5460 = vpop.f32.mrb[0].mxu0
      %v5461 = vadd.f32 0.0, %v5460
      %v5462 = vpop.f32.mrb[0].mxu0
      %v5463 = vpop.f32.mrb[0].mxu0
      %v5464 = vadd.f32 0.0, %v5463
      %v5465 = vpop.f32.mrb[0].mxu0
      %5466 = vmatprep.mubr.bf16.mxu0 0
      %5467 = vmatmul.mubr.bf16.gmra.mrb[0].mxu0 %v5076
      %v5468 = vpop.f32.mrb[0].mxu0
      %v5469 = vadd.f32 0.0, %v5468
      %v5470 = vpop.f32.mrb[0].mxu0
      %v5471 = vpop.f32.mrb[0].mxu0
      %v5472 = vadd.f32 0.0, %v5471
      %v5473 = vpop.f32.mrb[0].mxu0
      %5474 = vmatprep.mubr.bf16.mxu0 0
      %5475 = vmatmul.mubr.bf16.gmra.mrb[0].mxu0 %v5077
      %v5476 = vpop.f32.mrb[0].mxu0
      %v5477 = vadd.f32 0.0, %v5476
      %v5478 = vpop.f32.mrb[0].mxu0
      %v5479 = vpop.f32.mrb[0].mxu0
      %v5480 = vadd.f32 0.0, %v5479
      %v5481 = vpop.f32.mrb[0].mxu0
      %5482 = vmatprep.mubr.bf16.mxu0 0
      %5483 = vmatmul.mubr.bf16.gmra.mrb[0].mxu0 %v5078
      %v5484 = vpop.f32.mrb[0].mxu0
      %v5485 = vadd.f32 0.0, %v5484
      %v5486 = vpop.f32.mrb[0].mxu0
      %v5487 = vpop.f32.mrb[0].mxu0
      %v5488 = vadd.f32 0.0, %v5487
      %v5489 = vpop.f32.mrb[0].mxu0
      %5490 = vmatprep.mubr.bf16.mxu0 0
      %5491 = vmatmul.mubr.bf16.gmra.mrb[0].mxu0 %v5079
      %v5492 = vpop.f32.mrb[0].mxu0
      %v5493 = vadd.f32 0.0, %v5492
      %v5494 = vpop.f32.mrb[0].mxu0
      %v5495 = vpop.f32.mrb[0].mxu0
      %v5496 = vadd.f32 0.0, %v5495
      %v5497 = vpop.f32.mrb[0].mxu0
      %5498 = vmatprep.mubr.bf16.mxu0 0
      %5499 = vmatmul.mubr.bf16.gmra.mrb[0].mxu0 %v5080
      %v5500 = vpop.f32.mrb[0].mxu0
      %v5501 = vadd.f32 0.0, %v5500
      %v5502 = vpop.f32.mrb[0].mxu0
      %v5503 = vpop.f32.mrb[0].mxu0
      %v5504 = vadd.f32 0.0, %v5503
      %v5505 = vpop.f32.mrb[0].mxu0
      %5506 = vmatprep.mubr.bf16.mxu0 0
      %5507 = vmatmul.mubr.bf16.gmra.mrb[0].mxu0 %v5081
      %v5508 = vpop.f32.mrb[0].mxu0
      %v5509 = vadd.f32 0.0, %v5508
      %v5510 = vpop.f32.mrb[0].mxu0
      %v5511 = vpop.f32.mrb[0].mxu0
      %v5512 = vadd.f32 0.0, %v5511
      %v5513 = vpop.f32.mrb[0].mxu0
      %5514 = vmatprep.mubr.bf16.mxu0 0
      %5515 = vmatmul.mubr.bf16.gmra.mrb[0].mxu0 %v5082
      %v5516 = vpop.f32.mrb[0].mxu0
      %v5517 = vadd.f32 0.0, %v5516
      %v5518 = vpop.f32.mrb[0].mxu0
      %v5519 = vpop.f32.mrb[0].mxu0
      %v5520 = vadd.f32 0.0, %v5519
      %v5521 = vpop.f32.mrb[0].mxu0
      %5522 = vmatprep.mubr.bf16.mxu0 0
      %5523 = vmatmul.mubr.bf16.gmra.mrb[0].mxu0 %v5083
      %v5524 = vpop.f32.mrb[0].mxu0
      %v5525 = vadd.f32 0.0, %v5524
      %v5526 = vpop.f32.mrb[0].mxu0
      %v5527 = vpop.f32.mrb[0].mxu0
      %v5528 = vadd.f32 0.0, %v5527
      %v5529 = vpop.f32.mrb[0].mxu0
      %5530 = vmatprep.mubr.bf16.mxu0 0
      %5531 = vmatmul.mubr.bf16.gmra.mrb[0].mxu0 %v5084
      %v5532 = vpop.f32.mrb[0].mxu0
      %v5533 = vadd.f32 0.0, %v5532
      %v5534 = vpop.f32.mrb[0].mxu0
      %v5535 = vpop.f32.mrb[0].mxu0
      %v5536 = vadd.f32 0.0, %v5535
      %v5537 = vpop.f32.mrb[0].mxu0
      %5538 = vmatprep.mubr.bf16.mxu0 0
      %5539 = vmatmul.mubr.bf16.gmra.mrb[0].mxu0 %v5085
      %v5540 = vpop.f32.mrb[0].mxu0
      %v5541 = vadd.f32 0.0, %v5540
      %v5542 = vpop.f32.mrb[0].mxu0
      %v5543 = vpop.f32.mrb[0].mxu0
      %v5544 = vadd.f32 0.0, %v5543
      %v5545 = vpop.f32.mrb[0].mxu0
      %5546 = vmatprep.mubr.bf16.mxu0 0
      %5547 = vmatmul.mubr.bf16.gmra.mrb[0].mxu0 %v5086
      %v5548 = vpop.f32.mrb[0].mxu0
      %v5549 = vadd.f32 0.0, %v5548
      %v5550 = vpop.f32.mrb[0].mxu0
      %v5551 = vpop.f32.mrb[0].mxu0
      %v5552 = vadd.f32 0.0, %v5551
      %v5553 = vpop.f32.mrb[0].mxu0
      %5554 = vmatprep.mubr.bf16.mxu0 0
      %5555 = vmatmul.mubr.bf16.gmra.mrb[0].mxu0 %v5087
      %v5556 = vpop.f32.mrb[0].mxu0
      %v5557 = vadd.f32 0.0, %v5556
      %v5558 = vpop.f32.mrb[0].mxu0
      %v5559 = vpop.f32.mrb[0].mxu0
      %v5560 = vadd.f32 0.0, %v5559
      %v5561 = vpop.f32.mrb[0].mxu0
      %5562 = vmatprep.mubr.bf16.mxu0 0
      %5563 = vmatmul.mubr.bf16.gmra.mrb[0].mxu0 %v5088
      %v5564 = vpop.f32.mrb[0].mxu0
      %v5565 = vadd.f32 0.0, %v5564
      %v5566 = vpop.f32.mrb[0].mxu0
      %v5567 = vpop.f32.mrb[0].mxu0
      %v5568 = vadd.f32 0.0, %v5567
      %v5569 = vpop.f32.mrb[0].mxu0
      %5570 = vmatprep.mubr.bf16.mxu0 0
      %5571 = vmatmul.mubr.bf16.gmra.mrb[0].mxu0 %v5089
      %v5572 = vpop.f32.mrb[0].mxu0
      %v5573 = vadd.f32 0.0, %v5572
      %v5574 = vpop.f32.mrb[0].mxu0
      %v5575 = vpop.f32.mrb[0].mxu0
      %v5576 = vadd.f32 0.0, %v5575
      %v5577 = vpop.f32.mrb[0].mxu0
      %5578 = vmatprep.mubr.bf16.mxu0 0
      %5579 = vmatmul.mubr.bf16.gmra.mrb[0].mxu0 %v5090
      %v5580 = vpop.f32.mrb[0].mxu0
      %v5581 = vadd.f32 0.0, %v5580
      %v5582 = vpop.f32.mrb[0].mxu0
      %v5583 = vpop.f32.mrb[0].mxu0
      %v5584 = vadd.f32 0.0, %v5583
      %v5585 = vpop.f32.mrb[0].mxu0
      %5586 = vmatprep.mubr.bf16.mxu0 0
      %5587 = vmatmul.mubr.bf16.gmra.mrb[0].mxu0 %v5091
      %v5588 = vpop.f32.mrb[0].mxu0
      %v5589 = vadd.f32 0.0, %v5588
      %v5590 = vpop.f32.mrb[0].mxu0
      %v5591 = vpop.f32.mrb[0].mxu0
      %v5592 = vadd.f32 0.0, %v5591
      %v5593 = vpop.f32.mrb[0].mxu0
      %5594 = vmatprep.mubr.bf16.mxu0 0
      %5595 = vmatmul.mubr.bf16.gmra.mrb[0].mxu0 %v5092
      %v5596 = vpop.f32.mrb[0].mxu0
      %v5597 = vadd.f32 0.0, %v5596
      %v5598 = vpop.f32.mrb[0].mxu0
      %v5599 = vpop.f32.mrb[0].mxu0
      %v5600 = vadd.f32 0.0, %v5599
      %v5601 = vpop.f32.mrb[0].mxu0
      %5602 = vmatprep.mubr.bf16.mxu0 0
      %5603 = vmatmul.mubr.bf16.gmra.mrb[0].mxu0 %v5093
      %v5604 = vpop.f32.mrb[0].mxu0
      %v5605 = vadd.f32 0.0, %v5604
      %v5606 = vpop.f32.mrb[0].mxu0
      %v5607 = vpop.f32.mrb[0].mxu0
      %v5608 = vadd.f32 0.0, %v5607
      %v5609 = vpop.f32.mrb[0].mxu0
      %5610 = vmatprep.mubr.bf16.mxu0 0
      %5611 = vmatmul.mubr.bf16.gmra.mrb[0].mxu0 %v5094
      %v5612 = vpop.f32.mrb[0].mxu0
      %v5613 = vadd.f32 0.0, %v5612
      %v5614 = vpop.f32.mrb[0].mxu0
      %v5615 = vpop.f32.mrb[0].mxu0
      %v5616 = vadd.f32 0.0, %v5615
      %v5617 = vpop.f32.mrb[0].mxu0
      %5618 = vmatprep.mubr.bf16.mxu0 0
      %5619 = vmatmul.mubr.bf16.gmra.mrb[0].mxu0 %v5095
      %v5620 = vpop.f32.mrb[0].mxu0
      %v5621 = vadd.f32 0.0, %v5620
      %v5622 = vpop.f32.mrb[0].mxu0
      %v5623 = vpop.f32.mrb[0].mxu0
      %v5624 = vadd.f32 0.0, %v5623
      %v5625 = vpop.f32.mrb[0].mxu0
      %5626 = vmatprep.mubr.bf16.mxu0 0
      %5627 = vmatmul.mubr.bf16.gmra.mrb[0].mxu0 %v5096
      %v5628 = vpop.f32.mrb[0].mxu0
      %v5629 = vadd.f32 0.0, %v5628
      %v5630 = vpop.f32.mrb[0].mxu0
      %v5631 = vpop.f32.mrb[0].mxu0
      %v5632 = vadd.f32 0.0, %v5631
      %v5633 = vpop.f32.mrb[0].mxu0
      %5634 = vmatprep.mubr.bf16.mxu0 0
      %5635 = vmatmul.mubr.bf16.gmra.mrb[0].mxu0 %v5097
      %v5636 = vpop.f32.mrb[0].mxu0
      %v5637 = vadd.f32 0.0, %v5636
      %v5638 = vpop.f32.mrb[0].mxu0
      %v5639 = vpop.f32.mrb[0].mxu0
      %v5640 = vadd.f32 0.0, %v5639
      %v5641 = vpop.f32.mrb[0].mxu0
      %5642 = vmatprep.mubr.bf16.mxu0 0
      %5643 = vmatmul.mubr.bf16.gmra.mrb[0].mxu0 %v5098
      %v5644 = vpop.f32.mrb[0].mxu0
      %v5645 = vadd.f32 0.0, %v5644
      %v5646 = vpop.f32.mrb[0].mxu0
      %v5647 = vpop.f32.mrb[0].mxu0
      %v5648 = vadd.f32 0.0, %v5647
      %v5649 = vpop.f32.mrb[0].mxu0
      %5650 = vmatprep.mubr.bf16.mxu0 0
      %5651 = vmatmul.mubr.bf16.gmra.mrb[0].mxu0 %v5099
      %v5652 = vpop.f32.mrb[0].mxu0
      %v5653 = vadd.f32 0.0, %v5652
      %v5654 = vpop.f32.mrb[0].mxu0
      %v5655 = vpop.f32.mrb[0].mxu0
      %v5656 = vadd.f32 0.0, %v5655
      %v5657 = vpop.f32.mrb[0].mxu0
      %5658 = vmatprep.mubr.bf16.mxu0 0
      %5659 = vmatmul.mubr.bf16.gmra.mrb[0].mxu0 %v5100
      %v5660 = vpop.f32.mrb[0].mxu0
      %v5661 = vadd.f32 0.0, %v5660
      %v5662 = vpop.f32.mrb[0].mxu0
      %v5663 = vpop.f32.mrb[0].mxu0
      %v5664 = vadd.f32 0.0, %v5663
      %v5665 = vpop.f32.mrb[0].mxu0
      %5666 = vmatprep.mubr.bf16.mxu0 0
      %5667 = vmatmul.mubr.bf16.gmra.mrb[0].mxu0 %v5101
      %v5668 = vpop.f32.mrb[0].mxu0
      %v5669 = vadd.f32 0.0, %v5668
      %v5670 = vpop.f32.mrb[0].mxu0
      %v5671 = vpop.f32.mrb[0].mxu0
      %v5672 = vadd.f32 0.0, %v5671
      %v5673 = vpop.f32.mrb[0].mxu0
      %5674 = vmatprep.mubr.bf16.mxu0 0
      %5675 = vmatmul.mubr.bf16.gmra.mrb[0].mxu0 %v5102
      %v5676 = vpop.f32.mrb[0].mxu0
      %v5677 = vadd.f32 0.0, %v5676
      %v5678 = vpop.f32.mrb[0].mxu0
      %v5679 = vpop.f32.mrb[0].mxu0
      %v5680 = vadd.f32 0.0, %v5679
      %v5681 = vpop.f32.mrb[0].mxu0
      %5682 = vmatprep.mubr.bf16.mxu0 0
      %5683 = vmatmul.mubr.bf16.gmra.mrb[0].mxu0 %v5103
      %v5684 = vpop.f32.mrb[0].mxu0
      %v5685 = vadd.f32 0.0, %v5684
      %v5686 = vpop.f32.mrb[0].mxu0
      %v5687 = vpop.f32.mrb[0].mxu0
      %v5688 = vadd.f32 0.0, %v5687
      %v5689 = vpop.f32.mrb[0].mxu0
      %5690 = vmatprep.mubr.bf16.mxu0 0
      %5691 = vmatmul.mubr.bf16.gmra.mrb[0].mxu0 %v5104
      %v5692 = vpop.f32.mrb[0].mxu0
      %v5693 = vadd.f32 0.0, %v5692
      %v5694 = vpop.f32.mrb[0].mxu0
      %v5695 = vpop.f32.mrb[0].mxu0
      %v5696 = vadd.f32 0.0, %v5695
      %v5697 = vpop.f32.mrb[0].mxu0
      %5698 = vmatprep.mubr.bf16.mxu0 0
      %5699 = vmatmul.mubr.bf16.gmra.mrb[0].mxu0 %v5105
      %v5700 = vpop.f32.mrb[0].mxu0
      %v5701 = vadd.f32 0.0, %v5700
      %v5702 = vpop.f32.mrb[0].mxu0
      %v5703 = vpop.f32.mrb[0].mxu0
      %v5704 = vadd.f32 0.0, %v5703
      %v5705 = vpop.f32.mrb[0].mxu0
      %5706 = vmatprep.mubr.bf16.mxu0 0
      %5707 = vmatmul.mubr.bf16.gmra.mrb[0].mxu0 %v5106
      %v5708 = vpop.f32.mrb[0].mxu0
      %v5709 = vadd.f32 0.0, %v5708
      %v5710 = vpop.f32.mrb[0].mxu0
      %v5711 = vpop.f32.mrb[0].mxu0
      %v5712 = vadd.f32 0.0, %v5711
      %v5713 = vpop.f32.mrb[0].mxu0
      %5714 = vmatprep.mubr.bf16.mxu0 0
      %5715 = vmatmul.mubr.bf16.gmra.mrb[0].mxu0 %v5107
      %v5716 = vpop.f32.mrb[0].mxu0
      %v5717 = vadd.f32 0.0, %v5716
      %v5718 = vpop.f32.mrb[0].mxu0
      %v5719 = vpop.f32.mrb[0].mxu0
      %v5720 = vadd.f32 0.0, %v5719
      %v5721 = vpop.f32.mrb[0].mxu0
      %5722 = vmatprep.mubr.bf16.mxu0 0
      %5723 = vmatmul.mubr.bf16.gmra.mrb[0].mxu0 %v5108
      %v5724 = vpop.f32.mrb[0].mxu0
      %v5725 = vadd.f32 0.0, %v5724
      %v5726 = vpop.f32.mrb[0].mxu0
      %v5727 = vpop.f32.mrb[0].mxu0
      %v5728 = vadd.f32 0.0, %v5727
      %v5729 = vpop.f32.mrb[0].mxu0
      %5730 = vmatprep.mubr.bf16.mxu0 0
      %5731 = vmatmul.mubr.bf16.gmra.mrb[0].mxu0 %v5109
      %v5732 = vpop.f32.mrb[0].mxu0
      %v5733 = vadd.f32 0.0, %v5732
      %v5734 = vpop.f32.mrb[0].mxu0
      %v5735 = vpop.f32.mrb[0].mxu0
      %v5736 = vadd.f32 0.0, %v5735
      %v5737 = vpop.f32.mrb[0].mxu0
      %5738 = vmatprep.mubr.bf16.mxu0 0
      %5739 = vmatmul.mubr.bf16.gmra.mrb[0].mxu0 %v5110
      %v5740 = vpop.f32.mrb[0].mxu0
      %v5741 = vadd.f32 0.0, %v5740
      %v5742 = vpop.f32.mrb[0].mxu0
      %v5743 = vpop.f32.mrb[0].mxu0
      %v5744 = vadd.f32 0.0, %v5743
      %v5745 = vpop.f32.mrb[0].mxu0
      %5746 = vmatprep.mubr.bf16.mxu0 0
      %5747 = vmatmul.mubr.bf16.gmra.mrb[0].mxu0 %v5111
      %v5748 = vpop.f32.mrb[0].mxu0
      %v5749 = vadd.f32 0.0, %v5748
      %v5750 = vpop.f32.mrb[0].mxu0
      %v5751 = vpop.f32.mrb[0].mxu0
      %v5752 = vadd.f32 0.0, %v5751
      %v5753 = vpop.f32.mrb[0].mxu0
      %5754 = vmatprep.mubr.bf16.mxu0 0
      %5755 = vmatmul.mubr.bf16.gmra.mrb[0].mxu0 %v5112
      %v5756 = vpop.f32.mrb[0].mxu0
      %v5757 = vadd.f32 0.0, %v5756
      %v5758 = vpop.f32.mrb[0].mxu0
      %v5759 = vpop.f32.mrb[0].mxu0
      %v5760 = vadd.f32 0.0, %v5759
      %v5761 = vpop.f32.mrb[0].mxu0
      %5762 = vmatprep.mubr.bf16.mxu0 0
      %5763 = vmatmul.mubr.bf16.gmra.mrb[0].mxu0 %v5113
      %v5764 = vpop.f32.mrb[0].mxu0
      %v5765 = vadd.f32 0.0, %v5764
      %v5766 = vpop.f32.mrb[0].mxu0
      %v5767 = vpop.f32.mrb[0].mxu0
      %v5768 = vadd.f32 0.0, %v5767
      %v5769 = vpop.f32.mrb[0].mxu0
      %5770 = vdwg.mxu0
      %v5787 = vunpack.c.l.b16 %v4762
      %v5788 = vunpack.c.l.b16 %v4763
      %v5789 = vunpack.c.l.b16 %v4764
      %v5790 = vunpack.c.l.b16 %v4765
      %v5791 = vunpack.c.l.b16 %v4766
      %v5792 = vunpack.c.l.b16 %v4767
      %v5793 = vunpack.c.l.b16 %v4768
      %v5794 = vunpack.c.l.b16 %v4769
      %v5795 = vunpack.c.l.b16 %v4770
      %v5796 = vunpack.c.l.b16 %v4771
      %v5797 = vunpack.c.l.b16 %v4772
      %v5798 = vunpack.c.l.b16 %v4773
      %v5799 = vunpack.c.l.b16 %v4774
      %v5800 = vunpack.c.l.b16 %v4775
      %v5801 = vunpack.c.l.b16 %v4776
      %v5802 = vunpack.c.l.b16 %v4777
      %v5803 = vpack.c.b16 %v5788, %v5787
      %v5804 = vpack.c.b16 %v5790, %v5789
      %v5805 = vpack.c.b16 %v5792, %v5791
      %v5806 = vpack.c.b16 %v5794, %v5793
      %v5807 = vpack.c.b16 %v5796, %v5795
      %v5808 = vpack.c.b16 %v5798, %v5797
      %v5809 = vpack.c.b16 %v5800, %v5799
      %v5810 = vpack.c.b16 %v5802, %v5801
      %5819 = vmatprep.subr.bf16.mxu0 0
      %5820 = vmatpush1.bf16.msra.mxu0 %v5803
      %5821 = vmatprep.subr.bf16.mxu0 0
      %5822 = vmatpush1.bf16.msra.mxu0 %v5804
      %5823 = vmatprep.subr.bf16.mxu0 0
      %5824 = vmatpush1.bf16.msra.mxu0 %v5805
      %5825 = vmatprep.subr.bf16.mxu0 0
      %5826 = vmatpush1.bf16.msra.mxu0 %v5806
      %5827 = vmatprep.subr.bf16.mxu0 0
      %5828 = vmatpush1.bf16.msra.mxu0 %v5807
      %5829 = vmatprep.subr.bf16.mxu0 0
      %5830 = vmatpush1.bf16.msra.mxu0 %v5808
      %5831 = vmatprep.subr.bf16.mxu0 0
      %5832 = vmatpush1.bf16.msra.mxu0 %v5809
      %5833 = vmatprep.subr.bf16.mxu0 0
      %5834 = vmatpush1.bf16.msra.mxu0 %v5810
      %5835 = vmatprep.subr.bf16.mxu0 0
      %5836 = vmatpush1.bf16.msra.mxu0 0
      %5837 = vmatprep.subr.bf16.mxu0 0
      %5838 = vmatpush1.bf16.msra.mxu0 0
      %5839 = vmatprep.subr.bf16.mxu0 0
      %5840 = vmatpush1.bf16.msra.mxu0 0
      %5841 = vmatprep.subr.bf16.mxu0 0
      %5842 = vmatpush1.bf16.msra.mxu0 0
      %5843 = vmatprep.subr.bf16.mxu0 0
      %5844 = vmatpush1.bf16.msra.mxu0 0
      %5845 = vmatprep.subr.bf16.mxu0 0
      %5846 = vmatpush1.bf16.msra.mxu0 0
      %5847 = vmatprep.subr.bf16.mxu0 0
      %5848 = vmatpush1.bf16.msra.mxu0 0
      %5849 = vmatprep.subr.bf16.mxu0 0
      %5850 = vmatpush1.bf16.msra.mxu0 0
      %5851 = vmatprep.mubr.bf16.mxu0 0
      %5852 = vmatmul.mubr.bf16.gmra.mrb[0].mxu0 %v4570
      %v5853 = vpop.f32.mrb[0].mxu0
      %v5854 = vadd.f32 %v5261, %v5853
      %v5855 = vpop.f32.mrb[0].mxu0
      %v5856 = vpop.f32.mrb[0].mxu0
      %v5857 = vadd.f32 %v5264, %v5856
      %v5858 = vpop.f32.mrb[0].mxu0
      %5859 = vmatprep.mubr.bf16.mxu0 0
      %5860 = vmatmul.mubr.bf16.gmra.mrb[0].mxu0 %v4571
      %v5861 = vpop.f32.mrb[0].mxu0
      %v5862 = vadd.f32 %v5269, %v5861
      %v5863 = vpop.f32.mrb[0].mxu0
      %v5864 = vpop.f32.mrb[0].mxu0
      %v5865 = vadd.f32 %v5272, %v5864
      %v5866 = vpop.f32.mrb[0].mxu0
      %5867 = vmatprep.mubr.bf16.mxu0 0
      %5868 = vmatmul.mubr.bf16.gmra.mrb[0].mxu0 %v4572
      %v5869 = vpop.f32.mrb[0].mxu0
      %v5870 = vadd.f32 %v5277, %v5869
      %v5871 = vpop.f32.mrb[0].mxu0
      %v5872 = vpop.f32.mrb[0].mxu0
      %v5873 = vadd.f32 %v5280, %v5872
      %v5874 = vpop.f32.mrb[0].mxu0
      %5875 = vmatprep.mubr.bf16.mxu0 0
      %5876 = vmatmul.mubr.bf16.gmra.mrb[0].mxu0 %v4573
      %v5877 = vpop.f32.mrb[0].mxu0
      %v5878 = vadd.f32 %v5285, %v5877
      %v5879 = vpop.f32.mrb[0].mxu0
      %v5880 = vpop.f32.mrb[0].mxu0
      %v5881 = vadd.f32 %v5288, %v5880
      %v5882 = vpop.f32.mrb[0].mxu0
      %5883 = vmatprep.mubr.bf16.mxu0 0
      %5884 = vmatmul.mubr.bf16.gmra.mrb[0].mxu0 %v4574
      %v5885 = vpop.f32.mrb[0].mxu0
      %v5886 = vadd.f32 %v5293, %v5885
      %v5887 = vpop.f32.mrb[0].mxu0
      %v5888 = vpop.f32.mrb[0].mxu0
      %v5889 = vadd.f32 %v5296, %v5888
      %v5890 = vpop.f32.mrb[0].mxu0
      %5891 = vmatprep.mubr.bf16.mxu0 0
      %5892 = vmatmul.mubr.bf16.gmra.mrb[0].mxu0 %v4575
      %v5893 = vpop.f32.mrb[0].mxu0
      %v5894 = vadd.f32 %v5301, %v5893
      %v5895 = vpop.f32.mrb[0].mxu0
      %v5896 = vpop.f32.mrb[0].mxu0
      %v5897 = vadd.f32 %v5304, %v5896
      %v5898 = vpop.f32.mrb[0].mxu0
      %5899 = vmatprep.mubr.bf16.mxu0 0
      %5900 = vmatmul.mubr.bf16.gmra.mrb[0].mxu0 %v4576
      %v5901 = vpop.f32.mrb[0].mxu0
      %v5902 = vadd.f32 %v5309, %v5901
      %v5903 = vpop.f32.mrb[0].mxu0
      %v5904 = vpop.f32.mrb[0].mxu0
      %v5905 = vadd.f32 %v5312, %v5904
      %v5906 = vpop.f32.mrb[0].mxu0
      %5907 = vmatprep.mubr.bf16.mxu0 0
      %5908 = vmatmul.mubr.bf16.gmra.mrb[0].mxu0 %v4577
      %v5909 = vpop.f32.mrb[0].mxu0
      %v5910 = vadd.f32 %v5317, %v5909
      %v5911 = vpop.f32.mrb[0].mxu0
      %v5912 = vpop.f32.mrb[0].mxu0
      %v5913 = vadd.f32 %v5320, %v5912
      %v5914 = vpop.f32.mrb[0].mxu0
      %5915 = vmatprep.mubr.bf16.mxu0 0
      %5916 = vmatmul.mubr.bf16.gmra.mrb[0].mxu0 %v4578
      %v5917 = vpop.f32.mrb[0].mxu0
      %v5918 = vadd.f32 %v5325, %v5917
      %v5919 = vpop.f32.mrb[0].mxu0
      %v5920 = vpop.f32.mrb[0].mxu0
      %v5921 = vadd.f32 %v5328, %v5920
      %v5922 = vpop.f32.mrb[0].mxu0
      %5923 = vmatprep.mubr.bf16.mxu0 0
      %5924 = vmatmul.mubr.bf16.gmra.mrb[0].mxu0 %v4579
      %v5925 = vpop.f32.mrb[0].mxu0
      %v5926 = vadd.f32 %v5333, %v5925
      %v5927 = vpop.f32.mrb[0].mxu0
      %v5928 = vpop.f32.mrb[0].mxu0
      %v5929 = vadd.f32 %v5336, %v5928
      %v5930 = vpop.f32.mrb[0].mxu0
      %5931 = vmatprep.mubr.bf16.mxu0 0
      %5932 = vmatmul.mubr.bf16.gmra.mrb[0].mxu0 %v4580
      %v5933 = vpop.f32.mrb[0].mxu0
      %v5934 = vadd.f32 %v5341, %v5933
      %v5935 = vpop.f32.mrb[0].mxu0
      %v5936 = vpop.f32.mrb[0].mxu0
      %v5937 = vadd.f32 %v5344, %v5936
      %v5938 = vpop.f32.mrb[0].mxu0
      %5939 = vmatprep.mubr.bf16.mxu0 0
      %5940 = vmatmul.mubr.bf16.gmra.mrb[0].mxu0 %v4581
      %v5941 = vpop.f32.mrb[0].mxu0
      %v5942 = vadd.f32 %v5349, %v5941
      %v5943 = vpop.f32.mrb[0].mxu0
      %v5944 = vpop.f32.mrb[0].mxu0
      %v5945 = vadd.f32 %v5352, %v5944
      %v5946 = vpop.f32.mrb[0].mxu0
      %5947 = vmatprep.mubr.bf16.mxu0 0
      %5948 = vmatmul.mubr.bf16.gmra.mrb[0].mxu0 %v4582
      %v5949 = vpop.f32.mrb[0].mxu0
      %v5950 = vadd.f32 %v5357, %v5949
      %v5951 = vpop.f32.mrb[0].mxu0
      %v5952 = vpop.f32.mrb[0].mxu0
      %v5953 = vadd.f32 %v5360, %v5952
      %v5954 = vpop.f32.mrb[0].mxu0
      %5955 = vmatprep.mubr.bf16.mxu0 0
      %5956 = vmatmul.mubr.bf16.gmra.mrb[0].mxu0 %v4583
      %v5957 = vpop.f32.mrb[0].mxu0
      %v5958 = vadd.f32 %v5365, %v5957
      %v5959 = vpop.f32.mrb[0].mxu0
      %v5960 = vpop.f32.mrb[0].mxu0
      %v5961 = vadd.f32 %v5368, %v5960
      %v5962 = vpop.f32.mrb[0].mxu0
      %5963 = vmatprep.mubr.bf16.mxu0 0
      %5964 = vmatmul.mubr.bf16.gmra.mrb[0].mxu0 %v4584
      %v5965 = vpop.f32.mrb[0].mxu0
      %v5966 = vadd.f32 %v5373, %v5965
      %v5967 = vpop.f32.mrb[0].mxu0
      %v5968 = vpop.f32.mrb[0].mxu0
      %v5969 = vadd.f32 %v5376, %v5968
      %v5970 = vpop.f32.mrb[0].mxu0
      %5971 = vmatprep.mubr.bf16.mxu0 0
      %5972 = vmatmul.mubr.bf16.gmra.mrb[0].mxu0 %v4585
      %v5973 = vpop.f32.mrb[0].mxu0
      %v5974 = vadd.f32 %v5381, %v5973
      %v5975 = vpop.f32.mrb[0].mxu0
      %v5976 = vpop.f32.mrb[0].mxu0
      %v5977 = vadd.f32 %v5384, %v5976
      %v5978 = vpop.f32.mrb[0].mxu0
      %5979 = vmatprep.mubr.bf16.mxu0 0
      %5980 = vmatmul.mubr.bf16.gmra.mrb[0].mxu0 %v4586
      %v5981 = vpop.f32.mrb[0].mxu0
      %v5982 = vadd.f32 %v5389, %v5981
      %v5983 = vpop.f32.mrb[0].mxu0
      %v5984 = vpop.f32.mrb[0].mxu0
      %v5985 = vadd.f32 %v5392, %v5984
      %v5986 = vpop.f32.mrb[0].mxu0
      %5987 = vmatprep.mubr.bf16.mxu0 0
      %5988 = vmatmul.mubr.bf16.gmra.mrb[0].mxu0 %v4587
      %v5989 = vpop.f32.mrb[0].mxu0
      %v5990 = vadd.f32 %v5397, %v5989
      %v5991 = vpop.f32.mrb[0].mxu0
      %v5992 = vpop.f32.mrb[0].mxu0
      %v5993 = vadd.f32 %v5400, %v5992
      %v5994 = vpop.f32.mrb[0].mxu0
      %5995 = vmatprep.mubr.bf16.mxu0 0
      %5996 = vmatmul.mubr.bf16.gmra.mrb[0].mxu0 %v4588
      %v5997 = vpop.f32.mrb[0].mxu0
      %v5998 = vadd.f32 %v5405, %v5997
      %v5999 = vpop.f32.mrb[0].mxu0
      %v6000 = vpop.f32.mrb[0].mxu0
      %v6001 = vadd.f32 %v5408, %v6000
      %v6002 = vpop.f32.mrb[0].mxu0
      %6003 = vmatprep.mubr.bf16.mxu0 0
      %6004 = vmatmul.mubr.bf16.gmra.mrb[0].mxu0 %v4589
      %v6005 = vpop.f32.mrb[0].mxu0
      %v6006 = vadd.f32 %v5413, %v6005
      %v6007 = vpop.f32.mrb[0].mxu0
      %v6008 = vpop.f32.mrb[0].mxu0
      %v6009 = vadd.f32 %v5416, %v6008
      %v6010 = vpop.f32.mrb[0].mxu0
      %6011 = vmatprep.mubr.bf16.mxu0 0
      %6012 = vmatmul.mubr.bf16.gmra.mrb[0].mxu0 %v4590
      %v6013 = vpop.f32.mrb[0].mxu0
      %v6014 = vadd.f32 %v5421, %v6013
      %v6015 = vpop.f32.mrb[0].mxu0
      %v6016 = vpop.f32.mrb[0].mxu0
      %v6017 = vadd.f32 %v5424, %v6016
      %v6018 = vpop.f32.mrb[0].mxu0
      %6019 = vmatprep.mubr.bf16.mxu0 0
      %6020 = vmatmul.mubr.bf16.gmra.mrb[0].mxu0 %v4591
      %v6021 = vpop.f32.mrb[0].mxu0
      %v6022 = vadd.f32 %v5429, %v6021
      %v6023 = vpop.f32.mrb[0].mxu0
      %v6024 = vpop.f32.mrb[0].mxu0
      %v6025 = vadd.f32 %v5432, %v6024
      %v6026 = vpop.f32.mrb[0].mxu0
      %6027 = vmatprep.mubr.bf16.mxu0 0
      %6028 = vmatmul.mubr.bf16.gmra.mrb[0].mxu0 %v4592
      %v6029 = vpop.f32.mrb[0].mxu0
      %v6030 = vadd.f32 %v5437, %v6029
      %v6031 = vpop.f32.mrb[0].mxu0
      %v6032 = vpop.f32.mrb[0].mxu0
      %v6033 = vadd.f32 %v5440, %v6032
      %v6034 = vpop.f32.mrb[0].mxu0
      %6035 = vmatprep.mubr.bf16.mxu0 0
      %6036 = vmatmul.mubr.bf16.gmra.mrb[0].mxu0 %v4593
      %v6037 = vpop.f32.mrb[0].mxu0
      %v6038 = vadd.f32 %v5445, %v6037
      %v6039 = vpop.f32.mrb[0].mxu0
      %v6040 = vpop.f32.mrb[0].mxu0
      %v6041 = vadd.f32 %v5448, %v6040
      %v6042 = vpop.f32.mrb[0].mxu0
      %6043 = vmatprep.mubr.bf16.mxu0 0
      %6044 = vmatmul.mubr.bf16.gmra.mrb[0].mxu0 %v4594
      %v6045 = vpop.f32.mrb[0].mxu0
      %v6046 = vadd.f32 %v5453, %v6045
      %v6047 = vpop.f32.mrb[0].mxu0
      %v6048 = vpop.f32.mrb[0].mxu0
      %v6049 = vadd.f32 %v5456, %v6048
      %v6050 = vpop.f32.mrb[0].mxu0
      %6051 = vmatprep.mubr.bf16.mxu0 0
      %6052 = vmatmul.mubr.bf16.gmra.mrb[0].mxu0 %v4595
      %v6053 = vpop.f32.mrb[0].mxu0
      %v6054 = vadd.f32 %v5461, %v6053
      %v6055 = vpop.f32.mrb[0].mxu0
      %v6056 = vpop.f32.mrb[0].mxu0
      %v6057 = vadd.f32 %v5464, %v6056
      %v6058 = vpop.f32.mrb[0].mxu0
      %6059 = vmatprep.mubr.bf16.mxu0 0
      %6060 = vmatmul.mubr.bf16.gmra.mrb[0].mxu0 %v4596
      %v6061 = vpop.f32.mrb[0].mxu0
      %v6062 = vadd.f32 %v5469, %v6061
      %v6063 = vpop.f32.mrb[0].mxu0
      %v6064 = vpop.f32.mrb[0].mxu0
      %v6065 = vadd.f32 %v5472, %v6064
      %v6066 = vpop.f32.mrb[0].mxu0
      %6067 = vmatprep.mubr.bf16.mxu0 0
      %6068 = vmatmul.mubr.bf16.gmra.mrb[0].mxu0 %v4597
      %v6069 = vpop.f32.mrb[0].mxu0
      %v6070 = vadd.f32 %v5477, %v6069
      %v6071 = vpop.f32.mrb[0].mxu0
      %v6072 = vpop.f32.mrb[0].mxu0
      %v6073 = vadd.f32 %v5480, %v6072
      %v6074 = vpop.f32.mrb[0].mxu0
      %6075 = vmatprep.mubr.bf16.mxu0 0
      %6076 = vmatmul.mubr.bf16.gmra.mrb[0].mxu0 %v4598
      %v6077 = vpop.f32.mrb[0].mxu0
      %v6078 = vadd.f32 %v5485, %v6077
      %v6079 = vpop.f32.mrb[0].mxu0
      %v6080 = vpop.f32.mrb[0].mxu0
      %v6081 = vadd.f32 %v5488, %v6080
      %v6082 = vpop.f32.mrb[0].mxu0
      %6083 = vmatprep.mubr.bf16.mxu0 0
      %6084 = vmatmul.mubr.bf16.gmra.mrb[0].mxu0 %v4599
      %v6085 = vpop.f32.mrb[0].mxu0
      %v6086 = vadd.f32 %v5493, %v6085
      %v6087 = vpop.f32.mrb[0].mxu0
      %v6088 = vpop.f32.mrb[0].mxu0
      %v6089 = vadd.f32 %v5496, %v6088
      %v6090 = vpop.f32.mrb[0].mxu0
      %6091 = vmatprep.mubr.bf16.mxu0 0
      %6092 = vmatmul.mubr.bf16.gmra.mrb[0].mxu0 %v4600
      %v6093 = vpop.f32.mrb[0].mxu0
      %v6094 = vadd.f32 %v5501, %v6093
      %v6095 = vpop.f32.mrb[0].mxu0
      %v6096 = vpop.f32.mrb[0].mxu0
      %v6097 = vadd.f32 %v5504, %v6096
      %v6098 = vpop.f32.mrb[0].mxu0
      %6099 = vmatprep.mubr.bf16.mxu0 0
      %6100 = vmatmul.mubr.bf16.gmra.mrb[0].mxu0 %v4601
      %v6101 = vpop.f32.mrb[0].mxu0
      %v6102 = vadd.f32 %v5509, %v6101
      %v6103 = vpop.f32.mrb[0].mxu0
      %v6104 = vpop.f32.mrb[0].mxu0
      %v6105 = vadd.f32 %v5512, %v6104
      %v6106 = vpop.f32.mrb[0].mxu0
      %6107 = vmatprep.mubr.bf16.mxu0 0
      %6108 = vmatmul.mubr.bf16.gmra.mrb[0].mxu0 %v4602
      %v6109 = vpop.f32.mrb[0].mxu0
      %v6110 = vadd.f32 %v5517, %v6109
      %v6111 = vpop.f32.mrb[0].mxu0
      %v6112 = vpop.f32.mrb[0].mxu0
      %v6113 = vadd.f32 %v5520, %v6112
      %v6114 = vpop.f32.mrb[0].mxu0
      %6115 = vmatprep.mubr.bf16.mxu0 0
      %6116 = vmatmul.mubr.bf16.gmra.mrb[0].mxu0 %v4603
      %v6117 = vpop.f32.mrb[0].mxu0
      %v6118 = vadd.f32 %v5525, %v6117
      %v6119 = vpop.f32.mrb[0].mxu0
      %v6120 = vpop.f32.mrb[0].mxu0
      %v6121 = vadd.f32 %v5528, %v6120
      %v6122 = vpop.f32.mrb[0].mxu0
      %6123 = vmatprep.mubr.bf16.mxu0 0
      %6124 = vmatmul.mubr.bf16.gmra.mrb[0].mxu0 %v4604
      %v6125 = vpop.f32.mrb[0].mxu0
      %v6126 = vadd.f32 %v5533, %v6125
      %v6127 = vpop.f32.mrb[0].mxu0
      %v6128 = vpop.f32.mrb[0].mxu0
      %v6129 = vadd.f32 %v5536, %v6128
      %v6130 = vpop.f32.mrb[0].mxu0
      %6131 = vmatprep.mubr.bf16.mxu0 0
      %6132 = vmatmul.mubr.bf16.gmra.mrb[0].mxu0 %v4605
      %v6133 = vpop.f32.mrb[0].mxu0
      %v6134 = vadd.f32 %v5541, %v6133
      %v6135 = vpop.f32.mrb[0].mxu0
      %v6136 = vpop.f32.mrb[0].mxu0
      %v6137 = vadd.f32 %v5544, %v6136
      %v6138 = vpop.f32.mrb[0].mxu0
      %6139 = vmatprep.mubr.bf16.mxu0 0
      %6140 = vmatmul.mubr.bf16.gmra.mrb[0].mxu0 %v4606
      %v6141 = vpop.f32.mrb[0].mxu0
      %v6142 = vadd.f32 %v5549, %v6141
      %v6143 = vpop.f32.mrb[0].mxu0
      %v6144 = vpop.f32.mrb[0].mxu0
      %v6145 = vadd.f32 %v5552, %v6144
      %v6146 = vpop.f32.mrb[0].mxu0
      %6147 = vmatprep.mubr.bf16.mxu0 0
      %6148 = vmatmul.mubr.bf16.gmra.mrb[0].mxu0 %v4607
      %v6149 = vpop.f32.mrb[0].mxu0
      %v6150 = vadd.f32 %v5557, %v6149
      %v6151 = vpop.f32.mrb[0].mxu0
      %v6152 = vpop.f32.mrb[0].mxu0
      %v6153 = vadd.f32 %v5560, %v6152
      %v6154 = vpop.f32.mrb[0].mxu0
      %6155 = vmatprep.mubr.bf16.mxu0 0
      %6156 = vmatmul.mubr.bf16.gmra.mrb[0].mxu0 %v4608
      %v6157 = vpop.f32.mrb[0].mxu0
      %v6158 = vadd.f32 %v5565, %v6157
      %v6159 = vpop.f32.mrb[0].mxu0
      %v6160 = vpop.f32.mrb[0].mxu0
      %v6161 = vadd.f32 %v5568, %v6160
      %v6162 = vpop.f32.mrb[0].mxu0
      %6163 = vmatprep.mubr.bf16.mxu0 0
      %6164 = vmatmul.mubr.bf16.gmra.mrb[0].mxu0 %v4609
      %v6165 = vpop.f32.mrb[0].mxu0
      %v6166 = vadd.f32 %v5573, %v6165
      %v6167 = vpop.f32.mrb[0].mxu0
      %v6168 = vpop.f32.mrb[0].mxu0
      %v6169 = vadd.f32 %v5576, %v6168
      %v6170 = vpop.f32.mrb[0].mxu0
      %6171 = vmatprep.mubr.bf16.mxu0 0
      %6172 = vmatmul.mubr.bf16.gmra.mrb[0].mxu0 %v4610
      %v6173 = vpop.f32.mrb[0].mxu0
      %v6174 = vadd.f32 %v5581, %v6173
      %v6175 = vpop.f32.mrb[0].mxu0
      %v6176 = vpop.f32.mrb[0].mxu0
      %v6177 = vadd.f32 %v5584, %v6176
      %v6178 = vpop.f32.mrb[0].mxu0
      %6179 = vmatprep.mubr.bf16.mxu0 0
      %6180 = vmatmul.mubr.bf16.gmra.mrb[0].mxu0 %v4611
      %v6181 = vpop.f32.mrb[0].mxu0
      %v6182 = vadd.f32 %v5589, %v6181
      %v6183 = vpop.f32.mrb[0].mxu0
      %v6184 = vpop.f32.mrb[0].mxu0
      %v6185 = vadd.f32 %v5592, %v6184
      %v6186 = vpop.f32.mrb[0].mxu0
      %6187 = vmatprep.mubr.bf16.mxu0 0
      %6188 = vmatmul.mubr.bf16.gmra.mrb[0].mxu0 %v4612
      %v6189 = vpop.f32.mrb[0].mxu0
      %v6190 = vadd.f32 %v5597, %v6189
      %v6191 = vpop.f32.mrb[0].mxu0
      %v6192 = vpop.f32.mrb[0].mxu0
      %v6193 = vadd.f32 %v5600, %v6192
      %v6194 = vpop.f32.mrb[0].mxu0
      %6195 = vmatprep.mubr.bf16.mxu0 0
      %6196 = vmatmul.mubr.bf16.gmra.mrb[0].mxu0 %v4613
      %v6197 = vpop.f32.mrb[0].mxu0
      %v6198 = vadd.f32 %v5605, %v6197
      %v6199 = vpop.f32.mrb[0].mxu0
      %v6200 = vpop.f32.mrb[0].mxu0
      %v6201 = vadd.f32 %v5608, %v6200
      %v6202 = vpop.f32.mrb[0].mxu0
      %6203 = vmatprep.mubr.bf16.mxu0 0
      %6204 = vmatmul.mubr.bf16.gmra.mrb[0].mxu0 %v4614
      %v6205 = vpop.f32.mrb[0].mxu0
      %v6206 = vadd.f32 %v5613, %v6205
      %v6207 = vpop.f32.mrb[0].mxu0
      %v6208 = vpop.f32.mrb[0].mxu0
      %v6209 = vadd.f32 %v5616, %v6208
      %v6210 = vpop.f32.mrb[0].mxu0
      %6211 = vmatprep.mubr.bf16.mxu0 0
      %6212 = vmatmul.mubr.bf16.gmra.mrb[0].mxu0 %v4615
      %v6213 = vpop.f32.mrb[0].mxu0
      %v6214 = vadd.f32 %v5621, %v6213
      %v6215 = vpop.f32.mrb[0].mxu0
      %v6216 = vpop.f32.mrb[0].mxu0
      %v6217 = vadd.f32 %v5624, %v6216
      %v6218 = vpop.f32.mrb[0].mxu0
      %6219 = vmatprep.mubr.bf16.mxu0 0
      %6220 = vmatmul.mubr.bf16.gmra.mrb[0].mxu0 %v4616
      %v6221 = vpop.f32.mrb[0].mxu0
      %v6222 = vadd.f32 %v5629, %v6221
      %v6223 = vpop.f32.mrb[0].mxu0
      %v6224 = vpop.f32.mrb[0].mxu0
      %v6225 = vadd.f32 %v5632, %v6224
      %v6226 = vpop.f32.mrb[0].mxu0
      %6227 = vmatprep.mubr.bf16.mxu0 0
      %6228 = vmatmul.mubr.bf16.gmra.mrb[0].mxu0 %v4617
      %v6229 = vpop.f32.mrb[0].mxu0
      %v6230 = vadd.f32 %v5637, %v6229
      %v6231 = vpop.f32.mrb[0].mxu0
      %v6232 = vpop.f32.mrb[0].mxu0
      %v6233 = vadd.f32 %v5640, %v6232
      %v6234 = vpop.f32.mrb[0].mxu0
      %6235 = vmatprep.mubr.bf16.mxu0 0
      %6236 = vmatmul.mubr.bf16.gmra.mrb[0].mxu0 %v4618
      %v6237 = vpop.f32.mrb[0].mxu0
      %v6238 = vadd.f32 %v5645, %v6237
      %v6239 = vpop.f32.mrb[0].mxu0
      %v6240 = vpop.f32.mrb[0].mxu0
      %v6241 = vadd.f32 %v5648, %v6240
      %v6242 = vpop.f32.mrb[0].mxu0
      %6243 = vmatprep.mubr.bf16.mxu0 0
      %6244 = vmatmul.mubr.bf16.gmra.mrb[0].mxu0 %v4619
      %v6245 = vpop.f32.mrb[0].mxu0
      %v6246 = vadd.f32 %v5653, %v6245
      %v6247 = vpop.f32.mrb[0].mxu0
      %v6248 = vpop.f32.mrb[0].mxu0
      %v6249 = vadd.f32 %v5656, %v6248
      %v6250 = vpop.f32.mrb[0].mxu0
      %6251 = vmatprep.mubr.bf16.mxu0 0
      %6252 = vmatmul.mubr.bf16.gmra.mrb[0].mxu0 %v4620
      %v6253 = vpop.f32.mrb[0].mxu0
      %v6254 = vadd.f32 %v5661, %v6253
      %v6255 = vpop.f32.mrb[0].mxu0
      %v6256 = vpop.f32.mrb[0].mxu0
      %v6257 = vadd.f32 %v5664, %v6256
      %v6258 = vpop.f32.mrb[0].mxu0
      %6259 = vmatprep.mubr.bf16.mxu0 0
      %6260 = vmatmul.mubr.bf16.gmra.mrb[0].mxu0 %v4621
      %v6261 = vpop.f32.mrb[0].mxu0
      %v6262 = vadd.f32 %v5669, %v6261
      %v6263 = vpop.f32.mrb[0].mxu0
      %v6264 = vpop.f32.mrb[0].mxu0
      %v6265 = vadd.f32 %v5672, %v6264
      %v6266 = vpop.f32.mrb[0].mxu0
      %6267 = vmatprep.mubr.bf16.mxu0 0
      %6268 = vmatmul.mubr.bf16.gmra.mrb[0].mxu0 %v4622
      %v6269 = vpop.f32.mrb[0].mxu0
      %v6270 = vadd.f32 %v5677, %v6269
      %v6271 = vpop.f32.mrb[0].mxu0
      %v6272 = vpop.f32.mrb[0].mxu0
      %v6273 = vadd.f32 %v5680, %v6272
      %v6274 = vpop.f32.mrb[0].mxu0
      %6275 = vmatprep.mubr.bf16.mxu0 0
      %6276 = vmatmul.mubr.bf16.gmra.mrb[0].mxu0 %v4623
      %v6277 = vpop.f32.mrb[0].mxu0
      %v6278 = vadd.f32 %v5685, %v6277
      %v6279 = vpop.f32.mrb[0].mxu0
      %v6280 = vpop.f32.mrb[0].mxu0
      %v6281 = vadd.f32 %v5688, %v6280
      %v6282 = vpop.f32.mrb[0].mxu0
      %6283 = vmatprep.mubr.bf16.mxu0 0
      %6284 = vmatmul.mubr.bf16.gmra.mrb[0].mxu0 %v4624
      %v6285 = vpop.f32.mrb[0].mxu0
      %v6286 = vadd.f32 %v5693, %v6285
      %v6287 = vpop.f32.mrb[0].mxu0
      %v6288 = vpop.f32.mrb[0].mxu0
      %v6289 = vadd.f32 %v5696, %v6288
      %v6290 = vpop.f32.mrb[0].mxu0
      %6291 = vmatprep.mubr.bf16.mxu0 0
      %6292 = vmatmul.mubr.bf16.gmra.mrb[0].mxu0 %v4625
      %v6293 = vpop.f32.mrb[0].mxu0
      %v6294 = vadd.f32 %v5701, %v6293
      %v6295 = vpop.f32.mrb[0].mxu0
      %v6296 = vpop.f32.mrb[0].mxu0
      %v6297 = vadd.f32 %v5704, %v6296
      %v6298 = vpop.f32.mrb[0].mxu0
      %6299 = vmatprep.mubr.bf16.mxu0 0
      %6300 = vmatmul.mubr.bf16.gmra.mrb[0].mxu0 %v4626
      %v6301 = vpop.f32.mrb[0].mxu0
      %v6302 = vadd.f32 %v5709, %v6301
      %v6303 = vpop.f32.mrb[0].mxu0
      %v6304 = vpop.f32.mrb[0].mxu0
      %v6305 = vadd.f32 %v5712, %v6304
      %v6306 = vpop.f32.mrb[0].mxu0
      %6307 = vmatprep.mubr.bf16.mxu0 0
      %6308 = vmatmul.mubr.bf16.gmra.mrb[0].mxu0 %v4627
      %v6309 = vpop.f32.mrb[0].mxu0
      %v6310 = vadd.f32 %v5717, %v6309
      %v6311 = vpop.f32.mrb[0].mxu0
      %v6312 = vpop.f32.mrb[0].mxu0
      %v6313 = vadd.f32 %v5720, %v6312
      %v6314 = vpop.f32.mrb[0].mxu0
      %6315 = vmatprep.mubr.bf16.mxu0 0
      %6316 = vmatmul.mubr.bf16.gmra.mrb[0].mxu0 %v4628
      %v6317 = vpop.f32.mrb[0].mxu0
      %v6318 = vadd.f32 %v5725, %v6317
      %v6319 = vpop.f32.mrb[0].mxu0
      %v6320 = vpop.f32.mrb[0].mxu0
      %v6321 = vadd.f32 %v5728, %v6320
      %v6322 = vpop.f32.mrb[0].mxu0
      %6323 = vmatprep.mubr.bf16.mxu0 0
      %6324 = vmatmul.mubr.bf16.gmra.mrb[0].mxu0 %v4629
      %v6325 = vpop.f32.mrb[0].mxu0
      %v6326 = vadd.f32 %v5733, %v6325
      %v6327 = vpop.f32.mrb[0].mxu0
      %v6328 = vpop.f32.mrb[0].mxu0
      %v6329 = vadd.f32 %v5736, %v6328
      %v6330 = vpop.f32.mrb[0].mxu0
      %6331 = vmatprep.mubr.bf16.mxu0 0
      %6332 = vmatmul.mubr.bf16.gmra.mrb[0].mxu0 %v4630
      %v6333 = vpop.f32.mrb[0].mxu0
      %v6334 = vadd.f32 %v5741, %v6333
      %v6335 = vpop.f32.mrb[0].mxu0
      %v6336 = vpop.f32.mrb[0].mxu0
      %v6337 = vadd.f32 %v5744, %v6336
      %v6338 = vpop.f32.mrb[0].mxu0
      %6339 = vmatprep.mubr.bf16.mxu0 0
      %6340 = vmatmul.mubr.bf16.gmra.mrb[0].mxu0 %v4631
      %v6341 = vpop.f32.mrb[0].mxu0
      %v6342 = vadd.f32 %v5749, %v6341
      %v6343 = vpop.f32.mrb[0].mxu0
      %v6344 = vpop.f32.mrb[0].mxu0
      %v6345 = vadd.f32 %v5752, %v6344
      %v6346 = vpop.f32.mrb[0].mxu0
      %6347 = vmatprep.mubr.bf16.mxu0 0
      %6348 = vmatmul.mubr.bf16.gmra.mrb[0].mxu0 %v4632
      %v6349 = vpop.f32.mrb[0].mxu0
      %v6350 = vadd.f32 %v5757, %v6349
      %v6351 = vpop.f32.mrb[0].mxu0
      %v6352 = vpop.f32.mrb[0].mxu0
      %v6353 = vadd.f32 %v5760, %v6352
      %v6354 = vpop.f32.mrb[0].mxu0
      %6355 = vmatprep.mubr.bf16.mxu0 0
      %6356 = vmatmul.mubr.bf16.gmra.mrb[0].mxu0 %v4633
      %v6357 = vpop.f32.mrb[0].mxu0
      %v6358 = vadd.f32 %v5765, %v6357
      %v6359 = vpop.f32.mrb[0].mxu0
      %v6360 = vpop.f32.mrb[0].mxu0
      %v6361 = vadd.f32 %v5768, %v6360
      %v6362 = vpop.f32.mrb[0].mxu0
      %6363 = vdwg.mxu0
      %s6364 = scalar_lea.vmem %s3, 5
      %v6365 = vld [vmem:[%s6364] sm:$0x1]
      %v6367 = vlaneseq
      %v6368 = vshrl.u32 %v6367, 7
      %v6369 = vsub.s32 0, %v6368
      %v6370 = vrot.slane %v6365, %v6369
      %v6372 = vadd.f32 %v5854, %v6370
      %v6373 = vadd.f32 %v5857, %v6370
      %v6374 = vadd.f32 %v5862, %v6370
      %v6375 = vadd.f32 %v5865, %v6370
      %v6376 = vadd.f32 %v5870, %v6370
      %v6377 = vadd.f32 %v5873, %v6370
      %v6378 = vadd.f32 %v5878, %v6370
      %v6379 = vadd.f32 %v5881, %v6370
      %v6380 = vadd.f32 %v5886, %v6370
      %v6381 = vadd.f32 %v5889, %v6370
      %v6382 = vadd.f32 %v5894, %v6370
      %v6383 = vadd.f32 %v5897, %v6370
      %v6384 = vadd.f32 %v5902, %v6370
      %v6385 = vadd.f32 %v5905, %v6370
      %v6386 = vadd.f32 %v5910, %v6370
      %v6387 = vadd.f32 %v5913, %v6370
      %v6388 = vadd.f32 %v5918, %v6370
      %v6389 = vadd.f32 %v5921, %v6370
      %v6390 = vadd.f32 %v5926, %v6370
      %v6391 = vadd.f32 %v5929, %v6370
      %v6392 = vadd.f32 %v5934, %v6370
      %v6393 = vadd.f32 %v5937, %v6370
      %v6394 = vadd.f32 %v5942, %v6370
      %v6395 = vadd.f32 %v5945, %v6370
      %v6396 = vadd.f32 %v5950, %v6370
      %v6397 = vadd.f32 %v5953, %v6370
      %v6398 = vadd.f32 %v5958, %v6370
      %v6399 = vadd.f32 %v5961, %v6370
      %v6400 = vadd.f32 %v5966, %v6370
      %v6401 = vadd.f32 %v5969, %v6370
      %v6402 = vadd.f32 %v5974, %v6370
      %v6403 = vadd.f32 %v5977, %v6370
      %v6404 = vadd.f32 %v5982, %v6370
      %v6405 = vadd.f32 %v5985, %v6370
      %v6406 = vadd.f32 %v5990, %v6370
      %v6407 = vadd.f32 %v5993, %v6370
      %v6408 = vadd.f32 %v5998, %v6370
      %v6409 = vadd.f32 %v6001, %v6370
      %v6410 = vadd.f32 %v6006, %v6370
      %v6411 = vadd.f32 %v6009, %v6370
      %v6412 = vadd.f32 %v6014, %v6370
      %v6413 = vadd.f32 %v6017, %v6370
      %v6414 = vadd.f32 %v6022, %v6370
      %v6415 = vadd.f32 %v6025, %v6370
      %v6416 = vadd.f32 %v6030, %v6370
      %v6417 = vadd.f32 %v6033, %v6370
      %v6418 = vadd.f32 %v6038, %v6370
      %v6419 = vadd.f32 %v6041, %v6370
      %v6420 = vadd.f32 %v6046, %v6370
      %v6421 = vadd.f32 %v6049, %v6370
      %v6422 = vadd.f32 %v6054, %v6370
      %v6423 = vadd.f32 %v6057, %v6370
      %v6424 = vadd.f32 %v6062, %v6370
      %v6425 = vadd.f32 %v6065, %v6370
      %v6426 = vadd.f32 %v6070, %v6370
      %v6427 = vadd.f32 %v6073, %v6370
      %v6428 = vadd.f32 %v6078, %v6370
      %v6429 = vadd.f32 %v6081, %v6370
      %v6430 = vadd.f32 %v6086, %v6370
      %v6431 = vadd.f32 %v6089, %v6370
      %v6432 = vadd.f32 %v6094, %v6370
      %v6433 = vadd.f32 %v6097, %v6370
      %v6434 = vadd.f32 %v6102, %v6370
      %v6435 = vadd.f32 %v6105, %v6370
      %v6436 = vadd.f32 %v6110, %v6370
      %v6437 = vadd.f32 %v6113, %v6370
      %v6438 = vadd.f32 %v6118, %v6370
      %v6439 = vadd.f32 %v6121, %v6370
      %v6440 = vadd.f32 %v6126, %v6370
      %v6441 = vadd.f32 %v6129, %v6370
      %v6442 = vadd.f32 %v6134, %v6370
      %v6443 = vadd.f32 %v6137, %v6370
      %v6444 = vadd.f32 %v6142, %v6370
      %v6445 = vadd.f32 %v6145, %v6370
      %v6446 = vadd.f32 %v6150, %v6370
      %v6447 = vadd.f32 %v6153, %v6370
      %v6448 = vadd.f32 %v6158, %v6370
      %v6449 = vadd.f32 %v6161, %v6370
      %v6450 = vadd.f32 %v6166, %v6370
      %v6451 = vadd.f32 %v6169, %v6370
      %v6452 = vadd.f32 %v6174, %v6370
      %v6453 = vadd.f32 %v6177, %v6370
      %v6454 = vadd.f32 %v6182, %v6370
      %v6455 = vadd.f32 %v6185, %v6370
      %v6456 = vadd.f32 %v6190, %v6370
      %v6457 = vadd.f32 %v6193, %v6370
      %v6458 = vadd.f32 %v6198, %v6370
      %v6459 = vadd.f32 %v6201, %v6370
      %v6460 = vadd.f32 %v6206, %v6370
      %v6461 = vadd.f32 %v6209, %v6370
      %v6462 = vadd.f32 %v6214, %v6370
      %v6463 = vadd.f32 %v6217, %v6370
      %v6464 = vadd.f32 %v6222, %v6370
      %v6465 = vadd.f32 %v6225, %v6370
      %v6466 = vadd.f32 %v6230, %v6370
      %v6467 = vadd.f32 %v6233, %v6370
      %v6468 = vadd.f32 %v6238, %v6370
      %v6469 = vadd.f32 %v6241, %v6370
      %v6470 = vadd.f32 %v6246, %v6370
      %v6471 = vadd.f32 %v6249, %v6370
      %v6472 = vadd.f32 %v6254, %v6370
      %v6473 = vadd.f32 %v6257, %v6370
      %v6474 = vadd.f32 %v6262, %v6370
      %v6475 = vadd.f32 %v6265, %v6370
      %v6476 = vadd.f32 %v6270, %v6370
      %v6477 = vadd.f32 %v6273, %v6370
      %v6478 = vadd.f32 %v6278, %v6370
      %v6479 = vadd.f32 %v6281, %v6370
      %v6480 = vadd.f32 %v6286, %v6370
      %v6481 = vadd.f32 %v6289, %v6370
      %v6482 = vadd.f32 %v6294, %v6370
      %v6483 = vadd.f32 %v6297, %v6370
      %v6484 = vadd.f32 %v6302, %v6370
      %v6485 = vadd.f32 %v6305, %v6370
      %v6486 = vadd.f32 %v6310, %v6370
      %v6487 = vadd.f32 %v6313, %v6370
      %v6488 = vadd.f32 %v6318, %v6370
      %v6489 = vadd.f32 %v6321, %v6370
      %v6490 = vadd.f32 %v6326, %v6370
      %v6491 = vadd.f32 %v6329, %v6370
      %v6492 = vadd.f32 %v6334, %v6370
      %v6493 = vadd.f32 %v6337, %v6370
      %v6494 = vadd.f32 %v6342, %v6370
      %v6495 = vadd.f32 %v6345, %v6370
      %v6496 = vadd.f32 %v6350, %v6370
      %v6497 = vadd.f32 %v6353, %v6370
      %v6498 = vadd.f32 %v6358, %v6370
      %v6499 = vadd.f32 %v6361, %v6370
      %v6500 = vmax.f32 %v6372, 0.0
      %v6501 = vmax.f32 %v6373, 0.0
      %v6502 = vmax.f32 %v6374, 0.0
      %v6503 = vmax.f32 %v6375, 0.0
      %v6504 = vmax.f32 %v6376, 0.0
      %v6505 = vmax.f32 %v6377, 0.0
      %v6506 = vmax.f32 %v6378, 0.0
      %v6507 = vmax.f32 %v6379, 0.0
      %v6508 = vmax.f32 %v6380, 0.0
      %v6509 = vmax.f32 %v6381, 0.0
      %v6510 = vmax.f32 %v6382, 0.0
      %v6511 = vmax.f32 %v6383, 0.0
      %v6512 = vmax.f32 %v6384, 0.0
      %v6513 = vmax.f32 %v6385, 0.0
      %v6514 = vmax.f32 %v6386, 0.0
      %v6515 = vmax.f32 %v6387, 0.0
      %v6516 = vmax.f32 %v6388, 0.0
      %v6517 = vmax.f32 %v6389, 0.0
      %v6518 = vmax.f32 %v6390, 0.0
      %v6519 = vmax.f32 %v6391, 0.0
      %v6520 = vmax.f32 %v6392, 0.0
      %v6521 = vmax.f32 %v6393, 0.0
      %v6522 = vmax.f32 %v6394, 0.0
      %v6523 = vmax.f32 %v6395, 0.0
      %v6524 = vmax.f32 %v6396, 0.0
      %v6525 = vmax.f32 %v6397, 0.0
      %v6526 = vmax.f32 %v6398, 0.0
      %v6527 = vmax.f32 %v6399, 0.0
      %v6528 = vmax.f32 %v6400, 0.0
      %v6529 = vmax.f32 %v6401, 0.0
      %v6530 = vmax.f32 %v6402, 0.0
      %v6531 = vmax.f32 %v6403, 0.0
      %v6532 = vmax.f32 %v6404, 0.0
      %v6533 = vmax.f32 %v6405, 0.0
      %v6534 = vmax.f32 %v6406, 0.0
      %v6535 = vmax.f32 %v6407, 0.0
      %v6536 = vmax.f32 %v6408, 0.0
      %v6537 = vmax.f32 %v6409, 0.0
      %v6538 = vmax.f32 %v6410, 0.0
      %v6539 = vmax.f32 %v6411, 0.0
      %v6540 = vmax.f32 %v6412, 0.0
      %v6541 = vmax.f32 %v6413, 0.0
      %v6542 = vmax.f32 %v6414, 0.0
      %v6543 = vmax.f32 %v6415, 0.0
      %v6544 = vmax.f32 %v6416, 0.0
      %v6545 = vmax.f32 %v6417, 0.0
      %v6546 = vmax.f32 %v6418, 0.0
      %v6547 = vmax.f32 %v6419, 0.0
      %v6548 = vmax.f32 %v6420, 0.0
      %v6549 = vmax.f32 %v6421, 0.0
      %v6550 = vmax.f32 %v6422, 0.0
      %v6551 = vmax.f32 %v6423, 0.0
      %v6552 = vmax.f32 %v6424, 0.0
      %v6553 = vmax.f32 %v6425, 0.0
      %v6554 = vmax.f32 %v6426, 0.0
      %v6555 = vmax.f32 %v6427, 0.0
      %v6556 = vmax.f32 %v6428, 0.0
      %v6557 = vmax.f32 %v6429, 0.0
      %v6558 = vmax.f32 %v6430, 0.0
      %v6559 = vmax.f32 %v6431, 0.0
      %v6560 = vmax.f32 %v6432, 0.0
      %v6561 = vmax.f32 %v6433, 0.0
      %v6562 = vmax.f32 %v6434, 0.0
      %v6563 = vmax.f32 %v6435, 0.0
      %v6564 = vmax.f32 %v6436, 0.0
      %v6565 = vmax.f32 %v6437, 0.0
      %v6566 = vmax.f32 %v6438, 0.0
      %v6567 = vmax.f32 %v6439, 0.0
      %v6568 = vmax.f32 %v6440, 0.0
      %v6569 = vmax.f32 %v6441, 0.0
      %v6570 = vmax.f32 %v6442, 0.0
      %v6571 = vmax.f32 %v6443, 0.0
      %v6572 = vmax.f32 %v6444, 0.0
      %v6573 = vmax.f32 %v6445, 0.0
      %v6574 = vmax.f32 %v6446, 0.0
      %v6575 = vmax.f32 %v6447, 0.0
      %v6576 = vmax.f32 %v6448, 0.0
      %v6577 = vmax.f32 %v6449, 0.0
      %v6578 = vmax.f32 %v6450, 0.0
      %v6579 = vmax.f32 %v6451, 0.0
      %v6580 = vmax.f32 %v6452, 0.0
      %v6581 = vmax.f32 %v6453, 0.0
      %v6582 = vmax.f32 %v6454, 0.0
      %v6583 = vmax.f32 %v6455, 0.0
      %v6584 = vmax.f32 %v6456, 0.0
      %v6585 = vmax.f32 %v6457, 0.0
      %v6586 = vmax.f32 %v6458, 0.0
      %v6587 = vmax.f32 %v6459, 0.0
      %v6588 = vmax.f32 %v6460, 0.0
      %v6589 = vmax.f32 %v6461, 0.0
      %v6590 = vmax.f32 %v6462, 0.0
      %v6591 = vmax.f32 %v6463, 0.0
      %v6592 = vmax.f32 %v6464, 0.0
      %v6593 = vmax.f32 %v6465, 0.0
      %v6594 = vmax.f32 %v6466, 0.0
      %v6595 = vmax.f32 %v6467, 0.0
      %v6596 = vmax.f32 %v6468, 0.0
      %v6597 = vmax.f32 %v6469, 0.0
      %v6598 = vmax.f32 %v6470, 0.0
      %v6599 = vmax.f32 %v6471, 0.0
      %v6600 = vmax.f32 %v6472, 0.0
      %v6601 = vmax.f32 %v6473, 0.0
      %v6602 = vmax.f32 %v6474, 0.0
      %v6603 = vmax.f32 %v6475, 0.0
      %v6604 = vmax.f32 %v6476, 0.0
      %v6605 = vmax.f32 %v6477, 0.0
      %v6606 = vmax.f32 %v6478, 0.0
      %v6607 = vmax.f32 %v6479, 0.0
      %v6608 = vmax.f32 %v6480, 0.0
      %v6609 = vmax.f32 %v6481, 0.0
      %v6610 = vmax.f32 %v6482, 0.0
      %v6611 = vmax.f32 %v6483, 0.0
      %v6612 = vmax.f32 %v6484, 0.0
      %v6613 = vmax.f32 %v6485, 0.0
      %v6614 = vmax.f32 %v6486, 0.0
      %v6615 = vmax.f32 %v6487, 0.0
      %v6616 = vmax.f32 %v6488, 0.0
      %v6617 = vmax.f32 %v6489, 0.0
      %v6618 = vmax.f32 %v6490, 0.0
      %v6619 = vmax.f32 %v6491, 0.0
      %v6620 = vmax.f32 %v6492, 0.0
      %v6621 = vmax.f32 %v6493, 0.0
      %v6622 = vmax.f32 %v6494, 0.0
      %v6623 = vmax.f32 %v6495, 0.0
      %v6624 = vmax.f32 %v6496, 0.0
      %v6625 = vmax.f32 %v6497, 0.0
      %v6626 = vmax.f32 %v6498, 0.0
      %v6627 = vmax.f32 %v6499, 0.0
      %v6628 = vpack.c.bf16 %v6501, %v6500
      %v6629 = vpack.c.bf16 %v6503, %v6502
      %v6630 = vpack.c.bf16 %v6505, %v6504
      %v6631 = vpack.c.bf16 %v6507, %v6506
      %v6632 = vpack.c.bf16 %v6509, %v6508
      %v6633 = vpack.c.bf16 %v6511, %v6510
      %v6634 = vpack.c.bf16 %v6513, %v6512
      %v6635 = vpack.c.bf16 %v6515, %v6514
      %v6636 = vpack.c.bf16 %v6517, %v6516
      %v6637 = vpack.c.bf16 %v6519, %v6518
      %v6638 = vpack.c.bf16 %v6521, %v6520
      %v6639 = vpack.c.bf16 %v6523, %v6522
      %v6640 = vpack.c.bf16 %v6525, %v6524
      %v6641 = vpack.c.bf16 %v6527, %v6526
      %v6642 = vpack.c.bf16 %v6529, %v6528
      %v6643 = vpack.c.bf16 %v6531, %v6530
      %v6644 = vpack.c.bf16 %v6533, %v6532
      %v6645 = vpack.c.bf16 %v6535, %v6534
      %v6646 = vpack.c.bf16 %v6537, %v6536
      %v6647 = vpack.c.bf16 %v6539, %v6538
      %v6648 = vpack.c.bf16 %v6541, %v6540
      %v6649 = vpack.c.bf16 %v6543, %v6542
      %v6650 = vpack.c.bf16 %v6545, %v6544
      %v6651 = vpack.c.bf16 %v6547, %v6546
      %v6652 = vpack.c.bf16 %v6549, %v6548
      %v6653 = vpack.c.bf16 %v6551, %v6550
      %v6654 = vpack.c.bf16 %v6553, %v6552
      %v6655 = vpack.c.bf16 %v6555, %v6554
      %v6656 = vpack.c.bf16 %v6557, %v6556
      %v6657 = vpack.c.bf16 %v6559, %v6558
      %v6658 = vpack.c.bf16 %v6561, %v6560
      %v6659 = vpack.c.bf16 %v6563, %v6562
      %v6660 = vpack.c.bf16 %v6565, %v6564
      %v6661 = vpack.c.bf16 %v6567, %v6566
      %v6662 = vpack.c.bf16 %v6569, %v6568
      %v6663 = vpack.c.bf16 %v6571, %v6570
      %v6664 = vpack.c.bf16 %v6573, %v6572
      %v6665 = vpack.c.bf16 %v6575, %v6574
      %v6666 = vpack.c.bf16 %v6577, %v6576
      %v6667 = vpack.c.bf16 %v6579, %v6578
      %v6668 = vpack.c.bf16 %v6581, %v6580
      %v6669 = vpack.c.bf16 %v6583, %v6582
      %v6670 = vpack.c.bf16 %v6585, %v6584
      %v6671 = vpack.c.bf16 %v6587, %v6586
      %v6672 = vpack.c.bf16 %v6589, %v6588
      %v6673 = vpack.c.bf16 %v6591, %v6590
      %v6674 = vpack.c.bf16 %v6593, %v6592
      %v6675 = vpack.c.bf16 %v6595, %v6594
      %v6676 = vpack.c.bf16 %v6597, %v6596
      %v6677 = vpack.c.bf16 %v6599, %v6598
      %v6678 = vpack.c.bf16 %v6601, %v6600
      %v6679 = vpack.c.bf16 %v6603, %v6602
      %v6680 = vpack.c.bf16 %v6605, %v6604
      %v6681 = vpack.c.bf16 %v6607, %v6606
      %v6682 = vpack.c.bf16 %v6609, %v6608
      %v6683 = vpack.c.bf16 %v6611, %v6610
      %v6684 = vpack.c.bf16 %v6613, %v6612
      %v6685 = vpack.c.bf16 %v6615, %v6614
      %v6686 = vpack.c.bf16 %v6617, %v6616
      %v6687 = vpack.c.bf16 %v6619, %v6618
      %v6688 = vpack.c.bf16 %v6621, %v6620
      %v6689 = vpack.c.bf16 %v6623, %v6622
      %v6690 = vpack.c.bf16 %v6625, %v6624
      %v6691 = vpack.c.bf16 %v6627, %v6626
      %s6692 = scalar_lea.vmem %s1, 320
      %v6693 = vld [vmem:[%s6692] sm:$0xf]
      %v6694 = vld [vmem:[%s6692 + $0x4] sm:$0xf]
      %v6695 = vld [vmem:[%s6692 + $0x8] sm:$0xf]
      %v6696 = vld [vmem:[%s6692 + $0xc] sm:$0xf]
      %v6697 = vld [vmem:[%s6692 + $0x10] sm:$0xf]
      %v6698 = vld [vmem:[%s6692 + $0x14] sm:$0xf]
      %v6699 = vld [vmem:[%s6692 + $0x18] sm:$0xf]
      %v6700 = vld [vmem:[%s6692 + $0x1c] sm:$0xf]
      %v6701 = vld [vmem:[%s6692 + $0x20] sm:$0xf]
      %v6702 = vld [vmem:[%s6692 + $0x24] sm:$0xf]
      %v6703 = vld [vmem:[%s6692 + $0x28] sm:$0xf]
      %v6704 = vld [vmem:[%s6692 + $0x2c] sm:$0xf]
      %v6705 = vld [vmem:[%s6692 + $0x30] sm:$0xf]
      %v6706 = vld [vmem:[%s6692 + $0x34] sm:$0xf]
      %v6707 = vld [vmem:[%s6692 + $0x38] sm:$0xf]
      %v6708 = vld [vmem:[%s6692 + $0x3c] sm:$0xf]
      %s6709 = scalar_lea.vmem %s3, 6
      %v6710 = vld [vmem:[%s6709] sm:$0x1]
      %v6712 = vlaneseq
      %v6713 = vshrl.u32 %v6712, 7
      %v6714 = vsub.s32 0, %v6713
      %v6715 = vrot.slane %v6710, %v6714
      %v6733 = vunpack.c.l.b16 %v6693
      %v6734 = vunpack.c.l.b16 %v6694
      %v6735 = vunpack.c.l.b16 %v6695
      %v6736 = vunpack.c.l.b16 %v6696
      %v6737 = vunpack.c.l.b16 %v6697
      %v6738 = vunpack.c.l.b16 %v6698
      %v6739 = vunpack.c.l.b16 %v6699
      %v6740 = vunpack.c.l.b16 %v6700
      %v6741 = vunpack.c.l.b16 %v6701
      %v6742 = vunpack.c.l.b16 %v6702
      %v6743 = vunpack.c.l.b16 %v6703
      %v6744 = vunpack.c.l.b16 %v6704
      %v6745 = vunpack.c.l.b16 %v6705
      %v6746 = vunpack.c.l.b16 %v6706
      %v6747 = vunpack.c.l.b16 %v6707
      %v6748 = vunpack.c.l.b16 %v6708
      %v6749 = vpack.c.b16 %v6734, %v6733
      %v6750 = vpack.c.b16 %v6736, %v6735
      %v6751 = vpack.c.b16 %v6738, %v6737
      %v6752 = vpack.c.b16 %v6740, %v6739
      %v6753 = vpack.c.b16 %v6742, %v6741
      %v6754 = vpack.c.b16 %v6744, %v6743
      %v6755 = vpack.c.b16 %v6746, %v6745
      %v6756 = vpack.c.b16 %v6748, %v6747
      %6765 = vmatprep.subr.bf16.mxu0 0
      %6766 = vmatpush1.bf16.msra.mxu0 %v6749
      %6767 = vmatprep.subr.bf16.mxu0 0
      %6768 = vmatpush1.bf16.msra.mxu0 %v6750
      %6769 = vmatprep.subr.bf16.mxu0 0
      %6770 = vmatpush1.bf16.msra.mxu0 %v6751
      %6771 = vmatprep.subr.bf16.mxu0 0
      %6772 = vmatpush1.bf16.msra.mxu0 %v6752
      %6773 = vmatprep.subr.bf16.mxu0 0
      %6774 = vmatpush1.bf16.msra.mxu0 %v6753
      %6775 = vmatprep.subr.bf16.mxu0 0
      %6776 = vmatpush1.bf16.msra.mxu0 %v6754
      %6777 = vmatprep.subr.bf16.mxu0 0
      %6778 = vmatpush1.bf16.msra.mxu0 %v6755
      %6779 = vmatprep.subr.bf16.mxu0 0
      %6780 = vmatpush1.bf16.msra.mxu0 %v6756
      %6781 = vmatprep.subr.bf16.mxu0 0
      %6782 = vmatpush1.bf16.msra.mxu0 0
      %6783 = vmatprep.subr.bf16.mxu0 0
      %6784 = vmatpush1.bf16.msra.mxu0 0
      %6785 = vmatprep.subr.bf16.mxu0 0
      %6786 = vmatpush1.bf16.msra.mxu0 0
      %6787 = vmatprep.subr.bf16.mxu0 0
      %6788 = vmatpush1.bf16.msra.mxu0 0
      %6789 = vmatprep.subr.bf16.mxu0 0
      %6790 = vmatpush1.bf16.msra.mxu0 0
      %6791 = vmatprep.subr.bf16.mxu0 0
      %6792 = vmatpush1.bf16.msra.mxu0 0
      %6793 = vmatprep.subr.bf16.mxu0 0
      %6794 = vmatpush1.bf16.msra.mxu0 0
      %6795 = vmatprep.subr.bf16.mxu0 0
      %6796 = vmatpush1.bf16.msra.mxu0 0
      %6797 = vmatprep.mubr.bf16.mxu0 0
      %6798 = vmatmul.mubr.bf16.gmra.mrb[0].mxu0 %v6628
      %v6799 = vpop.f32.mrb[0].mxu0
      %v6800 = vadd.f32 %v6715, %v6799
      %v6801 = vpop.f32.mrb[0].mxu0
      %v6802 = vpop.f32.mrb[0].mxu0
      %v6803 = vadd.f32 %v6715, %v6802
      %v6804 = vpop.f32.mrb[0].mxu0
      %6805 = vmatprep.mubr.bf16.mxu0 0
      %6806 = vmatmul.mubr.bf16.gmra.mrb[0].mxu0 %v6629
      %v6807 = vpop.f32.mrb[0].mxu0
      %v6808 = vadd.f32 %v6715, %v6807
      %v6809 = vpop.f32.mrb[0].mxu0
      %v6810 = vpop.f32.mrb[0].mxu0
      %v6811 = vadd.f32 %v6715, %v6810
      %v6812 = vpop.f32.mrb[0].mxu0
      %6813 = vmatprep.mubr.bf16.mxu0 0
      %6814 = vmatmul.mubr.bf16.gmra.mrb[0].mxu0 %v6630
      %v6815 = vpop.f32.mrb[0].mxu0
      %v6816 = vadd.f32 %v6715, %v6815
      %v6817 = vpop.f32.mrb[0].mxu0
      %v6818 = vpop.f32.mrb[0].mxu0
      %v6819 = vadd.f32 %v6715, %v6818
      %v6820 = vpop.f32.mrb[0].mxu0
      %6821 = vmatprep.mubr.bf16.mxu0 0
      %6822 = vmatmul.mubr.bf16.gmra.mrb[0].mxu0 %v6631
      %v6823 = vpop.f32.mrb[0].mxu0
      %v6824 = vadd.f32 %v6715, %v6823
      %v6825 = vpop.f32.mrb[0].mxu0
      %v6826 = vpop.f32.mrb[0].mxu0
      %v6827 = vadd.f32 %v6715, %v6826
      %v6828 = vpop.f32.mrb[0].mxu0
      %6829 = vmatprep.mubr.bf16.mxu0 0
      %6830 = vmatmul.mubr.bf16.gmra.mrb[0].mxu0 %v6632
      %v6831 = vpop.f32.mrb[0].mxu0
      %v6832 = vadd.f32 %v6715, %v6831
      %v6833 = vpop.f32.mrb[0].mxu0
      %v6834 = vpop.f32.mrb[0].mxu0
      %v6835 = vadd.f32 %v6715, %v6834
      %v6836 = vpop.f32.mrb[0].mxu0
      %6837 = vmatprep.mubr.bf16.mxu0 0
      %6838 = vmatmul.mubr.bf16.gmra.mrb[0].mxu0 %v6633
      %v6839 = vpop.f32.mrb[0].mxu0
      %v6840 = vadd.f32 %v6715, %v6839
      %v6841 = vpop.f32.mrb[0].mxu0
      %v6842 = vpop.f32.mrb[0].mxu0
      %v6843 = vadd.f32 %v6715, %v6842
      %v6844 = vpop.f32.mrb[0].mxu0
      %6845 = vmatprep.mubr.bf16.mxu0 0
      %6846 = vmatmul.mubr.bf16.gmra.mrb[0].mxu0 %v6634
      %v6847 = vpop.f32.mrb[0].mxu0
      %v6848 = vadd.f32 %v6715, %v6847
      %v6849 = vpop.f32.mrb[0].mxu0
      %v6850 = vpop.f32.mrb[0].mxu0
      %v6851 = vadd.f32 %v6715, %v6850
      %v6852 = vpop.f32.mrb[0].mxu0
      %6853 = vmatprep.mubr.bf16.mxu0 0
      %6854 = vmatmul.mubr.bf16.gmra.mrb[0].mxu0 %v6635
      %v6855 = vpop.f32.mrb[0].mxu0
      %v6856 = vadd.f32 %v6715, %v6855
      %v6857 = vpop.f32.mrb[0].mxu0
      %v6858 = vpop.f32.mrb[0].mxu0
      %v6859 = vadd.f32 %v6715, %v6858
      %v6860 = vpop.f32.mrb[0].mxu0
      %6861 = vmatprep.mubr.bf16.mxu0 0
      %6862 = vmatmul.mubr.bf16.gmra.mrb[0].mxu0 %v6636
      %v6863 = vpop.f32.mrb[0].mxu0
      %v6864 = vadd.f32 %v6715, %v6863
      %v6865 = vpop.f32.mrb[0].mxu0
      %v6866 = vpop.f32.mrb[0].mxu0
      %v6867 = vadd.f32 %v6715, %v6866
      %v6868 = vpop.f32.mrb[0].mxu0
      %6869 = vmatprep.mubr.bf16.mxu0 0
      %6870 = vmatmul.mubr.bf16.gmra.mrb[0].mxu0 %v6637
      %v6871 = vpop.f32.mrb[0].mxu0
      %v6872 = vadd.f32 %v6715, %v6871
      %v6873 = vpop.f32.mrb[0].mxu0
      %v6874 = vpop.f32.mrb[0].mxu0
      %v6875 = vadd.f32 %v6715, %v6874
      %v6876 = vpop.f32.mrb[0].mxu0
      %6877 = vmatprep.mubr.bf16.mxu0 0
      %6878 = vmatmul.mubr.bf16.gmra.mrb[0].mxu0 %v6638
      %v6879 = vpop.f32.mrb[0].mxu0
      %v6880 = vadd.f32 %v6715, %v6879
      %v6881 = vpop.f32.mrb[0].mxu0
      %v6882 = vpop.f32.mrb[0].mxu0
      %v6883 = vadd.f32 %v6715, %v6882
      %v6884 = vpop.f32.mrb[0].mxu0
      %6885 = vmatprep.mubr.bf16.mxu0 0
      %6886 = vmatmul.mubr.bf16.gmra.mrb[0].mxu0 %v6639
      %v6887 = vpop.f32.mrb[0].mxu0
      %v6888 = vadd.f32 %v6715, %v6887
      %v6889 = vpop.f32.mrb[0].mxu0
      %v6890 = vpop.f32.mrb[0].mxu0
      %v6891 = vadd.f32 %v6715, %v6890
      %v6892 = vpop.f32.mrb[0].mxu0
      %6893 = vmatprep.mubr.bf16.mxu0 0
      %6894 = vmatmul.mubr.bf16.gmra.mrb[0].mxu0 %v6640
      %v6895 = vpop.f32.mrb[0].mxu0
      %v6896 = vadd.f32 %v6715, %v6895
      %v6897 = vpop.f32.mrb[0].mxu0
      %v6898 = vpop.f32.mrb[0].mxu0
      %v6899 = vadd.f32 %v6715, %v6898
      %v6900 = vpop.f32.mrb[0].mxu0
      %6901 = vmatprep.mubr.bf16.mxu0 0
      %6902 = vmatmul.mubr.bf16.gmra.mrb[0].mxu0 %v6641
      %v6903 = vpop.f32.mrb[0].mxu0
      %v6904 = vadd.f32 %v6715, %v6903
      %v6905 = vpop.f32.mrb[0].mxu0
      %v6906 = vpop.f32.mrb[0].mxu0
      %v6907 = vadd.f32 %v6715, %v6906
      %v6908 = vpop.f32.mrb[0].mxu0
      %6909 = vmatprep.mubr.bf16.mxu0 0
      %6910 = vmatmul.mubr.bf16.gmra.mrb[0].mxu0 %v6642
      %v6911 = vpop.f32.mrb[0].mxu0
      %v6912 = vadd.f32 %v6715, %v6911
      %v6913 = vpop.f32.mrb[0].mxu0
      %v6914 = vpop.f32.mrb[0].mxu0
      %v6915 = vadd.f32 %v6715, %v6914
      %v6916 = vpop.f32.mrb[0].mxu0
      %6917 = vmatprep.mubr.bf16.mxu0 0
      %6918 = vmatmul.mubr.bf16.gmra.mrb[0].mxu0 %v6643
      %v6919 = vpop.f32.mrb[0].mxu0
      %v6920 = vadd.f32 %v6715, %v6919
      %v6921 = vpop.f32.mrb[0].mxu0
      %v6922 = vpop.f32.mrb[0].mxu0
      %v6923 = vadd.f32 %v6715, %v6922
      %v6924 = vpop.f32.mrb[0].mxu0
      %6925 = vmatprep.mubr.bf16.mxu0 0
      %6926 = vmatmul.mubr.bf16.gmra.mrb[0].mxu0 %v6644
      %v6927 = vpop.f32.mrb[0].mxu0
      %v6928 = vadd.f32 %v6715, %v6927
      %v6929 = vpop.f32.mrb[0].mxu0
      %v6930 = vpop.f32.mrb[0].mxu0
      %v6931 = vadd.f32 %v6715, %v6930
      %v6932 = vpop.f32.mrb[0].mxu0
      %6933 = vmatprep.mubr.bf16.mxu0 0
      %6934 = vmatmul.mubr.bf16.gmra.mrb[0].mxu0 %v6645
      %v6935 = vpop.f32.mrb[0].mxu0
      %v6936 = vadd.f32 %v6715, %v6935
      %v6937 = vpop.f32.mrb[0].mxu0
      %v6938 = vpop.f32.mrb[0].mxu0
      %v6939 = vadd.f32 %v6715, %v6938
      %v6940 = vpop.f32.mrb[0].mxu0
      %6941 = vmatprep.mubr.bf16.mxu0 0
      %6942 = vmatmul.mubr.bf16.gmra.mrb[0].mxu0 %v6646
      %v6943 = vpop.f32.mrb[0].mxu0
      %v6944 = vadd.f32 %v6715, %v6943
      %v6945 = vpop.f32.mrb[0].mxu0
      %v6946 = vpop.f32.mrb[0].mxu0
      %v6947 = vadd.f32 %v6715, %v6946
      %v6948 = vpop.f32.mrb[0].mxu0
      %6949 = vmatprep.mubr.bf16.mxu0 0
      %6950 = vmatmul.mubr.bf16.gmra.mrb[0].mxu0 %v6647
      %v6951 = vpop.f32.mrb[0].mxu0
      %v6952 = vadd.f32 %v6715, %v6951
      %v6953 = vpop.f32.mrb[0].mxu0
      %v6954 = vpop.f32.mrb[0].mxu0
      %v6955 = vadd.f32 %v6715, %v6954
      %v6956 = vpop.f32.mrb[0].mxu0
      %6957 = vmatprep.mubr.bf16.mxu0 0
      %6958 = vmatmul.mubr.bf16.gmra.mrb[0].mxu0 %v6648
      %v6959 = vpop.f32.mrb[0].mxu0
      %v6960 = vadd.f32 %v6715, %v6959
      %v6961 = vpop.f32.mrb[0].mxu0
      %v6962 = vpop.f32.mrb[0].mxu0
      %v6963 = vadd.f32 %v6715, %v6962
      %v6964 = vpop.f32.mrb[0].mxu0
      %6965 = vmatprep.mubr.bf16.mxu0 0
      %6966 = vmatmul.mubr.bf16.gmra.mrb[0].mxu0 %v6649
      %v6967 = vpop.f32.mrb[0].mxu0
      %v6968 = vadd.f32 %v6715, %v6967
      %v6969 = vpop.f32.mrb[0].mxu0
      %v6970 = vpop.f32.mrb[0].mxu0
      %v6971 = vadd.f32 %v6715, %v6970
      %v6972 = vpop.f32.mrb[0].mxu0
      %6973 = vmatprep.mubr.bf16.mxu0 0
      %6974 = vmatmul.mubr.bf16.gmra.mrb[0].mxu0 %v6650
      %v6975 = vpop.f32.mrb[0].mxu0
      %v6976 = vadd.f32 %v6715, %v6975
      %v6977 = vpop.f32.mrb[0].mxu0
      %v6978 = vpop.f32.mrb[0].mxu0
      %v6979 = vadd.f32 %v6715, %v6978
      %v6980 = vpop.f32.mrb[0].mxu0
      %6981 = vmatprep.mubr.bf16.mxu0 0
      %6982 = vmatmul.mubr.bf16.gmra.mrb[0].mxu0 %v6651
      %v6983 = vpop.f32.mrb[0].mxu0
      %v6984 = vadd.f32 %v6715, %v6983
      %v6985 = vpop.f32.mrb[0].mxu0
      %v6986 = vpop.f32.mrb[0].mxu0
      %v6987 = vadd.f32 %v6715, %v6986
      %v6988 = vpop.f32.mrb[0].mxu0
      %6989 = vmatprep.mubr.bf16.mxu0 0
      %6990 = vmatmul.mubr.bf16.gmra.mrb[0].mxu0 %v6652
      %v6991 = vpop.f32.mrb[0].mxu0
      %v6992 = vadd.f32 %v6715, %v6991
      %v6993 = vpop.f32.mrb[0].mxu0
      %v6994 = vpop.f32.mrb[0].mxu0
      %v6995 = vadd.f32 %v6715, %v6994
      %v6996 = vpop.f32.mrb[0].mxu0
      %6997 = vmatprep.mubr.bf16.mxu0 0
      %6998 = vmatmul.mubr.bf16.gmra.mrb[0].mxu0 %v6653
      %v6999 = vpop.f32.mrb[0].mxu0
      %v7000 = vadd.f32 %v6715, %v6999
      %v7001 = vpop.f32.mrb[0].mxu0
      %v7002 = vpop.f32.mrb[0].mxu0
      %v7003 = vadd.f32 %v6715, %v7002
      %v7004 = vpop.f32.mrb[0].mxu0
      %7005 = vmatprep.mubr.bf16.mxu0 0
      %7006 = vmatmul.mubr.bf16.gmra.mrb[0].mxu0 %v6654
      %v7007 = vpop.f32.mrb[0].mxu0
      %v7008 = vadd.f32 %v6715, %v7007
      %v7009 = vpop.f32.mrb[0].mxu0
      %v7010 = vpop.f32.mrb[0].mxu0
      %v7011 = vadd.f32 %v6715, %v7010
      %v7012 = vpop.f32.mrb[0].mxu0
      %7013 = vmatprep.mubr.bf16.mxu0 0
      %7014 = vmatmul.mubr.bf16.gmra.mrb[0].mxu0 %v6655
      %v7015 = vpop.f32.mrb[0].mxu0
      %v7016 = vadd.f32 %v6715, %v7015
      %v7017 = vpop.f32.mrb[0].mxu0
      %v7018 = vpop.f32.mrb[0].mxu0
      %v7019 = vadd.f32 %v6715, %v7018
      %v7020 = vpop.f32.mrb[0].mxu0
      %7021 = vmatprep.mubr.bf16.mxu0 0
      %7022 = vmatmul.mubr.bf16.gmra.mrb[0].mxu0 %v6656
      %v7023 = vpop.f32.mrb[0].mxu0
      %v7024 = vadd.f32 %v6715, %v7023
      %v7025 = vpop.f32.mrb[0].mxu0
      %v7026 = vpop.f32.mrb[0].mxu0
      %v7027 = vadd.f32 %v6715, %v7026
      %v7028 = vpop.f32.mrb[0].mxu0
      %7029 = vmatprep.mubr.bf16.mxu0 0
      %7030 = vmatmul.mubr.bf16.gmra.mrb[0].mxu0 %v6657
      %v7031 = vpop.f32.mrb[0].mxu0
      %v7032 = vadd.f32 %v6715, %v7031
      %v7033 = vpop.f32.mrb[0].mxu0
      %v7034 = vpop.f32.mrb[0].mxu0
      %v7035 = vadd.f32 %v6715, %v7034
      %v7036 = vpop.f32.mrb[0].mxu0
      %7037 = vmatprep.mubr.bf16.mxu0 0
      %7038 = vmatmul.mubr.bf16.gmra.mrb[0].mxu0 %v6658
      %v7039 = vpop.f32.mrb[0].mxu0
      %v7040 = vadd.f32 %v6715, %v7039
      %v7041 = vpop.f32.mrb[0].mxu0
      %v7042 = vpop.f32.mrb[0].mxu0
      %v7043 = vadd.f32 %v6715, %v7042
      %v7044 = vpop.f32.mrb[0].mxu0
      %7045 = vmatprep.mubr.bf16.mxu0 0
      %7046 = vmatmul.mubr.bf16.gmra.mrb[0].mxu0 %v6659
      %v7047 = vpop.f32.mrb[0].mxu0
      %v7048 = vadd.f32 %v6715, %v7047
      %v7049 = vpop.f32.mrb[0].mxu0
      %v7050 = vpop.f32.mrb[0].mxu0
      %v7051 = vadd.f32 %v6715, %v7050
      %v7052 = vpop.f32.mrb[0].mxu0
      %7053 = vmatprep.mubr.bf16.mxu0 0
      %7054 = vmatmul.mubr.bf16.gmra.mrb[0].mxu0 %v6660
      %v7055 = vpop.f32.mrb[0].mxu0
      %v7056 = vadd.f32 %v6715, %v7055
      %v7057 = vpop.f32.mrb[0].mxu0
      %v7058 = vpop.f32.mrb[0].mxu0
      %v7059 = vadd.f32 %v6715, %v7058
      %v7060 = vpop.f32.mrb[0].mxu0
      %7061 = vmatprep.mubr.bf16.mxu0 0
      %7062 = vmatmul.mubr.bf16.gmra.mrb[0].mxu0 %v6661
      %v7063 = vpop.f32.mrb[0].mxu0
      %v7064 = vadd.f32 %v6715, %v7063
      %v7065 = vpop.f32.mrb[0].mxu0
      %v7066 = vpop.f32.mrb[0].mxu0
      %v7067 = vadd.f32 %v6715, %v7066
      %v7068 = vpop.f32.mrb[0].mxu0
      %7069 = vmatprep.mubr.bf16.mxu0 0
      %7070 = vmatmul.mubr.bf16.gmra.mrb[0].mxu0 %v6662
      %v7071 = vpop.f32.mrb[0].mxu0
      %v7072 = vadd.f32 %v6715, %v7071
      %v7073 = vpop.f32.mrb[0].mxu0
      %v7074 = vpop.f32.mrb[0].mxu0
      %v7075 = vadd.f32 %v6715, %v7074
      %v7076 = vpop.f32.mrb[0].mxu0
      %7077 = vmatprep.mubr.bf16.mxu0 0
      %7078 = vmatmul.mubr.bf16.gmra.mrb[0].mxu0 %v6663
      %v7079 = vpop.f32.mrb[0].mxu0
      %v7080 = vadd.f32 %v6715, %v7079
      %v7081 = vpop.f32.mrb[0].mxu0
      %v7082 = vpop.f32.mrb[0].mxu0
      %v7083 = vadd.f32 %v6715, %v7082
      %v7084 = vpop.f32.mrb[0].mxu0
      %7085 = vmatprep.mubr.bf16.mxu0 0
      %7086 = vmatmul.mubr.bf16.gmra.mrb[0].mxu0 %v6664
      %v7087 = vpop.f32.mrb[0].mxu0
      %v7088 = vadd.f32 %v6715, %v7087
      %v7089 = vpop.f32.mrb[0].mxu0
      %v7090 = vpop.f32.mrb[0].mxu0
      %v7091 = vadd.f32 %v6715, %v7090
      %v7092 = vpop.f32.mrb[0].mxu0
      %7093 = vmatprep.mubr.bf16.mxu0 0
      %7094 = vmatmul.mubr.bf16.gmra.mrb[0].mxu0 %v6665
      %v7095 = vpop.f32.mrb[0].mxu0
      %v7096 = vadd.f32 %v6715, %v7095
      %v7097 = vpop.f32.mrb[0].mxu0
      %v7098 = vpop.f32.mrb[0].mxu0
      %v7099 = vadd.f32 %v6715, %v7098
      %v7100 = vpop.f32.mrb[0].mxu0
      %7101 = vmatprep.mubr.bf16.mxu0 0
      %7102 = vmatmul.mubr.bf16.gmra.mrb[0].mxu0 %v6666
      %v7103 = vpop.f32.mrb[0].mxu0
      %v7104 = vadd.f32 %v6715, %v7103
      %v7105 = vpop.f32.mrb[0].mxu0
      %v7106 = vpop.f32.mrb[0].mxu0
      %v7107 = vadd.f32 %v6715, %v7106
      %v7108 = vpop.f32.mrb[0].mxu0
      %7109 = vmatprep.mubr.bf16.mxu0 0
      %7110 = vmatmul.mubr.bf16.gmra.mrb[0].mxu0 %v6667
      %v7111 = vpop.f32.mrb[0].mxu0
      %v7112 = vadd.f32 %v6715, %v7111
      %v7113 = vpop.f32.mrb[0].mxu0
      %v7114 = vpop.f32.mrb[0].mxu0
      %v7115 = vadd.f32 %v6715, %v7114
      %v7116 = vpop.f32.mrb[0].mxu0
      %7117 = vmatprep.mubr.bf16.mxu0 0
      %7118 = vmatmul.mubr.bf16.gmra.mrb[0].mxu0 %v6668
      %v7119 = vpop.f32.mrb[0].mxu0
      %v7120 = vadd.f32 %v6715, %v7119
      %v7121 = vpop.f32.mrb[0].mxu0
      %v7122 = vpop.f32.mrb[0].mxu0
      %v7123 = vadd.f32 %v6715, %v7122
      %v7124 = vpop.f32.mrb[0].mxu0
      %7125 = vmatprep.mubr.bf16.mxu0 0
      %7126 = vmatmul.mubr.bf16.gmra.mrb[0].mxu0 %v6669
      %v7127 = vpop.f32.mrb[0].mxu0
      %v7128 = vadd.f32 %v6715, %v7127
      %v7129 = vpop.f32.mrb[0].mxu0
      %v7130 = vpop.f32.mrb[0].mxu0
      %v7131 = vadd.f32 %v6715, %v7130
      %v7132 = vpop.f32.mrb[0].mxu0
      %7133 = vmatprep.mubr.bf16.mxu0 0
      %7134 = vmatmul.mubr.bf16.gmra.mrb[0].mxu0 %v6670
      %v7135 = vpop.f32.mrb[0].mxu0
      %v7136 = vadd.f32 %v6715, %v7135
      %v7137 = vpop.f32.mrb[0].mxu0
      %v7138 = vpop.f32.mrb[0].mxu0
      %v7139 = vadd.f32 %v6715, %v7138
      %v7140 = vpop.f32.mrb[0].mxu0
      %7141 = vmatprep.mubr.bf16.mxu0 0
      %7142 = vmatmul.mubr.bf16.gmra.mrb[0].mxu0 %v6671
      %v7143 = vpop.f32.mrb[0].mxu0
      %v7144 = vadd.f32 %v6715, %v7143
      %v7145 = vpop.f32.mrb[0].mxu0
      %v7146 = vpop.f32.mrb[0].mxu0
      %v7147 = vadd.f32 %v6715, %v7146
      %v7148 = vpop.f32.mrb[0].mxu0
      %7149 = vmatprep.mubr.bf16.mxu0 0
      %7150 = vmatmul.mubr.bf16.gmra.mrb[0].mxu0 %v6672
      %v7151 = vpop.f32.mrb[0].mxu0
      %v7152 = vadd.f32 %v6715, %v7151
      %v7153 = vpop.f32.mrb[0].mxu0
      %v7154 = vpop.f32.mrb[0].mxu0
      %v7155 = vadd.f32 %v6715, %v7154
      %v7156 = vpop.f32.mrb[0].mxu0
      %7157 = vmatprep.mubr.bf16.mxu0 0
      %7158 = vmatmul.mubr.bf16.gmra.mrb[0].mxu0 %v6673
      %v7159 = vpop.f32.mrb[0].mxu0
      %v7160 = vadd.f32 %v6715, %v7159
      %v7161 = vpop.f32.mrb[0].mxu0
      %v7162 = vpop.f32.mrb[0].mxu0
      %v7163 = vadd.f32 %v6715, %v7162
      %v7164 = vpop.f32.mrb[0].mxu0
      %7165 = vmatprep.mubr.bf16.mxu0 0
      %7166 = vmatmul.mubr.bf16.gmra.mrb[0].mxu0 %v6674
      %v7167 = vpop.f32.mrb[0].mxu0
      %v7168 = vadd.f32 %v6715, %v7167
      %v7169 = vpop.f32.mrb[0].mxu0
      %v7170 = vpop.f32.mrb[0].mxu0
      %v7171 = vadd.f32 %v6715, %v7170
      %v7172 = vpop.f32.mrb[0].mxu0
      %7173 = vmatprep.mubr.bf16.mxu0 0
      %7174 = vmatmul.mubr.bf16.gmra.mrb[0].mxu0 %v6675
      %v7175 = vpop.f32.mrb[0].mxu0
      %v7176 = vadd.f32 %v6715, %v7175
      %v7177 = vpop.f32.mrb[0].mxu0
      %v7178 = vpop.f32.mrb[0].mxu0
      %v7179 = vadd.f32 %v6715, %v7178
      %v7180 = vpop.f32.mrb[0].mxu0
      %7181 = vmatprep.mubr.bf16.mxu0 0
      %7182 = vmatmul.mubr.bf16.gmra.mrb[0].mxu0 %v6676
      %v7183 = vpop.f32.mrb[0].mxu0
      %v7184 = vadd.f32 %v6715, %v7183
      %v7185 = vpop.f32.mrb[0].mxu0
      %v7186 = vpop.f32.mrb[0].mxu0
      %v7187 = vadd.f32 %v6715, %v7186
      %v7188 = vpop.f32.mrb[0].mxu0
      %7189 = vmatprep.mubr.bf16.mxu0 0
      %7190 = vmatmul.mubr.bf16.gmra.mrb[0].mxu0 %v6677
      %v7191 = vpop.f32.mrb[0].mxu0
      %v7192 = vadd.f32 %v6715, %v7191
      %v7193 = vpop.f32.mrb[0].mxu0
      %v7194 = vpop.f32.mrb[0].mxu0
      %v7195 = vadd.f32 %v6715, %v7194
      %v7196 = vpop.f32.mrb[0].mxu0
      %7197 = vmatprep.mubr.bf16.mxu0 0
      %7198 = vmatmul.mubr.bf16.gmra.mrb[0].mxu0 %v6678
      %v7199 = vpop.f32.mrb[0].mxu0
      %v7200 = vadd.f32 %v6715, %v7199
      %v7201 = vpop.f32.mrb[0].mxu0
      %v7202 = vpop.f32.mrb[0].mxu0
      %v7203 = vadd.f32 %v6715, %v7202
      %v7204 = vpop.f32.mrb[0].mxu0
      %7205 = vmatprep.mubr.bf16.mxu0 0
      %7206 = vmatmul.mubr.bf16.gmra.mrb[0].mxu0 %v6679
      %v7207 = vpop.f32.mrb[0].mxu0
      %v7208 = vadd.f32 %v6715, %v7207
      %v7209 = vpop.f32.mrb[0].mxu0
      %v7210 = vpop.f32.mrb[0].mxu0
      %v7211 = vadd.f32 %v6715, %v7210
      %v7212 = vpop.f32.mrb[0].mxu0
      %7213 = vmatprep.mubr.bf16.mxu0 0
      %7214 = vmatmul.mubr.bf16.gmra.mrb[0].mxu0 %v6680
      %v7215 = vpop.f32.mrb[0].mxu0
      %v7216 = vadd.f32 %v6715, %v7215
      %v7217 = vpop.f32.mrb[0].mxu0
      %v7218 = vpop.f32.mrb[0].mxu0
      %v7219 = vadd.f32 %v6715, %v7218
      %v7220 = vpop.f32.mrb[0].mxu0
      %7221 = vmatprep.mubr.bf16.mxu0 0
      %7222 = vmatmul.mubr.bf16.gmra.mrb[0].mxu0 %v6681
      %v7223 = vpop.f32.mrb[0].mxu0
      %v7224 = vadd.f32 %v6715, %v7223
      %v7225 = vpop.f32.mrb[0].mxu0
      %v7226 = vpop.f32.mrb[0].mxu0
      %v7227 = vadd.f32 %v6715, %v7226
      %v7228 = vpop.f32.mrb[0].mxu0
      %7229 = vmatprep.mubr.bf16.mxu0 0
      %7230 = vmatmul.mubr.bf16.gmra.mrb[0].mxu0 %v6682
      %v7231 = vpop.f32.mrb[0].mxu0
      %v7232 = vadd.f32 %v6715, %v7231
      %v7233 = vpop.f32.mrb[0].mxu0
      %v7234 = vpop.f32.mrb[0].mxu0
      %v7235 = vadd.f32 %v6715, %v7234
      %v7236 = vpop.f32.mrb[0].mxu0
      %7237 = vmatprep.mubr.bf16.mxu0 0
      %7238 = vmatmul.mubr.bf16.gmra.mrb[0].mxu0 %v6683
      %v7239 = vpop.f32.mrb[0].mxu0
      %v7240 = vadd.f32 %v6715, %v7239
      %v7241 = vpop.f32.mrb[0].mxu0
      %v7242 = vpop.f32.mrb[0].mxu0
      %v7243 = vadd.f32 %v6715, %v7242
      %v7244 = vpop.f32.mrb[0].mxu0
      %7245 = vmatprep.mubr.bf16.mxu0 0
      %7246 = vmatmul.mubr.bf16.gmra.mrb[0].mxu0 %v6684
      %v7247 = vpop.f32.mrb[0].mxu0
      %v7248 = vadd.f32 %v6715, %v7247
      %v7249 = vpop.f32.mrb[0].mxu0
      %v7250 = vpop.f32.mrb[0].mxu0
      %v7251 = vadd.f32 %v6715, %v7250
      %v7252 = vpop.f32.mrb[0].mxu0
      %7253 = vmatprep.mubr.bf16.mxu0 0
      %7254 = vmatmul.mubr.bf16.gmra.mrb[0].mxu0 %v6685
      %v7255 = vpop.f32.mrb[0].mxu0
      %v7256 = vadd.f32 %v6715, %v7255
      %v7257 = vpop.f32.mrb[0].mxu0
      %v7258 = vpop.f32.mrb[0].mxu0
      %v7259 = vadd.f32 %v6715, %v7258
      %v7260 = vpop.f32.mrb[0].mxu0
      %7261 = vmatprep.mubr.bf16.mxu0 0
      %7262 = vmatmul.mubr.bf16.gmra.mrb[0].mxu0 %v6686
      %v7263 = vpop.f32.mrb[0].mxu0
      %v7264 = vadd.f32 %v6715, %v7263
      %v7265 = vpop.f32.mrb[0].mxu0
      %v7266 = vpop.f32.mrb[0].mxu0
      %v7267 = vadd.f32 %v6715, %v7266
      %v7268 = vpop.f32.mrb[0].mxu0
      %7269 = vmatprep.mubr.bf16.mxu0 0
      %7270 = vmatmul.mubr.bf16.gmra.mrb[0].mxu0 %v6687
      %v7271 = vpop.f32.mrb[0].mxu0
      %v7272 = vadd.f32 %v6715, %v7271
      %v7273 = vpop.f32.mrb[0].mxu0
      %v7274 = vpop.f32.mrb[0].mxu0
      %v7275 = vadd.f32 %v6715, %v7274
      %v7276 = vpop.f32.mrb[0].mxu0
      %7277 = vmatprep.mubr.bf16.mxu0 0
      %7278 = vmatmul.mubr.bf16.gmra.mrb[0].mxu0 %v6688
      %v7279 = vpop.f32.mrb[0].mxu0
      %v7280 = vadd.f32 %v6715, %v7279
      %v7281 = vpop.f32.mrb[0].mxu0
      %v7282 = vpop.f32.mrb[0].mxu0
      %v7283 = vadd.f32 %v6715, %v7282
      %v7284 = vpop.f32.mrb[0].mxu0
      %7285 = vmatprep.mubr.bf16.mxu0 0
      %7286 = vmatmul.mubr.bf16.gmra.mrb[0].mxu0 %v6689
      %v7287 = vpop.f32.mrb[0].mxu0
      %v7288 = vadd.f32 %v6715, %v7287
      %v7289 = vpop.f32.mrb[0].mxu0
      %v7290 = vpop.f32.mrb[0].mxu0
      %v7291 = vadd.f32 %v6715, %v7290
      %v7292 = vpop.f32.mrb[0].mxu0
      %7293 = vmatprep.mubr.bf16.mxu0 0
      %7294 = vmatmul.mubr.bf16.gmra.mrb[0].mxu0 %v6690
      %v7295 = vpop.f32.mrb[0].mxu0
      %v7296 = vadd.f32 %v6715, %v7295
      %v7297 = vpop.f32.mrb[0].mxu0
      %v7298 = vpop.f32.mrb[0].mxu0
      %v7299 = vadd.f32 %v6715, %v7298
      %v7300 = vpop.f32.mrb[0].mxu0
      %7301 = vmatprep.mubr.bf16.mxu0 0
      %7302 = vmatmul.mubr.bf16.gmra.mrb[0].mxu0 %v6691
      %v7303 = vpop.f32.mrb[0].mxu0
      %v7304 = vadd.f32 %v6715, %v7303
      %v7305 = vpop.f32.mrb[0].mxu0
      %v7306 = vpop.f32.mrb[0].mxu0
      %v7307 = vadd.f32 %v6715, %v7306
      %v7308 = vpop.f32.mrb[0].mxu0
      %7309 = vdwg.mxu0
      %v7310 = vmax.f32 %v6800, 0.0
      %v7311 = vmax.f32 %v6803, 0.0
      %v7312 = vmax.f32 %v6808, 0.0
      %v7313 = vmax.f32 %v6811, 0.0
      %v7314 = vmax.f32 %v6816, 0.0
      %v7315 = vmax.f32 %v6819, 0.0
      %v7316 = vmax.f32 %v6824, 0.0
      %v7317 = vmax.f32 %v6827, 0.0
      %v7318 = vmax.f32 %v6832, 0.0
      %v7319 = vmax.f32 %v6835, 0.0
      %v7320 = vmax.f32 %v6840, 0.0
      %v7321 = vmax.f32 %v6843, 0.0
      %v7322 = vmax.f32 %v6848, 0.0
      %v7323 = vmax.f32 %v6851, 0.0
      %v7324 = vmax.f32 %v6856, 0.0
      %v7325 = vmax.f32 %v6859, 0.0
      %v7326 = vmax.f32 %v6864, 0.0
      %v7327 = vmax.f32 %v6867, 0.0
      %v7328 = vmax.f32 %v6872, 0.0
      %v7329 = vmax.f32 %v6875, 0.0
      %v7330 = vmax.f32 %v6880, 0.0
      %v7331 = vmax.f32 %v6883, 0.0
      %v7332 = vmax.f32 %v6888, 0.0
      %v7333 = vmax.f32 %v6891, 0.0
      %v7334 = vmax.f32 %v6896, 0.0
      %v7335 = vmax.f32 %v6899, 0.0
      %v7336 = vmax.f32 %v6904, 0.0
      %v7337 = vmax.f32 %v6907, 0.0
      %v7338 = vmax.f32 %v6912, 0.0
      %v7339 = vmax.f32 %v6915, 0.0
      %v7340 = vmax.f32 %v6920, 0.0
      %v7341 = vmax.f32 %v6923, 0.0
      %v7342 = vmax.f32 %v6928, 0.0
      %v7343 = vmax.f32 %v6931, 0.0
      %v7344 = vmax.f32 %v6936, 0.0
      %v7345 = vmax.f32 %v6939, 0.0
      %v7346 = vmax.f32 %v6944, 0.0
      %v7347 = vmax.f32 %v6947, 0.0
      %v7348 = vmax.f32 %v6952, 0.0
      %v7349 = vmax.f32 %v6955, 0.0
      %v7350 = vmax.f32 %v6960, 0.0
      %v7351 = vmax.f32 %v6963, 0.0
      %v7352 = vmax.f32 %v6968, 0.0
      %v7353 = vmax.f32 %v6971, 0.0
      %v7354 = vmax.f32 %v6976, 0.0
      %v7355 = vmax.f32 %v6979, 0.0
      %v7356 = vmax.f32 %v6984, 0.0
      %v7357 = vmax.f32 %v6987, 0.0
      %v7358 = vmax.f32 %v6992, 0.0
      %v7359 = vmax.f32 %v6995, 0.0
      %v7360 = vmax.f32 %v7000, 0.0
      %v7361 = vmax.f32 %v7003, 0.0
      %v7362 = vmax.f32 %v7008, 0.0
      %v7363 = vmax.f32 %v7011, 0.0
      %v7364 = vmax.f32 %v7016, 0.0
      %v7365 = vmax.f32 %v7019, 0.0
      %v7366 = vmax.f32 %v7024, 0.0
      %v7367 = vmax.f32 %v7027, 0.0
      %v7368 = vmax.f32 %v7032, 0.0
      %v7369 = vmax.f32 %v7035, 0.0
      %v7370 = vmax.f32 %v7040, 0.0
      %v7371 = vmax.f32 %v7043, 0.0
      %v7372 = vmax.f32 %v7048, 0.0
      %v7373 = vmax.f32 %v7051, 0.0
      %v7374 = vmax.f32 %v7056, 0.0
      %v7375 = vmax.f32 %v7059, 0.0
      %v7376 = vmax.f32 %v7064, 0.0
      %v7377 = vmax.f32 %v7067, 0.0
      %v7378 = vmax.f32 %v7072, 0.0
      %v7379 = vmax.f32 %v7075, 0.0
      %v7380 = vmax.f32 %v7080, 0.0
      %v7381 = vmax.f32 %v7083, 0.0
      %v7382 = vmax.f32 %v7088, 0.0
      %v7383 = vmax.f32 %v7091, 0.0
      %v7384 = vmax.f32 %v7096, 0.0
      %v7385 = vmax.f32 %v7099, 0.0
      %v7386 = vmax.f32 %v7104, 0.0
      %v7387 = vmax.f32 %v7107, 0.0
      %v7388 = vmax.f32 %v7112, 0.0
      %v7389 = vmax.f32 %v7115, 0.0
      %v7390 = vmax.f32 %v7120, 0.0
      %v7391 = vmax.f32 %v7123, 0.0
      %v7392 = vmax.f32 %v7128, 0.0
      %v7393 = vmax.f32 %v7131, 0.0
      %v7394 = vmax.f32 %v7136, 0.0
      %v7395 = vmax.f32 %v7139, 0.0
      %v7396 = vmax.f32 %v7144, 0.0
      %v7397 = vmax.f32 %v7147, 0.0
      %v7398 = vmax.f32 %v7152, 0.0
      %v7399 = vmax.f32 %v7155, 0.0
      %v7400 = vmax.f32 %v7160, 0.0
      %v7401 = vmax.f32 %v7163, 0.0
      %v7402 = vmax.f32 %v7168, 0.0
      %v7403 = vmax.f32 %v7171, 0.0
      %v7404 = vmax.f32 %v7176, 0.0
      %v7405 = vmax.f32 %v7179, 0.0
      %v7406 = vmax.f32 %v7184, 0.0
      %v7407 = vmax.f32 %v7187, 0.0
      %v7408 = vmax.f32 %v7192, 0.0
      %v7409 = vmax.f32 %v7195, 0.0
      %v7410 = vmax.f32 %v7200, 0.0
      %v7411 = vmax.f32 %v7203, 0.0
      %v7412 = vmax.f32 %v7208, 0.0
      %v7413 = vmax.f32 %v7211, 0.0
      %v7414 = vmax.f32 %v7216, 0.0
      %v7415 = vmax.f32 %v7219, 0.0
      %v7416 = vmax.f32 %v7224, 0.0
      %v7417 = vmax.f32 %v7227, 0.0
      %v7418 = vmax.f32 %v7232, 0.0
      %v7419 = vmax.f32 %v7235, 0.0
      %v7420 = vmax.f32 %v7240, 0.0
      %v7421 = vmax.f32 %v7243, 0.0
      %v7422 = vmax.f32 %v7248, 0.0
      %v7423 = vmax.f32 %v7251, 0.0
      %v7424 = vmax.f32 %v7256, 0.0
      %v7425 = vmax.f32 %v7259, 0.0
      %v7426 = vmax.f32 %v7264, 0.0
      %v7427 = vmax.f32 %v7267, 0.0
      %v7428 = vmax.f32 %v7272, 0.0
      %v7429 = vmax.f32 %v7275, 0.0
      %v7430 = vmax.f32 %v7280, 0.0
      %v7431 = vmax.f32 %v7283, 0.0
      %v7432 = vmax.f32 %v7288, 0.0
      %v7433 = vmax.f32 %v7291, 0.0
      %v7434 = vmax.f32 %v7296, 0.0
      %v7435 = vmax.f32 %v7299, 0.0
      %v7436 = vmax.f32 %v7304, 0.0
      %v7437 = vmax.f32 %v7307, 0.0
      %v7438 = vpack.c.bf16 %v7311, %v7310
      %v7439 = vpack.c.bf16 %v7313, %v7312
      %v7440 = vpack.c.bf16 %v7315, %v7314
      %v7441 = vpack.c.bf16 %v7317, %v7316
      %v7442 = vpack.c.bf16 %v7319, %v7318
      %v7443 = vpack.c.bf16 %v7321, %v7320
      %v7444 = vpack.c.bf16 %v7323, %v7322
      %v7445 = vpack.c.bf16 %v7325, %v7324
      %v7446 = vpack.c.bf16 %v7327, %v7326
      %v7447 = vpack.c.bf16 %v7329, %v7328
      %v7448 = vpack.c.bf16 %v7331, %v7330
      %v7449 = vpack.c.bf16 %v7333, %v7332
      %v7450 = vpack.c.bf16 %v7335, %v7334
      %v7451 = vpack.c.bf16 %v7337, %v7336
      %v7452 = vpack.c.bf16 %v7339, %v7338
      %v7453 = vpack.c.bf16 %v7341, %v7340
      %v7454 = vpack.c.bf16 %v7343, %v7342
      %v7455 = vpack.c.bf16 %v7345, %v7344
      %v7456 = vpack.c.bf16 %v7347, %v7346
      %v7457 = vpack.c.bf16 %v7349, %v7348
      %v7458 = vpack.c.bf16 %v7351, %v7350
      %v7459 = vpack.c.bf16 %v7353, %v7352
      %v7460 = vpack.c.bf16 %v7355, %v7354
      %v7461 = vpack.c.bf16 %v7357, %v7356
      %v7462 = vpack.c.bf16 %v7359, %v7358
      %v7463 = vpack.c.bf16 %v7361, %v7360
      %v7464 = vpack.c.bf16 %v7363, %v7362
      %v7465 = vpack.c.bf16 %v7365, %v7364
      %v7466 = vpack.c.bf16 %v7367, %v7366
      %v7467 = vpack.c.bf16 %v7369, %v7368
      %v7468 = vpack.c.bf16 %v7371, %v7370
      %v7469 = vpack.c.bf16 %v7373, %v7372
      %v7470 = vpack.c.bf16 %v7375, %v7374
      %v7471 = vpack.c.bf16 %v7377, %v7376
      %v7472 = vpack.c.bf16 %v7379, %v7378
      %v7473 = vpack.c.bf16 %v7381, %v7380
      %v7474 = vpack.c.bf16 %v7383, %v7382
      %v7475 = vpack.c.bf16 %v7385, %v7384
      %v7476 = vpack.c.bf16 %v7387, %v7386
      %v7477 = vpack.c.bf16 %v7389, %v7388
      %v7478 = vpack.c.bf16 %v7391, %v7390
      %v7479 = vpack.c.bf16 %v7393, %v7392
      %v7480 = vpack.c.bf16 %v7395, %v7394
      %v7481 = vpack.c.bf16 %v7397, %v7396
      %v7482 = vpack.c.bf16 %v7399, %v7398
      %v7483 = vpack.c.bf16 %v7401, %v7400
      %v7484 = vpack.c.bf16 %v7403, %v7402
      %v7485 = vpack.c.bf16 %v7405, %v7404
      %v7486 = vpack.c.bf16 %v7407, %v7406
      %v7487 = vpack.c.bf16 %v7409, %v7408
      %v7488 = vpack.c.bf16 %v7411, %v7410
      %v7489 = vpack.c.bf16 %v7413, %v7412
      %v7490 = vpack.c.bf16 %v7415, %v7414
      %v7491 = vpack.c.bf16 %v7417, %v7416
      %v7492 = vpack.c.bf16 %v7419, %v7418
      %v7493 = vpack.c.bf16 %v7421, %v7420
      %v7494 = vpack.c.bf16 %v7423, %v7422
      %v7495 = vpack.c.bf16 %v7425, %v7424
      %v7496 = vpack.c.bf16 %v7427, %v7426
      %v7497 = vpack.c.bf16 %v7429, %v7428
      %v7498 = vpack.c.bf16 %v7431, %v7430
      %v7499 = vpack.c.bf16 %v7433, %v7432
      %v7500 = vpack.c.bf16 %v7435, %v7434
      %v7501 = vpack.c.bf16 %v7437, %v7436
      %s7502 = scalar_lea.vmem %s1, 384
      %v7503 = vld [vmem:[%s7502] sm:$0xf]
      %v7504 = vld [vmem:[%s7502 + $0x4] sm:$0xf]
      %v7505 = vld [vmem:[%s7502 + $0x8] sm:$0xf]
      %v7506 = vld [vmem:[%s7502 + $0xc] sm:$0xf]
      %v7507 = vld [vmem:[%s7502 + $0x10] sm:$0xf]
      %v7508 = vld [vmem:[%s7502 + $0x14] sm:$0xf]
      %v7509 = vld [vmem:[%s7502 + $0x18] sm:$0xf]
      %v7510 = vld [vmem:[%s7502 + $0x1c] sm:$0xf]
      %v7511 = vld [vmem:[%s7502 + $0x20] sm:$0xf]
      %v7512 = vld [vmem:[%s7502 + $0x24] sm:$0xf]
      %v7513 = vld [vmem:[%s7502 + $0x28] sm:$0xf]
      %v7514 = vld [vmem:[%s7502 + $0x2c] sm:$0xf]
      %v7515 = vld [vmem:[%s7502 + $0x30] sm:$0xf]
      %v7516 = vld [vmem:[%s7502 + $0x34] sm:$0xf]
      %v7517 = vld [vmem:[%s7502 + $0x38] sm:$0xf]
      %v7518 = vld [vmem:[%s7502 + $0x3c] sm:$0xf]
      %s7519 = scalar_lea.vmem %s3, 7
      %v7520 = vld [vmem:[%s7519] sm:$0x1]
      %v7522 = vlaneseq
      %v7523 = vshrl.u32 %v7522, 7
      %v7524 = vsub.s32 0, %v7523
      %v7525 = vrot.slane %v7520, %v7524
      %v7543 = vunpack.c.l.b16 %v7503
      %v7544 = vunpack.c.l.b16 %v7504
      %v7545 = vunpack.c.l.b16 %v7505
      %v7546 = vunpack.c.l.b16 %v7506
      %v7547 = vunpack.c.l.b16 %v7507
      %v7548 = vunpack.c.l.b16 %v7508
      %v7549 = vunpack.c.l.b16 %v7509
      %v7550 = vunpack.c.l.b16 %v7510
      %v7551 = vunpack.c.l.b16 %v7511
      %v7552 = vunpack.c.l.b16 %v7512
      %v7553 = vunpack.c.l.b16 %v7513
      %v7554 = vunpack.c.l.b16 %v7514
      %v7555 = vunpack.c.l.b16 %v7515
      %v7556 = vunpack.c.l.b16 %v7516
      %v7557 = vunpack.c.l.b16 %v7517
      %v7558 = vunpack.c.l.b16 %v7518
      %v7559 = vpack.c.b16 %v7544, %v7543
      %v7560 = vpack.c.b16 %v7546, %v7545
      %v7561 = vpack.c.b16 %v7548, %v7547
      %v7562 = vpack.c.b16 %v7550, %v7549
      %v7563 = vpack.c.b16 %v7552, %v7551
      %v7564 = vpack.c.b16 %v7554, %v7553
      %v7565 = vpack.c.b16 %v7556, %v7555
      %v7566 = vpack.c.b16 %v7558, %v7557
      %7575 = vmatprep.subr.bf16.mxu0 0
      %7576 = vmatpush1.bf16.msra.mxu0 %v7559
      %7577 = vmatprep.subr.bf16.mxu0 0
      %7578 = vmatpush1.bf16.msra.mxu0 %v7560
      %7579 = vmatprep.subr.bf16.mxu0 0
      %7580 = vmatpush1.bf16.msra.mxu0 %v7561
      %7581 = vmatprep.subr.bf16.mxu0 0
      %7582 = vmatpush1.bf16.msra.mxu0 %v7562
      %7583 = vmatprep.subr.bf16.mxu0 0
      %7584 = vmatpush1.bf16.msra.mxu0 %v7563
      %7585 = vmatprep.subr.bf16.mxu0 0
      %7586 = vmatpush1.bf16.msra.mxu0 %v7564
      %7587 = vmatprep.subr.bf16.mxu0 0
      %7588 = vmatpush1.bf16.msra.mxu0 %v7565
      %7589 = vmatprep.subr.bf16.mxu0 0
      %7590 = vmatpush1.bf16.msra.mxu0 %v7566
      %7591 = vmatprep.subr.bf16.mxu0 0
      %7592 = vmatpush1.bf16.msra.mxu0 0
      %7593 = vmatprep.subr.bf16.mxu0 0
      %7594 = vmatpush1.bf16.msra.mxu0 0
      %7595 = vmatprep.subr.bf16.mxu0 0
      %7596 = vmatpush1.bf16.msra.mxu0 0
      %7597 = vmatprep.subr.bf16.mxu0 0
      %7598 = vmatpush1.bf16.msra.mxu0 0
      %7599 = vmatprep.subr.bf16.mxu0 0
      %7600 = vmatpush1.bf16.msra.mxu0 0
      %7601 = vmatprep.subr.bf16.mxu0 0
      %7602 = vmatpush1.bf16.msra.mxu0 0
      %7603 = vmatprep.subr.bf16.mxu0 0
      %7604 = vmatpush1.bf16.msra.mxu0 0
      %7605 = vmatprep.subr.bf16.mxu0 0
      %7606 = vmatpush1.bf16.msra.mxu0 0
      %7607 = vmatprep.mubr.bf16.mxu0 0
      %7608 = vmatmul.mubr.bf16.gmra.mrb[0].mxu0 %v7438
      %v7609 = vpop.f32.mrb[0].mxu0
      %v7610 = vadd.f32 %v7525, %v7609
      %v7611 = vpop.f32.mrb[0].mxu0
      %v7612 = vpop.f32.mrb[0].mxu0
      %v7613 = vadd.f32 %v7525, %v7612
      %v7614 = vpop.f32.mrb[0].mxu0
      %7615 = vmatprep.mubr.bf16.mxu0 0
      %7616 = vmatmul.mubr.bf16.gmra.mrb[0].mxu0 %v7439
      %v7617 = vpop.f32.mrb[0].mxu0
      %v7618 = vadd.f32 %v7525, %v7617
      %v7619 = vpop.f32.mrb[0].mxu0
      %v7620 = vpop.f32.mrb[0].mxu0
      %v7621 = vadd.f32 %v7525, %v7620
      %v7622 = vpop.f32.mrb[0].mxu0
      %7623 = vmatprep.mubr.bf16.mxu0 0
      %7624 = vmatmul.mubr.bf16.gmra.mrb[0].mxu0 %v7440
      %v7625 = vpop.f32.mrb[0].mxu0
      %v7626 = vadd.f32 %v7525, %v7625
      %v7627 = vpop.f32.mrb[0].mxu0
      %v7628 = vpop.f32.mrb[0].mxu0
      %v7629 = vadd.f32 %v7525, %v7628
      %v7630 = vpop.f32.mrb[0].mxu0
      %7631 = vmatprep.mubr.bf16.mxu0 0
      %7632 = vmatmul.mubr.bf16.gmra.mrb[0].mxu0 %v7441
      %v7633 = vpop.f32.mrb[0].mxu0
      %v7634 = vadd.f32 %v7525, %v7633
      %v7635 = vpop.f32.mrb[0].mxu0
      %v7636 = vpop.f32.mrb[0].mxu0
      %v7637 = vadd.f32 %v7525, %v7636
      %v7638 = vpop.f32.mrb[0].mxu0
      %7639 = vmatprep.mubr.bf16.mxu0 0
      %7640 = vmatmul.mubr.bf16.gmra.mrb[0].mxu0 %v7442
      %v7641 = vpop.f32.mrb[0].mxu0
      %v7642 = vadd.f32 %v7525, %v7641
      %v7643 = vpop.f32.mrb[0].mxu0
      %v7644 = vpop.f32.mrb[0].mxu0
      %v7645 = vadd.f32 %v7525, %v7644
      %v7646 = vpop.f32.mrb[0].mxu0
      %7647 = vmatprep.mubr.bf16.mxu0 0
      %7648 = vmatmul.mubr.bf16.gmra.mrb[0].mxu0 %v7443
      %v7649 = vpop.f32.mrb[0].mxu0
      %v7650 = vadd.f32 %v7525, %v7649
      %v7651 = vpop.f32.mrb[0].mxu0
      %v7652 = vpop.f32.mrb[0].mxu0
      %v7653 = vadd.f32 %v7525, %v7652
      %v7654 = vpop.f32.mrb[0].mxu0
      %7655 = vmatprep.mubr.bf16.mxu0 0
      %7656 = vmatmul.mubr.bf16.gmra.mrb[0].mxu0 %v7444
      %v7657 = vpop.f32.mrb[0].mxu0
      %v7658 = vadd.f32 %v7525, %v7657
      %v7659 = vpop.f32.mrb[0].mxu0
      %v7660 = vpop.f32.mrb[0].mxu0
      %v7661 = vadd.f32 %v7525, %v7660
      %v7662 = vpop.f32.mrb[0].mxu0
      %7663 = vmatprep.mubr.bf16.mxu0 0
      %7664 = vmatmul.mubr.bf16.gmra.mrb[0].mxu0 %v7445
      %v7665 = vpop.f32.mrb[0].mxu0
      %v7666 = vadd.f32 %v7525, %v7665
      %v7667 = vpop.f32.mrb[0].mxu0
      %v7668 = vpop.f32.mrb[0].mxu0
      %v7669 = vadd.f32 %v7525, %v7668
      %v7670 = vpop.f32.mrb[0].mxu0
      %7671 = vmatprep.mubr.bf16.mxu0 0
      %7672 = vmatmul.mubr.bf16.gmra.mrb[0].mxu0 %v7446
      %v7673 = vpop.f32.mrb[0].mxu0
      %v7674 = vadd.f32 %v7525, %v7673
      %v7675 = vpop.f32.mrb[0].mxu0
      %v7676 = vpop.f32.mrb[0].mxu0
      %v7677 = vadd.f32 %v7525, %v7676
      %v7678 = vpop.f32.mrb[0].mxu0
      %7679 = vmatprep.mubr.bf16.mxu0 0
      %7680 = vmatmul.mubr.bf16.gmra.mrb[0].mxu0 %v7447
      %v7681 = vpop.f32.mrb[0].mxu0
      %v7682 = vadd.f32 %v7525, %v7681
      %v7683 = vpop.f32.mrb[0].mxu0
      %v7684 = vpop.f32.mrb[0].mxu0
      %v7685 = vadd.f32 %v7525, %v7684
      %v7686 = vpop.f32.mrb[0].mxu0
      %7687 = vmatprep.mubr.bf16.mxu0 0
      %7688 = vmatmul.mubr.bf16.gmra.mrb[0].mxu0 %v7448
      %v7689 = vpop.f32.mrb[0].mxu0
      %v7690 = vadd.f32 %v7525, %v7689
      %v7691 = vpop.f32.mrb[0].mxu0
      %v7692 = vpop.f32.mrb[0].mxu0
      %v7693 = vadd.f32 %v7525, %v7692
      %v7694 = vpop.f32.mrb[0].mxu0
      %7695 = vmatprep.mubr.bf16.mxu0 0
      %7696 = vmatmul.mubr.bf16.gmra.mrb[0].mxu0 %v7449
      %v7697 = vpop.f32.mrb[0].mxu0
      %v7698 = vadd.f32 %v7525, %v7697
      %v7699 = vpop.f32.mrb[0].mxu0
      %v7700 = vpop.f32.mrb[0].mxu0
      %v7701 = vadd.f32 %v7525, %v7700
      %v7702 = vpop.f32.mrb[0].mxu0
      %7703 = vmatprep.mubr.bf16.mxu0 0
      %7704 = vmatmul.mubr.bf16.gmra.mrb[0].mxu0 %v7450
      %v7705 = vpop.f32.mrb[0].mxu0
      %v7706 = vadd.f32 %v7525, %v7705
      %v7707 = vpop.f32.mrb[0].mxu0
      %v7708 = vpop.f32.mrb[0].mxu0
      %v7709 = vadd.f32 %v7525, %v7708
      %v7710 = vpop.f32.mrb[0].mxu0
      %7711 = vmatprep.mubr.bf16.mxu0 0
      %7712 = vmatmul.mubr.bf16.gmra.mrb[0].mxu0 %v7451
      %v7713 = vpop.f32.mrb[0].mxu0
      %v7714 = vadd.f32 %v7525, %v7713
      %v7715 = vpop.f32.mrb[0].mxu0
      %v7716 = vpop.f32.mrb[0].mxu0
      %v7717 = vadd.f32 %v7525, %v7716
      %v7718 = vpop.f32.mrb[0].mxu0
      %7719 = vmatprep.mubr.bf16.mxu0 0
      %7720 = vmatmul.mubr.bf16.gmra.mrb[0].mxu0 %v7452
      %v7721 = vpop.f32.mrb[0].mxu0
      %v7722 = vadd.f32 %v7525, %v7721
      %v7723 = vpop.f32.mrb[0].mxu0
      %v7724 = vpop.f32.mrb[0].mxu0
      %v7725 = vadd.f32 %v7525, %v7724
      %v7726 = vpop.f32.mrb[0].mxu0
      %7727 = vmatprep.mubr.bf16.mxu0 0
      %7728 = vmatmul.mubr.bf16.gmra.mrb[0].mxu0 %v7453
      %v7729 = vpop.f32.mrb[0].mxu0
      %v7730 = vadd.f32 %v7525, %v7729
      %v7731 = vpop.f32.mrb[0].mxu0
      %v7732 = vpop.f32.mrb[0].mxu0
      %v7733 = vadd.f32 %v7525, %v7732
      %v7734 = vpop.f32.mrb[0].mxu0
      %7735 = vmatprep.mubr.bf16.mxu0 0
      %7736 = vmatmul.mubr.bf16.gmra.mrb[0].mxu0 %v7454
      %v7737 = vpop.f32.mrb[0].mxu0
      %v7738 = vadd.f32 %v7525, %v7737
      %v7739 = vpop.f32.mrb[0].mxu0
      %v7740 = vpop.f32.mrb[0].mxu0
      %v7741 = vadd.f32 %v7525, %v7740
      %v7742 = vpop.f32.mrb[0].mxu0
      %7743 = vmatprep.mubr.bf16.mxu0 0
      %7744 = vmatmul.mubr.bf16.gmra.mrb[0].mxu0 %v7455
      %v7745 = vpop.f32.mrb[0].mxu0
      %v7746 = vadd.f32 %v7525, %v7745
      %v7747 = vpop.f32.mrb[0].mxu0
      %v7748 = vpop.f32.mrb[0].mxu0
      %v7749 = vadd.f32 %v7525, %v7748
      %v7750 = vpop.f32.mrb[0].mxu0
      %7751 = vmatprep.mubr.bf16.mxu0 0
      %7752 = vmatmul.mubr.bf16.gmra.mrb[0].mxu0 %v7456
      %v7753 = vpop.f32.mrb[0].mxu0
      %v7754 = vadd.f32 %v7525, %v7753
      %v7755 = vpop.f32.mrb[0].mxu0
      %v7756 = vpop.f32.mrb[0].mxu0
      %v7757 = vadd.f32 %v7525, %v7756
      %v7758 = vpop.f32.mrb[0].mxu0
      %7759 = vmatprep.mubr.bf16.mxu0 0
      %7760 = vmatmul.mubr.bf16.gmra.mrb[0].mxu0 %v7457
      %v7761 = vpop.f32.mrb[0].mxu0
      %v7762 = vadd.f32 %v7525, %v7761
      %v7763 = vpop.f32.mrb[0].mxu0
      %v7764 = vpop.f32.mrb[0].mxu0
      %v7765 = vadd.f32 %v7525, %v7764
      %v7766 = vpop.f32.mrb[0].mxu0
      %7767 = vmatprep.mubr.bf16.mxu0 0
      %7768 = vmatmul.mubr.bf16.gmra.mrb[0].mxu0 %v7458
      %v7769 = vpop.f32.mrb[0].mxu0
      %v7770 = vadd.f32 %v7525, %v7769
      %v7771 = vpop.f32.mrb[0].mxu0
      %v7772 = vpop.f32.mrb[0].mxu0
      %v7773 = vadd.f32 %v7525, %v7772
      %v7774 = vpop.f32.mrb[0].mxu0
      %7775 = vmatprep.mubr.bf16.mxu0 0
      %7776 = vmatmul.mubr.bf16.gmra.mrb[0].mxu0 %v7459
      %v7777 = vpop.f32.mrb[0].mxu0
      %v7778 = vadd.f32 %v7525, %v7777
      %v7779 = vpop.f32.mrb[0].mxu0
      %v7780 = vpop.f32.mrb[0].mxu0
      %v7781 = vadd.f32 %v7525, %v7780
      %v7782 = vpop.f32.mrb[0].mxu0
      %7783 = vmatprep.mubr.bf16.mxu0 0
      %7784 = vmatmul.mubr.bf16.gmra.mrb[0].mxu0 %v7460
      %v7785 = vpop.f32.mrb[0].mxu0
      %v7786 = vadd.f32 %v7525, %v7785
      %v7787 = vpop.f32.mrb[0].mxu0
      %v7788 = vpop.f32.mrb[0].mxu0
      %v7789 = vadd.f32 %v7525, %v7788
      %v7790 = vpop.f32.mrb[0].mxu0
      %7791 = vmatprep.mubr.bf16.mxu0 0
      %7792 = vmatmul.mubr.bf16.gmra.mrb[0].mxu0 %v7461
      %v7793 = vpop.f32.mrb[0].mxu0
      %v7794 = vadd.f32 %v7525, %v7793
      %v7795 = vpop.f32.mrb[0].mxu0
      %v7796 = vpop.f32.mrb[0].mxu0
      %v7797 = vadd.f32 %v7525, %v7796
      %v7798 = vpop.f32.mrb[0].mxu0
      %7799 = vmatprep.mubr.bf16.mxu0 0
      %7800 = vmatmul.mubr.bf16.gmra.mrb[0].mxu0 %v7462
      %v7801 = vpop.f32.mrb[0].mxu0
      %v7802 = vadd.f32 %v7525, %v7801
      %v7803 = vpop.f32.mrb[0].mxu0
      %v7804 = vpop.f32.mrb[0].mxu0
      %v7805 = vadd.f32 %v7525, %v7804
      %v7806 = vpop.f32.mrb[0].mxu0
      %7807 = vmatprep.mubr.bf16.mxu0 0
      %7808 = vmatmul.mubr.bf16.gmra.mrb[0].mxu0 %v7463
      %v7809 = vpop.f32.mrb[0].mxu0
      %v7810 = vadd.f32 %v7525, %v7809
      %v7811 = vpop.f32.mrb[0].mxu0
      %v7812 = vpop.f32.mrb[0].mxu0
      %v7813 = vadd.f32 %v7525, %v7812
      %v7814 = vpop.f32.mrb[0].mxu0
      %7815 = vmatprep.mubr.bf16.mxu0 0
      %7816 = vmatmul.mubr.bf16.gmra.mrb[0].mxu0 %v7464
      %v7817 = vpop.f32.mrb[0].mxu0
      %v7818 = vadd.f32 %v7525, %v7817
      %v7819 = vpop.f32.mrb[0].mxu0
      %v7820 = vpop.f32.mrb[0].mxu0
      %v7821 = vadd.f32 %v7525, %v7820
      %v7822 = vpop.f32.mrb[0].mxu0
      %7823 = vmatprep.mubr.bf16.mxu0 0
      %7824 = vmatmul.mubr.bf16.gmra.mrb[0].mxu0 %v7465
      %v7825 = vpop.f32.mrb[0].mxu0
      %v7826 = vadd.f32 %v7525, %v7825
      %v7827 = vpop.f32.mrb[0].mxu0
      %v7828 = vpop.f32.mrb[0].mxu0
      %v7829 = vadd.f32 %v7525, %v7828
      %v7830 = vpop.f32.mrb[0].mxu0
      %7831 = vmatprep.mubr.bf16.mxu0 0
      %7832 = vmatmul.mubr.bf16.gmra.mrb[0].mxu0 %v7466
      %v7833 = vpop.f32.mrb[0].mxu0
      %v7834 = vadd.f32 %v7525, %v7833
      %v7835 = vpop.f32.mrb[0].mxu0
      %v7836 = vpop.f32.mrb[0].mxu0
      %v7837 = vadd.f32 %v7525, %v7836
      %v7838 = vpop.f32.mrb[0].mxu0
      %7839 = vmatprep.mubr.bf16.mxu0 0
      %7840 = vmatmul.mubr.bf16.gmra.mrb[0].mxu0 %v7467
      %v7841 = vpop.f32.mrb[0].mxu0
      %v7842 = vadd.f32 %v7525, %v7841
      %v7843 = vpop.f32.mrb[0].mxu0
      %v7844 = vpop.f32.mrb[0].mxu0
      %v7845 = vadd.f32 %v7525, %v7844
      %v7846 = vpop.f32.mrb[0].mxu0
      %7847 = vmatprep.mubr.bf16.mxu0 0
      %7848 = vmatmul.mubr.bf16.gmra.mrb[0].mxu0 %v7468
      %v7849 = vpop.f32.mrb[0].mxu0
      %v7850 = vadd.f32 %v7525, %v7849
      %v7851 = vpop.f32.mrb[0].mxu0
      %v7852 = vpop.f32.mrb[0].mxu0
      %v7853 = vadd.f32 %v7525, %v7852
      %v7854 = vpop.f32.mrb[0].mxu0
      %7855 = vmatprep.mubr.bf16.mxu0 0
      %7856 = vmatmul.mubr.bf16.gmra.mrb[0].mxu0 %v7469
      %v7857 = vpop.f32.mrb[0].mxu0
      %v7858 = vadd.f32 %v7525, %v7857
      %v7859 = vpop.f32.mrb[0].mxu0
      %v7860 = vpop.f32.mrb[0].mxu0
      %v7861 = vadd.f32 %v7525, %v7860
      %v7862 = vpop.f32.mrb[0].mxu0
      %7863 = vmatprep.mubr.bf16.mxu0 0
      %7864 = vmatmul.mubr.bf16.gmra.mrb[0].mxu0 %v7470
      %v7865 = vpop.f32.mrb[0].mxu0
      %v7866 = vadd.f32 %v7525, %v7865
      %v7867 = vpop.f32.mrb[0].mxu0
      %v7868 = vpop.f32.mrb[0].mxu0
      %v7869 = vadd.f32 %v7525, %v7868
      %v7870 = vpop.f32.mrb[0].mxu0
      %7871 = vmatprep.mubr.bf16.mxu0 0
      %7872 = vmatmul.mubr.bf16.gmra.mrb[0].mxu0 %v7471
      %v7873 = vpop.f32.mrb[0].mxu0
      %v7874 = vadd.f32 %v7525, %v7873
      %v7875 = vpop.f32.mrb[0].mxu0
      %v7876 = vpop.f32.mrb[0].mxu0
      %v7877 = vadd.f32 %v7525, %v7876
      %v7878 = vpop.f32.mrb[0].mxu0
      %7879 = vmatprep.mubr.bf16.mxu0 0
      %7880 = vmatmul.mubr.bf16.gmra.mrb[0].mxu0 %v7472
      %v7881 = vpop.f32.mrb[0].mxu0
      %v7882 = vadd.f32 %v7525, %v7881
      %v7883 = vpop.f32.mrb[0].mxu0
      %v7884 = vpop.f32.mrb[0].mxu0
      %v7885 = vadd.f32 %v7525, %v7884
      %v7886 = vpop.f32.mrb[0].mxu0
      %7887 = vmatprep.mubr.bf16.mxu0 0
      %7888 = vmatmul.mubr.bf16.gmra.mrb[0].mxu0 %v7473
      %v7889 = vpop.f32.mrb[0].mxu0
      %v7890 = vadd.f32 %v7525, %v7889
      %v7891 = vpop.f32.mrb[0].mxu0
      %v7892 = vpop.f32.mrb[0].mxu0
      %v7893 = vadd.f32 %v7525, %v7892
      %v7894 = vpop.f32.mrb[0].mxu0
      %7895 = vmatprep.mubr.bf16.mxu0 0
      %7896 = vmatmul.mubr.bf16.gmra.mrb[0].mxu0 %v7474
      %v7897 = vpop.f32.mrb[0].mxu0
      %v7898 = vadd.f32 %v7525, %v7897
      %v7899 = vpop.f32.mrb[0].mxu0
      %v7900 = vpop.f32.mrb[0].mxu0
      %v7901 = vadd.f32 %v7525, %v7900
      %v7902 = vpop.f32.mrb[0].mxu0
      %7903 = vmatprep.mubr.bf16.mxu0 0
      %7904 = vmatmul.mubr.bf16.gmra.mrb[0].mxu0 %v7475
      %v7905 = vpop.f32.mrb[0].mxu0
      %v7906 = vadd.f32 %v7525, %v7905
      %v7907 = vpop.f32.mrb[0].mxu0
      %v7908 = vpop.f32.mrb[0].mxu0
      %v7909 = vadd.f32 %v7525, %v7908
      %v7910 = vpop.f32.mrb[0].mxu0
      %7911 = vmatprep.mubr.bf16.mxu0 0
      %7912 = vmatmul.mubr.bf16.gmra.mrb[0].mxu0 %v7476
      %v7913 = vpop.f32.mrb[0].mxu0
      %v7914 = vadd.f32 %v7525, %v7913
      %v7915 = vpop.f32.mrb[0].mxu0
      %v7916 = vpop.f32.mrb[0].mxu0
      %v7917 = vadd.f32 %v7525, %v7916
      %v7918 = vpop.f32.mrb[0].mxu0
      %7919 = vmatprep.mubr.bf16.mxu0 0
      %7920 = vmatmul.mubr.bf16.gmra.mrb[0].mxu0 %v7477
      %v7921 = vpop.f32.mrb[0].mxu0
      %v7922 = vadd.f32 %v7525, %v7921
      %v7923 = vpop.f32.mrb[0].mxu0
      %v7924 = vpop.f32.mrb[0].mxu0
      %v7925 = vadd.f32 %v7525, %v7924
      %v7926 = vpop.f32.mrb[0].mxu0
      %7927 = vmatprep.mubr.bf16.mxu0 0
      %7928 = vmatmul.mubr.bf16.gmra.mrb[0].mxu0 %v7478
      %v7929 = vpop.f32.mrb[0].mxu0
      %v7930 = vadd.f32 %v7525, %v7929
      %v7931 = vpop.f32.mrb[0].mxu0
      %v7932 = vpop.f32.mrb[0].mxu0
      %v7933 = vadd.f32 %v7525, %v7932
      %v7934 = vpop.f32.mrb[0].mxu0
      %7935 = vmatprep.mubr.bf16.mxu0 0
      %7936 = vmatmul.mubr.bf16.gmra.mrb[0].mxu0 %v7479
      %v7937 = vpop.f32.mrb[0].mxu0
      %v7938 = vadd.f32 %v7525, %v7937
      %v7939 = vpop.f32.mrb[0].mxu0
      %v7940 = vpop.f32.mrb[0].mxu0
      %v7941 = vadd.f32 %v7525, %v7940
      %v7942 = vpop.f32.mrb[0].mxu0
      %7943 = vmatprep.mubr.bf16.mxu0 0
      %7944 = vmatmul.mubr.bf16.gmra.mrb[0].mxu0 %v7480
      %v7945 = vpop.f32.mrb[0].mxu0
      %v7946 = vadd.f32 %v7525, %v7945
      %v7947 = vpop.f32.mrb[0].mxu0
      %v7948 = vpop.f32.mrb[0].mxu0
      %v7949 = vadd.f32 %v7525, %v7948
      %v7950 = vpop.f32.mrb[0].mxu0
      %7951 = vmatprep.mubr.bf16.mxu0 0
      %7952 = vmatmul.mubr.bf16.gmra.mrb[0].mxu0 %v7481
      %v7953 = vpop.f32.mrb[0].mxu0
      %v7954 = vadd.f32 %v7525, %v7953
      %v7955 = vpop.f32.mrb[0].mxu0
      %v7956 = vpop.f32.mrb[0].mxu0
      %v7957 = vadd.f32 %v7525, %v7956
      %v7958 = vpop.f32.mrb[0].mxu0
      %7959 = vmatprep.mubr.bf16.mxu0 0
      %7960 = vmatmul.mubr.bf16.gmra.mrb[0].mxu0 %v7482
      %v7961 = vpop.f32.mrb[0].mxu0
      %v7962 = vadd.f32 %v7525, %v7961
      %v7963 = vpop.f32.mrb[0].mxu0
      %v7964 = vpop.f32.mrb[0].mxu0
      %v7965 = vadd.f32 %v7525, %v7964
      %v7966 = vpop.f32.mrb[0].mxu0
      %7967 = vmatprep.mubr.bf16.mxu0 0
      %7968 = vmatmul.mubr.bf16.gmra.mrb[0].mxu0 %v7483
      %v7969 = vpop.f32.mrb[0].mxu0
      %v7970 = vadd.f32 %v7525, %v7969
      %v7971 = vpop.f32.mrb[0].mxu0
      %v7972 = vpop.f32.mrb[0].mxu0
      %v7973 = vadd.f32 %v7525, %v7972
      %v7974 = vpop.f32.mrb[0].mxu0
      %7975 = vmatprep.mubr.bf16.mxu0 0
      %7976 = vmatmul.mubr.bf16.gmra.mrb[0].mxu0 %v7484
      %v7977 = vpop.f32.mrb[0].mxu0
      %v7978 = vadd.f32 %v7525, %v7977
      %v7979 = vpop.f32.mrb[0].mxu0
      %v7980 = vpop.f32.mrb[0].mxu0
      %v7981 = vadd.f32 %v7525, %v7980
      %v7982 = vpop.f32.mrb[0].mxu0
      %7983 = vmatprep.mubr.bf16.mxu0 0
      %7984 = vmatmul.mubr.bf16.gmra.mrb[0].mxu0 %v7485
      %v7985 = vpop.f32.mrb[0].mxu0
      %v7986 = vadd.f32 %v7525, %v7985
      %v7987 = vpop.f32.mrb[0].mxu0
      %v7988 = vpop.f32.mrb[0].mxu0
      %v7989 = vadd.f32 %v7525, %v7988
      %v7990 = vpop.f32.mrb[0].mxu0
      %7991 = vmatprep.mubr.bf16.mxu0 0
      %7992 = vmatmul.mubr.bf16.gmra.mrb[0].mxu0 %v7486
      %v7993 = vpop.f32.mrb[0].mxu0
      %v7994 = vadd.f32 %v7525, %v7993
      %v7995 = vpop.f32.mrb[0].mxu0
      %v7996 = vpop.f32.mrb[0].mxu0
      %v7997 = vadd.f32 %v7525, %v7996
      %v7998 = vpop.f32.mrb[0].mxu0
      %7999 = vmatprep.mubr.bf16.mxu0 0
      %8000 = vmatmul.mubr.bf16.gmra.mrb[0].mxu0 %v7487
      %v8001 = vpop.f32.mrb[0].mxu0
      %v8002 = vadd.f32 %v7525, %v8001
      %v8003 = vpop.f32.mrb[0].mxu0
      %v8004 = vpop.f32.mrb[0].mxu0
      %v8005 = vadd.f32 %v7525, %v8004
      %v8006 = vpop.f32.mrb[0].mxu0
      %8007 = vmatprep.mubr.bf16.mxu0 0
      %8008 = vmatmul.mubr.bf16.gmra.mrb[0].mxu0 %v7488
      %v8009 = vpop.f32.mrb[0].mxu0
      %v8010 = vadd.f32 %v7525, %v8009
      %v8011 = vpop.f32.mrb[0].mxu0
      %v8012 = vpop.f32.mrb[0].mxu0
      %v8013 = vadd.f32 %v7525, %v8012
      %v8014 = vpop.f32.mrb[0].mxu0
      %8015 = vmatprep.mubr.bf16.mxu0 0
      %8016 = vmatmul.mubr.bf16.gmra.mrb[0].mxu0 %v7489
      %v8017 = vpop.f32.mrb[0].mxu0
      %v8018 = vadd.f32 %v7525, %v8017
      %v8019 = vpop.f32.mrb[0].mxu0
      %v8020 = vpop.f32.mrb[0].mxu0
      %v8021 = vadd.f32 %v7525, %v8020
      %v8022 = vpop.f32.mrb[0].mxu0
      %8023 = vmatprep.mubr.bf16.mxu0 0
      %8024 = vmatmul.mubr.bf16.gmra.mrb[0].mxu0 %v7490
      %v8025 = vpop.f32.mrb[0].mxu0
      %v8026 = vadd.f32 %v7525, %v8025
      %v8027 = vpop.f32.mrb[0].mxu0
      %v8028 = vpop.f32.mrb[0].mxu0
      %v8029 = vadd.f32 %v7525, %v8028
      %v8030 = vpop.f32.mrb[0].mxu0
      %8031 = vmatprep.mubr.bf16.mxu0 0
      %8032 = vmatmul.mubr.bf16.gmra.mrb[0].mxu0 %v7491
      %v8033 = vpop.f32.mrb[0].mxu0
      %v8034 = vadd.f32 %v7525, %v8033
      %v8035 = vpop.f32.mrb[0].mxu0
      %v8036 = vpop.f32.mrb[0].mxu0
      %v8037 = vadd.f32 %v7525, %v8036
      %v8038 = vpop.f32.mrb[0].mxu0
      %8039 = vmatprep.mubr.bf16.mxu0 0
      %8040 = vmatmul.mubr.bf16.gmra.mrb[0].mxu0 %v7492
      %v8041 = vpop.f32.mrb[0].mxu0
      %v8042 = vadd.f32 %v7525, %v8041
      %v8043 = vpop.f32.mrb[0].mxu0
      %v8044 = vpop.f32.mrb[0].mxu0
      %v8045 = vadd.f32 %v7525, %v8044
      %v8046 = vpop.f32.mrb[0].mxu0
      %8047 = vmatprep.mubr.bf16.mxu0 0
      %8048 = vmatmul.mubr.bf16.gmra.mrb[0].mxu0 %v7493
      %v8049 = vpop.f32.mrb[0].mxu0
      %v8050 = vadd.f32 %v7525, %v8049
      %v8051 = vpop.f32.mrb[0].mxu0
      %v8052 = vpop.f32.mrb[0].mxu0
      %v8053 = vadd.f32 %v7525, %v8052
      %v8054 = vpop.f32.mrb[0].mxu0
      %8055 = vmatprep.mubr.bf16.mxu0 0
      %8056 = vmatmul.mubr.bf16.gmra.mrb[0].mxu0 %v7494
      %v8057 = vpop.f32.mrb[0].mxu0
      %v8058 = vadd.f32 %v7525, %v8057
      %v8059 = vpop.f32.mrb[0].mxu0
      %v8060 = vpop.f32.mrb[0].mxu0
      %v8061 = vadd.f32 %v7525, %v8060
      %v8062 = vpop.f32.mrb[0].mxu0
      %8063 = vmatprep.mubr.bf16.mxu0 0
      %8064 = vmatmul.mubr.bf16.gmra.mrb[0].mxu0 %v7495
      %v8065 = vpop.f32.mrb[0].mxu0
      %v8066 = vadd.f32 %v7525, %v8065
      %v8067 = vpop.f32.mrb[0].mxu0
      %v8068 = vpop.f32.mrb[0].mxu0
      %v8069 = vadd.f32 %v7525, %v8068
      %v8070 = vpop.f32.mrb[0].mxu0
      %8071 = vmatprep.mubr.bf16.mxu0 0
      %8072 = vmatmul.mubr.bf16.gmra.mrb[0].mxu0 %v7496
      %v8073 = vpop.f32.mrb[0].mxu0
      %v8074 = vadd.f32 %v7525, %v8073
      %v8075 = vpop.f32.mrb[0].mxu0
      %v8076 = vpop.f32.mrb[0].mxu0
      %v8077 = vadd.f32 %v7525, %v8076
      %v8078 = vpop.f32.mrb[0].mxu0
      %8079 = vmatprep.mubr.bf16.mxu0 0
      %8080 = vmatmul.mubr.bf16.gmra.mrb[0].mxu0 %v7497
      %v8081 = vpop.f32.mrb[0].mxu0
      %v8082 = vadd.f32 %v7525, %v8081
      %v8083 = vpop.f32.mrb[0].mxu0
      %v8084 = vpop.f32.mrb[0].mxu0
      %v8085 = vadd.f32 %v7525, %v8084
      %v8086 = vpop.f32.mrb[0].mxu0
      %8087 = vmatprep.mubr.bf16.mxu0 0
      %8088 = vmatmul.mubr.bf16.gmra.mrb[0].mxu0 %v7498
      %v8089 = vpop.f32.mrb[0].mxu0
      %v8090 = vadd.f32 %v7525, %v8089
      %v8091 = vpop.f32.mrb[0].mxu0
      %v8092 = vpop.f32.mrb[0].mxu0
      %v8093 = vadd.f32 %v7525, %v8092
      %v8094 = vpop.f32.mrb[0].mxu0
      %8095 = vmatprep.mubr.bf16.mxu0 0
      %8096 = vmatmul.mubr.bf16.gmra.mrb[0].mxu0 %v7499
      %v8097 = vpop.f32.mrb[0].mxu0
      %v8098 = vadd.f32 %v7525, %v8097
      %v8099 = vpop.f32.mrb[0].mxu0
      %v8100 = vpop.f32.mrb[0].mxu0
      %v8101 = vadd.f32 %v7525, %v8100
      %v8102 = vpop.f32.mrb[0].mxu0
      %8103 = vmatprep.mubr.bf16.mxu0 0
      %8104 = vmatmul.mubr.bf16.gmra.mrb[0].mxu0 %v7500
      %v8105 = vpop.f32.mrb[0].mxu0
      %v8106 = vadd.f32 %v7525, %v8105
      %v8107 = vpop.f32.mrb[0].mxu0
      %v8108 = vpop.f32.mrb[0].mxu0
      %v8109 = vadd.f32 %v7525, %v8108
      %v8110 = vpop.f32.mrb[0].mxu0
      %8111 = vmatprep.mubr.bf16.mxu0 0
      %8112 = vmatmul.mubr.bf16.gmra.mrb[0].mxu0 %v7501
      %v8113 = vpop.f32.mrb[0].mxu0
      %v8114 = vadd.f32 %v7525, %v8113
      %v8115 = vpop.f32.mrb[0].mxu0
      %v8116 = vpop.f32.mrb[0].mxu0
      %v8117 = vadd.f32 %v7525, %v8116
      %v8118 = vpop.f32.mrb[0].mxu0
      %8119 = vdwg.mxu0
      %v8120 = vmax.f32 %v7610, 0.0
      %v8121 = vmax.f32 %v7613, 0.0
      %v8122 = vmax.f32 %v7618, 0.0
      %v8123 = vmax.f32 %v7621, 0.0
      %v8124 = vmax.f32 %v7626, 0.0
      %v8125 = vmax.f32 %v7629, 0.0
      %v8126 = vmax.f32 %v7634, 0.0
      %v8127 = vmax.f32 %v7637, 0.0
      %v8128 = vmax.f32 %v7642, 0.0
      %v8129 = vmax.f32 %v7645, 0.0
      %v8130 = vmax.f32 %v7650, 0.0
      %v8131 = vmax.f32 %v7653, 0.0
      %v8132 = vmax.f32 %v7658, 0.0
      %v8133 = vmax.f32 %v7661, 0.0
      %v8134 = vmax.f32 %v7666, 0.0
      %v8135 = vmax.f32 %v7669, 0.0
      %v8136 = vmax.f32 %v7674, 0.0
      %v8137 = vmax.f32 %v7677, 0.0
      %v8138 = vmax.f32 %v7682, 0.0
      %v8139 = vmax.f32 %v7685, 0.0
      %v8140 = vmax.f32 %v7690, 0.0
      %v8141 = vmax.f32 %v7693, 0.0
      %v8142 = vmax.f32 %v7698, 0.0
      %v8143 = vmax.f32 %v7701, 0.0
      %v8144 = vmax.f32 %v7706, 0.0
      %v8145 = vmax.f32 %v7709, 0.0
      %v8146 = vmax.f32 %v7714, 0.0
      %v8147 = vmax.f32 %v7717, 0.0
      %v8148 = vmax.f32 %v7722, 0.0
      %v8149 = vmax.f32 %v7725, 0.0
      %v8150 = vmax.f32 %v7730, 0.0
      %v8151 = vmax.f32 %v7733, 0.0
      %v8152 = vmax.f32 %v7738, 0.0
      %v8153 = vmax.f32 %v7741, 0.0
      %v8154 = vmax.f32 %v7746, 0.0
      %v8155 = vmax.f32 %v7749, 0.0
      %v8156 = vmax.f32 %v7754, 0.0
      %v8157 = vmax.f32 %v7757, 0.0
      %v8158 = vmax.f32 %v7762, 0.0
      %v8159 = vmax.f32 %v7765, 0.0
      %v8160 = vmax.f32 %v7770, 0.0
      %v8161 = vmax.f32 %v7773, 0.0
      %v8162 = vmax.f32 %v7778, 0.0
      %v8163 = vmax.f32 %v7781, 0.0
      %v8164 = vmax.f32 %v7786, 0.0
      %v8165 = vmax.f32 %v7789, 0.0
      %v8166 = vmax.f32 %v7794, 0.0
      %v8167 = vmax.f32 %v7797, 0.0
      %v8168 = vmax.f32 %v7802, 0.0
      %v8169 = vmax.f32 %v7805, 0.0
      %v8170 = vmax.f32 %v7810, 0.0
      %v8171 = vmax.f32 %v7813, 0.0
      %v8172 = vmax.f32 %v7818, 0.0
      %v8173 = vmax.f32 %v7821, 0.0
      %v8174 = vmax.f32 %v7826, 0.0
      %v8175 = vmax.f32 %v7829, 0.0
      %v8176 = vmax.f32 %v7834, 0.0
      %v8177 = vmax.f32 %v7837, 0.0
      %v8178 = vmax.f32 %v7842, 0.0
      %v8179 = vmax.f32 %v7845, 0.0
      %v8180 = vmax.f32 %v7850, 0.0
      %v8181 = vmax.f32 %v7853, 0.0
      %v8182 = vmax.f32 %v7858, 0.0
      %v8183 = vmax.f32 %v7861, 0.0
      %v8184 = vmax.f32 %v7866, 0.0
      %v8185 = vmax.f32 %v7869, 0.0
      %v8186 = vmax.f32 %v7874, 0.0
      %v8187 = vmax.f32 %v7877, 0.0
      %v8188 = vmax.f32 %v7882, 0.0
      %v8189 = vmax.f32 %v7885, 0.0
      %v8190 = vmax.f32 %v7890, 0.0
      %v8191 = vmax.f32 %v7893, 0.0
      %v8192 = vmax.f32 %v7898, 0.0
      %v8193 = vmax.f32 %v7901, 0.0
      %v8194 = vmax.f32 %v7906, 0.0
      %v8195 = vmax.f32 %v7909, 0.0
      %v8196 = vmax.f32 %v7914, 0.0
      %v8197 = vmax.f32 %v7917, 0.0
      %v8198 = vmax.f32 %v7922, 0.0
      %v8199 = vmax.f32 %v7925, 0.0
      %v8200 = vmax.f32 %v7930, 0.0
      %v8201 = vmax.f32 %v7933, 0.0
      %v8202 = vmax.f32 %v7938, 0.0
      %v8203 = vmax.f32 %v7941, 0.0
      %v8204 = vmax.f32 %v7946, 0.0
      %v8205 = vmax.f32 %v7949, 0.0
      %v8206 = vmax.f32 %v7954, 0.0
      %v8207 = vmax.f32 %v7957, 0.0
      %v8208 = vmax.f32 %v7962, 0.0
      %v8209 = vmax.f32 %v7965, 0.0
      %v8210 = vmax.f32 %v7970, 0.0
      %v8211 = vmax.f32 %v7973, 0.0
      %v8212 = vmax.f32 %v7978, 0.0
      %v8213 = vmax.f32 %v7981, 0.0
      %v8214 = vmax.f32 %v7986, 0.0
      %v8215 = vmax.f32 %v7989, 0.0
      %v8216 = vmax.f32 %v7994, 0.0
      %v8217 = vmax.f32 %v7997, 0.0
      %v8218 = vmax.f32 %v8002, 0.0
      %v8219 = vmax.f32 %v8005, 0.0
      %v8220 = vmax.f32 %v8010, 0.0
      %v8221 = vmax.f32 %v8013, 0.0
      %v8222 = vmax.f32 %v8018, 0.0
      %v8223 = vmax.f32 %v8021, 0.0
      %v8224 = vmax.f32 %v8026, 0.0
      %v8225 = vmax.f32 %v8029, 0.0
      %v8226 = vmax.f32 %v8034, 0.0
      %v8227 = vmax.f32 %v8037, 0.0
      %v8228 = vmax.f32 %v8042, 0.0
      %v8229 = vmax.f32 %v8045, 0.0
      %v8230 = vmax.f32 %v8050, 0.0
      %v8231 = vmax.f32 %v8053, 0.0
      %v8232 = vmax.f32 %v8058, 0.0
      %v8233 = vmax.f32 %v8061, 0.0
      %v8234 = vmax.f32 %v8066, 0.0
      %v8235 = vmax.f32 %v8069, 0.0
      %v8236 = vmax.f32 %v8074, 0.0
      %v8237 = vmax.f32 %v8077, 0.0
      %v8238 = vmax.f32 %v8082, 0.0
      %v8239 = vmax.f32 %v8085, 0.0
      %v8240 = vmax.f32 %v8090, 0.0
      %v8241 = vmax.f32 %v8093, 0.0
      %v8242 = vmax.f32 %v8098, 0.0
      %v8243 = vmax.f32 %v8101, 0.0
      %v8244 = vmax.f32 %v8106, 0.0
      %v8245 = vmax.f32 %v8109, 0.0
      %v8246 = vmax.f32 %v8114, 0.0
      %v8247 = vmax.f32 %v8117, 0.0
      %v8248 = vpack.c.bf16 %v8121, %v8120
      %v8249 = vpack.c.bf16 %v8123, %v8122
      %v8250 = vpack.c.bf16 %v8125, %v8124
      %v8251 = vpack.c.bf16 %v8127, %v8126
      %v8252 = vpack.c.bf16 %v8129, %v8128
      %v8253 = vpack.c.bf16 %v8131, %v8130
      %v8254 = vpack.c.bf16 %v8133, %v8132
      %v8255 = vpack.c.bf16 %v8135, %v8134
      %v8256 = vpack.c.bf16 %v8137, %v8136
      %v8257 = vpack.c.bf16 %v8139, %v8138
      %v8258 = vpack.c.bf16 %v8141, %v8140
      %v8259 = vpack.c.bf16 %v8143, %v8142
      %v8260 = vpack.c.bf16 %v8145, %v8144
      %v8261 = vpack.c.bf16 %v8147, %v8146
      %v8262 = vpack.c.bf16 %v8149, %v8148
      %v8263 = vpack.c.bf16 %v8151, %v8150
      %v8264 = vpack.c.bf16 %v8153, %v8152
      %v8265 = vpack.c.bf16 %v8155, %v8154
      %v8266 = vpack.c.bf16 %v8157, %v8156
      %v8267 = vpack.c.bf16 %v8159, %v8158
      %v8268 = vpack.c.bf16 %v8161, %v8160
      %v8269 = vpack.c.bf16 %v8163, %v8162
      %v8270 = vpack.c.bf16 %v8165, %v8164
      %v8271 = vpack.c.bf16 %v8167, %v8166
      %v8272 = vpack.c.bf16 %v8169, %v8168
      %v8273 = vpack.c.bf16 %v8171, %v8170
      %v8274 = vpack.c.bf16 %v8173, %v8172
      %v8275 = vpack.c.bf16 %v8175, %v8174
      %v8276 = vpack.c.bf16 %v8177, %v8176
      %v8277 = vpack.c.bf16 %v8179, %v8178
      %v8278 = vpack.c.bf16 %v8181, %v8180
      %v8279 = vpack.c.bf16 %v8183, %v8182
      %v8280 = vpack.c.bf16 %v8185, %v8184
      %v8281 = vpack.c.bf16 %v8187, %v8186
      %v8282 = vpack.c.bf16 %v8189, %v8188
      %v8283 = vpack.c.bf16 %v8191, %v8190
      %v8284 = vpack.c.bf16 %v8193, %v8192
      %v8285 = vpack.c.bf16 %v8195, %v8194
      %v8286 = vpack.c.bf16 %v8197, %v8196
      %v8287 = vpack.c.bf16 %v8199, %v8198
      %v8288 = vpack.c.bf16 %v8201, %v8200
      %v8289 = vpack.c.bf16 %v8203, %v8202
      %v8290 = vpack.c.bf16 %v8205, %v8204
      %v8291 = vpack.c.bf16 %v8207, %v8206
      %v8292 = vpack.c.bf16 %v8209, %v8208
      %v8293 = vpack.c.bf16 %v8211, %v8210
      %v8294 = vpack.c.bf16 %v8213, %v8212
      %v8295 = vpack.c.bf16 %v8215, %v8214
      %v8296 = vpack.c.bf16 %v8217, %v8216
      %v8297 = vpack.c.bf16 %v8219, %v8218
      %v8298 = vpack.c.bf16 %v8221, %v8220
      %v8299 = vpack.c.bf16 %v8223, %v8222
      %v8300 = vpack.c.bf16 %v8225, %v8224
      %v8301 = vpack.c.bf16 %v8227, %v8226
      %v8302 = vpack.c.bf16 %v8229, %v8228
      %v8303 = vpack.c.bf16 %v8231, %v8230
      %v8304 = vpack.c.bf16 %v8233, %v8232
      %v8305 = vpack.c.bf16 %v8235, %v8234
      %v8306 = vpack.c.bf16 %v8237, %v8236
      %v8307 = vpack.c.bf16 %v8239, %v8238
      %v8308 = vpack.c.bf16 %v8241, %v8240
      %v8309 = vpack.c.bf16 %v8243, %v8242
      %v8310 = vpack.c.bf16 %v8245, %v8244
      %v8311 = vpack.c.bf16 %v8247, %v8246
      %s8312 = scalar_lea.vmem %s1, 448
      %v8313 = vld [vmem:[%s8312] sm:$0xf]
      %v8314 = vld [vmem:[%s8312 + $0x4] sm:$0xf]
      %v8315 = vld [vmem:[%s8312 + $0x8] sm:$0xf]
      %v8316 = vld [vmem:[%s8312 + $0xc] sm:$0xf]
      %v8317 = vld [vmem:[%s8312 + $0x10] sm:$0xf]
      %v8318 = vld [vmem:[%s8312 + $0x14] sm:$0xf]
      %v8319 = vld [vmem:[%s8312 + $0x18] sm:$0xf]
      %v8320 = vld [vmem:[%s8312 + $0x1c] sm:$0xf]
      %v8321 = vld [vmem:[%s8312 + $0x20] sm:$0xf]
      %v8322 = vld [vmem:[%s8312 + $0x24] sm:$0xf]
      %v8323 = vld [vmem:[%s8312 + $0x28] sm:$0xf]
      %v8324 = vld [vmem:[%s8312 + $0x2c] sm:$0xf]
      %v8325 = vld [vmem:[%s8312 + $0x30] sm:$0xf]
      %v8326 = vld [vmem:[%s8312 + $0x34] sm:$0xf]
      %v8327 = vld [vmem:[%s8312 + $0x38] sm:$0xf]
      %v8328 = vld [vmem:[%s8312 + $0x3c] sm:$0xf]
      %s8329 = scalar_lea.vmem %s3, 8
      %v8330 = vld [vmem:[%s8329] sm:$0x1]
      %v8332 = vlaneseq
      %v8333 = vshrl.u32 %v8332, 7
      %v8334 = vsub.s32 0, %v8333
      %v8335 = vrot.slane %v8330, %v8334
      %v8353 = vunpack.c.l.b16 %v8313
      %v8354 = vunpack.c.l.b16 %v8314
      %v8355 = vunpack.c.l.b16 %v8315
      %v8356 = vunpack.c.l.b16 %v8316
      %v8357 = vunpack.c.l.b16 %v8317
      %v8358 = vunpack.c.l.b16 %v8318
      %v8359 = vunpack.c.l.b16 %v8319
      %v8360 = vunpack.c.l.b16 %v8320
      %v8361 = vunpack.c.l.b16 %v8321
      %v8362 = vunpack.c.l.b16 %v8322
      %v8363 = vunpack.c.l.b16 %v8323
      %v8364 = vunpack.c.l.b16 %v8324
      %v8365 = vunpack.c.l.b16 %v8325
      %v8366 = vunpack.c.l.b16 %v8326
      %v8367 = vunpack.c.l.b16 %v8327
      %v8368 = vunpack.c.l.b16 %v8328
      %v8369 = vpack.c.b16 %v8354, %v8353
      %v8370 = vpack.c.b16 %v8356, %v8355
      %v8371 = vpack.c.b16 %v8358, %v8357
      %v8372 = vpack.c.b16 %v8360, %v8359
      %v8373 = vpack.c.b16 %v8362, %v8361
      %v8374 = vpack.c.b16 %v8364, %v8363
      %v8375 = vpack.c.b16 %v8366, %v8365
      %v8376 = vpack.c.b16 %v8368, %v8367
      %8385 = vmatprep.subr.bf16.mxu0 0
      %8386 = vmatpush1.bf16.msra.mxu0 %v8369
      %8387 = vmatprep.subr.bf16.mxu0 0
      %8388 = vmatpush1.bf16.msra.mxu0 %v8370
      %8389 = vmatprep.subr.bf16.mxu0 0
      %8390 = vmatpush1.bf16.msra.mxu0 %v8371
      %8391 = vmatprep.subr.bf16.mxu0 0
      %8392 = vmatpush1.bf16.msra.mxu0 %v8372
      %8393 = vmatprep.subr.bf16.mxu0 0
      %8394 = vmatpush1.bf16.msra.mxu0 %v8373
      %8395 = vmatprep.subr.bf16.mxu0 0
      %8396 = vmatpush1.bf16.msra.mxu0 %v8374
      %8397 = vmatprep.subr.bf16.mxu0 0
      %8398 = vmatpush1.bf16.msra.mxu0 %v8375
      %8399 = vmatprep.subr.bf16.mxu0 0
      %8400 = vmatpush1.bf16.msra.mxu0 %v8376
      %8401 = vmatprep.subr.bf16.mxu0 0
      %8402 = vmatpush1.bf16.msra.mxu0 0
      %8403 = vmatprep.subr.bf16.mxu0 0
      %8404 = vmatpush1.bf16.msra.mxu0 0
      %8405 = vmatprep.subr.bf16.mxu0 0
      %8406 = vmatpush1.bf16.msra.mxu0 0
      %8407 = vmatprep.subr.bf16.mxu0 0
      %8408 = vmatpush1.bf16.msra.mxu0 0
      %8409 = vmatprep.subr.bf16.mxu0 0
      %8410 = vmatpush1.bf16.msra.mxu0 0
      %8411 = vmatprep.subr.bf16.mxu0 0
      %8412 = vmatpush1.bf16.msra.mxu0 0
      %8413 = vmatprep.subr.bf16.mxu0 0
      %8414 = vmatpush1.bf16.msra.mxu0 0
      %8415 = vmatprep.subr.bf16.mxu0 0
      %8416 = vmatpush1.bf16.msra.mxu0 0
      %8417 = vmatprep.mubr.bf16.mxu0 0
      %8418 = vmatmul.mubr.bf16.gmra.mrb[0].mxu0 %v8248
      %v8419 = vpop.f32.mrb[0].mxu0
      %v8420 = vadd.f32 %v8335, %v8419
      %v8421 = vpop.f32.mrb[0].mxu0
      %v8422 = vpop.f32.mrb[0].mxu0
      %v8423 = vadd.f32 %v8335, %v8422
      %v8424 = vpop.f32.mrb[0].mxu0
      %8425 = vmatprep.mubr.bf16.mxu0 0
      %8426 = vmatmul.mubr.bf16.gmra.mrb[0].mxu0 %v8249
      %v8427 = vpop.f32.mrb[0].mxu0
      %v8428 = vadd.f32 %v8335, %v8427
      %v8429 = vpop.f32.mrb[0].mxu0
      %v8430 = vpop.f32.mrb[0].mxu0
      %v8431 = vadd.f32 %v8335, %v8430
      %v8432 = vpop.f32.mrb[0].mxu0
      %8433 = vmatprep.mubr.bf16.mxu0 0
      %8434 = vmatmul.mubr.bf16.gmra.mrb[0].mxu0 %v8250
      %v8435 = vpop.f32.mrb[0].mxu0
      %v8436 = vadd.f32 %v8335, %v8435
      %v8437 = vpop.f32.mrb[0].mxu0
      %v8438 = vpop.f32.mrb[0].mxu0
      %v8439 = vadd.f32 %v8335, %v8438
      %v8440 = vpop.f32.mrb[0].mxu0
      %8441 = vmatprep.mubr.bf16.mxu0 0
      %8442 = vmatmul.mubr.bf16.gmra.mrb[0].mxu0 %v8251
      %v8443 = vpop.f32.mrb[0].mxu0
      %v8444 = vadd.f32 %v8335, %v8443
      %v8445 = vpop.f32.mrb[0].mxu0
      %v8446 = vpop.f32.mrb[0].mxu0
      %v8447 = vadd.f32 %v8335, %v8446
      %v8448 = vpop.f32.mrb[0].mxu0
      %8449 = vmatprep.mubr.bf16.mxu0 0
      %8450 = vmatmul.mubr.bf16.gmra.mrb[0].mxu0 %v8252
      %v8451 = vpop.f32.mrb[0].mxu0
      %v8452 = vadd.f32 %v8335, %v8451
      %v8453 = vpop.f32.mrb[0].mxu0
      %v8454 = vpop.f32.mrb[0].mxu0
      %v8455 = vadd.f32 %v8335, %v8454
      %v8456 = vpop.f32.mrb[0].mxu0
      %8457 = vmatprep.mubr.bf16.mxu0 0
      %8458 = vmatmul.mubr.bf16.gmra.mrb[0].mxu0 %v8253
      %v8459 = vpop.f32.mrb[0].mxu0
      %v8460 = vadd.f32 %v8335, %v8459
      %v8461 = vpop.f32.mrb[0].mxu0
      %v8462 = vpop.f32.mrb[0].mxu0
      %v8463 = vadd.f32 %v8335, %v8462
      %v8464 = vpop.f32.mrb[0].mxu0
      %8465 = vmatprep.mubr.bf16.mxu0 0
      %8466 = vmatmul.mubr.bf16.gmra.mrb[0].mxu0 %v8254
      %v8467 = vpop.f32.mrb[0].mxu0
      %v8468 = vadd.f32 %v8335, %v8467
      %v8469 = vpop.f32.mrb[0].mxu0
      %v8470 = vpop.f32.mrb[0].mxu0
      %v8471 = vadd.f32 %v8335, %v8470
      %v8472 = vpop.f32.mrb[0].mxu0
      %8473 = vmatprep.mubr.bf16.mxu0 0
      %8474 = vmatmul.mubr.bf16.gmra.mrb[0].mxu0 %v8255
      %v8475 = vpop.f32.mrb[0].mxu0
      %v8476 = vadd.f32 %v8335, %v8475
      %v8477 = vpop.f32.mrb[0].mxu0
      %v8478 = vpop.f32.mrb[0].mxu0
      %v8479 = vadd.f32 %v8335, %v8478
      %v8480 = vpop.f32.mrb[0].mxu0
      %8481 = vmatprep.mubr.bf16.mxu0 0
      %8482 = vmatmul.mubr.bf16.gmra.mrb[0].mxu0 %v8256
      %v8483 = vpop.f32.mrb[0].mxu0
      %v8484 = vadd.f32 %v8335, %v8483
      %v8485 = vpop.f32.mrb[0].mxu0
      %v8486 = vpop.f32.mrb[0].mxu0
      %v8487 = vadd.f32 %v8335, %v8486
      %v8488 = vpop.f32.mrb[0].mxu0
      %8489 = vmatprep.mubr.bf16.mxu0 0
      %8490 = vmatmul.mubr.bf16.gmra.mrb[0].mxu0 %v8257
      %v8491 = vpop.f32.mrb[0].mxu0
      %v8492 = vadd.f32 %v8335, %v8491
      %v8493 = vpop.f32.mrb[0].mxu0
      %v8494 = vpop.f32.mrb[0].mxu0
      %v8495 = vadd.f32 %v8335, %v8494
      %v8496 = vpop.f32.mrb[0].mxu0
      %8497 = vmatprep.mubr.bf16.mxu0 0
      %8498 = vmatmul.mubr.bf16.gmra.mrb[0].mxu0 %v8258
      %v8499 = vpop.f32.mrb[0].mxu0
      %v8500 = vadd.f32 %v8335, %v8499
      %v8501 = vpop.f32.mrb[0].mxu0
      %v8502 = vpop.f32.mrb[0].mxu0
      %v8503 = vadd.f32 %v8335, %v8502
      %v8504 = vpop.f32.mrb[0].mxu0
      %8505 = vmatprep.mubr.bf16.mxu0 0
      %8506 = vmatmul.mubr.bf16.gmra.mrb[0].mxu0 %v8259
      %v8507 = vpop.f32.mrb[0].mxu0
      %v8508 = vadd.f32 %v8335, %v8507
      %v8509 = vpop.f32.mrb[0].mxu0
      %v8510 = vpop.f32.mrb[0].mxu0
      %v8511 = vadd.f32 %v8335, %v8510
      %v8512 = vpop.f32.mrb[0].mxu0
      %8513 = vmatprep.mubr.bf16.mxu0 0
      %8514 = vmatmul.mubr.bf16.gmra.mrb[0].mxu0 %v8260
      %v8515 = vpop.f32.mrb[0].mxu0
      %v8516 = vadd.f32 %v8335, %v8515
      %v8517 = vpop.f32.mrb[0].mxu0
      %v8518 = vpop.f32.mrb[0].mxu0
      %v8519 = vadd.f32 %v8335, %v8518
      %v8520 = vpop.f32.mrb[0].mxu0
      %8521 = vmatprep.mubr.bf16.mxu0 0
      %8522 = vmatmul.mubr.bf16.gmra.mrb[0].mxu0 %v8261
      %v8523 = vpop.f32.mrb[0].mxu0
      %v8524 = vadd.f32 %v8335, %v8523
      %v8525 = vpop.f32.mrb[0].mxu0
      %v8526 = vpop.f32.mrb[0].mxu0
      %v8527 = vadd.f32 %v8335, %v8526
      %v8528 = vpop.f32.mrb[0].mxu0
      %8529 = vmatprep.mubr.bf16.mxu0 0
      %8530 = vmatmul.mubr.bf16.gmra.mrb[0].mxu0 %v8262
      %v8531 = vpop.f32.mrb[0].mxu0
      %v8532 = vadd.f32 %v8335, %v8531
      %v8533 = vpop.f32.mrb[0].mxu0
      %v8534 = vpop.f32.mrb[0].mxu0
      %v8535 = vadd.f32 %v8335, %v8534
      %v8536 = vpop.f32.mrb[0].mxu0
      %8537 = vmatprep.mubr.bf16.mxu0 0
      %8538 = vmatmul.mubr.bf16.gmra.mrb[0].mxu0 %v8263
      %v8539 = vpop.f32.mrb[0].mxu0
      %v8540 = vadd.f32 %v8335, %v8539
      %v8541 = vpop.f32.mrb[0].mxu0
      %v8542 = vpop.f32.mrb[0].mxu0
      %v8543 = vadd.f32 %v8335, %v8542
      %v8544 = vpop.f32.mrb[0].mxu0
      %8545 = vmatprep.mubr.bf16.mxu0 0
      %8546 = vmatmul.mubr.bf16.gmra.mrb[0].mxu0 %v8264
      %v8547 = vpop.f32.mrb[0].mxu0
      %v8548 = vadd.f32 %v8335, %v8547
      %v8549 = vpop.f32.mrb[0].mxu0
      %v8550 = vpop.f32.mrb[0].mxu0
      %v8551 = vadd.f32 %v8335, %v8550
      %v8552 = vpop.f32.mrb[0].mxu0
      %8553 = vmatprep.mubr.bf16.mxu0 0
      %8554 = vmatmul.mubr.bf16.gmra.mrb[0].mxu0 %v8265
      %v8555 = vpop.f32.mrb[0].mxu0
      %v8556 = vadd.f32 %v8335, %v8555
      %v8557 = vpop.f32.mrb[0].mxu0
      %v8558 = vpop.f32.mrb[0].mxu0
      %v8559 = vadd.f32 %v8335, %v8558
      %v8560 = vpop.f32.mrb[0].mxu0
      %8561 = vmatprep.mubr.bf16.mxu0 0
      %8562 = vmatmul.mubr.bf16.gmra.mrb[0].mxu0 %v8266
      %v8563 = vpop.f32.mrb[0].mxu0
      %v8564 = vadd.f32 %v8335, %v8563
      %v8565 = vpop.f32.mrb[0].mxu0
      %v8566 = vpop.f32.mrb[0].mxu0
      %v8567 = vadd.f32 %v8335, %v8566
      %v8568 = vpop.f32.mrb[0].mxu0
      %8569 = vmatprep.mubr.bf16.mxu0 0
      %8570 = vmatmul.mubr.bf16.gmra.mrb[0].mxu0 %v8267
      %v8571 = vpop.f32.mrb[0].mxu0
      %v8572 = vadd.f32 %v8335, %v8571
      %v8573 = vpop.f32.mrb[0].mxu0
      %v8574 = vpop.f32.mrb[0].mxu0
      %v8575 = vadd.f32 %v8335, %v8574
      %v8576 = vpop.f32.mrb[0].mxu0
      %8577 = vmatprep.mubr.bf16.mxu0 0
      %8578 = vmatmul.mubr.bf16.gmra.mrb[0].mxu0 %v8268
      %v8579 = vpop.f32.mrb[0].mxu0
      %v8580 = vadd.f32 %v8335, %v8579
      %v8581 = vpop.f32.mrb[0].mxu0
      %v8582 = vpop.f32.mrb[0].mxu0
      %v8583 = vadd.f32 %v8335, %v8582
      %v8584 = vpop.f32.mrb[0].mxu0
      %8585 = vmatprep.mubr.bf16.mxu0 0
      %8586 = vmatmul.mubr.bf16.gmra.mrb[0].mxu0 %v8269
      %v8587 = vpop.f32.mrb[0].mxu0
      %v8588 = vadd.f32 %v8335, %v8587
      %v8589 = vpop.f32.mrb[0].mxu0
      %v8590 = vpop.f32.mrb[0].mxu0
      %v8591 = vadd.f32 %v8335, %v8590
      %v8592 = vpop.f32.mrb[0].mxu0
      %8593 = vmatprep.mubr.bf16.mxu0 0
      %8594 = vmatmul.mubr.bf16.gmra.mrb[0].mxu0 %v8270
      %v8595 = vpop.f32.mrb[0].mxu0
      %v8596 = vadd.f32 %v8335, %v8595
      %v8597 = vpop.f32.mrb[0].mxu0
      %v8598 = vpop.f32.mrb[0].mxu0
      %v8599 = vadd.f32 %v8335, %v8598
      %v8600 = vpop.f32.mrb[0].mxu0
      %8601 = vmatprep.mubr.bf16.mxu0 0
      %8602 = vmatmul.mubr.bf16.gmra.mrb[0].mxu0 %v8271
      %v8603 = vpop.f32.mrb[0].mxu0
      %v8604 = vadd.f32 %v8335, %v8603
      %v8605 = vpop.f32.mrb[0].mxu0
      %v8606 = vpop.f32.mrb[0].mxu0
      %v8607 = vadd.f32 %v8335, %v8606
      %v8608 = vpop.f32.mrb[0].mxu0
      %8609 = vmatprep.mubr.bf16.mxu0 0
      %8610 = vmatmul.mubr.bf16.gmra.mrb[0].mxu0 %v8272
      %v8611 = vpop.f32.mrb[0].mxu0
      %v8612 = vadd.f32 %v8335, %v8611
      %v8613 = vpop.f32.mrb[0].mxu0
      %v8614 = vpop.f32.mrb[0].mxu0
      %v8615 = vadd.f32 %v8335, %v8614
      %v8616 = vpop.f32.mrb[0].mxu0
      %8617 = vmatprep.mubr.bf16.mxu0 0
      %8618 = vmatmul.mubr.bf16.gmra.mrb[0].mxu0 %v8273
      %v8619 = vpop.f32.mrb[0].mxu0
      %v8620 = vadd.f32 %v8335, %v8619
      %v8621 = vpop.f32.mrb[0].mxu0
      %v8622 = vpop.f32.mrb[0].mxu0
      %v8623 = vadd.f32 %v8335, %v8622
      %v8624 = vpop.f32.mrb[0].mxu0
      %8625 = vmatprep.mubr.bf16.mxu0 0
      %8626 = vmatmul.mubr.bf16.gmra.mrb[0].mxu0 %v8274
      %v8627 = vpop.f32.mrb[0].mxu0
      %v8628 = vadd.f32 %v8335, %v8627
      %v8629 = vpop.f32.mrb[0].mxu0
      %v8630 = vpop.f32.mrb[0].mxu0
      %v8631 = vadd.f32 %v8335, %v8630
      %v8632 = vpop.f32.mrb[0].mxu0
      %8633 = vmatprep.mubr.bf16.mxu0 0
      %8634 = vmatmul.mubr.bf16.gmra.mrb[0].mxu0 %v8275
      %v8635 = vpop.f32.mrb[0].mxu0
      %v8636 = vadd.f32 %v8335, %v8635
      %v8637 = vpop.f32.mrb[0].mxu0
      %v8638 = vpop.f32.mrb[0].mxu0
      %v8639 = vadd.f32 %v8335, %v8638
      %v8640 = vpop.f32.mrb[0].mxu0
      %8641 = vmatprep.mubr.bf16.mxu0 0
      %8642 = vmatmul.mubr.bf16.gmra.mrb[0].mxu0 %v8276
      %v8643 = vpop.f32.mrb[0].mxu0
      %v8644 = vadd.f32 %v8335, %v8643
      %v8645 = vpop.f32.mrb[0].mxu0
      %v8646 = vpop.f32.mrb[0].mxu0
      %v8647 = vadd.f32 %v8335, %v8646
      %v8648 = vpop.f32.mrb[0].mxu0
      %8649 = vmatprep.mubr.bf16.mxu0 0
      %8650 = vmatmul.mubr.bf16.gmra.mrb[0].mxu0 %v8277
      %v8651 = vpop.f32.mrb[0].mxu0
      %v8652 = vadd.f32 %v8335, %v8651
      %v8653 = vpop.f32.mrb[0].mxu0
      %v8654 = vpop.f32.mrb[0].mxu0
      %v8655 = vadd.f32 %v8335, %v8654
      %v8656 = vpop.f32.mrb[0].mxu0
      %8657 = vmatprep.mubr.bf16.mxu0 0
      %8658 = vmatmul.mubr.bf16.gmra.mrb[0].mxu0 %v8278
      %v8659 = vpop.f32.mrb[0].mxu0
      %v8660 = vadd.f32 %v8335, %v8659
      %v8661 = vpop.f32.mrb[0].mxu0
      %v8662 = vpop.f32.mrb[0].mxu0
      %v8663 = vadd.f32 %v8335, %v8662
      %v8664 = vpop.f32.mrb[0].mxu0
      %8665 = vmatprep.mubr.bf16.mxu0 0
      %8666 = vmatmul.mubr.bf16.gmra.mrb[0].mxu0 %v8279
      %v8667 = vpop.f32.mrb[0].mxu0
      %v8668 = vadd.f32 %v8335, %v8667
      %v8669 = vpop.f32.mrb[0].mxu0
      %v8670 = vpop.f32.mrb[0].mxu0
      %v8671 = vadd.f32 %v8335, %v8670
      %v8672 = vpop.f32.mrb[0].mxu0
      %8673 = vmatprep.mubr.bf16.mxu0 0
      %8674 = vmatmul.mubr.bf16.gmra.mrb[0].mxu0 %v8280
      %v8675 = vpop.f32.mrb[0].mxu0
      %v8676 = vadd.f32 %v8335, %v8675
      %v8677 = vpop.f32.mrb[0].mxu0
      %v8678 = vpop.f32.mrb[0].mxu0
      %v8679 = vadd.f32 %v8335, %v8678
      %v8680 = vpop.f32.mrb[0].mxu0
      %8681 = vmatprep.mubr.bf16.mxu0 0
      %8682 = vmatmul.mubr.bf16.gmra.mrb[0].mxu0 %v8281
      %v8683 = vpop.f32.mrb[0].mxu0
      %v8684 = vadd.f32 %v8335, %v8683
      %v8685 = vpop.f32.mrb[0].mxu0
      %v8686 = vpop.f32.mrb[0].mxu0
      %v8687 = vadd.f32 %v8335, %v8686
      %v8688 = vpop.f32.mrb[0].mxu0
      %8689 = vmatprep.mubr.bf16.mxu0 0
      %8690 = vmatmul.mubr.bf16.gmra.mrb[0].mxu0 %v8282
      %v8691 = vpop.f32.mrb[0].mxu0
      %v8692 = vadd.f32 %v8335, %v8691
      %v8693 = vpop.f32.mrb[0].mxu0
      %v8694 = vpop.f32.mrb[0].mxu0
      %v8695 = vadd.f32 %v8335, %v8694
      %v8696 = vpop.f32.mrb[0].mxu0
      %8697 = vmatprep.mubr.bf16.mxu0 0
      %8698 = vmatmul.mubr.bf16.gmra.mrb[0].mxu0 %v8283
      %v8699 = vpop.f32.mrb[0].mxu0
      %v8700 = vadd.f32 %v8335, %v8699
      %v8701 = vpop.f32.mrb[0].mxu0
      %v8702 = vpop.f32.mrb[0].mxu0
      %v8703 = vadd.f32 %v8335, %v8702
      %v8704 = vpop.f32.mrb[0].mxu0
      %8705 = vmatprep.mubr.bf16.mxu0 0
      %8706 = vmatmul.mubr.bf16.gmra.mrb[0].mxu0 %v8284
      %v8707 = vpop.f32.mrb[0].mxu0
      %v8708 = vadd.f32 %v8335, %v8707
      %v8709 = vpop.f32.mrb[0].mxu0
      %v8710 = vpop.f32.mrb[0].mxu0
      %v8711 = vadd.f32 %v8335, %v8710
      %v8712 = vpop.f32.mrb[0].mxu0
      %8713 = vmatprep.mubr.bf16.mxu0 0
      %8714 = vmatmul.mubr.bf16.gmra.mrb[0].mxu0 %v8285
      %v8715 = vpop.f32.mrb[0].mxu0
      %v8716 = vadd.f32 %v8335, %v8715
      %v8717 = vpop.f32.mrb[0].mxu0
      %v8718 = vpop.f32.mrb[0].mxu0
      %v8719 = vadd.f32 %v8335, %v8718
      %v8720 = vpop.f32.mrb[0].mxu0
      %8721 = vmatprep.mubr.bf16.mxu0 0
      %8722 = vmatmul.mubr.bf16.gmra.mrb[0].mxu0 %v8286
      %v8723 = vpop.f32.mrb[0].mxu0
      %v8724 = vadd.f32 %v8335, %v8723
      %v8725 = vpop.f32.mrb[0].mxu0
      %v8726 = vpop.f32.mrb[0].mxu0
      %v8727 = vadd.f32 %v8335, %v8726
      %v8728 = vpop.f32.mrb[0].mxu0
      %8729 = vmatprep.mubr.bf16.mxu0 0
      %8730 = vmatmul.mubr.bf16.gmra.mrb[0].mxu0 %v8287
      %v8731 = vpop.f32.mrb[0].mxu0
      %v8732 = vadd.f32 %v8335, %v8731
      %v8733 = vpop.f32.mrb[0].mxu0
      %v8734 = vpop.f32.mrb[0].mxu0
      %v8735 = vadd.f32 %v8335, %v8734
      %v8736 = vpop.f32.mrb[0].mxu0
      %8737 = vmatprep.mubr.bf16.mxu0 0
      %8738 = vmatmul.mubr.bf16.gmra.mrb[0].mxu0 %v8288
      %v8739 = vpop.f32.mrb[0].mxu0
      %v8740 = vadd.f32 %v8335, %v8739
      %v8741 = vpop.f32.mrb[0].mxu0
      %v8742 = vpop.f32.mrb[0].mxu0
      %v8743 = vadd.f32 %v8335, %v8742
      %v8744 = vpop.f32.mrb[0].mxu0
      %8745 = vmatprep.mubr.bf16.mxu0 0
      %8746 = vmatmul.mubr.bf16.gmra.mrb[0].mxu0 %v8289
      %v8747 = vpop.f32.mrb[0].mxu0
      %v8748 = vadd.f32 %v8335, %v8747
      %v8749 = vpop.f32.mrb[0].mxu0
      %v8750 = vpop.f32.mrb[0].mxu0
      %v8751 = vadd.f32 %v8335, %v8750
      %v8752 = vpop.f32.mrb[0].mxu0
      %8753 = vmatprep.mubr.bf16.mxu0 0
      %8754 = vmatmul.mubr.bf16.gmra.mrb[0].mxu0 %v8290
      %v8755 = vpop.f32.mrb[0].mxu0
      %v8756 = vadd.f32 %v8335, %v8755
      %v8757 = vpop.f32.mrb[0].mxu0
      %v8758 = vpop.f32.mrb[0].mxu0
      %v8759 = vadd.f32 %v8335, %v8758
      %v8760 = vpop.f32.mrb[0].mxu0
      %8761 = vmatprep.mubr.bf16.mxu0 0
      %8762 = vmatmul.mubr.bf16.gmra.mrb[0].mxu0 %v8291
      %v8763 = vpop.f32.mrb[0].mxu0
      %v8764 = vadd.f32 %v8335, %v8763
      %v8765 = vpop.f32.mrb[0].mxu0
      %v8766 = vpop.f32.mrb[0].mxu0
      %v8767 = vadd.f32 %v8335, %v8766
      %v8768 = vpop.f32.mrb[0].mxu0
      %8769 = vmatprep.mubr.bf16.mxu0 0
      %8770 = vmatmul.mubr.bf16.gmra.mrb[0].mxu0 %v8292
      %v8771 = vpop.f32.mrb[0].mxu0
      %v8772 = vadd.f32 %v8335, %v8771
      %v8773 = vpop.f32.mrb[0].mxu0
      %v8774 = vpop.f32.mrb[0].mxu0
      %v8775 = vadd.f32 %v8335, %v8774
      %v8776 = vpop.f32.mrb[0].mxu0
      %8777 = vmatprep.mubr.bf16.mxu0 0
      %8778 = vmatmul.mubr.bf16.gmra.mrb[0].mxu0 %v8293
      %v8779 = vpop.f32.mrb[0].mxu0
      %v8780 = vadd.f32 %v8335, %v8779
      %v8781 = vpop.f32.mrb[0].mxu0
      %v8782 = vpop.f32.mrb[0].mxu0
      %v8783 = vadd.f32 %v8335, %v8782
      %v8784 = vpop.f32.mrb[0].mxu0
      %8785 = vmatprep.mubr.bf16.mxu0 0
      %8786 = vmatmul.mubr.bf16.gmra.mrb[0].mxu0 %v8294
      %v8787 = vpop.f32.mrb[0].mxu0
      %v8788 = vadd.f32 %v8335, %v8787
      %v8789 = vpop.f32.mrb[0].mxu0
      %v8790 = vpop.f32.mrb[0].mxu0
      %v8791 = vadd.f32 %v8335, %v8790
      %v8792 = vpop.f32.mrb[0].mxu0
      %8793 = vmatprep.mubr.bf16.mxu0 0
      %8794 = vmatmul.mubr.bf16.gmra.mrb[0].mxu0 %v8295
      %v8795 = vpop.f32.mrb[0].mxu0
      %v8796 = vadd.f32 %v8335, %v8795
      %v8797 = vpop.f32.mrb[0].mxu0
      %v8798 = vpop.f32.mrb[0].mxu0
      %v8799 = vadd.f32 %v8335, %v8798
      %v8800 = vpop.f32.mrb[0].mxu0
      %8801 = vmatprep.mubr.bf16.mxu0 0
      %8802 = vmatmul.mubr.bf16.gmra.mrb[0].mxu0 %v8296
      %v8803 = vpop.f32.mrb[0].mxu0
      %v8804 = vadd.f32 %v8335, %v8803
      %v8805 = vpop.f32.mrb[0].mxu0
      %v8806 = vpop.f32.mrb[0].mxu0
      %v8807 = vadd.f32 %v8335, %v8806
      %v8808 = vpop.f32.mrb[0].mxu0
      %8809 = vmatprep.mubr.bf16.mxu0 0
      %8810 = vmatmul.mubr.bf16.gmra.mrb[0].mxu0 %v8297
      %v8811 = vpop.f32.mrb[0].mxu0
      %v8812 = vadd.f32 %v8335, %v8811
      %v8813 = vpop.f32.mrb[0].mxu0
      %v8814 = vpop.f32.mrb[0].mxu0
      %v8815 = vadd.f32 %v8335, %v8814
      %v8816 = vpop.f32.mrb[0].mxu0
      %8817 = vmatprep.mubr.bf16.mxu0 0
      %8818 = vmatmul.mubr.bf16.gmra.mrb[0].mxu0 %v8298
      %v8819 = vpop.f32.mrb[0].mxu0
      %v8820 = vadd.f32 %v8335, %v8819
      %v8821 = vpop.f32.mrb[0].mxu0
      %v8822 = vpop.f32.mrb[0].mxu0
      %v8823 = vadd.f32 %v8335, %v8822
      %v8824 = vpop.f32.mrb[0].mxu0
      %8825 = vmatprep.mubr.bf16.mxu0 0
      %8826 = vmatmul.mubr.bf16.gmra.mrb[0].mxu0 %v8299
      %v8827 = vpop.f32.mrb[0].mxu0
      %v8828 = vadd.f32 %v8335, %v8827
      %v8829 = vpop.f32.mrb[0].mxu0
      %v8830 = vpop.f32.mrb[0].mxu0
      %v8831 = vadd.f32 %v8335, %v8830
      %v8832 = vpop.f32.mrb[0].mxu0
      %8833 = vmatprep.mubr.bf16.mxu0 0
      %8834 = vmatmul.mubr.bf16.gmra.mrb[0].mxu0 %v8300
      %v8835 = vpop.f32.mrb[0].mxu0
      %v8836 = vadd.f32 %v8335, %v8835
      %v8837 = vpop.f32.mrb[0].mxu0
      %v8838 = vpop.f32.mrb[0].mxu0
      %v8839 = vadd.f32 %v8335, %v8838
      %v8840 = vpop.f32.mrb[0].mxu0
      %8841 = vmatprep.mubr.bf16.mxu0 0
      %8842 = vmatmul.mubr.bf16.gmra.mrb[0].mxu0 %v8301
      %v8843 = vpop.f32.mrb[0].mxu0
      %v8844 = vadd.f32 %v8335, %v8843
      %v8845 = vpop.f32.mrb[0].mxu0
      %v8846 = vpop.f32.mrb[0].mxu0
      %v8847 = vadd.f32 %v8335, %v8846
      %v8848 = vpop.f32.mrb[0].mxu0
      %8849 = vmatprep.mubr.bf16.mxu0 0
      %8850 = vmatmul.mubr.bf16.gmra.mrb[0].mxu0 %v8302
      %v8851 = vpop.f32.mrb[0].mxu0
      %v8852 = vadd.f32 %v8335, %v8851
      %v8853 = vpop.f32.mrb[0].mxu0
      %v8854 = vpop.f32.mrb[0].mxu0
      %v8855 = vadd.f32 %v8335, %v8854
      %v8856 = vpop.f32.mrb[0].mxu0
      %8857 = vmatprep.mubr.bf16.mxu0 0
      %8858 = vmatmul.mubr.bf16.gmra.mrb[0].mxu0 %v8303
      %v8859 = vpop.f32.mrb[0].mxu0
      %v8860 = vadd.f32 %v8335, %v8859
      %v8861 = vpop.f32.mrb[0].mxu0
      %v8862 = vpop.f32.mrb[0].mxu0
      %v8863 = vadd.f32 %v8335, %v8862
      %v8864 = vpop.f32.mrb[0].mxu0
      %8865 = vmatprep.mubr.bf16.mxu0 0
      %8866 = vmatmul.mubr.bf16.gmra.mrb[0].mxu0 %v8304
      %v8867 = vpop.f32.mrb[0].mxu0
      %v8868 = vadd.f32 %v8335, %v8867
      %v8869 = vpop.f32.mrb[0].mxu0
      %v8870 = vpop.f32.mrb[0].mxu0
      %v8871 = vadd.f32 %v8335, %v8870
      %v8872 = vpop.f32.mrb[0].mxu0
      %8873 = vmatprep.mubr.bf16.mxu0 0
      %8874 = vmatmul.mubr.bf16.gmra.mrb[0].mxu0 %v8305
      %v8875 = vpop.f32.mrb[0].mxu0
      %v8876 = vadd.f32 %v8335, %v8875
      %v8877 = vpop.f32.mrb[0].mxu0
      %v8878 = vpop.f32.mrb[0].mxu0
      %v8879 = vadd.f32 %v8335, %v8878
      %v8880 = vpop.f32.mrb[0].mxu0
      %8881 = vmatprep.mubr.bf16.mxu0 0
      %8882 = vmatmul.mubr.bf16.gmra.mrb[0].mxu0 %v8306
      %v8883 = vpop.f32.mrb[0].mxu0
      %v8884 = vadd.f32 %v8335, %v8883
      %v8885 = vpop.f32.mrb[0].mxu0
      %v8886 = vpop.f32.mrb[0].mxu0
      %v8887 = vadd.f32 %v8335, %v8886
      %v8888 = vpop.f32.mrb[0].mxu0
      %8889 = vmatprep.mubr.bf16.mxu0 0
      %8890 = vmatmul.mubr.bf16.gmra.mrb[0].mxu0 %v8307
      %v8891 = vpop.f32.mrb[0].mxu0
      %v8892 = vadd.f32 %v8335, %v8891
      %v8893 = vpop.f32.mrb[0].mxu0
      %v8894 = vpop.f32.mrb[0].mxu0
      %v8895 = vadd.f32 %v8335, %v8894
      %v8896 = vpop.f32.mrb[0].mxu0
      %8897 = vmatprep.mubr.bf16.mxu0 0
      %8898 = vmatmul.mubr.bf16.gmra.mrb[0].mxu0 %v8308
      %v8899 = vpop.f32.mrb[0].mxu0
      %v8900 = vadd.f32 %v8335, %v8899
      %v8901 = vpop.f32.mrb[0].mxu0
      %v8902 = vpop.f32.mrb[0].mxu0
      %v8903 = vadd.f32 %v8335, %v8902
      %v8904 = vpop.f32.mrb[0].mxu0
      %8905 = vmatprep.mubr.bf16.mxu0 0
      %8906 = vmatmul.mubr.bf16.gmra.mrb[0].mxu0 %v8309
      %v8907 = vpop.f32.mrb[0].mxu0
      %v8908 = vadd.f32 %v8335, %v8907
      %v8909 = vpop.f32.mrb[0].mxu0
      %v8910 = vpop.f32.mrb[0].mxu0
      %v8911 = vadd.f32 %v8335, %v8910
      %v8912 = vpop.f32.mrb[0].mxu0
      %8913 = vmatprep.mubr.bf16.mxu0 0
      %8914 = vmatmul.mubr.bf16.gmra.mrb[0].mxu0 %v8310
      %v8915 = vpop.f32.mrb[0].mxu0
      %v8916 = vadd.f32 %v8335, %v8915
      %v8917 = vpop.f32.mrb[0].mxu0
      %v8918 = vpop.f32.mrb[0].mxu0
      %v8919 = vadd.f32 %v8335, %v8918
      %v8920 = vpop.f32.mrb[0].mxu0
      %8921 = vmatprep.mubr.bf16.mxu0 0
      %8922 = vmatmul.mubr.bf16.gmra.mrb[0].mxu0 %v8311
      %v8923 = vpop.f32.mrb[0].mxu0
      %v8924 = vadd.f32 %v8335, %v8923
      %v8925 = vpop.f32.mrb[0].mxu0
      %v8926 = vpop.f32.mrb[0].mxu0
      %v8927 = vadd.f32 %v8335, %v8926
      %v8928 = vpop.f32.mrb[0].mxu0
      %8929 = vdwg.mxu0
      %v8930 = vmax.f32 %v8420, 0.0
      %v8931 = vmax.f32 %v8423, 0.0
      %v8932 = vmax.f32 %v8428, 0.0
      %v8933 = vmax.f32 %v8431, 0.0
      %v8934 = vmax.f32 %v8436, 0.0
      %v8935 = vmax.f32 %v8439, 0.0
      %v8936 = vmax.f32 %v8444, 0.0
      %v8937 = vmax.f32 %v8447, 0.0
      %v8938 = vmax.f32 %v8452, 0.0
      %v8939 = vmax.f32 %v8455, 0.0
      %v8940 = vmax.f32 %v8460, 0.0
      %v8941 = vmax.f32 %v8463, 0.0
      %v8942 = vmax.f32 %v8468, 0.0
      %v8943 = vmax.f32 %v8471, 0.0
      %v8944 = vmax.f32 %v8476, 0.0
      %v8945 = vmax.f32 %v8479, 0.0
      %v8946 = vmax.f32 %v8484, 0.0
      %v8947 = vmax.f32 %v8487, 0.0
      %v8948 = vmax.f32 %v8492, 0.0
      %v8949 = vmax.f32 %v8495, 0.0
      %v8950 = vmax.f32 %v8500, 0.0
      %v8951 = vmax.f32 %v8503, 0.0
      %v8952 = vmax.f32 %v8508, 0.0
      %v8953 = vmax.f32 %v8511, 0.0
      %v8954 = vmax.f32 %v8516, 0.0
      %v8955 = vmax.f32 %v8519, 0.0
      %v8956 = vmax.f32 %v8524, 0.0
      %v8957 = vmax.f32 %v8527, 0.0
      %v8958 = vmax.f32 %v8532, 0.0
      %v8959 = vmax.f32 %v8535, 0.0
      %v8960 = vmax.f32 %v8540, 0.0
      %v8961 = vmax.f32 %v8543, 0.0
      %v8962 = vmax.f32 %v8548, 0.0
      %v8963 = vmax.f32 %v8551, 0.0
      %v8964 = vmax.f32 %v8556, 0.0
      %v8965 = vmax.f32 %v8559, 0.0
      %v8966 = vmax.f32 %v8564, 0.0
      %v8967 = vmax.f32 %v8567, 0.0
      %v8968 = vmax.f32 %v8572, 0.0
      %v8969 = vmax.f32 %v8575, 0.0
      %v8970 = vmax.f32 %v8580, 0.0
      %v8971 = vmax.f32 %v8583, 0.0
      %v8972 = vmax.f32 %v8588, 0.0
      %v8973 = vmax.f32 %v8591, 0.0
      %v8974 = vmax.f32 %v8596, 0.0
      %v8975 = vmax.f32 %v8599, 0.0
      %v8976 = vmax.f32 %v8604, 0.0
      %v8977 = vmax.f32 %v8607, 0.0
      %v8978 = vmax.f32 %v8612, 0.0
      %v8979 = vmax.f32 %v8615, 0.0
      %v8980 = vmax.f32 %v8620, 0.0
      %v8981 = vmax.f32 %v8623, 0.0
      %v8982 = vmax.f32 %v8628, 0.0
      %v8983 = vmax.f32 %v8631, 0.0
      %v8984 = vmax.f32 %v8636, 0.0
      %v8985 = vmax.f32 %v8639, 0.0
      %v8986 = vmax.f32 %v8644, 0.0
      %v8987 = vmax.f32 %v8647, 0.0
      %v8988 = vmax.f32 %v8652, 0.0
      %v8989 = vmax.f32 %v8655, 0.0
      %v8990 = vmax.f32 %v8660, 0.0
      %v8991 = vmax.f32 %v8663, 0.0
      %v8992 = vmax.f32 %v8668, 0.0
      %v8993 = vmax.f32 %v8671, 0.0
      %v8994 = vmax.f32 %v8676, 0.0
      %v8995 = vmax.f32 %v8679, 0.0
      %v8996 = vmax.f32 %v8684, 0.0
      %v8997 = vmax.f32 %v8687, 0.0
      %v8998 = vmax.f32 %v8692, 0.0
      %v8999 = vmax.f32 %v8695, 0.0
      %v9000 = vmax.f32 %v8700, 0.0
      %v9001 = vmax.f32 %v8703, 0.0
      %v9002 = vmax.f32 %v8708, 0.0
      %v9003 = vmax.f32 %v8711, 0.0
      %v9004 = vmax.f32 %v8716, 0.0
      %v9005 = vmax.f32 %v8719, 0.0
      %v9006 = vmax.f32 %v8724, 0.0
      %v9007 = vmax.f32 %v8727, 0.0
      %v9008 = vmax.f32 %v8732, 0.0
      %v9009 = vmax.f32 %v8735, 0.0
      %v9010 = vmax.f32 %v8740, 0.0
      %v9011 = vmax.f32 %v8743, 0.0
      %v9012 = vmax.f32 %v8748, 0.0
      %v9013 = vmax.f32 %v8751, 0.0
      %v9014 = vmax.f32 %v8756, 0.0
      %v9015 = vmax.f32 %v8759, 0.0
      %v9016 = vmax.f32 %v8764, 0.0
      %v9017 = vmax.f32 %v8767, 0.0
      %v9018 = vmax.f32 %v8772, 0.0
      %v9019 = vmax.f32 %v8775, 0.0
      %v9020 = vmax.f32 %v8780, 0.0
      %v9021 = vmax.f32 %v8783, 0.0
      %v9022 = vmax.f32 %v8788, 0.0
      %v9023 = vmax.f32 %v8791, 0.0
      %v9024 = vmax.f32 %v8796, 0.0
      %v9025 = vmax.f32 %v8799, 0.0
      %v9026 = vmax.f32 %v8804, 0.0
      %v9027 = vmax.f32 %v8807, 0.0
      %v9028 = vmax.f32 %v8812, 0.0
      %v9029 = vmax.f32 %v8815, 0.0
      %v9030 = vmax.f32 %v8820, 0.0
      %v9031 = vmax.f32 %v8823, 0.0
      %v9032 = vmax.f32 %v8828, 0.0
      %v9033 = vmax.f32 %v8831, 0.0
      %v9034 = vmax.f32 %v8836, 0.0
      %v9035 = vmax.f32 %v8839, 0.0
      %v9036 = vmax.f32 %v8844, 0.0
      %v9037 = vmax.f32 %v8847, 0.0
      %v9038 = vmax.f32 %v8852, 0.0
      %v9039 = vmax.f32 %v8855, 0.0
      %v9040 = vmax.f32 %v8860, 0.0
      %v9041 = vmax.f32 %v8863, 0.0
      %v9042 = vmax.f32 %v8868, 0.0
      %v9043 = vmax.f32 %v8871, 0.0
      %v9044 = vmax.f32 %v8876, 0.0
      %v9045 = vmax.f32 %v8879, 0.0
      %v9046 = vmax.f32 %v8884, 0.0
      %v9047 = vmax.f32 %v8887, 0.0
      %v9048 = vmax.f32 %v8892, 0.0
      %v9049 = vmax.f32 %v8895, 0.0
      %v9050 = vmax.f32 %v8900, 0.0
      %v9051 = vmax.f32 %v8903, 0.0
      %v9052 = vmax.f32 %v8908, 0.0
      %v9053 = vmax.f32 %v8911, 0.0
      %v9054 = vmax.f32 %v8916, 0.0
      %v9055 = vmax.f32 %v8919, 0.0
      %v9056 = vmax.f32 %v8924, 0.0
      %v9057 = vmax.f32 %v8927, 0.0
      %v9058 = vpack.c.bf16 %v8931, %v8930
      %v9059 = vpack.c.bf16 %v8933, %v8932
      %v9060 = vpack.c.bf16 %v8935, %v8934
      %v9061 = vpack.c.bf16 %v8937, %v8936
      %v9062 = vpack.c.bf16 %v8939, %v8938
      %v9063 = vpack.c.bf16 %v8941, %v8940
      %v9064 = vpack.c.bf16 %v8943, %v8942
      %v9065 = vpack.c.bf16 %v8945, %v8944
      %v9066 = vpack.c.bf16 %v8947, %v8946
      %v9067 = vpack.c.bf16 %v8949, %v8948
      %v9068 = vpack.c.bf16 %v8951, %v8950
      %v9069 = vpack.c.bf16 %v8953, %v8952
      %v9070 = vpack.c.bf16 %v8955, %v8954
      %v9071 = vpack.c.bf16 %v8957, %v8956
      %v9072 = vpack.c.bf16 %v8959, %v8958
      %v9073 = vpack.c.bf16 %v8961, %v8960
      %v9074 = vpack.c.bf16 %v8963, %v8962
      %v9075 = vpack.c.bf16 %v8965, %v8964
      %v9076 = vpack.c.bf16 %v8967, %v8966
      %v9077 = vpack.c.bf16 %v8969, %v8968
      %v9078 = vpack.c.bf16 %v8971, %v8970
      %v9079 = vpack.c.bf16 %v8973, %v8972
      %v9080 = vpack.c.bf16 %v8975, %v8974
      %v9081 = vpack.c.bf16 %v8977, %v8976
      %v9082 = vpack.c.bf16 %v8979, %v8978
      %v9083 = vpack.c.bf16 %v8981, %v8980
      %v9084 = vpack.c.bf16 %v8983, %v8982
      %v9085 = vpack.c.bf16 %v8985, %v8984
      %v9086 = vpack.c.bf16 %v8987, %v8986
      %v9087 = vpack.c.bf16 %v8989, %v8988
      %v9088 = vpack.c.bf16 %v8991, %v8990
      %v9089 = vpack.c.bf16 %v8993, %v8992
      %v9090 = vpack.c.bf16 %v8995, %v8994
      %v9091 = vpack.c.bf16 %v8997, %v8996
      %v9092 = vpack.c.bf16 %v8999, %v8998
      %v9093 = vpack.c.bf16 %v9001, %v9000
      %v9094 = vpack.c.bf16 %v9003, %v9002
      %v9095 = vpack.c.bf16 %v9005, %v9004
      %v9096 = vpack.c.bf16 %v9007, %v9006
      %v9097 = vpack.c.bf16 %v9009, %v9008
      %v9098 = vpack.c.bf16 %v9011, %v9010
      %v9099 = vpack.c.bf16 %v9013, %v9012
      %v9100 = vpack.c.bf16 %v9015, %v9014
      %v9101 = vpack.c.bf16 %v9017, %v9016
      %v9102 = vpack.c.bf16 %v9019, %v9018
      %v9103 = vpack.c.bf16 %v9021, %v9020
      %v9104 = vpack.c.bf16 %v9023, %v9022
      %v9105 = vpack.c.bf16 %v9025, %v9024
      %v9106 = vpack.c.bf16 %v9027, %v9026
      %v9107 = vpack.c.bf16 %v9029, %v9028
      %v9108 = vpack.c.bf16 %v9031, %v9030
      %v9109 = vpack.c.bf16 %v9033, %v9032
      %v9110 = vpack.c.bf16 %v9035, %v9034
      %v9111 = vpack.c.bf16 %v9037, %v9036
      %v9112 = vpack.c.bf16 %v9039, %v9038
      %v9113 = vpack.c.bf16 %v9041, %v9040
      %v9114 = vpack.c.bf16 %v9043, %v9042
      %v9115 = vpack.c.bf16 %v9045, %v9044
      %v9116 = vpack.c.bf16 %v9047, %v9046
      %v9117 = vpack.c.bf16 %v9049, %v9048
      %v9118 = vpack.c.bf16 %v9051, %v9050
      %v9119 = vpack.c.bf16 %v9053, %v9052
      %v9120 = vpack.c.bf16 %v9055, %v9054
      %v9121 = vpack.c.bf16 %v9057, %v9056
      %s9122 = scalar_lea.vmem %s1, 512
      %v9123 = vld [vmem:[%s9122] sm:$0xf]
      %v9124 = vld [vmem:[%s9122 + $0x4] sm:$0xf]
      %v9125 = vld [vmem:[%s9122 + $0x8] sm:$0xf]
      %v9126 = vld [vmem:[%s9122 + $0xc] sm:$0xf]
      %v9127 = vld [vmem:[%s9122 + $0x10] sm:$0xf]
      %v9128 = vld [vmem:[%s9122 + $0x14] sm:$0xf]
      %v9129 = vld [vmem:[%s9122 + $0x18] sm:$0xf]
      %v9130 = vld [vmem:[%s9122 + $0x1c] sm:$0xf]
      %v9131 = vld [vmem:[%s9122 + $0x20] sm:$0xf]
      %v9132 = vld [vmem:[%s9122 + $0x24] sm:$0xf]
      %v9133 = vld [vmem:[%s9122 + $0x28] sm:$0xf]
      %v9134 = vld [vmem:[%s9122 + $0x2c] sm:$0xf]
      %v9135 = vld [vmem:[%s9122 + $0x30] sm:$0xf]
      %v9136 = vld [vmem:[%s9122 + $0x34] sm:$0xf]
      %v9137 = vld [vmem:[%s9122 + $0x38] sm:$0xf]
      %v9138 = vld [vmem:[%s9122 + $0x3c] sm:$0xf]
      %s9139 = scalar_lea.vmem %s3, 9
      %v9140 = vld [vmem:[%s9139] sm:$0x1]
      %v9142 = vlaneseq
      %v9143 = vshrl.u32 %v9142, 7
      %v9144 = vsub.s32 0, %v9143
      %v9145 = vrot.slane %v9140, %v9144
      %v9163 = vunpack.c.l.b16 %v9123
      %v9164 = vunpack.c.l.b16 %v9124
      %v9165 = vunpack.c.l.b16 %v9125
      %v9166 = vunpack.c.l.b16 %v9126
      %v9167 = vunpack.c.l.b16 %v9127
      %v9168 = vunpack.c.l.b16 %v9128
      %v9169 = vunpack.c.l.b16 %v9129
      %v9170 = vunpack.c.l.b16 %v9130
      %v9171 = vunpack.c.l.b16 %v9131
      %v9172 = vunpack.c.l.b16 %v9132
      %v9173 = vunpack.c.l.b16 %v9133
      %v9174 = vunpack.c.l.b16 %v9134
      %v9175 = vunpack.c.l.b16 %v9135
      %v9176 = vunpack.c.l.b16 %v9136
      %v9177 = vunpack.c.l.b16 %v9137
      %v9178 = vunpack.c.l.b16 %v9138
      %v9179 = vpack.c.b16 %v9164, %v9163
      %v9180 = vpack.c.b16 %v9166, %v9165
      %v9181 = vpack.c.b16 %v9168, %v9167
      %v9182 = vpack.c.b16 %v9170, %v9169
      %v9183 = vpack.c.b16 %v9172, %v9171
      %v9184 = vpack.c.b16 %v9174, %v9173
      %v9185 = vpack.c.b16 %v9176, %v9175
      %v9186 = vpack.c.b16 %v9178, %v9177
      %9195 = vmatprep.subr.bf16.mxu0 0
      %9196 = vmatpush1.bf16.msra.mxu0 %v9179
      %9197 = vmatprep.subr.bf16.mxu0 0
      %9198 = vmatpush1.bf16.msra.mxu0 %v9180
      %9199 = vmatprep.subr.bf16.mxu0 0
      %9200 = vmatpush1.bf16.msra.mxu0 %v9181
      %9201 = vmatprep.subr.bf16.mxu0 0
      %9202 = vmatpush1.bf16.msra.mxu0 %v9182
      %9203 = vmatprep.subr.bf16.mxu0 0
      %9204 = vmatpush1.bf16.msra.mxu0 %v9183
      %9205 = vmatprep.subr.bf16.mxu0 0
      %9206 = vmatpush1.bf16.msra.mxu0 %v9184
      %9207 = vmatprep.subr.bf16.mxu0 0
      %9208 = vmatpush1.bf16.msra.mxu0 %v9185
      %9209 = vmatprep.subr.bf16.mxu0 0
      %9210 = vmatpush1.bf16.msra.mxu0 %v9186
      %9211 = vmatprep.subr.bf16.mxu0 0
      %9212 = vmatpush1.bf16.msra.mxu0 0
      %9213 = vmatprep.subr.bf16.mxu0 0
      %9214 = vmatpush1.bf16.msra.mxu0 0
      %9215 = vmatprep.subr.bf16.mxu0 0
      %9216 = vmatpush1.bf16.msra.mxu0 0
      %9217 = vmatprep.subr.bf16.mxu0 0
      %9218 = vmatpush1.bf16.msra.mxu0 0
      %9219 = vmatprep.subr.bf16.mxu0 0
      %9220 = vmatpush1.bf16.msra.mxu0 0
      %9221 = vmatprep.subr.bf16.mxu0 0
      %9222 = vmatpush1.bf16.msra.mxu0 0
      %9223 = vmatprep.subr.bf16.mxu0 0
      %9224 = vmatpush1.bf16.msra.mxu0 0
      %9225 = vmatprep.subr.bf16.mxu0 0
      %9226 = vmatpush1.bf16.msra.mxu0 0
      %9227 = vmatprep.mubr.bf16.mxu0 0
      %9228 = vmatmul.mubr.bf16.gmra.mrb[0].mxu0 %v9058
      %v9229 = vpop.f32.mrb[0].mxu0
      %v9230 = vadd.f32 %v9145, %v9229
      %v9231 = vpop.f32.mrb[0].mxu0
      %v9232 = vpop.f32.mrb[0].mxu0
      %v9233 = vadd.f32 %v9145, %v9232
      %v9234 = vpop.f32.mrb[0].mxu0
      %9235 = vmatprep.mubr.bf16.mxu0 0
      %9236 = vmatmul.mubr.bf16.gmra.mrb[0].mxu0 %v9059
      %v9237 = vpop.f32.mrb[0].mxu0
      %v9238 = vadd.f32 %v9145, %v9237
      %v9239 = vpop.f32.mrb[0].mxu0
      %v9240 = vpop.f32.mrb[0].mxu0
      %v9241 = vadd.f32 %v9145, %v9240
      %v9242 = vpop.f32.mrb[0].mxu0
      %9243 = vmatprep.mubr.bf16.mxu0 0
      %9244 = vmatmul.mubr.bf16.gmra.mrb[0].mxu0 %v9060
      %v9245 = vpop.f32.mrb[0].mxu0
      %v9246 = vadd.f32 %v9145, %v9245
      %v9247 = vpop.f32.mrb[0].mxu0
      %v9248 = vpop.f32.mrb[0].mxu0
      %v9249 = vadd.f32 %v9145, %v9248
      %v9250 = vpop.f32.mrb[0].mxu0
      %9251 = vmatprep.mubr.bf16.mxu0 0
      %9252 = vmatmul.mubr.bf16.gmra.mrb[0].mxu0 %v9061
      %v9253 = vpop.f32.mrb[0].mxu0
      %v9254 = vadd.f32 %v9145, %v9253
      %v9255 = vpop.f32.mrb[0].mxu0
      %v9256 = vpop.f32.mrb[0].mxu0
      %v9257 = vadd.f32 %v9145, %v9256
      %v9258 = vpop.f32.mrb[0].mxu0
      %9259 = vmatprep.mubr.bf16.mxu0 0
      %9260 = vmatmul.mubr.bf16.gmra.mrb[0].mxu0 %v9062
      %v9261 = vpop.f32.mrb[0].mxu0
      %v9262 = vadd.f32 %v9145, %v9261
      %v9263 = vpop.f32.mrb[0].mxu0
      %v9264 = vpop.f32.mrb[0].mxu0
      %v9265 = vadd.f32 %v9145, %v9264
      %v9266 = vpop.f32.mrb[0].mxu0
      %9267 = vmatprep.mubr.bf16.mxu0 0
      %9268 = vmatmul.mubr.bf16.gmra.mrb[0].mxu0 %v9063
      %v9269 = vpop.f32.mrb[0].mxu0
      %v9270 = vadd.f32 %v9145, %v9269
      %v9271 = vpop.f32.mrb[0].mxu0
      %v9272 = vpop.f32.mrb[0].mxu0
      %v9273 = vadd.f32 %v9145, %v9272
      %v9274 = vpop.f32.mrb[0].mxu0
      %9275 = vmatprep.mubr.bf16.mxu0 0
      %9276 = vmatmul.mubr.bf16.gmra.mrb[0].mxu0 %v9064
      %v9277 = vpop.f32.mrb[0].mxu0
      %v9278 = vadd.f32 %v9145, %v9277
      %v9279 = vpop.f32.mrb[0].mxu0
      %v9280 = vpop.f32.mrb[0].mxu0
      %v9281 = vadd.f32 %v9145, %v9280
      %v9282 = vpop.f32.mrb[0].mxu0
      %9283 = vmatprep.mubr.bf16.mxu0 0
      %9284 = vmatmul.mubr.bf16.gmra.mrb[0].mxu0 %v9065
      %v9285 = vpop.f32.mrb[0].mxu0
      %v9286 = vadd.f32 %v9145, %v9285
      %v9287 = vpop.f32.mrb[0].mxu0
      %v9288 = vpop.f32.mrb[0].mxu0
      %v9289 = vadd.f32 %v9145, %v9288
      %v9290 = vpop.f32.mrb[0].mxu0
      %9291 = vmatprep.mubr.bf16.mxu0 0
      %9292 = vmatmul.mubr.bf16.gmra.mrb[0].mxu0 %v9066
      %v9293 = vpop.f32.mrb[0].mxu0
      %v9294 = vadd.f32 %v9145, %v9293
      %v9295 = vpop.f32.mrb[0].mxu0
      %v9296 = vpop.f32.mrb[0].mxu0
      %v9297 = vadd.f32 %v9145, %v9296
      %v9298 = vpop.f32.mrb[0].mxu0
      %9299 = vmatprep.mubr.bf16.mxu0 0
      %9300 = vmatmul.mubr.bf16.gmra.mrb[0].mxu0 %v9067
      %v9301 = vpop.f32.mrb[0].mxu0
      %v9302 = vadd.f32 %v9145, %v9301
      %v9303 = vpop.f32.mrb[0].mxu0
      %v9304 = vpop.f32.mrb[0].mxu0
      %v9305 = vadd.f32 %v9145, %v9304
      %v9306 = vpop.f32.mrb[0].mxu0
      %9307 = vmatprep.mubr.bf16.mxu0 0
      %9308 = vmatmul.mubr.bf16.gmra.mrb[0].mxu0 %v9068
      %v9309 = vpop.f32.mrb[0].mxu0
      %v9310 = vadd.f32 %v9145, %v9309
      %v9311 = vpop.f32.mrb[0].mxu0
      %v9312 = vpop.f32.mrb[0].mxu0
      %v9313 = vadd.f32 %v9145, %v9312
      %v9314 = vpop.f32.mrb[0].mxu0
      %9315 = vmatprep.mubr.bf16.mxu0 0
      %9316 = vmatmul.mubr.bf16.gmra.mrb[0].mxu0 %v9069
      %v9317 = vpop.f32.mrb[0].mxu0
      %v9318 = vadd.f32 %v9145, %v9317
      %v9319 = vpop.f32.mrb[0].mxu0
      %v9320 = vpop.f32.mrb[0].mxu0
      %v9321 = vadd.f32 %v9145, %v9320
      %v9322 = vpop.f32.mrb[0].mxu0
      %9323 = vmatprep.mubr.bf16.mxu0 0
      %9324 = vmatmul.mubr.bf16.gmra.mrb[0].mxu0 %v9070
      %v9325 = vpop.f32.mrb[0].mxu0
      %v9326 = vadd.f32 %v9145, %v9325
      %v9327 = vpop.f32.mrb[0].mxu0
      %v9328 = vpop.f32.mrb[0].mxu0
      %v9329 = vadd.f32 %v9145, %v9328
      %v9330 = vpop.f32.mrb[0].mxu0
      %9331 = vmatprep.mubr.bf16.mxu0 0
      %9332 = vmatmul.mubr.bf16.gmra.mrb[0].mxu0 %v9071
      %v9333 = vpop.f32.mrb[0].mxu0
      %v9334 = vadd.f32 %v9145, %v9333
      %v9335 = vpop.f32.mrb[0].mxu0
      %v9336 = vpop.f32.mrb[0].mxu0
      %v9337 = vadd.f32 %v9145, %v9336
      %v9338 = vpop.f32.mrb[0].mxu0
      %9339 = vmatprep.mubr.bf16.mxu0 0
      %9340 = vmatmul.mubr.bf16.gmra.mrb[0].mxu0 %v9072
      %v9341 = vpop.f32.mrb[0].mxu0
      %v9342 = vadd.f32 %v9145, %v9341
      %v9343 = vpop.f32.mrb[0].mxu0
      %v9344 = vpop.f32.mrb[0].mxu0
      %v9345 = vadd.f32 %v9145, %v9344
      %v9346 = vpop.f32.mrb[0].mxu0
      %9347 = vmatprep.mubr.bf16.mxu0 0
      %9348 = vmatmul.mubr.bf16.gmra.mrb[0].mxu0 %v9073
      %v9349 = vpop.f32.mrb[0].mxu0
      %v9350 = vadd.f32 %v9145, %v9349
      %v9351 = vpop.f32.mrb[0].mxu0
      %v9352 = vpop.f32.mrb[0].mxu0
      %v9353 = vadd.f32 %v9145, %v9352
      %v9354 = vpop.f32.mrb[0].mxu0
      %9355 = vmatprep.mubr.bf16.mxu0 0
      %9356 = vmatmul.mubr.bf16.gmra.mrb[0].mxu0 %v9074
      %v9357 = vpop.f32.mrb[0].mxu0
      %v9358 = vadd.f32 %v9145, %v9357
      %v9359 = vpop.f32.mrb[0].mxu0
      %v9360 = vpop.f32.mrb[0].mxu0
      %v9361 = vadd.f32 %v9145, %v9360
      %v9362 = vpop.f32.mrb[0].mxu0
      %9363 = vmatprep.mubr.bf16.mxu0 0
      %9364 = vmatmul.mubr.bf16.gmra.mrb[0].mxu0 %v9075
      %v9365 = vpop.f32.mrb[0].mxu0
      %v9366 = vadd.f32 %v9145, %v9365
      %v9367 = vpop.f32.mrb[0].mxu0
      %v9368 = vpop.f32.mrb[0].mxu0
      %v9369 = vadd.f32 %v9145, %v9368
      %v9370 = vpop.f32.mrb[0].mxu0
      %9371 = vmatprep.mubr.bf16.mxu0 0
      %9372 = vmatmul.mubr.bf16.gmra.mrb[0].mxu0 %v9076
      %v9373 = vpop.f32.mrb[0].mxu0
      %v9374 = vadd.f32 %v9145, %v9373
      %v9375 = vpop.f32.mrb[0].mxu0
      %v9376 = vpop.f32.mrb[0].mxu0
      %v9377 = vadd.f32 %v9145, %v9376
      %v9378 = vpop.f32.mrb[0].mxu0
      %9379 = vmatprep.mubr.bf16.mxu0 0
      %9380 = vmatmul.mubr.bf16.gmra.mrb[0].mxu0 %v9077
      %v9381 = vpop.f32.mrb[0].mxu0
      %v9382 = vadd.f32 %v9145, %v9381
      %v9383 = vpop.f32.mrb[0].mxu0
      %v9384 = vpop.f32.mrb[0].mxu0
      %v9385 = vadd.f32 %v9145, %v9384
      %v9386 = vpop.f32.mrb[0].mxu0
      %9387 = vmatprep.mubr.bf16.mxu0 0
      %9388 = vmatmul.mubr.bf16.gmra.mrb[0].mxu0 %v9078
      %v9389 = vpop.f32.mrb[0].mxu0
      %v9390 = vadd.f32 %v9145, %v9389
      %v9391 = vpop.f32.mrb[0].mxu0
      %v9392 = vpop.f32.mrb[0].mxu0
      %v9393 = vadd.f32 %v9145, %v9392
      %v9394 = vpop.f32.mrb[0].mxu0
      %9395 = vmatprep.mubr.bf16.mxu0 0
      %9396 = vmatmul.mubr.bf16.gmra.mrb[0].mxu0 %v9079
      %v9397 = vpop.f32.mrb[0].mxu0
      %v9398 = vadd.f32 %v9145, %v9397
      %v9399 = vpop.f32.mrb[0].mxu0
      %v9400 = vpop.f32.mrb[0].mxu0
      %v9401 = vadd.f32 %v9145, %v9400
      %v9402 = vpop.f32.mrb[0].mxu0
      %9403 = vmatprep.mubr.bf16.mxu0 0
      %9404 = vmatmul.mubr.bf16.gmra.mrb[0].mxu0 %v9080
      %v9405 = vpop.f32.mrb[0].mxu0
      %v9406 = vadd.f32 %v9145, %v9405
      %v9407 = vpop.f32.mrb[0].mxu0
      %v9408 = vpop.f32.mrb[0].mxu0
      %v9409 = vadd.f32 %v9145, %v9408
      %v9410 = vpop.f32.mrb[0].mxu0
      %9411 = vmatprep.mubr.bf16.mxu0 0
      %9412 = vmatmul.mubr.bf16.gmra.mrb[0].mxu0 %v9081
      %v9413 = vpop.f32.mrb[0].mxu0
      %v9414 = vadd.f32 %v9145, %v9413
      %v9415 = vpop.f32.mrb[0].mxu0
      %v9416 = vpop.f32.mrb[0].mxu0
      %v9417 = vadd.f32 %v9145, %v9416
      %v9418 = vpop.f32.mrb[0].mxu0
      %9419 = vmatprep.mubr.bf16.mxu0 0
      %9420 = vmatmul.mubr.bf16.gmra.mrb[0].mxu0 %v9082
      %v9421 = vpop.f32.mrb[0].mxu0
      %v9422 = vadd.f32 %v9145, %v9421
      %v9423 = vpop.f32.mrb[0].mxu0
      %v9424 = vpop.f32.mrb[0].mxu0
      %v9425 = vadd.f32 %v9145, %v9424
      %v9426 = vpop.f32.mrb[0].mxu0
      %9427 = vmatprep.mubr.bf16.mxu0 0
      %9428 = vmatmul.mubr.bf16.gmra.mrb[0].mxu0 %v9083
      %v9429 = vpop.f32.mrb[0].mxu0
      %v9430 = vadd.f32 %v9145, %v9429
      %v9431 = vpop.f32.mrb[0].mxu0
      %v9432 = vpop.f32.mrb[0].mxu0
      %v9433 = vadd.f32 %v9145, %v9432
      %v9434 = vpop.f32.mrb[0].mxu0
      %9435 = vmatprep.mubr.bf16.mxu0 0
      %9436 = vmatmul.mubr.bf16.gmra.mrb[0].mxu0 %v9084
      %v9437 = vpop.f32.mrb[0].mxu0
      %v9438 = vadd.f32 %v9145, %v9437
      %v9439 = vpop.f32.mrb[0].mxu0
      %v9440 = vpop.f32.mrb[0].mxu0
      %v9441 = vadd.f32 %v9145, %v9440
      %v9442 = vpop.f32.mrb[0].mxu0
      %9443 = vmatprep.mubr.bf16.mxu0 0
      %9444 = vmatmul.mubr.bf16.gmra.mrb[0].mxu0 %v9085
      %v9445 = vpop.f32.mrb[0].mxu0
      %v9446 = vadd.f32 %v9145, %v9445
      %v9447 = vpop.f32.mrb[0].mxu0
      %v9448 = vpop.f32.mrb[0].mxu0
      %v9449 = vadd.f32 %v9145, %v9448
      %v9450 = vpop.f32.mrb[0].mxu0
      %9451 = vmatprep.mubr.bf16.mxu0 0
      %9452 = vmatmul.mubr.bf16.gmra.mrb[0].mxu0 %v9086
      %v9453 = vpop.f32.mrb[0].mxu0
      %v9454 = vadd.f32 %v9145, %v9453
      %v9455 = vpop.f32.mrb[0].mxu0
      %v9456 = vpop.f32.mrb[0].mxu0
      %v9457 = vadd.f32 %v9145, %v9456
      %v9458 = vpop.f32.mrb[0].mxu0
      %9459 = vmatprep.mubr.bf16.mxu0 0
      %9460 = vmatmul.mubr.bf16.gmra.mrb[0].mxu0 %v9087
      %v9461 = vpop.f32.mrb[0].mxu0
      %v9462 = vadd.f32 %v9145, %v9461
      %v9463 = vpop.f32.mrb[0].mxu0
      %v9464 = vpop.f32.mrb[0].mxu0
      %v9465 = vadd.f32 %v9145, %v9464
      %v9466 = vpop.f32.mrb[0].mxu0
      %9467 = vmatprep.mubr.bf16.mxu0 0
      %9468 = vmatmul.mubr.bf16.gmra.mrb[0].mxu0 %v9088
      %v9469 = vpop.f32.mrb[0].mxu0
      %v9470 = vadd.f32 %v9145, %v9469
      %v9471 = vpop.f32.mrb[0].mxu0
      %v9472 = vpop.f32.mrb[0].mxu0
      %v9473 = vadd.f32 %v9145, %v9472
      %v9474 = vpop.f32.mrb[0].mxu0
      %9475 = vmatprep.mubr.bf16.mxu0 0
      %9476 = vmatmul.mubr.bf16.gmra.mrb[0].mxu0 %v9089
      %v9477 = vpop.f32.mrb[0].mxu0
      %v9478 = vadd.f32 %v9145, %v9477
      %v9479 = vpop.f32.mrb[0].mxu0
      %v9480 = vpop.f32.mrb[0].mxu0
      %v9481 = vadd.f32 %v9145, %v9480
      %v9482 = vpop.f32.mrb[0].mxu0
      %9483 = vmatprep.mubr.bf16.mxu0 0
      %9484 = vmatmul.mubr.bf16.gmra.mrb[0].mxu0 %v9090
      %v9485 = vpop.f32.mrb[0].mxu0
      %v9486 = vadd.f32 %v9145, %v9485
      %v9487 = vpop.f32.mrb[0].mxu0
      %v9488 = vpop.f32.mrb[0].mxu0
      %v9489 = vadd.f32 %v9145, %v9488
      %v9490 = vpop.f32.mrb[0].mxu0
      %9491 = vmatprep.mubr.bf16.mxu0 0
      %9492 = vmatmul.mubr.bf16.gmra.mrb[0].mxu0 %v9091
      %v9493 = vpop.f32.mrb[0].mxu0
      %v9494 = vadd.f32 %v9145, %v9493
      %v9495 = vpop.f32.mrb[0].mxu0
      %v9496 = vpop.f32.mrb[0].mxu0
      %v9497 = vadd.f32 %v9145, %v9496
      %v9498 = vpop.f32.mrb[0].mxu0
      %9499 = vmatprep.mubr.bf16.mxu0 0
      %9500 = vmatmul.mubr.bf16.gmra.mrb[0].mxu0 %v9092
      %v9501 = vpop.f32.mrb[0].mxu0
      %v9502 = vadd.f32 %v9145, %v9501
      %v9503 = vpop.f32.mrb[0].mxu0
      %v9504 = vpop.f32.mrb[0].mxu0
      %v9505 = vadd.f32 %v9145, %v9504
      %v9506 = vpop.f32.mrb[0].mxu0
      %9507 = vmatprep.mubr.bf16.mxu0 0
      %9508 = vmatmul.mubr.bf16.gmra.mrb[0].mxu0 %v9093
      %v9509 = vpop.f32.mrb[0].mxu0
      %v9510 = vadd.f32 %v9145, %v9509
      %v9511 = vpop.f32.mrb[0].mxu0
      %v9512 = vpop.f32.mrb[0].mxu0
      %v9513 = vadd.f32 %v9145, %v9512
      %v9514 = vpop.f32.mrb[0].mxu0
      %9515 = vmatprep.mubr.bf16.mxu0 0
      %9516 = vmatmul.mubr.bf16.gmra.mrb[0].mxu0 %v9094
      %v9517 = vpop.f32.mrb[0].mxu0
      %v9518 = vadd.f32 %v9145, %v9517
      %v9519 = vpop.f32.mrb[0].mxu0
      %v9520 = vpop.f32.mrb[0].mxu0
      %v9521 = vadd.f32 %v9145, %v9520
      %v9522 = vpop.f32.mrb[0].mxu0
      %9523 = vmatprep.mubr.bf16.mxu0 0
      %9524 = vmatmul.mubr.bf16.gmra.mrb[0].mxu0 %v9095
      %v9525 = vpop.f32.mrb[0].mxu0
      %v9526 = vadd.f32 %v9145, %v9525
      %v9527 = vpop.f32.mrb[0].mxu0
      %v9528 = vpop.f32.mrb[0].mxu0
      %v9529 = vadd.f32 %v9145, %v9528
      %v9530 = vpop.f32.mrb[0].mxu0
      %9531 = vmatprep.mubr.bf16.mxu0 0
      %9532 = vmatmul.mubr.bf16.gmra.mrb[0].mxu0 %v9096
      %v9533 = vpop.f32.mrb[0].mxu0
      %v9534 = vadd.f32 %v9145, %v9533
      %v9535 = vpop.f32.mrb[0].mxu0
      %v9536 = vpop.f32.mrb[0].mxu0
      %v9537 = vadd.f32 %v9145, %v9536
      %v9538 = vpop.f32.mrb[0].mxu0
      %9539 = vmatprep.mubr.bf16.mxu0 0
      %9540 = vmatmul.mubr.bf16.gmra.mrb[0].mxu0 %v9097
      %v9541 = vpop.f32.mrb[0].mxu0
      %v9542 = vadd.f32 %v9145, %v9541
      %v9543 = vpop.f32.mrb[0].mxu0
      %v9544 = vpop.f32.mrb[0].mxu0
      %v9545 = vadd.f32 %v9145, %v9544
      %v9546 = vpop.f32.mrb[0].mxu0
      %9547 = vmatprep.mubr.bf16.mxu0 0
      %9548 = vmatmul.mubr.bf16.gmra.mrb[0].mxu0 %v9098
      %v9549 = vpop.f32.mrb[0].mxu0
      %v9550 = vadd.f32 %v9145, %v9549
      %v9551 = vpop.f32.mrb[0].mxu0
      %v9552 = vpop.f32.mrb[0].mxu0
      %v9553 = vadd.f32 %v9145, %v9552
      %v9554 = vpop.f32.mrb[0].mxu0
      %9555 = vmatprep.mubr.bf16.mxu0 0
      %9556 = vmatmul.mubr.bf16.gmra.mrb[0].mxu0 %v9099
      %v9557 = vpop.f32.mrb[0].mxu0
      %v9558 = vadd.f32 %v9145, %v9557
      %v9559 = vpop.f32.mrb[0].mxu0
      %v9560 = vpop.f32.mrb[0].mxu0
      %v9561 = vadd.f32 %v9145, %v9560
      %v9562 = vpop.f32.mrb[0].mxu0
      %9563 = vmatprep.mubr.bf16.mxu0 0
      %9564 = vmatmul.mubr.bf16.gmra.mrb[0].mxu0 %v9100
      %v9565 = vpop.f32.mrb[0].mxu0
      %v9566 = vadd.f32 %v9145, %v9565
      %v9567 = vpop.f32.mrb[0].mxu0
      %v9568 = vpop.f32.mrb[0].mxu0
      %v9569 = vadd.f32 %v9145, %v9568
      %v9570 = vpop.f32.mrb[0].mxu0
      %9571 = vmatprep.mubr.bf16.mxu0 0
      %9572 = vmatmul.mubr.bf16.gmra.mrb[0].mxu0 %v9101
      %v9573 = vpop.f32.mrb[0].mxu0
      %v9574 = vadd.f32 %v9145, %v9573
      %v9575 = vpop.f32.mrb[0].mxu0
      %v9576 = vpop.f32.mrb[0].mxu0
      %v9577 = vadd.f32 %v9145, %v9576
      %v9578 = vpop.f32.mrb[0].mxu0
      %9579 = vmatprep.mubr.bf16.mxu0 0
      %9580 = vmatmul.mubr.bf16.gmra.mrb[0].mxu0 %v9102
      %v9581 = vpop.f32.mrb[0].mxu0
      %v9582 = vadd.f32 %v9145, %v9581
      %v9583 = vpop.f32.mrb[0].mxu0
      %v9584 = vpop.f32.mrb[0].mxu0
      %v9585 = vadd.f32 %v9145, %v9584
      %v9586 = vpop.f32.mrb[0].mxu0
      %9587 = vmatprep.mubr.bf16.mxu0 0
      %9588 = vmatmul.mubr.bf16.gmra.mrb[0].mxu0 %v9103
      %v9589 = vpop.f32.mrb[0].mxu0
      %v9590 = vadd.f32 %v9145, %v9589
      %v9591 = vpop.f32.mrb[0].mxu0
      %v9592 = vpop.f32.mrb[0].mxu0
      %v9593 = vadd.f32 %v9145, %v9592
      %v9594 = vpop.f32.mrb[0].mxu0
      %9595 = vmatprep.mubr.bf16.mxu0 0
      %9596 = vmatmul.mubr.bf16.gmra.mrb[0].mxu0 %v9104
      %v9597 = vpop.f32.mrb[0].mxu0
      %v9598 = vadd.f32 %v9145, %v9597
      %v9599 = vpop.f32.mrb[0].mxu0
      %v9600 = vpop.f32.mrb[0].mxu0
      %v9601 = vadd.f32 %v9145, %v9600
      %v9602 = vpop.f32.mrb[0].mxu0
      %9603 = vmatprep.mubr.bf16.mxu0 0
      %9604 = vmatmul.mubr.bf16.gmra.mrb[0].mxu0 %v9105
      %v9605 = vpop.f32.mrb[0].mxu0
      %v9606 = vadd.f32 %v9145, %v9605
      %v9607 = vpop.f32.mrb[0].mxu0
      %v9608 = vpop.f32.mrb[0].mxu0
      %v9609 = vadd.f32 %v9145, %v9608
      %v9610 = vpop.f32.mrb[0].mxu0
      %9611 = vmatprep.mubr.bf16.mxu0 0
      %9612 = vmatmul.mubr.bf16.gmra.mrb[0].mxu0 %v9106
      %v9613 = vpop.f32.mrb[0].mxu0
      %v9614 = vadd.f32 %v9145, %v9613
      %v9615 = vpop.f32.mrb[0].mxu0
      %v9616 = vpop.f32.mrb[0].mxu0
      %v9617 = vadd.f32 %v9145, %v9616
      %v9618 = vpop.f32.mrb[0].mxu0
      %9619 = vmatprep.mubr.bf16.mxu0 0
      %9620 = vmatmul.mubr.bf16.gmra.mrb[0].mxu0 %v9107
      %v9621 = vpop.f32.mrb[0].mxu0
      %v9622 = vadd.f32 %v9145, %v9621
      %v9623 = vpop.f32.mrb[0].mxu0
      %v9624 = vpop.f32.mrb[0].mxu0
      %v9625 = vadd.f32 %v9145, %v9624
      %v9626 = vpop.f32.mrb[0].mxu0
      %9627 = vmatprep.mubr.bf16.mxu0 0
      %9628 = vmatmul.mubr.bf16.gmra.mrb[0].mxu0 %v9108
      %v9629 = vpop.f32.mrb[0].mxu0
      %v9630 = vadd.f32 %v9145, %v9629
      %v9631 = vpop.f32.mrb[0].mxu0
      %v9632 = vpop.f32.mrb[0].mxu0
      %v9633 = vadd.f32 %v9145, %v9632
      %v9634 = vpop.f32.mrb[0].mxu0
      %9635 = vmatprep.mubr.bf16.mxu0 0
      %9636 = vmatmul.mubr.bf16.gmra.mrb[0].mxu0 %v9109
      %v9637 = vpop.f32.mrb[0].mxu0
      %v9638 = vadd.f32 %v9145, %v9637
      %v9639 = vpop.f32.mrb[0].mxu0
      %v9640 = vpop.f32.mrb[0].mxu0
      %v9641 = vadd.f32 %v9145, %v9640
      %v9642 = vpop.f32.mrb[0].mxu0
      %9643 = vmatprep.mubr.bf16.mxu0 0
      %9644 = vmatmul.mubr.bf16.gmra.mrb[0].mxu0 %v9110
      %v9645 = vpop.f32.mrb[0].mxu0
      %v9646 = vadd.f32 %v9145, %v9645
      %v9647 = vpop.f32.mrb[0].mxu0
      %v9648 = vpop.f32.mrb[0].mxu0
      %v9649 = vadd.f32 %v9145, %v9648
      %v9650 = vpop.f32.mrb[0].mxu0
      %9651 = vmatprep.mubr.bf16.mxu0 0
      %9652 = vmatmul.mubr.bf16.gmra.mrb[0].mxu0 %v9111
      %v9653 = vpop.f32.mrb[0].mxu0
      %v9654 = vadd.f32 %v9145, %v9653
      %v9655 = vpop.f32.mrb[0].mxu0
      %v9656 = vpop.f32.mrb[0].mxu0
      %v9657 = vadd.f32 %v9145, %v9656
      %v9658 = vpop.f32.mrb[0].mxu0
      %9659 = vmatprep.mubr.bf16.mxu0 0
      %9660 = vmatmul.mubr.bf16.gmra.mrb[0].mxu0 %v9112
      %v9661 = vpop.f32.mrb[0].mxu0
      %v9662 = vadd.f32 %v9145, %v9661
      %v9663 = vpop.f32.mrb[0].mxu0
      %v9664 = vpop.f32.mrb[0].mxu0
      %v9665 = vadd.f32 %v9145, %v9664
      %v9666 = vpop.f32.mrb[0].mxu0
      %9667 = vmatprep.mubr.bf16.mxu0 0
      %9668 = vmatmul.mubr.bf16.gmra.mrb[0].mxu0 %v9113
      %v9669 = vpop.f32.mrb[0].mxu0
      %v9670 = vadd.f32 %v9145, %v9669
      %v9671 = vpop.f32.mrb[0].mxu0
      %v9672 = vpop.f32.mrb[0].mxu0
      %v9673 = vadd.f32 %v9145, %v9672
      %v9674 = vpop.f32.mrb[0].mxu0
      %9675 = vmatprep.mubr.bf16.mxu0 0
      %9676 = vmatmul.mubr.bf16.gmra.mrb[0].mxu0 %v9114
      %v9677 = vpop.f32.mrb[0].mxu0
      %v9678 = vadd.f32 %v9145, %v9677
      %v9679 = vpop.f32.mrb[0].mxu0
      %v9680 = vpop.f32.mrb[0].mxu0
      %v9681 = vadd.f32 %v9145, %v9680
      %v9682 = vpop.f32.mrb[0].mxu0
      %9683 = vmatprep.mubr.bf16.mxu0 0
      %9684 = vmatmul.mubr.bf16.gmra.mrb[0].mxu0 %v9115
      %v9685 = vpop.f32.mrb[0].mxu0
      %v9686 = vadd.f32 %v9145, %v9685
      %v9687 = vpop.f32.mrb[0].mxu0
      %v9688 = vpop.f32.mrb[0].mxu0
      %v9689 = vadd.f32 %v9145, %v9688
      %v9690 = vpop.f32.mrb[0].mxu0
      %9691 = vmatprep.mubr.bf16.mxu0 0
      %9692 = vmatmul.mubr.bf16.gmra.mrb[0].mxu0 %v9116
      %v9693 = vpop.f32.mrb[0].mxu0
      %v9694 = vadd.f32 %v9145, %v9693
      %v9695 = vpop.f32.mrb[0].mxu0
      %v9696 = vpop.f32.mrb[0].mxu0
      %v9697 = vadd.f32 %v9145, %v9696
      %v9698 = vpop.f32.mrb[0].mxu0
      %9699 = vmatprep.mubr.bf16.mxu0 0
      %9700 = vmatmul.mubr.bf16.gmra.mrb[0].mxu0 %v9117
      %v9701 = vpop.f32.mrb[0].mxu0
      %v9702 = vadd.f32 %v9145, %v9701
      %v9703 = vpop.f32.mrb[0].mxu0
      %v9704 = vpop.f32.mrb[0].mxu0
      %v9705 = vadd.f32 %v9145, %v9704
      %v9706 = vpop.f32.mrb[0].mxu0
      %9707 = vmatprep.mubr.bf16.mxu0 0
      %9708 = vmatmul.mubr.bf16.gmra.mrb[0].mxu0 %v9118
      %v9709 = vpop.f32.mrb[0].mxu0
      %v9710 = vadd.f32 %v9145, %v9709
      %v9711 = vpop.f32.mrb[0].mxu0
      %v9712 = vpop.f32.mrb[0].mxu0
      %v9713 = vadd.f32 %v9145, %v9712
      %v9714 = vpop.f32.mrb[0].mxu0
      %9715 = vmatprep.mubr.bf16.mxu0 0
      %9716 = vmatmul.mubr.bf16.gmra.mrb[0].mxu0 %v9119
      %v9717 = vpop.f32.mrb[0].mxu0
      %v9718 = vadd.f32 %v9145, %v9717
      %v9719 = vpop.f32.mrb[0].mxu0
      %v9720 = vpop.f32.mrb[0].mxu0
      %v9721 = vadd.f32 %v9145, %v9720
      %v9722 = vpop.f32.mrb[0].mxu0
      %9723 = vmatprep.mubr.bf16.mxu0 0
      %9724 = vmatmul.mubr.bf16.gmra.mrb[0].mxu0 %v9120
      %v9725 = vpop.f32.mrb[0].mxu0
      %v9726 = vadd.f32 %v9145, %v9725
      %v9727 = vpop.f32.mrb[0].mxu0
      %v9728 = vpop.f32.mrb[0].mxu0
      %v9729 = vadd.f32 %v9145, %v9728
      %v9730 = vpop.f32.mrb[0].mxu0
      %9731 = vmatprep.mubr.bf16.mxu0 0
      %9732 = vmatmul.mubr.bf16.gmra.mrb[0].mxu0 %v9121
      %v9733 = vpop.f32.mrb[0].mxu0
      %v9734 = vadd.f32 %v9145, %v9733
      %v9735 = vpop.f32.mrb[0].mxu0
      %v9736 = vpop.f32.mrb[0].mxu0
      %v9737 = vadd.f32 %v9145, %v9736
      %v9738 = vpop.f32.mrb[0].mxu0
      %9739 = vdwg.mxu0
      %9740 = vst [vmem:[%s199] sm:$0xff] %v9230
      %9741 = vst [vmem:[%s199 + $0x8] sm:$0xff] %v9233
      %9742 = vst [vmem:[%s199 + $0x10] sm:$0xff] %v9238
      %9743 = vst [vmem:[%s199 + $0x18] sm:$0xff] %v9241
      %9744 = vst [vmem:[%s199 + $0x20] sm:$0xff] %v9246
      %9745 = vst [vmem:[%s199 + $0x28] sm:$0xff] %v9249
      %9746 = vst [vmem:[%s199 + $0x30] sm:$0xff] %v9254
      %9747 = vst [vmem:[%s199 + $0x38] sm:$0xff] %v9257
      %9748 = vst [vmem:[%s199 + $0x40] sm:$0xff] %v9262
      %9749 = vst [vmem:[%s199 + $0x48] sm:$0xff] %v9265
      %9750 = vst [vmem:[%s199 + $0x50] sm:$0xff] %v9270
      %9751 = vst [vmem:[%s199 + $0x58] sm:$0xff] %v9273
      %9752 = vst [vmem:[%s199 + $0x60] sm:$0xff] %v9278
      %9753 = vst [vmem:[%s199 + $0x68] sm:$0xff] %v9281
      %9754 = vst [vmem:[%s199 + $0x70] sm:$0xff] %v9286
      %9755 = vst [vmem:[%s199 + $0x78] sm:$0xff] %v9289
      %9756 = vst [vmem:[%s199 + $0x80] sm:$0xff] %v9294
      %9757 = vst [vmem:[%s199 + $0x88] sm:$0xff] %v9297
      %9758 = vst [vmem:[%s199 + $0x90] sm:$0xff] %v9302
      %9759 = vst [vmem:[%s199 + $0x98] sm:$0xff] %v9305
      %9760 = vst [vmem:[%s199 + $0xa0] sm:$0xff] %v9310
      %9761 = vst [vmem:[%s199 + $0xa8] sm:$0xff] %v9313
      %9762 = vst [vmem:[%s199 + $0xb0] sm:$0xff] %v9318
      %9763 = vst [vmem:[%s199 + $0xb8] sm:$0xff] %v9321
      %9764 = vst [vmem:[%s199 + $0xc0] sm:$0xff] %v9326
      %9765 = vst [vmem:[%s199 + $0xc8] sm:$0xff] %v9329
      %9766 = vst [vmem:[%s199 + $0xd0] sm:$0xff] %v9334
      %9767 = vst [vmem:[%s199 + $0xd8] sm:$0xff] %v9337
      %9768 = vst [vmem:[%s199 + $0xe0] sm:$0xff] %v9342
      %9769 = vst [vmem:[%s199 + $0xe8] sm:$0xff] %v9345
      %9770 = vst [vmem:[%s199 + $0xf0] sm:$0xff] %v9350
      %9771 = vst [vmem:[%s199 + $0xf8] sm:$0xff] %v9353
      %9772 = vst [vmem:[%s199 + $0x100] sm:$0xff] %v9358
      %9773 = vst [vmem:[%s199 + $0x108] sm:$0xff] %v9361
      %9774 = vst [vmem:[%s199 + $0x110] sm:$0xff] %v9366
      %9775 = vst [vmem:[%s199 + $0x118] sm:$0xff] %v9369
      %9776 = vst [vmem:[%s199 + $0x120] sm:$0xff] %v9374
      %9777 = vst [vmem:[%s199 + $0x128] sm:$0xff] %v9377
      %9778 = vst [vmem:[%s199 + $0x130] sm:$0xff] %v9382
      %9779 = vst [vmem:[%s199 + $0x138] sm:$0xff] %v9385
      %9780 = vst [vmem:[%s199 + $0x140] sm:$0xff] %v9390
      %9781 = vst [vmem:[%s199 + $0x148] sm:$0xff] %v9393
      %9782 = vst [vmem:[%s199 + $0x150] sm:$0xff] %v9398
      %9783 = vst [vmem:[%s199 + $0x158] sm:$0xff] %v9401
      %9784 = vst [vmem:[%s199 + $0x160] sm:$0xff] %v9406
      %9785 = vst [vmem:[%s199 + $0x168] sm:$0xff] %v9409
      %9786 = vst [vmem:[%s199 + $0x170] sm:$0xff] %v9414
      %9787 = vst [vmem:[%s199 + $0x178] sm:$0xff] %v9417
      %9788 = vst [vmem:[%s199 + $0x180] sm:$0xff] %v9422
      %9789 = vst [vmem:[%s199 + $0x188] sm:$0xff] %v9425
      %9790 = vst [vmem:[%s199 + $0x190] sm:$0xff] %v9430
      %9791 = vst [vmem:[%s199 + $0x198] sm:$0xff] %v9433
      %9792 = vst [vmem:[%s199 + $0x1a0] sm:$0xff] %v9438
      %9793 = vst [vmem:[%s199 + $0x1a8] sm:$0xff] %v9441
      %9794 = vst [vmem:[%s199 + $0x1b0] sm:$0xff] %v9446
      %9795 = vst [vmem:[%s199 + $0x1b8] sm:$0xff] %v9449
      %9796 = vst [vmem:[%s199 + $0x1c0] sm:$0xff] %v9454
      %9797 = vst [vmem:[%s199 + $0x1c8] sm:$0xff] %v9457
      %9798 = vst [vmem:[%s199 + $0x1d0] sm:$0xff] %v9462
      %9799 = vst [vmem:[%s199 + $0x1d8] sm:$0xff] %v9465
      %9800 = vst [vmem:[%s199 + $0x1e0] sm:$0xff] %v9470
      %9801 = vst [vmem:[%s199 + $0x1e8] sm:$0xff] %v9473
      %9802 = vst [vmem:[%s199 + $0x1f0] sm:$0xff] %v9478
      %9803 = vst [vmem:[%s199 + $0x1f8] sm:$0xff] %v9481
      %9804 = vst [vmem:[%s199 + $0x200] sm:$0xff] %v9486
      %9805 = vst [vmem:[%s199 + $0x208] sm:$0xff] %v9489
      %9806 = vst [vmem:[%s199 + $0x210] sm:$0xff] %v9494
      %9807 = vst [vmem:[%s199 + $0x218] sm:$0xff] %v9497
      %9808 = vst [vmem:[%s199 + $0x220] sm:$0xff] %v9502
      %9809 = vst [vmem:[%s199 + $0x228] sm:$0xff] %v9505
      %9810 = vst [vmem:[%s199 + $0x230] sm:$0xff] %v9510
      %9811 = vst [vmem:[%s199 + $0x238] sm:$0xff] %v9513
      %9812 = vst [vmem:[%s199 + $0x240] sm:$0xff] %v9518
      %9813 = vst [vmem:[%s199 + $0x248] sm:$0xff] %v9521
      %9814 = vst [vmem:[%s199 + $0x250] sm:$0xff] %v9526
      %9815 = vst [vmem:[%s199 + $0x258] sm:$0xff] %v9529
      %9816 = vst [vmem:[%s199 + $0x260] sm:$0xff] %v9534
      %9817 = vst [vmem:[%s199 + $0x268] sm:$0xff] %v9537
      %9818 = vst [vmem:[%s199 + $0x270] sm:$0xff] %v9542
      %9819 = vst [vmem:[%s199 + $0x278] sm:$0xff] %v9545
      %9820 = vst [vmem:[%s199 + $0x280] sm:$0xff] %v9550
      %9821 = vst [vmem:[%s199 + $0x288] sm:$0xff] %v9553
      %9822 = vst [vmem:[%s199 + $0x290] sm:$0xff] %v9558
      %9823 = vst [vmem:[%s199 + $0x298] sm:$0xff] %v9561
      %9824 = vst [vmem:[%s199 + $0x2a0] sm:$0xff] %v9566
      %9825 = vst [vmem:[%s199 + $0x2a8] sm:$0xff] %v9569
      %9826 = vst [vmem:[%s199 + $0x2b0] sm:$0xff] %v9574
      %9827 = vst [vmem:[%s199 + $0x2b8] sm:$0xff] %v9577
      %9828 = vst [vmem:[%s199 + $0x2c0] sm:$0xff] %v9582
      %9829 = vst [vmem:[%s199 + $0x2c8] sm:$0xff] %v9585
      %9830 = vst [vmem:[%s199 + $0x2d0] sm:$0xff] %v9590
      %9831 = vst [vmem:[%s199 + $0x2d8] sm:$0xff] %v9593
      %9832 = vst [vmem:[%s199 + $0x2e0] sm:$0xff] %v9598
      %9833 = vst [vmem:[%s199 + $0x2e8] sm:$0xff] %v9601
      %9834 = vst [vmem:[%s199 + $0x2f0] sm:$0xff] %v9606
      %9835 = vst [vmem:[%s199 + $0x2f8] sm:$0xff] %v9609
      %9836 = vst [vmem:[%s199 + $0x300] sm:$0xff] %v9614
      %9837 = vst [vmem:[%s199 + $0x308] sm:$0xff] %v9617
      %9838 = vst [vmem:[%s199 + $0x310] sm:$0xff] %v9622
      %9839 = vst [vmem:[%s199 + $0x318] sm:$0xff] %v9625
      %9840 = vst [vmem:[%s199 + $0x320] sm:$0xff] %v9630
      %9841 = vst [vmem:[%s199 + $0x328] sm:$0xff] %v9633
      %9842 = vst [vmem:[%s199 + $0x330] sm:$0xff] %v9638
      %9843 = vst [vmem:[%s199 + $0x338] sm:$0xff] %v9641
      %9844 = vst [vmem:[%s199 + $0x340] sm:$0xff] %v9646
      %9845 = vst [vmem:[%s199 + $0x348] sm:$0xff] %v9649
      %9846 = vst [vmem:[%s199 + $0x350] sm:$0xff] %v9654
      %9847 = vst [vmem:[%s199 + $0x358] sm:$0xff] %v9657
      %9848 = vst [vmem:[%s199 + $0x360] sm:$0xff] %v9662
      %9849 = vst [vmem:[%s199 + $0x368] sm:$0xff] %v9665
      %9850 = vst [vmem:[%s199 + $0x370] sm:$0xff] %v9670
      %9851 = vst [vmem:[%s199 + $0x378] sm:$0xff] %v9673
      %9852 = vst [vmem:[%s199 + $0x380] sm:$0xff] %v9678
      %9853 = vst [vmem:[%s199 + $0x388] sm:$0xff] %v9681
      %9854 = vst [vmem:[%s199 + $0x390] sm:$0xff] %v9686
      %9855 = vst [vmem:[%s199 + $0x398] sm:$0xff] %v9689
      %9856 = vst [vmem:[%s199 + $0x3a0] sm:$0xff] %v9694
      %9857 = vst [vmem:[%s199 + $0x3a8] sm:$0xff] %v9697
      %9858 = vst [vmem:[%s199 + $0x3b0] sm:$0xff] %v9702
      %9859 = vst [vmem:[%s199 + $0x3b8] sm:$0xff] %v9705
      %9860 = vst [vmem:[%s199 + $0x3c0] sm:$0xff] %v9710
      %9861 = vst [vmem:[%s199 + $0x3c8] sm:$0xff] %v9713
      %9862 = vst [vmem:[%s199 + $0x3d0] sm:$0xff] %v9718
      %9863 = vst [vmem:[%s199 + $0x3d8] sm:$0xff] %v9721
      %9864 = vst [vmem:[%s199 + $0x3e0] sm:$0xff] %v9726
      %9865 = vst [vmem:[%s199 + $0x3e8] sm:$0xff] %v9729
      %9866 = vst [vmem:[%s199 + $0x3f0] sm:$0xff] %v9734
      %9867 = vst [vmem:[%s199 + $0x3f8] sm:$0xff] %v9737
      %s9868 = smul.u32 128, %s15
      %p9869 = scmp.lt.s32.totalorder %s9868, 255
      %s9870 = scalar_select %p9869, %s9868, 255
      %s9871 = smul.addr %s9870, 8
      %s9872 = scalar_lea.vmem %s4, %s9871
      // Predicated region
      $region37: #{_tiny_nerf_pallas.1} parent=35 // pred_check
        %p9873 = pneg %p122
      $region38: #{_tiny_nerf_pallas.1} parent=35 // pred_check_branch
        %9875 = sbr.rel (%p9873) target = $region40
      $region39: #{_tiny_nerf_pallas.1} parent=35 // pred_region
        %s9876 = smul.u32 128, %s15
      $region40: #{_tiny_nerf_pallas.1} parent=35 // pred_fallthru
        _
    $region36: #{_tiny_nerf_pallas.1} parent=5 // pred_fallthru
      _
    %p9877 = scmp.le.s32.totalorder 2, %s10
    // Predicated region
    $region41: #{_tiny_nerf_pallas.1} parent=5 // pred_check
      %p9878 = pneg %p9877
    $region42: #{_tiny_nerf_pallas.1} parent=5 // pred_check_branch
      %9880 = sbr.rel (%p9878) target = $region44
    $region43: #{_tiny_nerf_pallas.1} parent=5 // pred_region
      %s9881 = ssub.s32 %s10, 2
      // Predicated region
      $region45: #{_tiny_nerf_pallas.1} parent=43 // pred_check
        %p9882 = pneg %p128
      $region46: #{_tiny_nerf_pallas.1} parent=43 // pred_check_branch
        %9884 = sbr.rel (%p9882) target = $region48
      $region47: #{_tiny_nerf_pallas.1} parent=43 // pred_region
        %s9885 = smul.u32 128, %s16
        %p9886 = scmp.lt.s32.totalorder %s9885, 255
        %s9887 = scalar_select %p9886, %s9885, 255
        %s9888 = smul.addr %s9887, 8
        %s9889 = scalar_lea.vmem %s4, %s9888
      $region48: #{_tiny_nerf_pallas.1} parent=43 // pred_fallthru
        _
    $region44: #{_tiny_nerf_pallas.1} parent=5 // pred_fallthru
      _
  $region6: #{_tiny_nerf_pallas.1} parent=0 // loop_footer
    %s14 = sadd.s32 1, %s10
  $region7: #{_tiny_nerf_pallas.1} parent=0 // loop_footer_branch
    %9 = sbr.rel target = $region3
  $region8: #{_tiny_nerf_pallas.1} parent=0 // loop_exit
    _

</llo_original>
